<compile_context>
chip_gen: v6e
topology: v6e:2x2x1
jax: 0.10.0
libtpu: 0.0.40
codegen_flags: <defaults>
</compile_context>

<pallas_src>
import functools

import jax
import jax.numpy as jnp
from jax.experimental import pallas as pl
from jax.experimental.pallas import tpu as pltpu

IN_FEATURES = 224      # nn.LSTM input_size
H_REAL = 112           # nn.LSTM hidden_size (out_num)
H_PAD = 128            # lane-aligned padded hidden size
NUM_LAYERS = 3
NUM_CLASSES = 9
OUT_PAD = 128          # lane-dense padded FC output width


# ----------------------------------------------------------------------------
# Fused Pallas kernel: 3 bidirectional LSTM layers + head (cat last 2 steps,
# Linear(448,64), Linear(64,9)).
# ----------------------------------------------------------------------------
def _bilstm_fc_kernel(x_ref, wih0_ref, wihr_ref, whh_ref, b_ref,
                      fc1w_ref, fc1b_ref, fc2w_ref, fc2b_ref, out_ref, *, B, T):
    H = H_PAD

    def run_direction(xproj, whh, reverse):
        # xproj: (T*B, 4H) hoisted input projection (+ fused bias), timestep-major.
        h = jnp.zeros((B, H), jnp.float32)
        c = jnp.zeros((B, H), jnp.float32)
        outs = [None] * T
        # T is small and static -> Python unroll keeps the whole cell visible
        # to the LLO scheduler.  (Switch to lax.fori_loop(unroll=True) with a
        # VMEM sequence scratch if T grows large.)
        for step in range(T):
            t = (T - 1 - step) if reverse else step
            gates = xproj[t * B:(t + 1) * B, :] + jnp.dot(
                h, whh, preferred_element_type=jnp.float32)
            sig = jax.nn.sigmoid(gates[:, :3 * H])       # [i | f | o] (reordered)
            g_g = jnp.tanh(gates[:, 3 * H:])             # g
            c = sig[:, H:2 * H] * c + sig[:, :H] * g_g
            h = sig[:, 2 * H:3 * H] * jnp.tanh(c)
            outs[t] = h
        return outs

    # ---- layer 0: raw 224-feature input -------------------------------------
    x = x_ref[...]                                                  # (T*B, 224)
    fwd = run_direction(
        jnp.dot(x, wih0_ref[0], preferred_element_type=jnp.float32) + b_ref[0, 0],
        whh_ref[0, 0], reverse=False)
    bwd = run_direction(
        jnp.dot(x, wih0_ref[1], preferred_element_type=jnp.float32) + b_ref[0, 1],
        whh_ref[0, 1], reverse=True)

    # ---- layers 1..2: input = [fwd | bwd], lane-aligned 2*128 ---------------
    # TODO(synk): nn.LSTM inter-layer dropout(p=0.1) is train-mode only; eval
    # semantics (identity) are implemented here.
    for layer in range(1, NUM_LAYERS):
        seq = jnp.concatenate(
            [jnp.concatenate(fwd, axis=0), jnp.concatenate(bwd, axis=0)],
            axis=-1)                                                # (T*B, 256)
        fwd = run_direction(
            jnp.dot(seq, wihr_ref[layer - 1, 0],
                    preferred_element_type=jnp.float32) + b_ref[layer, 0],
            whh_ref[layer, 0], reverse=False)
        bwd = run_direction(
            jnp.dot(seq, wihr_ref[layer - 1, 1],
                    preferred_element_type=jnp.float32) + b_ref[layer, 1],
            whh_ref[layer, 1], reverse=True)

    # ---- head: cat(out[:,-2,:], out[:,-1,:]) -> Linear(448,64) -> Linear(64,9)
    feat = jnp.concatenate([fwd[T - 2], bwd[T - 2], fwd[T - 1], bwd[T - 1]],
                           axis=-1)                                 # (B, 512)
    hid = (jnp.dot(feat, fc1w_ref[...], preferred_element_type=jnp.float32)
           + fc1b_ref[...])
    out = (jnp.dot(hid, fc2w_ref[...], preferred_element_type=jnp.float32)
           + fc2b_ref[...])
    out_ref[...] = out


def bilstm_forward(x, params):
    """x: (B, 1, 224, T) float32  ->  (B, 9) float32 (PyTorch BiLSTM.forward)."""
    B, _, F, T = x.shape
    assert F == IN_FEATURES
    # squeeze(1) + transpose(2,1), flattened timestep-major: row index = t*B + b.
    x_tb = jnp.transpose(x[:, 0, :, :], (2, 0, 1)).reshape(T * B, F)
    vmem = pl.BlockSpec(memory_space=pltpu.MemorySpace.VMEM)
    out = pl.pallas_call(
        functools.partial(_bilstm_fc_kernel, B=B, T=T),
        out_shape=jax.ShapeDtypeStruct((B, OUT_PAD), jnp.float32),
        in_specs=[vmem] * 9,
        out_specs=vmem,
    )(x_tb, params["wih0"], params["wihr"], params["whh"], params["bias"],
      params["fc1w"], params["fc1b"], params["fc2w"], params["fc2b"])
    return out[:, :NUM_CLASSES]


# ----------------------------------------------------------------------------
# Parameter construction (deterministic, PyTorch-default-like uniform bounds)
# and kernel-ready packing (gate reorder + lane padding).
# ----------------------------------------------------------------------------
def _uniform(key, shape, bound):
    return jax.random.uniform(key, shape, jnp.float32, -bound, bound)


def _reorder_pad_gates(w):
    """(4*112, ...) -> (4*128, ...): gate blocks (i,f,g,o) -> (i,f,o,g),
    each zero-padded 112 -> 128."""
    H, Hp = H_REAL, H_PAD
    i, f, g, o = w[0:H], w[H:2 * H], w[2 * H:3 * H], w[3 * H:4 * H]
    pad = ((0, Hp - H),) + ((0, 0),) * (w.ndim - 1)
    return jnp.concatenate([jnp.pad(blk, pad) for blk in (i, f, o, g)], axis=0)


def _pad_row_blocks(wt, block=H_REAL, padded=H_PAD):
    """Zero-pad every `block` rows up to `padded` rows (lane-align input feats)."""
    nb = wt.shape[0] // block
    return jnp.concatenate(
        [jnp.pad(wt[k * block:(k + 1) * block], ((0, padded - block), (0, 0)))
         for k in range(nb)], axis=0)


def _prep_lstm_dir(w_ih, w_hh, b_ih, b_hh):
    wi = _reorder_pad_gates(w_ih).T                               # (in, 512)
    wh = jnp.pad(_reorder_pad_gates(w_hh).T,
                 ((0, H_PAD - H_REAL), (0, 0)))                   # (128, 512)
    b = _reorder_pad_gates(b_ih + b_hh).reshape(1, 4 * H_PAD)     # (1, 512)
    return wi, wh, b


def init_params(key):
    keys = iter(jax.random.split(key, 64))
    k_lstm = 1.0 / H_REAL ** 0.5
    raw = {"lstm": [], "fc": None}
    wih0, wihr, whh_all, b_all = None, [], [], []
    for layer in range(NUM_LAYERS):
        in_dim = IN_FEATURES if layer == 0 else 2 * H_REAL
        raw_dirs, wi_dirs, wh_dirs, b_dirs = [], [], [], []
        for _d in range(2):                                       # fwd, reverse
            w_ih = _uniform(next(keys), (4 * H_REAL, in_dim), k_lstm)
            w_hh = _uniform(next(keys), (4 * H_REAL, H_REAL), k_lstm)
            b_ih = _uniform(next(keys), (4 * H_REAL,), k_lstm)
            b_hh = _uniform(next(keys), (4 * H_REAL,), k_lstm)
            raw_dirs.append((w_ih, w_hh, b_ih, b_hh))
            wi, wh, b = _prep_lstm_dir(w_ih, w_hh, b_ih, b_hh)
            if layer > 0:
                wi = _pad_row_blocks(wi)                          # (224,512)->(256,512)
            wi_dirs.append(wi); wh_dirs.append(wh); b_dirs.append(b)
        raw["lstm"].append(raw_dirs)
        if layer == 0:
            wih0 = jnp.stack(wi_dirs)                             # (2, 224, 512)
        else:
            wihr.append(jnp.stack(wi_dirs))                       # (2, 256, 512)
        whh_all.append(jnp.stack(wh_dirs))                        # (2, 128, 512)
        b_all.append(jnp.stack(b_dirs))                           # (2, 1, 512)

    # fc1 = Sequential(Linear(448, 64), Linear(64, 9))
    in1 = 2 * 2 * H_REAL                                          # 448
    fc1_w = _uniform(next(keys), (64, in1), 1.0 / in1 ** 0.5)
    fc1_b = _uniform(next(keys), (64,), 1.0 / in1 ** 0.5)
    fc2_w = _uniform(next(keys), (NUM_CLASSES, 64), 1.0 / 64 ** 0.5)
    fc2_b = _uniform(next(keys), (NUM_CLASSES,), 1.0 / 64 ** 0.5)
    raw["fc"] = (fc1_w, fc1_b, fc2_w, fc2_b)

    params = {
        "wih0": wih0,                                             # (2, 224, 512)
        "wihr": jnp.stack(wihr),                                  # (2, 2, 256, 512)
        "whh": jnp.stack(whh_all),                                # (3, 2, 128, 512)
        "bias": jnp.stack(b_all),                                 # (3, 2, 1, 512)
        # fc1 rows map to [fwd[-2] | bwd[-2] | fwd[-1] | bwd[-1]], each block
        # padded 112 -> 128 to match the kernel's lane-aligned feature layout.
        "fc1w": _pad_row_blocks(fc1_w.T),                         # (512, 64)
        "fc1b": fc1_b.reshape(1, 64),
        "fc2w": jnp.pad(fc2_w.T, ((0, 0), (0, OUT_PAD - NUM_CLASSES))),   # (64, 128)
        "fc2b": jnp.pad(fc2_b, (0, OUT_PAD - NUM_CLASSES)).reshape(1, OUT_PAD),
    }
    return params, raw


# ----------------------------------------------------------------------------
# Pure-JAX reference with PyTorch nn.LSTM / nn.Linear semantics (eval mode)
# ----------------------------------------------------------------------------
def bilstm_reference(x, raw):
    B, _, F, T = x.shape
    xs = jnp.transpose(x[:, 0, :, :], (0, 2, 1))                  # (B, T, 224)
    hp = jax.lax.Precision.HIGHEST
    Hh = H_REAL

    def cell(x_t, h, c, w_ih, w_hh, b_ih, b_hh):
        gates = (jnp.dot(x_t, w_ih.T, precision=hp)
                 + jnp.dot(h, w_hh.T, precision=hp) + b_ih + b_hh)
        i = jax.nn.sigmoid(gates[:, 0:Hh])
        f = jax.nn.sigmoid(gates[:, Hh:2 * Hh])
        g = jnp.tanh(gates[:, 2 * Hh:3 * Hh])
        o = jax.nn.sigmoid(gates[:, 3 * Hh:4 * Hh])
        c = f * c + i * g
        return o * jnp.tanh(c), c

    layer_in = xs
    for layer in range(NUM_LAYERS):
        dir_outs = []
        for d in range(2):
            w_ih, w_hh, b_ih, b_hh = raw["lstm"][layer][d]
            h = jnp.zeros((B, Hh), jnp.float32)
            c = jnp.zeros((B, Hh), jnp.float32)
            hs = [None] * T
            order = range(T) if d == 0 else range(T - 1, -1, -1)
            for t in order:
                h, c = cell(layer_in[:, t, :], h, c, w_ih, w_hh, b_ih, b_hh)
                hs[t] = h
            dir_outs.append(jnp.stack(hs, axis=1))                # (B, T, 112)
        layer_in = jnp.concatenate(dir_outs, axis=-1)             # (B, T, 224)
    feat = jnp.concatenate([layer_in[:, -2, :], layer_in[:, -1, :]], axis=1)
    fc1_w, fc1_b, fc2_w, fc2_b = raw["fc"]
    hid = jnp.dot(feat, fc1_w.T, precision=hp) + fc1_b
    return jnp.dot(hid, fc2_w.T, precision=hp) + fc2_b


if __name__ == "__main__":
    key = jax.random.PRNGKey(0)
    pkey, xkey = jax.random.split(key)
    params, raw = init_params(pkey)

    # forward implies x: (B, 1, 224, T); squeeze(1).transpose(2,1) -> (B, T, 224)
    B, T = 2, 8
    x = jax.random.uniform(xkey, (B, 1, IN_FEATURES, T), jnp.float32)

    fwd_fn = jax.jit(bilstm_forward)
    out = fwd_fn(x, params)
    jax.block_until_ready(out)
    assert out.shape == (B, NUM_CLASSES), out.shape

    ref = bilstm_reference(x, raw)
    err = float(jnp.max(jnp.abs(out - ref)))
    assert err < 5e-2, f"max abs err vs reference: {err}"

    print("KERNEL_OK")
</pallas_src>

<mosaic_0001>
module attributes {stable_mosaic.version = 11 : i64} {
  func.func @_bilstm_fc_kernel(%arg0: memref<16x224xf32, #tpu.memory_space<vmem>>, %arg1: memref<2x224x512xf32, #tpu.memory_space<vmem>>, %arg2: memref<2x2x256x512xf32, #tpu.memory_space<vmem>>, %arg3: memref<3x2x128x512xf32, #tpu.memory_space<vmem>>, %arg4: memref<3x2x1x512xf32, #tpu.memory_space<vmem>>, %arg5: memref<512x64xf32, #tpu.memory_space<vmem>>, %arg6: memref<1x64xf32, #tpu.memory_space<vmem>>, %arg7: memref<64x128xf32, #tpu.memory_space<vmem>>, %arg8: memref<1x128xf32, #tpu.memory_space<vmem>>, %arg9: memref<2x128xf32, #tpu.memory_space<vmem>>) attributes {dimension_semantics = [], scalar_prefetch = 0 : i64, scratch_operands = 0 : i64, tpu.core_type = #tpu.core_type<tc>} {
    %c0 = arith.constant 0 : index
    %c0_0 = arith.constant 0 : index
    %0 = vector.load %arg0[%c0, %c0_0] : memref<16x224xf32, #tpu.memory_space<vmem>>, vector<16x224xf32>
    %c0_1 = arith.constant 0 : index
    %c0_2 = arith.constant 0 : index
    %c0_3 = arith.constant 0 : index
    %1 = vector.load %arg1[%c0_1, %c0_2, %c0_3] : memref<2x224x512xf32, #tpu.memory_space<vmem>>, vector<1x224x512xf32>
    %2 = vector.shape_cast %1 : vector<1x224x512xf32> to vector<224x512xf32>
    %cst = arith.constant dense<0.000000e+00> : vector<16x512xf32>
    %3 = tpu.matmul %0, %2, %cst {dimension_numbers = #tpu.dot_dimension_numbers<[1], [0], [0], [1], [0, 0, 1, 1], [], []>} : vector<16x224xf32>, vector<224x512xf32>, vector<16x512xf32> -> vector<16x512xf32>
    %c0_4 = arith.constant 0 : index
    %c0_5 = arith.constant 0 : index
    %c0_6 = arith.constant 0 : index
    %c0_7 = arith.constant 0 : index
    %4 = vector.load %arg4[%c0_4, %c0_5, %c0_6, %c0_7] : memref<3x2x1x512xf32, #tpu.memory_space<vmem>>, vector<1x1x1x512xf32>
    %5 = vector.shape_cast %4 : vector<1x1x1x512xf32> to vector<1x512xf32>
    %6 = vector.broadcast %5 : vector<1x512xf32> to vector<16x512xf32>
    %7 = arith.addf %3, %6 : vector<16x512xf32>
    %c0_8 = arith.constant 0 : index
    %c0_9 = arith.constant 0 : index
    %c0_10 = arith.constant 0 : index
    %c0_11 = arith.constant 0 : index
    %8 = vector.load %arg3[%c0_8, %c0_9, %c0_10, %c0_11] : memref<3x2x128x512xf32, #tpu.memory_space<vmem>>, vector<1x1x128x512xf32>
    %9 = vector.shape_cast %8 : vector<1x1x128x512xf32> to vector<128x512xf32>
    %cst_12 = arith.constant 0.000000e+00 : f32
    %10 = vector.broadcast %cst_12 : f32 to vector<2x128xf32>
    %cst_13 = arith.constant 0.000000e+00 : f32
    %11 = vector.broadcast %cst_13 : f32 to vector<2x128xf32>
    %12 = vector.extract_strided_slice %7 {offsets = [0, 0], sizes = [2, 512], strides = [1, 1]} : vector<16x512xf32> to vector<2x512xf32>
    %cst_14 = arith.constant dense<0.000000e+00> : vector<2x512xf32>
    %13 = tpu.matmul %10, %9, %cst_14 {dimension_numbers = #tpu.dot_dimension_numbers<[1], [0], [0], [1], [0, 0, 1, 1], [], []>} : vector<2x128xf32>, vector<128x512xf32>, vector<2x512xf32> -> vector<2x512xf32>
    %14 = arith.addf %12, %13 : vector<2x512xf32>
    %15 = vector.extract_strided_slice %14 {offsets = [0, 0], sizes = [2, 384], strides = [1, 1]} : vector<2x512xf32> to vector<2x384xf32>
    %16 = arith.negf %15 : vector<2x384xf32>
    %17 = math.exp %16 : vector<2x384xf32>
    %cst_15 = arith.constant 1.000000e+00 : f32
    %18 = vector.broadcast %cst_15 : f32 to vector<2x384xf32>
    %19 = arith.addf %18, %17 : vector<2x384xf32>
    %20 = arith.divf %18, %19 : vector<2x384xf32>
    %21 = vector.extract_strided_slice %14 {offsets = [0, 384], sizes = [2, 128], strides = [1, 1]} : vector<2x512xf32> to vector<2x128xf32>
    %22 = math.tanh %21 : vector<2x128xf32>
    %23 = vector.extract_strided_slice %20 {offsets = [0, 128], sizes = [2, 128], strides = [1, 1]} : vector<2x384xf32> to vector<2x128xf32>
    %24 = arith.mulf %23, %11 : vector<2x128xf32>
    %25 = vector.extract_strided_slice %20 {offsets = [0, 0], sizes = [2, 128], strides = [1, 1]} : vector<2x384xf32> to vector<2x128xf32>
    %26 = arith.mulf %25, %22 : vector<2x128xf32>
    %27 = arith.addf %24, %26 : vector<2x128xf32>
    %28 = vector.extract_strided_slice %20 {offsets = [0, 256], sizes = [2, 128], strides = [1, 1]} : vector<2x384xf32> to vector<2x128xf32>
    %29 = math.tanh %27 : vector<2x128xf32>
    %30 = arith.mulf %28, %29 : vector<2x128xf32>
    %31 = vector.extract_strided_slice %7 {offsets = [2, 0], sizes = [2, 512], strides = [1, 1]} : vector<16x512xf32> to vector<2x512xf32>
    %cst_16 = arith.constant dense<0.000000e+00> : vector<2x512xf32>
    %32 = tpu.matmul %30, %9, %cst_16 {dimension_numbers = #tpu.dot_dimension_numbers<[1], [0], [0], [1], [0, 0, 1, 1], [], []>} : vector<2x128xf32>, vector<128x512xf32>, vector<2x512xf32> -> vector<2x512xf32>
    %33 = arith.addf %31, %32 : vector<2x512xf32>
    %34 = vector.extract_strided_slice %33 {offsets = [0, 0], sizes = [2, 384], strides = [1, 1]} : vector<2x512xf32> to vector<2x384xf32>
    %35 = arith.negf %34 : vector<2x384xf32>
    %36 = math.exp %35 : vector<2x384xf32>
    %cst_17 = arith.constant 1.000000e+00 : f32
    %37 = vector.broadcast %cst_17 : f32 to vector<2x384xf32>
    %38 = arith.addf %37, %36 : vector<2x384xf32>
    %39 = arith.divf %37, %38 : vector<2x384xf32>
    %40 = vector.extract_strided_slice %33 {offsets = [0, 384], sizes = [2, 128], strides = [1, 1]} : vector<2x512xf32> to vector<2x128xf32>
    %41 = math.tanh %40 : vector<2x128xf32>
    %42 = vector.extract_strided_slice %39 {offsets = [0, 128], sizes = [2, 128], strides = [1, 1]} : vector<2x384xf32> to vector<2x128xf32>
    %43 = arith.mulf %42, %27 : vector<2x128xf32>
    %44 = vector.extract_strided_slice %39 {offsets = [0, 0], sizes = [2, 128], strides = [1, 1]} : vector<2x384xf32> to vector<2x128xf32>
    %45 = arith.mulf %44, %41 : vector<2x128xf32>
    %46 = arith.addf %43, %45 : vector<2x128xf32>
    %47 = vector.extract_strided_slice %39 {offsets = [0, 256], sizes = [2, 128], strides = [1, 1]} : vector<2x384xf32> to vector<2x128xf32>
    %48 = math.tanh %46 : vector<2x128xf32>
    %49 = arith.mulf %47, %48 : vector<2x128xf32>
    %50 = vector.extract_strided_slice %7 {offsets = [4, 0], sizes = [2, 512], strides = [1, 1]} : vector<16x512xf32> to vector<2x512xf32>
    %cst_18 = arith.constant dense<0.000000e+00> : vector<2x512xf32>
    %51 = tpu.matmul %49, %9, %cst_18 {dimension_numbers = #tpu.dot_dimension_numbers<[1], [0], [0], [1], [0, 0, 1, 1], [], []>} : vector<2x128xf32>, vector<128x512xf32>, vector<2x512xf32> -> vector<2x512xf32>
    %52 = arith.addf %50, %51 : vector<2x512xf32>
    %53 = vector.extract_strided_slice %52 {offsets = [0, 0], sizes = [2, 384], strides = [1, 1]} : vector<2x512xf32> to vector<2x384xf32>
    %54 = arith.negf %53 : vector<2x384xf32>
    %55 = math.exp %54 : vector<2x384xf32>
    %cst_19 = arith.constant 1.000000e+00 : f32
    %56 = vector.broadcast %cst_19 : f32 to vector<2x384xf32>
    %57 = arith.addf %56, %55 : vector<2x384xf32>
    %58 = arith.divf %56, %57 : vector<2x384xf32>
    %59 = vector.extract_strided_slice %52 {offsets = [0, 384], sizes = [2, 128], strides = [1, 1]} : vector<2x512xf32> to vector<2x128xf32>
    %60 = math.tanh %59 : vector<2x128xf32>
    %61 = vector.extract_strided_slice %58 {offsets = [0, 128], sizes = [2, 128], strides = [1, 1]} : vector<2x384xf32> to vector<2x128xf32>
    %62 = arith.mulf %61, %46 : vector<2x128xf32>
    %63 = vector.extract_strided_slice %58 {offsets = [0, 0], sizes = [2, 128], strides = [1, 1]} : vector<2x384xf32> to vector<2x128xf32>
    %64 = arith.mulf %63, %60 : vector<2x128xf32>
    %65 = arith.addf %62, %64 : vector<2x128xf32>
    %66 = vector.extract_strided_slice %58 {offsets = [0, 256], sizes = [2, 128], strides = [1, 1]} : vector<2x384xf32> to vector<2x128xf32>
    %67 = math.tanh %65 : vector<2x128xf32>
    %68 = arith.mulf %66, %67 : vector<2x128xf32>
    %69 = vector.extract_strided_slice %7 {offsets = [6, 0], sizes = [2, 512], strides = [1, 1]} : vector<16x512xf32> to vector<2x512xf32>
    %cst_20 = arith.constant dense<0.000000e+00> : vector<2x512xf32>
    %70 = tpu.matmul %68, %9, %cst_20 {dimension_numbers = #tpu.dot_dimension_numbers<[1], [0], [0], [1], [0, 0, 1, 1], [], []>} : vector<2x128xf32>, vector<128x512xf32>, vector<2x512xf32> -> vector<2x512xf32>
    %71 = arith.addf %69, %70 : vector<2x512xf32>
    %72 = vector.extract_strided_slice %71 {offsets = [0, 0], sizes = [2, 384], strides = [1, 1]} : vector<2x512xf32> to vector<2x384xf32>
    %73 = arith.negf %72 : vector<2x384xf32>
    %74 = math.exp %73 : vector<2x384xf32>
    %cst_21 = arith.constant 1.000000e+00 : f32
    %75 = vector.broadcast %cst_21 : f32 to vector<2x384xf32>
    %76 = arith.addf %75, %74 : vector<2x384xf32>
    %77 = arith.divf %75, %76 : vector<2x384xf32>
    %78 = vector.extract_strided_slice %71 {offsets = [0, 384], sizes = [2, 128], strides = [1, 1]} : vector<2x512xf32> to vector<2x128xf32>
    %79 = math.tanh %78 : vector<2x128xf32>
    %80 = vector.extract_strided_slice %77 {offsets = [0, 128], sizes = [2, 128], strides = [1, 1]} : vector<2x384xf32> to vector<2x128xf32>
    %81 = arith.mulf %80, %65 : vector<2x128xf32>
    %82 = vector.extract_strided_slice %77 {offsets = [0, 0], sizes = [2, 128], strides = [1, 1]} : vector<2x384xf32> to vector<2x128xf32>
    %83 = arith.mulf %82, %79 : vector<2x128xf32>
    %84 = arith.addf %81, %83 : vector<2x128xf32>
    %85 = vector.extract_strided_slice %77 {offsets = [0, 256], sizes = [2, 128], strides = [1, 1]} : vector<2x384xf32> to vector<2x128xf32>
    %86 = math.tanh %84 : vector<2x128xf32>
    %87 = arith.mulf %85, %86 : vector<2x128xf32>
    %88 = vector.extract_strided_slice %7 {offsets = [8, 0], sizes = [2, 512], strides = [1, 1]} : vector<16x512xf32> to vector<2x512xf32>
    %cst_22 = arith.constant dense<0.000000e+00> : vector<2x512xf32>
    %89 = tpu.matmul %87, %9, %cst_22 {dimension_numbers = #tpu.dot_dimension_numbers<[1], [0], [0], [1], [0, 0, 1, 1], [], []>} : vector<2x128xf32>, vector<128x512xf32>, vector<2x512xf32> -> vector<2x512xf32>
    %90 = arith.addf %88, %89 : vector<2x512xf32>
    %91 = vector.extract_strided_slice %90 {offsets = [0, 0], sizes = [2, 384], strides = [1, 1]} : vector<2x512xf32> to vector<2x384xf32>
    %92 = arith.negf %91 : vector<2x384xf32>
    %93 = math.exp %92 : vector<2x384xf32>
    %cst_23 = arith.constant 1.000000e+00 : f32
    %94 = vector.broadcast %cst_23 : f32 to vector<2x384xf32>
    %95 = arith.addf %94, %93 : vector<2x384xf32>
    %96 = arith.divf %94, %95 : vector<2x384xf32>
    %97 = vector.extract_strided_slice %90 {offsets = [0, 384], sizes = [2, 128], strides = [1, 1]} : vector<2x512xf32> to vector<2x128xf32>
    %98 = math.tanh %97 : vector<2x128xf32>
    %99 = vector.extract_strided_slice %96 {offsets = [0, 128], sizes = [2, 128], strides = [1, 1]} : vector<2x384xf32> to vector<2x128xf32>
    %100 = arith.mulf %99, %84 : vector<2x128xf32>
    %101 = vector.extract_strided_slice %96 {offsets = [0, 0], sizes = [2, 128], strides = [1, 1]} : vector<2x384xf32> to vector<2x128xf32>
    %102 = arith.mulf %101, %98 : vector<2x128xf32>
    %103 = arith.addf %100, %102 : vector<2x128xf32>
    %104 = vector.extract_strided_slice %96 {offsets = [0, 256], sizes = [2, 128], strides = [1, 1]} : vector<2x384xf32> to vector<2x128xf32>
    %105 = math.tanh %103 : vector<2x128xf32>
    %106 = arith.mulf %104, %105 : vector<2x128xf32>
    %107 = vector.extract_strided_slice %7 {offsets = [10, 0], sizes = [2, 512], strides = [1, 1]} : vector<16x512xf32> to vector<2x512xf32>
    %cst_24 = arith.constant dense<0.000000e+00> : vector<2x512xf32>
    %108 = tpu.matmul %106, %9, %cst_24 {dimension_numbers = #tpu.dot_dimension_numbers<[1], [0], [0], [1], [0, 0, 1, 1], [], []>} : vector<2x128xf32>, vector<128x512xf32>, vector<2x512xf32> -> vector<2x512xf32>
    %109 = arith.addf %107, %108 : vector<2x512xf32>
    %110 = vector.extract_strided_slice %109 {offsets = [0, 0], sizes = [2, 384], strides = [1, 1]} : vector<2x512xf32> to vector<2x384xf32>
    %111 = arith.negf %110 : vector<2x384xf32>
    %112 = math.exp %111 : vector<2x384xf32>
    %cst_25 = arith.constant 1.000000e+00 : f32
    %113 = vector.broadcast %cst_25 : f32 to vector<2x384xf32>
    %114 = arith.addf %113, %112 : vector<2x384xf32>
    %115 = arith.divf %113, %114 : vector<2x384xf32>
    %116 = vector.extract_strided_slice %109 {offsets = [0, 384], sizes = [2, 128], strides = [1, 1]} : vector<2x512xf32> to vector<2x128xf32>
    %117 = math.tanh %116 : vector<2x128xf32>
    %118 = vector.extract_strided_slice %115 {offsets = [0, 128], sizes = [2, 128], strides = [1, 1]} : vector<2x384xf32> to vector<2x128xf32>
    %119 = arith.mulf %118, %103 : vector<2x128xf32>
    %120 = vector.extract_strided_slice %115 {offsets = [0, 0], sizes = [2, 128], strides = [1, 1]} : vector<2x384xf32> to vector<2x128xf32>
    %121 = arith.mulf %120, %117 : vector<2x128xf32>
    %122 = arith.addf %119, %121 : vector<2x128xf32>
    %123 = vector.extract_strided_slice %115 {offsets = [0, 256], sizes = [2, 128], strides = [1, 1]} : vector<2x384xf32> to vector<2x128xf32>
    %124 = math.tanh %122 : vector<2x128xf32>
    %125 = arith.mulf %123, %124 : vector<2x128xf32>
    %126 = vector.extract_strided_slice %7 {offsets = [12, 0], sizes = [2, 512], strides = [1, 1]} : vector<16x512xf32> to vector<2x512xf32>
    %cst_26 = arith.constant dense<0.000000e+00> : vector<2x512xf32>
    %127 = tpu.matmul %125, %9, %cst_26 {dimension_numbers = #tpu.dot_dimension_numbers<[1], [0], [0], [1], [0, 0, 1, 1], [], []>} : vector<2x128xf32>, vector<128x512xf32>, vector<2x512xf32> -> vector<2x512xf32>
    %128 = arith.addf %126, %127 : vector<2x512xf32>
    %129 = vector.extract_strided_slice %128 {offsets = [0, 0], sizes = [2, 384], strides = [1, 1]} : vector<2x512xf32> to vector<2x384xf32>
    %130 = arith.negf %129 : vector<2x384xf32>
    %131 = math.exp %130 : vector<2x384xf32>
    %cst_27 = arith.constant 1.000000e+00 : f32
    %132 = vector.broadcast %cst_27 : f32 to vector<2x384xf32>
    %133 = arith.addf %132, %131 : vector<2x384xf32>
    %134 = arith.divf %132, %133 : vector<2x384xf32>
    %135 = vector.extract_strided_slice %128 {offsets = [0, 384], sizes = [2, 128], strides = [1, 1]} : vector<2x512xf32> to vector<2x128xf32>
    %136 = math.tanh %135 : vector<2x128xf32>
    %137 = vector.extract_strided_slice %134 {offsets = [0, 128], sizes = [2, 128], strides = [1, 1]} : vector<2x384xf32> to vector<2x128xf32>
    %138 = arith.mulf %137, %122 : vector<2x128xf32>
    %139 = vector.extract_strided_slice %134 {offsets = [0, 0], sizes = [2, 128], strides = [1, 1]} : vector<2x384xf32> to vector<2x128xf32>
    %140 = arith.mulf %139, %136 : vector<2x128xf32>
    %141 = arith.addf %138, %140 : vector<2x128xf32>
    %142 = vector.extract_strided_slice %134 {offsets = [0, 256], sizes = [2, 128], strides = [1, 1]} : vector<2x384xf32> to vector<2x128xf32>
    %143 = math.tanh %141 : vector<2x128xf32>
    %144 = arith.mulf %142, %143 : vector<2x128xf32>
    %145 = vector.extract_strided_slice %7 {offsets = [14, 0], sizes = [2, 512], strides = [1, 1]} : vector<16x512xf32> to vector<2x512xf32>
    %cst_28 = arith.constant dense<0.000000e+00> : vector<2x512xf32>
    %146 = tpu.matmul %144, %9, %cst_28 {dimension_numbers = #tpu.dot_dimension_numbers<[1], [0], [0], [1], [0, 0, 1, 1], [], []>} : vector<2x128xf32>, vector<128x512xf32>, vector<2x512xf32> -> vector<2x512xf32>
    %147 = arith.addf %145, %146 : vector<2x512xf32>
    %148 = vector.extract_strided_slice %147 {offsets = [0, 0], sizes = [2, 384], strides = [1, 1]} : vector<2x512xf32> to vector<2x384xf32>
    %149 = arith.negf %148 : vector<2x384xf32>
    %150 = math.exp %149 : vector<2x384xf32>
    %cst_29 = arith.constant 1.000000e+00 : f32
    %151 = vector.broadcast %cst_29 : f32 to vector<2x384xf32>
    %152 = arith.addf %151, %150 : vector<2x384xf32>
    %153 = arith.divf %151, %152 : vector<2x384xf32>
    %154 = vector.extract_strided_slice %147 {offsets = [0, 384], sizes = [2, 128], strides = [1, 1]} : vector<2x512xf32> to vector<2x128xf32>
    %155 = math.tanh %154 : vector<2x128xf32>
    %156 = vector.extract_strided_slice %153 {offsets = [0, 128], sizes = [2, 128], strides = [1, 1]} : vector<2x384xf32> to vector<2x128xf32>
    %157 = arith.mulf %156, %141 : vector<2x128xf32>
    %158 = vector.extract_strided_slice %153 {offsets = [0, 0], sizes = [2, 128], strides = [1, 1]} : vector<2x384xf32> to vector<2x128xf32>
    %159 = arith.mulf %158, %155 : vector<2x128xf32>
    %160 = arith.addf %157, %159 : vector<2x128xf32>
    %161 = vector.extract_strided_slice %153 {offsets = [0, 256], sizes = [2, 128], strides = [1, 1]} : vector<2x384xf32> to vector<2x128xf32>
    %162 = math.tanh %160 : vector<2x128xf32>
    %163 = arith.mulf %161, %162 : vector<2x128xf32>
    %c1 = arith.constant 1 : index
    %c0_30 = arith.constant 0 : index
    %c0_31 = arith.constant 0 : index
    %164 = vector.load %arg1[%c1, %c0_30, %c0_31] : memref<2x224x512xf32, #tpu.memory_space<vmem>>, vector<1x224x512xf32>
    %165 = vector.shape_cast %164 : vector<1x224x512xf32> to vector<224x512xf32>
    %cst_32 = arith.constant dense<0.000000e+00> : vector<16x512xf32>
    %166 = tpu.matmul %0, %165, %cst_32 {dimension_numbers = #tpu.dot_dimension_numbers<[1], [0], [0], [1], [0, 0, 1, 1], [], []>} : vector<16x224xf32>, vector<224x512xf32>, vector<16x512xf32> -> vector<16x512xf32>
    %c0_33 = arith.constant 0 : index
    %c1_34 = arith.constant 1 : index
    %c0_35 = arith.constant 0 : index
    %c0_36 = arith.constant 0 : index
    %167 = vector.load %arg4[%c0_33, %c1_34, %c0_35, %c0_36] : memref<3x2x1x512xf32, #tpu.memory_space<vmem>>, vector<1x1x1x512xf32>
    %168 = vector.shape_cast %167 : vector<1x1x1x512xf32> to vector<1x512xf32>
    %169 = vector.broadcast %168 : vector<1x512xf32> to vector<16x512xf32>
    %170 = arith.addf %166, %169 : vector<16x512xf32>
    %c0_37 = arith.constant 0 : index
    %c1_38 = arith.constant 1 : index
    %c0_39 = arith.constant 0 : index
    %c0_40 = arith.constant 0 : index
    %171 = vector.load %arg3[%c0_37, %c1_38, %c0_39, %c0_40] : memref<3x2x128x512xf32, #tpu.memory_space<vmem>>, vector<1x1x128x512xf32>
    %172 = vector.shape_cast %171 : vector<1x1x128x512xf32> to vector<128x512xf32>
    %cst_41 = arith.constant 0.000000e+00 : f32
    %173 = vector.broadcast %cst_41 : f32 to vector<2x128xf32>
    %cst_42 = arith.constant 0.000000e+00 : f32
    %174 = vector.broadcast %cst_42 : f32 to vector<2x128xf32>
    %175 = vector.extract_strided_slice %170 {offsets = [14, 0], sizes = [2, 512], strides = [1, 1]} : vector<16x512xf32> to vector<2x512xf32>
    %cst_43 = arith.constant dense<0.000000e+00> : vector<2x512xf32>
    %176 = tpu.matmul %173, %172, %cst_43 {dimension_numbers = #tpu.dot_dimension_numbers<[1], [0], [0], [1], [0, 0, 1, 1], [], []>} : vector<2x128xf32>, vector<128x512xf32>, vector<2x512xf32> -> vector<2x512xf32>
    %177 = arith.addf %175, %176 : vector<2x512xf32>
    %178 = vector.extract_strided_slice %177 {offsets = [0, 0], sizes = [2, 384], strides = [1, 1]} : vector<2x512xf32> to vector<2x384xf32>
    %179 = arith.negf %178 : vector<2x384xf32>
    %180 = math.exp %179 : vector<2x384xf32>
    %cst_44 = arith.constant 1.000000e+00 : f32
    %181 = vector.broadcast %cst_44 : f32 to vector<2x384xf32>
    %182 = arith.addf %181, %180 : vector<2x384xf32>
    %183 = arith.divf %181, %182 : vector<2x384xf32>
    %184 = vector.extract_strided_slice %177 {offsets = [0, 384], sizes = [2, 128], strides = [1, 1]} : vector<2x512xf32> to vector<2x128xf32>
    %185 = math.tanh %184 : vector<2x128xf32>
    %186 = vector.extract_strided_slice %183 {offsets = [0, 128], sizes = [2, 128], strides = [1, 1]} : vector<2x384xf32> to vector<2x128xf32>
    %187 = arith.mulf %186, %174 : vector<2x128xf32>
    %188 = vector.extract_strided_slice %183 {offsets = [0, 0], sizes = [2, 128], strides = [1, 1]} : vector<2x384xf32> to vector<2x128xf32>
    %189 = arith.mulf %188, %185 : vector<2x128xf32>
    %190 = arith.addf %187, %189 : vector<2x128xf32>
    %191 = vector.extract_strided_slice %183 {offsets = [0, 256], sizes = [2, 128], strides = [1, 1]} : vector<2x384xf32> to vector<2x128xf32>
    %192 = math.tanh %190 : vector<2x128xf32>
    %193 = arith.mulf %191, %192 : vector<2x128xf32>
    %194 = vector.extract_strided_slice %170 {offsets = [12, 0], sizes = [2, 512], strides = [1, 1]} : vector<16x512xf32> to vector<2x512xf32>
    %cst_45 = arith.constant dense<0.000000e+00> : vector<2x512xf32>
    %195 = tpu.matmul %193, %172, %cst_45 {dimension_numbers = #tpu.dot_dimension_numbers<[1], [0], [0], [1], [0, 0, 1, 1], [], []>} : vector<2x128xf32>, vector<128x512xf32>, vector<2x512xf32> -> vector<2x512xf32>
    %196 = arith.addf %194, %195 : vector<2x512xf32>
    %197 = vector.extract_strided_slice %196 {offsets = [0, 0], sizes = [2, 384], strides = [1, 1]} : vector<2x512xf32> to vector<2x384xf32>
    %198 = arith.negf %197 : vector<2x384xf32>
    %199 = math.exp %198 : vector<2x384xf32>
    %cst_46 = arith.constant 1.000000e+00 : f32
    %200 = vector.broadcast %cst_46 : f32 to vector<2x384xf32>
    %201 = arith.addf %200, %199 : vector<2x384xf32>
    %202 = arith.divf %200, %201 : vector<2x384xf32>
    %203 = vector.extract_strided_slice %196 {offsets = [0, 384], sizes = [2, 128], strides = [1, 1]} : vector<2x512xf32> to vector<2x128xf32>
    %204 = math.tanh %203 : vector<2x128xf32>
    %205 = vector.extract_strided_slice %202 {offsets = [0, 128], sizes = [2, 128], strides = [1, 1]} : vector<2x384xf32> to vector<2x128xf32>
    %206 = arith.mulf %205, %190 : vector<2x128xf32>
    %207 = vector.extract_strided_slice %202 {offsets = [0, 0], sizes = [2, 128], strides = [1, 1]} : vector<2x384xf32> to vector<2x128xf32>
    %208 = arith.mulf %207, %204 : vector<2x128xf32>
    %209 = arith.addf %206, %208 : vector<2x128xf32>
    %210 = vector.extract_strided_slice %202 {offsets = [0, 256], sizes = [2, 128], strides = [1, 1]} : vector<2x384xf32> to vector<2x128xf32>
    %211 = math.tanh %209 : vector<2x128xf32>
    %212 = arith.mulf %210, %211 : vector<2x128xf32>
    %213 = vector.extract_strided_slice %170 {offsets = [10, 0], sizes = [2, 512], strides = [1, 1]} : vector<16x512xf32> to vector<2x512xf32>
    %cst_47 = arith.constant dense<0.000000e+00> : vector<2x512xf32>
    %214 = tpu.matmul %212, %172, %cst_47 {dimension_numbers = #tpu.dot_dimension_numbers<[1], [0], [0], [1], [0, 0, 1, 1], [], []>} : vector<2x128xf32>, vector<128x512xf32>, vector<2x512xf32> -> vector<2x512xf32>
    %215 = arith.addf %213, %214 : vector<2x512xf32>
    %216 = vector.extract_strided_slice %215 {offsets = [0, 0], sizes = [2, 384], strides = [1, 1]} : vector<2x512xf32> to vector<2x384xf32>
    %217 = arith.negf %216 : vector<2x384xf32>
    %218 = math.exp %217 : vector<2x384xf32>
    %cst_48 = arith.constant 1.000000e+00 : f32
    %219 = vector.broadcast %cst_48 : f32 to vector<2x384xf32>
    %220 = arith.addf %219, %218 : vector<2x384xf32>
    %221 = arith.divf %219, %220 : vector<2x384xf32>
    %222 = vector.extract_strided_slice %215 {offsets = [0, 384], sizes = [2, 128], strides = [1, 1]} : vector<2x512xf32> to vector<2x128xf32>
    %223 = math.tanh %222 : vector<2x128xf32>
    %224 = vector.extract_strided_slice %221 {offsets = [0, 128], sizes = [2, 128], strides = [1, 1]} : vector<2x384xf32> to vector<2x128xf32>
    %225 = arith.mulf %224, %209 : vector<2x128xf32>
    %226 = vector.extract_strided_slice %221 {offsets = [0, 0], sizes = [2, 128], strides = [1, 1]} : vector<2x384xf32> to vector<2x128xf32>
    %227 = arith.mulf %226, %223 : vector<2x128xf32>
    %228 = arith.addf %225, %227 : vector<2x128xf32>
    %229 = vector.extract_strided_slice %221 {offsets = [0, 256], sizes = [2, 128], strides = [1, 1]} : vector<2x384xf32> to vector<2x128xf32>
    %230 = math.tanh %228 : vector<2x128xf32>
    %231 = arith.mulf %229, %230 : vector<2x128xf32>
    %232 = vector.extract_strided_slice %170 {offsets = [8, 0], sizes = [2, 512], strides = [1, 1]} : vector<16x512xf32> to vector<2x512xf32>
    %cst_49 = arith.constant dense<0.000000e+00> : vector<2x512xf32>
    %233 = tpu.matmul %231, %172, %cst_49 {dimension_numbers = #tpu.dot_dimension_numbers<[1], [0], [0], [1], [0, 0, 1, 1], [], []>} : vector<2x128xf32>, vector<128x512xf32>, vector<2x512xf32> -> vector<2x512xf32>
    %234 = arith.addf %232, %233 : vector<2x512xf32>
    %235 = vector.extract_strided_slice %234 {offsets = [0, 0], sizes = [2, 384], strides = [1, 1]} : vector<2x512xf32> to vector<2x384xf32>
    %236 = arith.negf %235 : vector<2x384xf32>
    %237 = math.exp %236 : vector<2x384xf32>
    %cst_50 = arith.constant 1.000000e+00 : f32
    %238 = vector.broadcast %cst_50 : f32 to vector<2x384xf32>
    %239 = arith.addf %238, %237 : vector<2x384xf32>
    %240 = arith.divf %238, %239 : vector<2x384xf32>
    %241 = vector.extract_strided_slice %234 {offsets = [0, 384], sizes = [2, 128], strides = [1, 1]} : vector<2x512xf32> to vector<2x128xf32>
    %242 = math.tanh %241 : vector<2x128xf32>
    %243 = vector.extract_strided_slice %240 {offsets = [0, 128], sizes = [2, 128], strides = [1, 1]} : vector<2x384xf32> to vector<2x128xf32>
    %244 = arith.mulf %243, %228 : vector<2x128xf32>
    %245 = vector.extract_strided_slice %240 {offsets = [0, 0], sizes = [2, 128], strides = [1, 1]} : vector<2x384xf32> to vector<2x128xf32>
    %246 = arith.mulf %245, %242 : vector<2x128xf32>
    %247 = arith.addf %244, %246 : vector<2x128xf32>
    %248 = vector.extract_strided_slice %240 {offsets = [0, 256], sizes = [2, 128], strides = [1, 1]} : vector<2x384xf32> to vector<2x128xf32>
    %249 = math.tanh %247 : vector<2x128xf32>
    %250 = arith.mulf %248, %249 : vector<2x128xf32>
    %251 = vector.extract_strided_slice %170 {offsets = [6, 0], sizes = [2, 512], strides = [1, 1]} : vector<16x512xf32> to vector<2x512xf32>
    %cst_51 = arith.constant dense<0.000000e+00> : vector<2x512xf32>
    %252 = tpu.matmul %250, %172, %cst_51 {dimension_numbers = #tpu.dot_dimension_numbers<[1], [0], [0], [1], [0, 0, 1, 1], [], []>} : vector<2x128xf32>, vector<128x512xf32>, vector<2x512xf32> -> vector<2x512xf32>
    %253 = arith.addf %251, %252 : vector<2x512xf32>
    %254 = vector.extract_strided_slice %253 {offsets = [0, 0], sizes = [2, 384], strides = [1, 1]} : vector<2x512xf32> to vector<2x384xf32>
    %255 = arith.negf %254 : vector<2x384xf32>
    %256 = math.exp %255 : vector<2x384xf32>
    %cst_52 = arith.constant 1.000000e+00 : f32
    %257 = vector.broadcast %cst_52 : f32 to vector<2x384xf32>
    %258 = arith.addf %257, %256 : vector<2x384xf32>
    %259 = arith.divf %257, %258 : vector<2x384xf32>
    %260 = vector.extract_strided_slice %253 {offsets = [0, 384], sizes = [2, 128], strides = [1, 1]} : vector<2x512xf32> to vector<2x128xf32>
    %261 = math.tanh %260 : vector<2x128xf32>
    %262 = vector.extract_strided_slice %259 {offsets = [0, 128], sizes = [2, 128], strides = [1, 1]} : vector<2x384xf32> to vector<2x128xf32>
    %263 = arith.mulf %262, %247 : vector<2x128xf32>
    %264 = vector.extract_strided_slice %259 {offsets = [0, 0], sizes = [2, 128], strides = [1, 1]} : vector<2x384xf32> to vector<2x128xf32>
    %265 = arith.mulf %264, %261 : vector<2x128xf32>
    %266 = arith.addf %263, %265 : vector<2x128xf32>
    %267 = vector.extract_strided_slice %259 {offsets = [0, 256], sizes = [2, 128], strides = [1, 1]} : vector<2x384xf32> to vector<2x128xf32>
    %268 = math.tanh %266 : vector<2x128xf32>
    %269 = arith.mulf %267, %268 : vector<2x128xf32>
    %270 = vector.extract_strided_slice %170 {offsets = [4, 0], sizes = [2, 512], strides = [1, 1]} : vector<16x512xf32> to vector<2x512xf32>
    %cst_53 = arith.constant dense<0.000000e+00> : vector<2x512xf32>
    %271 = tpu.matmul %269, %172, %cst_53 {dimension_numbers = #tpu.dot_dimension_numbers<[1], [0], [0], [1], [0, 0, 1, 1], [], []>} : vector<2x128xf32>, vector<128x512xf32>, vector<2x512xf32> -> vector<2x512xf32>
    %272 = arith.addf %270, %271 : vector<2x512xf32>
    %273 = vector.extract_strided_slice %272 {offsets = [0, 0], sizes = [2, 384], strides = [1, 1]} : vector<2x512xf32> to vector<2x384xf32>
    %274 = arith.negf %273 : vector<2x384xf32>
    %275 = math.exp %274 : vector<2x384xf32>
    %cst_54 = arith.constant 1.000000e+00 : f32
    %276 = vector.broadcast %cst_54 : f32 to vector<2x384xf32>
    %277 = arith.addf %276, %275 : vector<2x384xf32>
    %278 = arith.divf %276, %277 : vector<2x384xf32>
    %279 = vector.extract_strided_slice %272 {offsets = [0, 384], sizes = [2, 128], strides = [1, 1]} : vector<2x512xf32> to vector<2x128xf32>
    %280 = math.tanh %279 : vector<2x128xf32>
    %281 = vector.extract_strided_slice %278 {offsets = [0, 128], sizes = [2, 128], strides = [1, 1]} : vector<2x384xf32> to vector<2x128xf32>
    %282 = arith.mulf %281, %266 : vector<2x128xf32>
    %283 = vector.extract_strided_slice %278 {offsets = [0, 0], sizes = [2, 128], strides = [1, 1]} : vector<2x384xf32> to vector<2x128xf32>
    %284 = arith.mulf %283, %280 : vector<2x128xf32>
    %285 = arith.addf %282, %284 : vector<2x128xf32>
    %286 = vector.extract_strided_slice %278 {offsets = [0, 256], sizes = [2, 128], strides = [1, 1]} : vector<2x384xf32> to vector<2x128xf32>
    %287 = math.tanh %285 : vector<2x128xf32>
    %288 = arith.mulf %286, %287 : vector<2x128xf32>
    %289 = vector.extract_strided_slice %170 {offsets = [2, 0], sizes = [2, 512], strides = [1, 1]} : vector<16x512xf32> to vector<2x512xf32>
    %cst_55 = arith.constant dense<0.000000e+00> : vector<2x512xf32>
    %290 = tpu.matmul %288, %172, %cst_55 {dimension_numbers = #tpu.dot_dimension_numbers<[1], [0], [0], [1], [0, 0, 1, 1], [], []>} : vector<2x128xf32>, vector<128x512xf32>, vector<2x512xf32> -> vector<2x512xf32>
    %291 = arith.addf %289, %290 : vector<2x512xf32>
    %292 = vector.extract_strided_slice %291 {offsets = [0, 0], sizes = [2, 384], strides = [1, 1]} : vector<2x512xf32> to vector<2x384xf32>
    %293 = arith.negf %292 : vector<2x384xf32>
    %294 = math.exp %293 : vector<2x384xf32>
    %cst_56 = arith.constant 1.000000e+00 : f32
    %295 = vector.broadcast %cst_56 : f32 to vector<2x384xf32>
    %296 = arith.addf %295, %294 : vector<2x384xf32>
    %297 = arith.divf %295, %296 : vector<2x384xf32>
    %298 = vector.extract_strided_slice %291 {offsets = [0, 384], sizes = [2, 128], strides = [1, 1]} : vector<2x512xf32> to vector<2x128xf32>
    %299 = math.tanh %298 : vector<2x128xf32>
    %300 = vector.extract_strided_slice %297 {offsets = [0, 128], sizes = [2, 128], strides = [1, 1]} : vector<2x384xf32> to vector<2x128xf32>
    %301 = arith.mulf %300, %285 : vector<2x128xf32>
    %302 = vector.extract_strided_slice %297 {offsets = [0, 0], sizes = [2, 128], strides = [1, 1]} : vector<2x384xf32> to vector<2x128xf32>
    %303 = arith.mulf %302, %299 : vector<2x128xf32>
    %304 = arith.addf %301, %303 : vector<2x128xf32>
    %305 = vector.extract_strided_slice %297 {offsets = [0, 256], sizes = [2, 128], strides = [1, 1]} : vector<2x384xf32> to vector<2x128xf32>
    %306 = math.tanh %304 : vector<2x128xf32>
    %307 = arith.mulf %305, %306 : vector<2x128xf32>
    %308 = vector.extract_strided_slice %170 {offsets = [0, 0], sizes = [2, 512], strides = [1, 1]} : vector<16x512xf32> to vector<2x512xf32>
    %cst_57 = arith.constant dense<0.000000e+00> : vector<2x512xf32>
    %309 = tpu.matmul %307, %172, %cst_57 {dimension_numbers = #tpu.dot_dimension_numbers<[1], [0], [0], [1], [0, 0, 1, 1], [], []>} : vector<2x128xf32>, vector<128x512xf32>, vector<2x512xf32> -> vector<2x512xf32>
    %310 = arith.addf %308, %309 : vector<2x512xf32>
    %311 = vector.extract_strided_slice %310 {offsets = [0, 0], sizes = [2, 384], strides = [1, 1]} : vector<2x512xf32> to vector<2x384xf32>
    %312 = arith.negf %311 : vector<2x384xf32>
    %313 = math.exp %312 : vector<2x384xf32>
    %cst_58 = arith.constant 1.000000e+00 : f32
    %314 = vector.broadcast %cst_58 : f32 to vector<2x384xf32>
    %315 = arith.addf %314, %313 : vector<2x384xf32>
    %316 = arith.divf %314, %315 : vector<2x384xf32>
    %317 = vector.extract_strided_slice %310 {offsets = [0, 384], sizes = [2, 128], strides = [1, 1]} : vector<2x512xf32> to vector<2x128xf32>
    %318 = math.tanh %317 : vector<2x128xf32>
    %319 = vector.extract_strided_slice %316 {offsets = [0, 128], sizes = [2, 128], strides = [1, 1]} : vector<2x384xf32> to vector<2x128xf32>
    %320 = arith.mulf %319, %304 : vector<2x128xf32>
    %321 = vector.extract_strided_slice %316 {offsets = [0, 0], sizes = [2, 128], strides = [1, 1]} : vector<2x384xf32> to vector<2x128xf32>
    %322 = arith.mulf %321, %318 : vector<2x128xf32>
    %323 = arith.addf %320, %322 : vector<2x128xf32>
    %324 = vector.extract_strided_slice %316 {offsets = [0, 256], sizes = [2, 128], strides = [1, 1]} : vector<2x384xf32> to vector<2x128xf32>
    %325 = math.tanh %323 : vector<2x128xf32>
    %326 = arith.mulf %324, %325 : vector<2x128xf32>
    %327 = tpu.concatenate %30, %49, %68, %87, %106, %125, %144, %163 in 0 : vector<2x128xf32>, vector<2x128xf32>, vector<2x128xf32>, vector<2x128xf32>, vector<2x128xf32>, vector<2x128xf32>, vector<2x128xf32>, vector<2x128xf32> -> vector<16x128xf32>
    %328 = tpu.concatenate %326, %307, %288, %269, %250, %231, %212, %193 in 0 : vector<2x128xf32>, vector<2x128xf32>, vector<2x128xf32>, vector<2x128xf32>, vector<2x128xf32>, vector<2x128xf32>, vector<2x128xf32>, vector<2x128xf32> -> vector<16x128xf32>
    %329 = tpu.concatenate %327, %328 in 1 : vector<16x128xf32>, vector<16x128xf32> -> vector<16x256xf32>
    %c0_59 = arith.constant 0 : index
    %c0_60 = arith.constant 0 : index
    %c0_61 = arith.constant 0 : index
    %c0_62 = arith.constant 0 : index
    %330 = vector.load %arg2[%c0_59, %c0_60, %c0_61, %c0_62] : memref<2x2x256x512xf32, #tpu.memory_space<vmem>>, vector<1x1x256x512xf32>
    %331 = vector.shape_cast %330 : vector<1x1x256x512xf32> to vector<256x512xf32>
    %cst_63 = arith.constant dense<0.000000e+00> : vector<16x512xf32>
    %332 = tpu.matmul %329, %331, %cst_63 {dimension_numbers = #tpu.dot_dimension_numbers<[1], [0], [0], [1], [0, 0, 1, 1], [], []>} : vector<16x256xf32>, vector<256x512xf32>, vector<16x512xf32> -> vector<16x512xf32>
    %c1_64 = arith.constant 1 : index
    %c0_65 = arith.constant 0 : index
    %c0_66 = arith.constant 0 : index
    %c0_67 = arith.constant 0 : index
    %333 = vector.load %arg4[%c1_64, %c0_65, %c0_66, %c0_67] : memref<3x2x1x512xf32, #tpu.memory_space<vmem>>, vector<1x1x1x512xf32>
    %334 = vector.shape_cast %333 : vector<1x1x1x512xf32> to vector<1x512xf32>
    %335 = vector.broadcast %334 : vector<1x512xf32> to vector<16x512xf32>
    %336 = arith.addf %332, %335 : vector<16x512xf32>
    %c1_68 = arith.constant 1 : index
    %c0_69 = arith.constant 0 : index
    %c0_70 = arith.constant 0 : index
    %c0_71 = arith.constant 0 : index
    %337 = vector.load %arg3[%c1_68, %c0_69, %c0_70, %c0_71] : memref<3x2x128x512xf32, #tpu.memory_space<vmem>>, vector<1x1x128x512xf32>
    %338 = vector.shape_cast %337 : vector<1x1x128x512xf32> to vector<128x512xf32>
    %cst_72 = arith.constant 0.000000e+00 : f32
    %339 = vector.broadcast %cst_72 : f32 to vector<2x128xf32>
    %cst_73 = arith.constant 0.000000e+00 : f32
    %340 = vector.broadcast %cst_73 : f32 to vector<2x128xf32>
    %341 = vector.extract_strided_slice %336 {offsets = [0, 0], sizes = [2, 512], strides = [1, 1]} : vector<16x512xf32> to vector<2x512xf32>
    %cst_74 = arith.constant dense<0.000000e+00> : vector<2x512xf32>
    %342 = tpu.matmul %339, %338, %cst_74 {dimension_numbers = #tpu.dot_dimension_numbers<[1], [0], [0], [1], [0, 0, 1, 1], [], []>} : vector<2x128xf32>, vector<128x512xf32>, vector<2x512xf32> -> vector<2x512xf32>
    %343 = arith.addf %341, %342 : vector<2x512xf32>
    %344 = vector.extract_strided_slice %343 {offsets = [0, 0], sizes = [2, 384], strides = [1, 1]} : vector<2x512xf32> to vector<2x384xf32>
    %345 = arith.negf %344 : vector<2x384xf32>
    %346 = math.exp %345 : vector<2x384xf32>
    %cst_75 = arith.constant 1.000000e+00 : f32
    %347 = vector.broadcast %cst_75 : f32 to vector<2x384xf32>
    %348 = arith.addf %347, %346 : vector<2x384xf32>
    %349 = arith.divf %347, %348 : vector<2x384xf32>
    %350 = vector.extract_strided_slice %343 {offsets = [0, 384], sizes = [2, 128], strides = [1, 1]} : vector<2x512xf32> to vector<2x128xf32>
    %351 = math.tanh %350 : vector<2x128xf32>
    %352 = vector.extract_strided_slice %349 {offsets = [0, 128], sizes = [2, 128], strides = [1, 1]} : vector<2x384xf32> to vector<2x128xf32>
    %353 = arith.mulf %352, %340 : vector<2x128xf32>
    %354 = vector.extract_strided_slice %349 {offsets = [0, 0], sizes = [2, 128], strides = [1, 1]} : vector<2x384xf32> to vector<2x128xf32>
    %355 = arith.mulf %354, %351 : vector<2x128xf32>
    %356 = arith.addf %353, %355 : vector<2x128xf32>
    %357 = vector.extract_strided_slice %349 {offsets = [0, 256], sizes = [2, 128], strides = [1, 1]} : vector<2x384xf32> to vector<2x128xf32>
    %358 = math.tanh %356 : vector<2x128xf32>
    %359 = arith.mulf %357, %358 : vector<2x128xf32>
    %360 = vector.extract_strided_slice %336 {offsets = [2, 0], sizes = [2, 512], strides = [1, 1]} : vector<16x512xf32> to vector<2x512xf32>
    %cst_76 = arith.constant dense<0.000000e+00> : vector<2x512xf32>
    %361 = tpu.matmul %359, %338, %cst_76 {dimension_numbers = #tpu.dot_dimension_numbers<[1], [0], [0], [1], [0, 0, 1, 1], [], []>} : vector<2x128xf32>, vector<128x512xf32>, vector<2x512xf32> -> vector<2x512xf32>
    %362 = arith.addf %360, %361 : vector<2x512xf32>
    %363 = vector.extract_strided_slice %362 {offsets = [0, 0], sizes = [2, 384], strides = [1, 1]} : vector<2x512xf32> to vector<2x384xf32>
    %364 = arith.negf %363 : vector<2x384xf32>
    %365 = math.exp %364 : vector<2x384xf32>
    %cst_77 = arith.constant 1.000000e+00 : f32
    %366 = vector.broadcast %cst_77 : f32 to vector<2x384xf32>
    %367 = arith.addf %366, %365 : vector<2x384xf32>
    %368 = arith.divf %366, %367 : vector<2x384xf32>
    %369 = vector.extract_strided_slice %362 {offsets = [0, 384], sizes = [2, 128], strides = [1, 1]} : vector<2x512xf32> to vector<2x128xf32>
    %370 = math.tanh %369 : vector<2x128xf32>
    %371 = vector.extract_strided_slice %368 {offsets = [0, 128], sizes = [2, 128], strides = [1, 1]} : vector<2x384xf32> to vector<2x128xf32>
    %372 = arith.mulf %371, %356 : vector<2x128xf32>
    %373 = vector.extract_strided_slice %368 {offsets = [0, 0], sizes = [2, 128], strides = [1, 1]} : vector<2x384xf32> to vector<2x128xf32>
    %374 = arith.mulf %373, %370 : vector<2x128xf32>
    %375 = arith.addf %372, %374 : vector<2x128xf32>
    %376 = vector.extract_strided_slice %368 {offsets = [0, 256], sizes = [2, 128], strides = [1, 1]} : vector<2x384xf32> to vector<2x128xf32>
    %377 = math.tanh %375 : vector<2x128xf32>
    %378 = arith.mulf %376, %377 : vector<2x128xf32>
    %379 = vector.extract_strided_slice %336 {offsets = [4, 0], sizes = [2, 512], strides = [1, 1]} : vector<16x512xf32> to vector<2x512xf32>
    %cst_78 = arith.constant dense<0.000000e+00> : vector<2x512xf32>
    %380 = tpu.matmul %378, %338, %cst_78 {dimension_numbers = #tpu.dot_dimension_numbers<[1], [0], [0], [1], [0, 0, 1, 1], [], []>} : vector<2x128xf32>, vector<128x512xf32>, vector<2x512xf32> -> vector<2x512xf32>
    %381 = arith.addf %379, %380 : vector<2x512xf32>
    %382 = vector.extract_strided_slice %381 {offsets = [0, 0], sizes = [2, 384], strides = [1, 1]} : vector<2x512xf32> to vector<2x384xf32>
    %383 = arith.negf %382 : vector<2x384xf32>
    %384 = math.exp %383 : vector<2x384xf32>
    %cst_79 = arith.constant 1.000000e+00 : f32
    %385 = vector.broadcast %cst_79 : f32 to vector<2x384xf32>
    %386 = arith.addf %385, %384 : vector<2x384xf32>
    %387 = arith.divf %385, %386 : vector<2x384xf32>
    %388 = vector.extract_strided_slice %381 {offsets = [0, 384], sizes = [2, 128], strides = [1, 1]} : vector<2x512xf32> to vector<2x128xf32>
    %389 = math.tanh %388 : vector<2x128xf32>
    %390 = vector.extract_strided_slice %387 {offsets = [0, 128], sizes = [2, 128], strides = [1, 1]} : vector<2x384xf32> to vector<2x128xf32>
    %391 = arith.mulf %390, %375 : vector<2x128xf32>
    %392 = vector.extract_strided_slice %387 {offsets = [0, 0], sizes = [2, 128], strides = [1, 1]} : vector<2x384xf32> to vector<2x128xf32>
    %393 = arith.mulf %392, %389 : vector<2x128xf32>
    %394 = arith.addf %391, %393 : vector<2x128xf32>
    %395 = vector.extract_strided_slice %387 {offsets = [0, 256], sizes = [2, 128], strides = [1, 1]} : vector<2x384xf32> to vector<2x128xf32>
    %396 = math.tanh %394 : vector<2x128xf32>
    %397 = arith.mulf %395, %396 : vector<2x128xf32>
    %398 = vector.extract_strided_slice %336 {offsets = [6, 0], sizes = [2, 512], strides = [1, 1]} : vector<16x512xf32> to vector<2x512xf32>
    %cst_80 = arith.constant dense<0.000000e+00> : vector<2x512xf32>
    %399 = tpu.matmul %397, %338, %cst_80 {dimension_numbers = #tpu.dot_dimension_numbers<[1], [0], [0], [1], [0, 0, 1, 1], [], []>} : vector<2x128xf32>, vector<128x512xf32>, vector<2x512xf32> -> vector<2x512xf32>
    %400 = arith.addf %398, %399 : vector<2x512xf32>
    %401 = vector.extract_strided_slice %400 {offsets = [0, 0], sizes = [2, 384], strides = [1, 1]} : vector<2x512xf32> to vector<2x384xf32>
    %402 = arith.negf %401 : vector<2x384xf32>
    %403 = math.exp %402 : vector<2x384xf32>
    %cst_81 = arith.constant 1.000000e+00 : f32
    %404 = vector.broadcast %cst_81 : f32 to vector<2x384xf32>
    %405 = arith.addf %404, %403 : vector<2x384xf32>
    %406 = arith.divf %404, %405 : vector<2x384xf32>
    %407 = vector.extract_strided_slice %400 {offsets = [0, 384], sizes = [2, 128], strides = [1, 1]} : vector<2x512xf32> to vector<2x128xf32>
    %408 = math.tanh %407 : vector<2x128xf32>
    %409 = vector.extract_strided_slice %406 {offsets = [0, 128], sizes = [2, 128], strides = [1, 1]} : vector<2x384xf32> to vector<2x128xf32>
    %410 = arith.mulf %409, %394 : vector<2x128xf32>
    %411 = vector.extract_strided_slice %406 {offsets = [0, 0], sizes = [2, 128], strides = [1, 1]} : vector<2x384xf32> to vector<2x128xf32>
    %412 = arith.mulf %411, %408 : vector<2x128xf32>
    %413 = arith.addf %410, %412 : vector<2x128xf32>
    %414 = vector.extract_strided_slice %406 {offsets = [0, 256], sizes = [2, 128], strides = [1, 1]} : vector<2x384xf32> to vector<2x128xf32>
    %415 = math.tanh %413 : vector<2x128xf32>
    %416 = arith.mulf %414, %415 : vector<2x128xf32>
    %417 = vector.extract_strided_slice %336 {offsets = [8, 0], sizes = [2, 512], strides = [1, 1]} : vector<16x512xf32> to vector<2x512xf32>
    %cst_82 = arith.constant dense<0.000000e+00> : vector<2x512xf32>
    %418 = tpu.matmul %416, %338, %cst_82 {dimension_numbers = #tpu.dot_dimension_numbers<[1], [0], [0], [1], [0, 0, 1, 1], [], []>} : vector<2x128xf32>, vector<128x512xf32>, vector<2x512xf32> -> vector<2x512xf32>
    %419 = arith.addf %417, %418 : vector<2x512xf32>
    %420 = vector.extract_strided_slice %419 {offsets = [0, 0], sizes = [2, 384], strides = [1, 1]} : vector<2x512xf32> to vector<2x384xf32>
    %421 = arith.negf %420 : vector<2x384xf32>
    %422 = math.exp %421 : vector<2x384xf32>
    %cst_83 = arith.constant 1.000000e+00 : f32
    %423 = vector.broadcast %cst_83 : f32 to vector<2x384xf32>
    %424 = arith.addf %423, %422 : vector<2x384xf32>
    %425 = arith.divf %423, %424 : vector<2x384xf32>
    %426 = vector.extract_strided_slice %419 {offsets = [0, 384], sizes = [2, 128], strides = [1, 1]} : vector<2x512xf32> to vector<2x128xf32>
    %427 = math.tanh %426 : vector<2x128xf32>
    %428 = vector.extract_strided_slice %425 {offsets = [0, 128], sizes = [2, 128], strides = [1, 1]} : vector<2x384xf32> to vector<2x128xf32>
    %429 = arith.mulf %428, %413 : vector<2x128xf32>
    %430 = vector.extract_strided_slice %425 {offsets = [0, 0], sizes = [2, 128], strides = [1, 1]} : vector<2x384xf32> to vector<2x128xf32>
    %431 = arith.mulf %430, %427 : vector<2x128xf32>
    %432 = arith.addf %429, %431 : vector<2x128xf32>
    %433 = vector.extract_strided_slice %425 {offsets = [0, 256], sizes = [2, 128], strides = [1, 1]} : vector<2x384xf32> to vector<2x128xf32>
    %434 = math.tanh %432 : vector<2x128xf32>
    %435 = arith.mulf %433, %434 : vector<2x128xf32>
    %436 = vector.extract_strided_slice %336 {offsets = [10, 0], sizes = [2, 512], strides = [1, 1]} : vector<16x512xf32> to vector<2x512xf32>
    %cst_84 = arith.constant dense<0.000000e+00> : vector<2x512xf32>
    %437 = tpu.matmul %435, %338, %cst_84 {dimension_numbers = #tpu.dot_dimension_numbers<[1], [0], [0], [1], [0, 0, 1, 1], [], []>} : vector<2x128xf32>, vector<128x512xf32>, vector<2x512xf32> -> vector<2x512xf32>
    %438 = arith.addf %436, %437 : vector<2x512xf32>
    %439 = vector.extract_strided_slice %438 {offsets = [0, 0], sizes = [2, 384], strides = [1, 1]} : vector<2x512xf32> to vector<2x384xf32>
    %440 = arith.negf %439 : vector<2x384xf32>
    %441 = math.exp %440 : vector<2x384xf32>
    %cst_85 = arith.constant 1.000000e+00 : f32
    %442 = vector.broadcast %cst_85 : f32 to vector<2x384xf32>
    %443 = arith.addf %442, %441 : vector<2x384xf32>
    %444 = arith.divf %442, %443 : vector<2x384xf32>
    %445 = vector.extract_strided_slice %438 {offsets = [0, 384], sizes = [2, 128], strides = [1, 1]} : vector<2x512xf32> to vector<2x128xf32>
    %446 = math.tanh %445 : vector<2x128xf32>
    %447 = vector.extract_strided_slice %444 {offsets = [0, 128], sizes = [2, 128], strides = [1, 1]} : vector<2x384xf32> to vector<2x128xf32>
    %448 = arith.mulf %447, %432 : vector<2x128xf32>
    %449 = vector.extract_strided_slice %444 {offsets = [0, 0], sizes = [2, 128], strides = [1, 1]} : vector<2x384xf32> to vector<2x128xf32>
    %450 = arith.mulf %449, %446 : vector<2x128xf32>
    %451 = arith.addf %448, %450 : vector<2x128xf32>
    %452 = vector.extract_strided_slice %444 {offsets = [0, 256], sizes = [2, 128], strides = [1, 1]} : vector<2x384xf32> to vector<2x128xf32>
    %453 = math.tanh %451 : vector<2x128xf32>
    %454 = arith.mulf %452, %453 : vector<2x128xf32>
    %455 = vector.extract_strided_slice %336 {offsets = [12, 0], sizes = [2, 512], strides = [1, 1]} : vector<16x512xf32> to vector<2x512xf32>
    %cst_86 = arith.constant dense<0.000000e+00> : vector<2x512xf32>
    %456 = tpu.matmul %454, %338, %cst_86 {dimension_numbers = #tpu.dot_dimension_numbers<[1], [0], [0], [1], [0, 0, 1, 1], [], []>} : vector<2x128xf32>, vector<128x512xf32>, vector<2x512xf32> -> vector<2x512xf32>
    %457 = arith.addf %455, %456 : vector<2x512xf32>
    %458 = vector.extract_strided_slice %457 {offsets = [0, 0], sizes = [2, 384], strides = [1, 1]} : vector<2x512xf32> to vector<2x384xf32>
    %459 = arith.negf %458 : vector<2x384xf32>
    %460 = math.exp %459 : vector<2x384xf32>
    %cst_87 = arith.constant 1.000000e+00 : f32
    %461 = vector.broadcast %cst_87 : f32 to vector<2x384xf32>
    %462 = arith.addf %461, %460 : vector<2x384xf32>
    %463 = arith.divf %461, %462 : vector<2x384xf32>
    %464 = vector.extract_strided_slice %457 {offsets = [0, 384], sizes = [2, 128], strides = [1, 1]} : vector<2x512xf32> to vector<2x128xf32>
    %465 = math.tanh %464 : vector<2x128xf32>
    %466 = vector.extract_strided_slice %463 {offsets = [0, 128], sizes = [2, 128], strides = [1, 1]} : vector<2x384xf32> to vector<2x128xf32>
    %467 = arith.mulf %466, %451 : vector<2x128xf32>
    %468 = vector.extract_strided_slice %463 {offsets = [0, 0], sizes = [2, 128], strides = [1, 1]} : vector<2x384xf32> to vector<2x128xf32>
    %469 = arith.mulf %468, %465 : vector<2x128xf32>
    %470 = arith.addf %467, %469 : vector<2x128xf32>
    %471 = vector.extract_strided_slice %463 {offsets = [0, 256], sizes = [2, 128], strides = [1, 1]} : vector<2x384xf32> to vector<2x128xf32>
    %472 = math.tanh %470 : vector<2x128xf32>
    %473 = arith.mulf %471, %472 : vector<2x128xf32>
    %474 = vector.extract_strided_slice %336 {offsets = [14, 0], sizes = [2, 512], strides = [1, 1]} : vector<16x512xf32> to vector<2x512xf32>
    %cst_88 = arith.constant dense<0.000000e+00> : vector<2x512xf32>
    %475 = tpu.matmul %473, %338, %cst_88 {dimension_numbers = #tpu.dot_dimension_numbers<[1], [0], [0], [1], [0, 0, 1, 1], [], []>} : vector<2x128xf32>, vector<128x512xf32>, vector<2x512xf32> -> vector<2x512xf32>
    %476 = arith.addf %474, %475 : vector<2x512xf32>
    %477 = vector.extract_strided_slice %476 {offsets = [0, 0], sizes = [2, 384], strides = [1, 1]} : vector<2x512xf32> to vector<2x384xf32>
    %478 = arith.negf %477 : vector<2x384xf32>
    %479 = math.exp %478 : vector<2x384xf32>
    %cst_89 = arith.constant 1.000000e+00 : f32
    %480 = vector.broadcast %cst_89 : f32 to vector<2x384xf32>
    %481 = arith.addf %480, %479 : vector<2x384xf32>
    %482 = arith.divf %480, %481 : vector<2x384xf32>
    %483 = vector.extract_strided_slice %476 {offsets = [0, 384], sizes = [2, 128], strides = [1, 1]} : vector<2x512xf32> to vector<2x128xf32>
    %484 = math.tanh %483 : vector<2x128xf32>
    %485 = vector.extract_strided_slice %482 {offsets = [0, 128], sizes = [2, 128], strides = [1, 1]} : vector<2x384xf32> to vector<2x128xf32>
    %486 = arith.mulf %485, %470 : vector<2x128xf32>
    %487 = vector.extract_strided_slice %482 {offsets = [0, 0], sizes = [2, 128], strides = [1, 1]} : vector<2x384xf32> to vector<2x128xf32>
    %488 = arith.mulf %487, %484 : vector<2x128xf32>
    %489 = arith.addf %486, %488 : vector<2x128xf32>
    %490 = vector.extract_strided_slice %482 {offsets = [0, 256], sizes = [2, 128], strides = [1, 1]} : vector<2x384xf32> to vector<2x128xf32>
    %491 = math.tanh %489 : vector<2x128xf32>
    %492 = arith.mulf %490, %491 : vector<2x128xf32>
    %c0_90 = arith.constant 0 : index
    %c1_91 = arith.constant 1 : index
    %c0_92 = arith.constant 0 : index
    %c0_93 = arith.constant 0 : index
    %493 = vector.load %arg2[%c0_90, %c1_91, %c0_92, %c0_93] : memref<2x2x256x512xf32, #tpu.memory_space<vmem>>, vector<1x1x256x512xf32>
    %494 = vector.shape_cast %493 : vector<1x1x256x512xf32> to vector<256x512xf32>
    %cst_94 = arith.constant dense<0.000000e+00> : vector<16x512xf32>
    %495 = tpu.matmul %329, %494, %cst_94 {dimension_numbers = #tpu.dot_dimension_numbers<[1], [0], [0], [1], [0, 0, 1, 1], [], []>} : vector<16x256xf32>, vector<256x512xf32>, vector<16x512xf32> -> vector<16x512xf32>
    %c1_95 = arith.constant 1 : index
    %c1_96 = arith.constant 1 : index
    %c0_97 = arith.constant 0 : index
    %c0_98 = arith.constant 0 : index
    %496 = vector.load %arg4[%c1_95, %c1_96, %c0_97, %c0_98] : memref<3x2x1x512xf32, #tpu.memory_space<vmem>>, vector<1x1x1x512xf32>
    %497 = vector.shape_cast %496 : vector<1x1x1x512xf32> to vector<1x512xf32>
    %498 = vector.broadcast %497 : vector<1x512xf32> to vector<16x512xf32>
    %499 = arith.addf %495, %498 : vector<16x512xf32>
    %c1_99 = arith.constant 1 : index
    %c1_100 = arith.constant 1 : index
    %c0_101 = arith.constant 0 : index
    %c0_102 = arith.constant 0 : index
    %500 = vector.load %arg3[%c1_99, %c1_100, %c0_101, %c0_102] : memref<3x2x128x512xf32, #tpu.memory_space<vmem>>, vector<1x1x128x512xf32>
    %501 = vector.shape_cast %500 : vector<1x1x128x512xf32> to vector<128x512xf32>
    %cst_103 = arith.constant 0.000000e+00 : f32
    %502 = vector.broadcast %cst_103 : f32 to vector<2x128xf32>
    %cst_104 = arith.constant 0.000000e+00 : f32
    %503 = vector.broadcast %cst_104 : f32 to vector<2x128xf32>
    %504 = vector.extract_strided_slice %499 {offsets = [14, 0], sizes = [2, 512], strides = [1, 1]} : vector<16x512xf32> to vector<2x512xf32>
    %cst_105 = arith.constant dense<0.000000e+00> : vector<2x512xf32>
    %505 = tpu.matmul %502, %501, %cst_105 {dimension_numbers = #tpu.dot_dimension_numbers<[1], [0], [0], [1], [0, 0, 1, 1], [], []>} : vector<2x128xf32>, vector<128x512xf32>, vector<2x512xf32> -> vector<2x512xf32>
    %506 = arith.addf %504, %505 : vector<2x512xf32>
    %507 = vector.extract_strided_slice %506 {offsets = [0, 0], sizes = [2, 384], strides = [1, 1]} : vector<2x512xf32> to vector<2x384xf32>
    %508 = arith.negf %507 : vector<2x384xf32>
    %509 = math.exp %508 : vector<2x384xf32>
    %cst_106 = arith.constant 1.000000e+00 : f32
    %510 = vector.broadcast %cst_106 : f32 to vector<2x384xf32>
    %511 = arith.addf %510, %509 : vector<2x384xf32>
    %512 = arith.divf %510, %511 : vector<2x384xf32>
    %513 = vector.extract_strided_slice %506 {offsets = [0, 384], sizes = [2, 128], strides = [1, 1]} : vector<2x512xf32> to vector<2x128xf32>
    %514 = math.tanh %513 : vector<2x128xf32>
    %515 = vector.extract_strided_slice %512 {offsets = [0, 128], sizes = [2, 128], strides = [1, 1]} : vector<2x384xf32> to vector<2x128xf32>
    %516 = arith.mulf %515, %503 : vector<2x128xf32>
    %517 = vector.extract_strided_slice %512 {offsets = [0, 0], sizes = [2, 128], strides = [1, 1]} : vector<2x384xf32> to vector<2x128xf32>
    %518 = arith.mulf %517, %514 : vector<2x128xf32>
    %519 = arith.addf %516, %518 : vector<2x128xf32>
    %520 = vector.extract_strided_slice %512 {offsets = [0, 256], sizes = [2, 128], strides = [1, 1]} : vector<2x384xf32> to vector<2x128xf32>
    %521 = math.tanh %519 : vector<2x128xf32>
    %522 = arith.mulf %520, %521 : vector<2x128xf32>
    %523 = vector.extract_strided_slice %499 {offsets = [12, 0], sizes = [2, 512], strides = [1, 1]} : vector<16x512xf32> to vector<2x512xf32>
    %cst_107 = arith.constant dense<0.000000e+00> : vector<2x512xf32>
    %524 = tpu.matmul %522, %501, %cst_107 {dimension_numbers = #tpu.dot_dimension_numbers<[1], [0], [0], [1], [0, 0, 1, 1], [], []>} : vector<2x128xf32>, vector<128x512xf32>, vector<2x512xf32> -> vector<2x512xf32>
    %525 = arith.addf %523, %524 : vector<2x512xf32>
    %526 = vector.extract_strided_slice %525 {offsets = [0, 0], sizes = [2, 384], strides = [1, 1]} : vector<2x512xf32> to vector<2x384xf32>
    %527 = arith.negf %526 : vector<2x384xf32>
    %528 = math.exp %527 : vector<2x384xf32>
    %cst_108 = arith.constant 1.000000e+00 : f32
    %529 = vector.broadcast %cst_108 : f32 to vector<2x384xf32>
    %530 = arith.addf %529, %528 : vector<2x384xf32>
    %531 = arith.divf %529, %530 : vector<2x384xf32>
    %532 = vector.extract_strided_slice %525 {offsets = [0, 384], sizes = [2, 128], strides = [1, 1]} : vector<2x512xf32> to vector<2x128xf32>
    %533 = math.tanh %532 : vector<2x128xf32>
    %534 = vector.extract_strided_slice %531 {offsets = [0, 128], sizes = [2, 128], strides = [1, 1]} : vector<2x384xf32> to vector<2x128xf32>
    %535 = arith.mulf %534, %519 : vector<2x128xf32>
    %536 = vector.extract_strided_slice %531 {offsets = [0, 0], sizes = [2, 128], strides = [1, 1]} : vector<2x384xf32> to vector<2x128xf32>
    %537 = arith.mulf %536, %533 : vector<2x128xf32>
    %538 = arith.addf %535, %537 : vector<2x128xf32>
    %539 = vector.extract_strided_slice %531 {offsets = [0, 256], sizes = [2, 128], strides = [1, 1]} : vector<2x384xf32> to vector<2x128xf32>
    %540 = math.tanh %538 : vector<2x128xf32>
    %541 = arith.mulf %539, %540 : vector<2x128xf32>
    %542 = vector.extract_strided_slice %499 {offsets = [10, 0], sizes = [2, 512], strides = [1, 1]} : vector<16x512xf32> to vector<2x512xf32>
    %cst_109 = arith.constant dense<0.000000e+00> : vector<2x512xf32>
    %543 = tpu.matmul %541, %501, %cst_109 {dimension_numbers = #tpu.dot_dimension_numbers<[1], [0], [0], [1], [0, 0, 1, 1], [], []>} : vector<2x128xf32>, vector<128x512xf32>, vector<2x512xf32> -> vector<2x512xf32>
    %544 = arith.addf %542, %543 : vector<2x512xf32>
    %545 = vector.extract_strided_slice %544 {offsets = [0, 0], sizes = [2, 384], strides = [1, 1]} : vector<2x512xf32> to vector<2x384xf32>
    %546 = arith.negf %545 : vector<2x384xf32>
    %547 = math.exp %546 : vector<2x384xf32>
    %cst_110 = arith.constant 1.000000e+00 : f32
    %548 = vector.broadcast %cst_110 : f32 to vector<2x384xf32>
    %549 = arith.addf %548, %547 : vector<2x384xf32>
    %550 = arith.divf %548, %549 : vector<2x384xf32>
    %551 = vector.extract_strided_slice %544 {offsets = [0, 384], sizes = [2, 128], strides = [1, 1]} : vector<2x512xf32> to vector<2x128xf32>
    %552 = math.tanh %551 : vector<2x128xf32>
    %553 = vector.extract_strided_slice %550 {offsets = [0, 128], sizes = [2, 128], strides = [1, 1]} : vector<2x384xf32> to vector<2x128xf32>
    %554 = arith.mulf %553, %538 : vector<2x128xf32>
    %555 = vector.extract_strided_slice %550 {offsets = [0, 0], sizes = [2, 128], strides = [1, 1]} : vector<2x384xf32> to vector<2x128xf32>
    %556 = arith.mulf %555, %552 : vector<2x128xf32>
    %557 = arith.addf %554, %556 : vector<2x128xf32>
    %558 = vector.extract_strided_slice %550 {offsets = [0, 256], sizes = [2, 128], strides = [1, 1]} : vector<2x384xf32> to vector<2x128xf32>
    %559 = math.tanh %557 : vector<2x128xf32>
    %560 = arith.mulf %558, %559 : vector<2x128xf32>
    %561 = vector.extract_strided_slice %499 {offsets = [8, 0], sizes = [2, 512], strides = [1, 1]} : vector<16x512xf32> to vector<2x512xf32>
    %cst_111 = arith.constant dense<0.000000e+00> : vector<2x512xf32>
    %562 = tpu.matmul %560, %501, %cst_111 {dimension_numbers = #tpu.dot_dimension_numbers<[1], [0], [0], [1], [0, 0, 1, 1], [], []>} : vector<2x128xf32>, vector<128x512xf32>, vector<2x512xf32> -> vector<2x512xf32>
    %563 = arith.addf %561, %562 : vector<2x512xf32>
    %564 = vector.extract_strided_slice %563 {offsets = [0, 0], sizes = [2, 384], strides = [1, 1]} : vector<2x512xf32> to vector<2x384xf32>
    %565 = arith.negf %564 : vector<2x384xf32>
    %566 = math.exp %565 : vector<2x384xf32>
    %cst_112 = arith.constant 1.000000e+00 : f32
    %567 = vector.broadcast %cst_112 : f32 to vector<2x384xf32>
    %568 = arith.addf %567, %566 : vector<2x384xf32>
    %569 = arith.divf %567, %568 : vector<2x384xf32>
    %570 = vector.extract_strided_slice %563 {offsets = [0, 384], sizes = [2, 128], strides = [1, 1]} : vector<2x512xf32> to vector<2x128xf32>
    %571 = math.tanh %570 : vector<2x128xf32>
    %572 = vector.extract_strided_slice %569 {offsets = [0, 128], sizes = [2, 128], strides = [1, 1]} : vector<2x384xf32> to vector<2x128xf32>
    %573 = arith.mulf %572, %557 : vector<2x128xf32>
    %574 = vector.extract_strided_slice %569 {offsets = [0, 0], sizes = [2, 128], strides = [1, 1]} : vector<2x384xf32> to vector<2x128xf32>
    %575 = arith.mulf %574, %571 : vector<2x128xf32>
    %576 = arith.addf %573, %575 : vector<2x128xf32>
    %577 = vector.extract_strided_slice %569 {offsets = [0, 256], sizes = [2, 128], strides = [1, 1]} : vector<2x384xf32> to vector<2x128xf32>
    %578 = math.tanh %576 : vector<2x128xf32>
    %579 = arith.mulf %577, %578 : vector<2x128xf32>
    %580 = vector.extract_strided_slice %499 {offsets = [6, 0], sizes = [2, 512], strides = [1, 1]} : vector<16x512xf32> to vector<2x512xf32>
    %cst_113 = arith.constant dense<0.000000e+00> : vector<2x512xf32>
    %581 = tpu.matmul %579, %501, %cst_113 {dimension_numbers = #tpu.dot_dimension_numbers<[1], [0], [0], [1], [0, 0, 1, 1], [], []>} : vector<2x128xf32>, vector<128x512xf32>, vector<2x512xf32> -> vector<2x512xf32>
    %582 = arith.addf %580, %581 : vector<2x512xf32>
    %583 = vector.extract_strided_slice %582 {offsets = [0, 0], sizes = [2, 384], strides = [1, 1]} : vector<2x512xf32> to vector<2x384xf32>
    %584 = arith.negf %583 : vector<2x384xf32>
    %585 = math.exp %584 : vector<2x384xf32>
    %cst_114 = arith.constant 1.000000e+00 : f32
    %586 = vector.broadcast %cst_114 : f32 to vector<2x384xf32>
    %587 = arith.addf %586, %585 : vector<2x384xf32>
    %588 = arith.divf %586, %587 : vector<2x384xf32>
    %589 = vector.extract_strided_slice %582 {offsets = [0, 384], sizes = [2, 128], strides = [1, 1]} : vector<2x512xf32> to vector<2x128xf32>
    %590 = math.tanh %589 : vector<2x128xf32>
    %591 = vector.extract_strided_slice %588 {offsets = [0, 128], sizes = [2, 128], strides = [1, 1]} : vector<2x384xf32> to vector<2x128xf32>
    %592 = arith.mulf %591, %576 : vector<2x128xf32>
    %593 = vector.extract_strided_slice %588 {offsets = [0, 0], sizes = [2, 128], strides = [1, 1]} : vector<2x384xf32> to vector<2x128xf32>
    %594 = arith.mulf %593, %590 : vector<2x128xf32>
    %595 = arith.addf %592, %594 : vector<2x128xf32>
    %596 = vector.extract_strided_slice %588 {offsets = [0, 256], sizes = [2, 128], strides = [1, 1]} : vector<2x384xf32> to vector<2x128xf32>
    %597 = math.tanh %595 : vector<2x128xf32>
    %598 = arith.mulf %596, %597 : vector<2x128xf32>
    %599 = vector.extract_strided_slice %499 {offsets = [4, 0], sizes = [2, 512], strides = [1, 1]} : vector<16x512xf32> to vector<2x512xf32>
    %cst_115 = arith.constant dense<0.000000e+00> : vector<2x512xf32>
    %600 = tpu.matmul %598, %501, %cst_115 {dimension_numbers = #tpu.dot_dimension_numbers<[1], [0], [0], [1], [0, 0, 1, 1], [], []>} : vector<2x128xf32>, vector<128x512xf32>, vector<2x512xf32> -> vector<2x512xf32>
    %601 = arith.addf %599, %600 : vector<2x512xf32>
    %602 = vector.extract_strided_slice %601 {offsets = [0, 0], sizes = [2, 384], strides = [1, 1]} : vector<2x512xf32> to vector<2x384xf32>
    %603 = arith.negf %602 : vector<2x384xf32>
    %604 = math.exp %603 : vector<2x384xf32>
    %cst_116 = arith.constant 1.000000e+00 : f32
    %605 = vector.broadcast %cst_116 : f32 to vector<2x384xf32>
    %606 = arith.addf %605, %604 : vector<2x384xf32>
    %607 = arith.divf %605, %606 : vector<2x384xf32>
    %608 = vector.extract_strided_slice %601 {offsets = [0, 384], sizes = [2, 128], strides = [1, 1]} : vector<2x512xf32> to vector<2x128xf32>
    %609 = math.tanh %608 : vector<2x128xf32>
    %610 = vector.extract_strided_slice %607 {offsets = [0, 128], sizes = [2, 128], strides = [1, 1]} : vector<2x384xf32> to vector<2x128xf32>
    %611 = arith.mulf %610, %595 : vector<2x128xf32>
    %612 = vector.extract_strided_slice %607 {offsets = [0, 0], sizes = [2, 128], strides = [1, 1]} : vector<2x384xf32> to vector<2x128xf32>
    %613 = arith.mulf %612, %609 : vector<2x128xf32>
    %614 = arith.addf %611, %613 : vector<2x128xf32>
    %615 = vector.extract_strided_slice %607 {offsets = [0, 256], sizes = [2, 128], strides = [1, 1]} : vector<2x384xf32> to vector<2x128xf32>
    %616 = math.tanh %614 : vector<2x128xf32>
    %617 = arith.mulf %615, %616 : vector<2x128xf32>
    %618 = vector.extract_strided_slice %499 {offsets = [2, 0], sizes = [2, 512], strides = [1, 1]} : vector<16x512xf32> to vector<2x512xf32>
    %cst_117 = arith.constant dense<0.000000e+00> : vector<2x512xf32>
    %619 = tpu.matmul %617, %501, %cst_117 {dimension_numbers = #tpu.dot_dimension_numbers<[1], [0], [0], [1], [0, 0, 1, 1], [], []>} : vector<2x128xf32>, vector<128x512xf32>, vector<2x512xf32> -> vector<2x512xf32>
    %620 = arith.addf %618, %619 : vector<2x512xf32>
    %621 = vector.extract_strided_slice %620 {offsets = [0, 0], sizes = [2, 384], strides = [1, 1]} : vector<2x512xf32> to vector<2x384xf32>
    %622 = arith.negf %621 : vector<2x384xf32>
    %623 = math.exp %622 : vector<2x384xf32>
    %cst_118 = arith.constant 1.000000e+00 : f32
    %624 = vector.broadcast %cst_118 : f32 to vector<2x384xf32>
    %625 = arith.addf %624, %623 : vector<2x384xf32>
    %626 = arith.divf %624, %625 : vector<2x384xf32>
    %627 = vector.extract_strided_slice %620 {offsets = [0, 384], sizes = [2, 128], strides = [1, 1]} : vector<2x512xf32> to vector<2x128xf32>
    %628 = math.tanh %627 : vector<2x128xf32>
    %629 = vector.extract_strided_slice %626 {offsets = [0, 128], sizes = [2, 128], strides = [1, 1]} : vector<2x384xf32> to vector<2x128xf32>
    %630 = arith.mulf %629, %614 : vector<2x128xf32>
    %631 = vector.extract_strided_slice %626 {offsets = [0, 0], sizes = [2, 128], strides = [1, 1]} : vector<2x384xf32> to vector<2x128xf32>
    %632 = arith.mulf %631, %628 : vector<2x128xf32>
    %633 = arith.addf %630, %632 : vector<2x128xf32>
    %634 = vector.extract_strided_slice %626 {offsets = [0, 256], sizes = [2, 128], strides = [1, 1]} : vector<2x384xf32> to vector<2x128xf32>
    %635 = math.tanh %633 : vector<2x128xf32>
    %636 = arith.mulf %634, %635 : vector<2x128xf32>
    %637 = vector.extract_strided_slice %499 {offsets = [0, 0], sizes = [2, 512], strides = [1, 1]} : vector<16x512xf32> to vector<2x512xf32>
    %cst_119 = arith.constant dense<0.000000e+00> : vector<2x512xf32>
    %638 = tpu.matmul %636, %501, %cst_119 {dimension_numbers = #tpu.dot_dimension_numbers<[1], [0], [0], [1], [0, 0, 1, 1], [], []>} : vector<2x128xf32>, vector<128x512xf32>, vector<2x512xf32> -> vector<2x512xf32>
    %639 = arith.addf %637, %638 : vector<2x512xf32>
    %640 = vector.extract_strided_slice %639 {offsets = [0, 0], sizes = [2, 384], strides = [1, 1]} : vector<2x512xf32> to vector<2x384xf32>
    %641 = arith.negf %640 : vector<2x384xf32>
    %642 = math.exp %641 : vector<2x384xf32>
    %cst_120 = arith.constant 1.000000e+00 : f32
    %643 = vector.broadcast %cst_120 : f32 to vector<2x384xf32>
    %644 = arith.addf %643, %642 : vector<2x384xf32>
    %645 = arith.divf %643, %644 : vector<2x384xf32>
    %646 = vector.extract_strided_slice %639 {offsets = [0, 384], sizes = [2, 128], strides = [1, 1]} : vector<2x512xf32> to vector<2x128xf32>
    %647 = math.tanh %646 : vector<2x128xf32>
    %648 = vector.extract_strided_slice %645 {offsets = [0, 128], sizes = [2, 128], strides = [1, 1]} : vector<2x384xf32> to vector<2x128xf32>
    %649 = arith.mulf %648, %633 : vector<2x128xf32>
    %650 = vector.extract_strided_slice %645 {offsets = [0, 0], sizes = [2, 128], strides = [1, 1]} : vector<2x384xf32> to vector<2x128xf32>
    %651 = arith.mulf %650, %647 : vector<2x128xf32>
    %652 = arith.addf %649, %651 : vector<2x128xf32>
    %653 = vector.extract_strided_slice %645 {offsets = [0, 256], sizes = [2, 128], strides = [1, 1]} : vector<2x384xf32> to vector<2x128xf32>
    %654 = math.tanh %652 : vector<2x128xf32>
    %655 = arith.mulf %653, %654 : vector<2x128xf32>
    %656 = tpu.concatenate %359, %378, %397, %416, %435, %454, %473, %492 in 0 : vector<2x128xf32>, vector<2x128xf32>, vector<2x128xf32>, vector<2x128xf32>, vector<2x128xf32>, vector<2x128xf32>, vector<2x128xf32>, vector<2x128xf32> -> vector<16x128xf32>
    %657 = tpu.concatenate %655, %636, %617, %598, %579, %560, %541, %522 in 0 : vector<2x128xf32>, vector<2x128xf32>, vector<2x128xf32>, vector<2x128xf32>, vector<2x128xf32>, vector<2x128xf32>, vector<2x128xf32>, vector<2x128xf32> -> vector<16x128xf32>
    %658 = tpu.concatenate %656, %657 in 1 : vector<16x128xf32>, vector<16x128xf32> -> vector<16x256xf32>
    %c1_121 = arith.constant 1 : index
    %c0_122 = arith.constant 0 : index
    %c0_123 = arith.constant 0 : index
    %c0_124 = arith.constant 0 : index
    %659 = vector.load %arg2[%c1_121, %c0_122, %c0_123, %c0_124] : memref<2x2x256x512xf32, #tpu.memory_space<vmem>>, vector<1x1x256x512xf32>
    %660 = vector.shape_cast %659 : vector<1x1x256x512xf32> to vector<256x512xf32>
    %cst_125 = arith.constant dense<0.000000e+00> : vector<16x512xf32>
    %661 = tpu.matmul %658, %660, %cst_125 {dimension_numbers = #tpu.dot_dimension_numbers<[1], [0], [0], [1], [0, 0, 1, 1], [], []>} : vector<16x256xf32>, vector<256x512xf32>, vector<16x512xf32> -> vector<16x512xf32>
    %c2 = arith.constant 2 : index
    %c0_126 = arith.constant 0 : index
    %c0_127 = arith.constant 0 : index
    %c0_128 = arith.constant 0 : index
    %662 = vector.load %arg4[%c2, %c0_126, %c0_127, %c0_128] : memref<3x2x1x512xf32, #tpu.memory_space<vmem>>, vector<1x1x1x512xf32>
    %663 = vector.shape_cast %662 : vector<1x1x1x512xf32> to vector<1x512xf32>
    %664 = vector.broadcast %663 : vector<1x512xf32> to vector<16x512xf32>
    %665 = arith.addf %661, %664 : vector<16x512xf32>
    %c2_129 = arith.constant 2 : index
    %c0_130 = arith.constant 0 : index
    %c0_131 = arith.constant 0 : index
    %c0_132 = arith.constant 0 : index
    %666 = vector.load %arg3[%c2_129, %c0_130, %c0_131, %c0_132] : memref<3x2x128x512xf32, #tpu.memory_space<vmem>>, vector<1x1x128x512xf32>
    %667 = vector.shape_cast %666 : vector<1x1x128x512xf32> to vector<128x512xf32>
    %cst_133 = arith.constant 0.000000e+00 : f32
    %668 = vector.broadcast %cst_133 : f32 to vector<2x128xf32>
    %cst_134 = arith.constant 0.000000e+00 : f32
    %669 = vector.broadcast %cst_134 : f32 to vector<2x128xf32>
    %670 = vector.extract_strided_slice %665 {offsets = [0, 0], sizes = [2, 512], strides = [1, 1]} : vector<16x512xf32> to vector<2x512xf32>
    %cst_135 = arith.constant dense<0.000000e+00> : vector<2x512xf32>
    %671 = tpu.matmul %668, %667, %cst_135 {dimension_numbers = #tpu.dot_dimension_numbers<[1], [0], [0], [1], [0, 0, 1, 1], [], []>} : vector<2x128xf32>, vector<128x512xf32>, vector<2x512xf32> -> vector<2x512xf32>
    %672 = arith.addf %670, %671 : vector<2x512xf32>
    %673 = vector.extract_strided_slice %672 {offsets = [0, 0], sizes = [2, 384], strides = [1, 1]} : vector<2x512xf32> to vector<2x384xf32>
    %674 = arith.negf %673 : vector<2x384xf32>
    %675 = math.exp %674 : vector<2x384xf32>
    %cst_136 = arith.constant 1.000000e+00 : f32
    %676 = vector.broadcast %cst_136 : f32 to vector<2x384xf32>
    %677 = arith.addf %676, %675 : vector<2x384xf32>
    %678 = arith.divf %676, %677 : vector<2x384xf32>
    %679 = vector.extract_strided_slice %672 {offsets = [0, 384], sizes = [2, 128], strides = [1, 1]} : vector<2x512xf32> to vector<2x128xf32>
    %680 = math.tanh %679 : vector<2x128xf32>
    %681 = vector.extract_strided_slice %678 {offsets = [0, 128], sizes = [2, 128], strides = [1, 1]} : vector<2x384xf32> to vector<2x128xf32>
    %682 = arith.mulf %681, %669 : vector<2x128xf32>
    %683 = vector.extract_strided_slice %678 {offsets = [0, 0], sizes = [2, 128], strides = [1, 1]} : vector<2x384xf32> to vector<2x128xf32>
    %684 = arith.mulf %683, %680 : vector<2x128xf32>
    %685 = arith.addf %682, %684 : vector<2x128xf32>
    %686 = vector.extract_strided_slice %678 {offsets = [0, 256], sizes = [2, 128], strides = [1, 1]} : vector<2x384xf32> to vector<2x128xf32>
    %687 = math.tanh %685 : vector<2x128xf32>
    %688 = arith.mulf %686, %687 : vector<2x128xf32>
    %689 = vector.extract_strided_slice %665 {offsets = [2, 0], sizes = [2, 512], strides = [1, 1]} : vector<16x512xf32> to vector<2x512xf32>
    %cst_137 = arith.constant dense<0.000000e+00> : vector<2x512xf32>
    %690 = tpu.matmul %688, %667, %cst_137 {dimension_numbers = #tpu.dot_dimension_numbers<[1], [0], [0], [1], [0, 0, 1, 1], [], []>} : vector<2x128xf32>, vector<128x512xf32>, vector<2x512xf32> -> vector<2x512xf32>
    %691 = arith.addf %689, %690 : vector<2x512xf32>
    %692 = vector.extract_strided_slice %691 {offsets = [0, 0], sizes = [2, 384], strides = [1, 1]} : vector<2x512xf32> to vector<2x384xf32>
    %693 = arith.negf %692 : vector<2x384xf32>
    %694 = math.exp %693 : vector<2x384xf32>
    %cst_138 = arith.constant 1.000000e+00 : f32
    %695 = vector.broadcast %cst_138 : f32 to vector<2x384xf32>
    %696 = arith.addf %695, %694 : vector<2x384xf32>
    %697 = arith.divf %695, %696 : vector<2x384xf32>
    %698 = vector.extract_strided_slice %691 {offsets = [0, 384], sizes = [2, 128], strides = [1, 1]} : vector<2x512xf32> to vector<2x128xf32>
    %699 = math.tanh %698 : vector<2x128xf32>
    %700 = vector.extract_strided_slice %697 {offsets = [0, 128], sizes = [2, 128], strides = [1, 1]} : vector<2x384xf32> to vector<2x128xf32>
    %701 = arith.mulf %700, %685 : vector<2x128xf32>
    %702 = vector.extract_strided_slice %697 {offsets = [0, 0], sizes = [2, 128], strides = [1, 1]} : vector<2x384xf32> to vector<2x128xf32>
    %703 = arith.mulf %702, %699 : vector<2x128xf32>
    %704 = arith.addf %701, %703 : vector<2x128xf32>
    %705 = vector.extract_strided_slice %697 {offsets = [0, 256], sizes = [2, 128], strides = [1, 1]} : vector<2x384xf32> to vector<2x128xf32>
    %706 = math.tanh %704 : vector<2x128xf32>
    %707 = arith.mulf %705, %706 : vector<2x128xf32>
    %708 = vector.extract_strided_slice %665 {offsets = [4, 0], sizes = [2, 512], strides = [1, 1]} : vector<16x512xf32> to vector<2x512xf32>
    %cst_139 = arith.constant dense<0.000000e+00> : vector<2x512xf32>
    %709 = tpu.matmul %707, %667, %cst_139 {dimension_numbers = #tpu.dot_dimension_numbers<[1], [0], [0], [1], [0, 0, 1, 1], [], []>} : vector<2x128xf32>, vector<128x512xf32>, vector<2x512xf32> -> vector<2x512xf32>
    %710 = arith.addf %708, %709 : vector<2x512xf32>
    %711 = vector.extract_strided_slice %710 {offsets = [0, 0], sizes = [2, 384], strides = [1, 1]} : vector<2x512xf32> to vector<2x384xf32>
    %712 = arith.negf %711 : vector<2x384xf32>
    %713 = math.exp %712 : vector<2x384xf32>
    %cst_140 = arith.constant 1.000000e+00 : f32
    %714 = vector.broadcast %cst_140 : f32 to vector<2x384xf32>
    %715 = arith.addf %714, %713 : vector<2x384xf32>
    %716 = arith.divf %714, %715 : vector<2x384xf32>
    %717 = vector.extract_strided_slice %710 {offsets = [0, 384], sizes = [2, 128], strides = [1, 1]} : vector<2x512xf32> to vector<2x128xf32>
    %718 = math.tanh %717 : vector<2x128xf32>
    %719 = vector.extract_strided_slice %716 {offsets = [0, 128], sizes = [2, 128], strides = [1, 1]} : vector<2x384xf32> to vector<2x128xf32>
    %720 = arith.mulf %719, %704 : vector<2x128xf32>
    %721 = vector.extract_strided_slice %716 {offsets = [0, 0], sizes = [2, 128], strides = [1, 1]} : vector<2x384xf32> to vector<2x128xf32>
    %722 = arith.mulf %721, %718 : vector<2x128xf32>
    %723 = arith.addf %720, %722 : vector<2x128xf32>
    %724 = vector.extract_strided_slice %716 {offsets = [0, 256], sizes = [2, 128], strides = [1, 1]} : vector<2x384xf32> to vector<2x128xf32>
    %725 = math.tanh %723 : vector<2x128xf32>
    %726 = arith.mulf %724, %725 : vector<2x128xf32>
    %727 = vector.extract_strided_slice %665 {offsets = [6, 0], sizes = [2, 512], strides = [1, 1]} : vector<16x512xf32> to vector<2x512xf32>
    %cst_141 = arith.constant dense<0.000000e+00> : vector<2x512xf32>
    %728 = tpu.matmul %726, %667, %cst_141 {dimension_numbers = #tpu.dot_dimension_numbers<[1], [0], [0], [1], [0, 0, 1, 1], [], []>} : vector<2x128xf32>, vector<128x512xf32>, vector<2x512xf32> -> vector<2x512xf32>
    %729 = arith.addf %727, %728 : vector<2x512xf32>
    %730 = vector.extract_strided_slice %729 {offsets = [0, 0], sizes = [2, 384], strides = [1, 1]} : vector<2x512xf32> to vector<2x384xf32>
    %731 = arith.negf %730 : vector<2x384xf32>
    %732 = math.exp %731 : vector<2x384xf32>
    %cst_142 = arith.constant 1.000000e+00 : f32
    %733 = vector.broadcast %cst_142 : f32 to vector<2x384xf32>
    %734 = arith.addf %733, %732 : vector<2x384xf32>
    %735 = arith.divf %733, %734 : vector<2x384xf32>
    %736 = vector.extract_strided_slice %729 {offsets = [0, 384], sizes = [2, 128], strides = [1, 1]} : vector<2x512xf32> to vector<2x128xf32>
    %737 = math.tanh %736 : vector<2x128xf32>
    %738 = vector.extract_strided_slice %735 {offsets = [0, 128], sizes = [2, 128], strides = [1, 1]} : vector<2x384xf32> to vector<2x128xf32>
    %739 = arith.mulf %738, %723 : vector<2x128xf32>
    %740 = vector.extract_strided_slice %735 {offsets = [0, 0], sizes = [2, 128], strides = [1, 1]} : vector<2x384xf32> to vector<2x128xf32>
    %741 = arith.mulf %740, %737 : vector<2x128xf32>
    %742 = arith.addf %739, %741 : vector<2x128xf32>
    %743 = vector.extract_strided_slice %735 {offsets = [0, 256], sizes = [2, 128], strides = [1, 1]} : vector<2x384xf32> to vector<2x128xf32>
    %744 = math.tanh %742 : vector<2x128xf32>
    %745 = arith.mulf %743, %744 : vector<2x128xf32>
    %746 = vector.extract_strided_slice %665 {offsets = [8, 0], sizes = [2, 512], strides = [1, 1]} : vector<16x512xf32> to vector<2x512xf32>
    %cst_143 = arith.constant dense<0.000000e+00> : vector<2x512xf32>
    %747 = tpu.matmul %745, %667, %cst_143 {dimension_numbers = #tpu.dot_dimension_numbers<[1], [0], [0], [1], [0, 0, 1, 1], [], []>} : vector<2x128xf32>, vector<128x512xf32>, vector<2x512xf32> -> vector<2x512xf32>
    %748 = arith.addf %746, %747 : vector<2x512xf32>
    %749 = vector.extract_strided_slice %748 {offsets = [0, 0], sizes = [2, 384], strides = [1, 1]} : vector<2x512xf32> to vector<2x384xf32>
    %750 = arith.negf %749 : vector<2x384xf32>
    %751 = math.exp %750 : vector<2x384xf32>
    %cst_144 = arith.constant 1.000000e+00 : f32
    %752 = vector.broadcast %cst_144 : f32 to vector<2x384xf32>
    %753 = arith.addf %752, %751 : vector<2x384xf32>
    %754 = arith.divf %752, %753 : vector<2x384xf32>
    %755 = vector.extract_strided_slice %748 {offsets = [0, 384], sizes = [2, 128], strides = [1, 1]} : vector<2x512xf32> to vector<2x128xf32>
    %756 = math.tanh %755 : vector<2x128xf32>
    %757 = vector.extract_strided_slice %754 {offsets = [0, 128], sizes = [2, 128], strides = [1, 1]} : vector<2x384xf32> to vector<2x128xf32>
    %758 = arith.mulf %757, %742 : vector<2x128xf32>
    %759 = vector.extract_strided_slice %754 {offsets = [0, 0], sizes = [2, 128], strides = [1, 1]} : vector<2x384xf32> to vector<2x128xf32>
    %760 = arith.mulf %759, %756 : vector<2x128xf32>
    %761 = arith.addf %758, %760 : vector<2x128xf32>
    %762 = vector.extract_strided_slice %754 {offsets = [0, 256], sizes = [2, 128], strides = [1, 1]} : vector<2x384xf32> to vector<2x128xf32>
    %763 = math.tanh %761 : vector<2x128xf32>
    %764 = arith.mulf %762, %763 : vector<2x128xf32>
    %765 = vector.extract_strided_slice %665 {offsets = [10, 0], sizes = [2, 512], strides = [1, 1]} : vector<16x512xf32> to vector<2x512xf32>
    %cst_145 = arith.constant dense<0.000000e+00> : vector<2x512xf32>
    %766 = tpu.matmul %764, %667, %cst_145 {dimension_numbers = #tpu.dot_dimension_numbers<[1], [0], [0], [1], [0, 0, 1, 1], [], []>} : vector<2x128xf32>, vector<128x512xf32>, vector<2x512xf32> -> vector<2x512xf32>
    %767 = arith.addf %765, %766 : vector<2x512xf32>
    %768 = vector.extract_strided_slice %767 {offsets = [0, 0], sizes = [2, 384], strides = [1, 1]} : vector<2x512xf32> to vector<2x384xf32>
    %769 = arith.negf %768 : vector<2x384xf32>
    %770 = math.exp %769 : vector<2x384xf32>
    %cst_146 = arith.constant 1.000000e+00 : f32
    %771 = vector.broadcast %cst_146 : f32 to vector<2x384xf32>
    %772 = arith.addf %771, %770 : vector<2x384xf32>
    %773 = arith.divf %771, %772 : vector<2x384xf32>
    %774 = vector.extract_strided_slice %767 {offsets = [0, 384], sizes = [2, 128], strides = [1, 1]} : vector<2x512xf32> to vector<2x128xf32>
    %775 = math.tanh %774 : vector<2x128xf32>
    %776 = vector.extract_strided_slice %773 {offsets = [0, 128], sizes = [2, 128], strides = [1, 1]} : vector<2x384xf32> to vector<2x128xf32>
    %777 = arith.mulf %776, %761 : vector<2x128xf32>
    %778 = vector.extract_strided_slice %773 {offsets = [0, 0], sizes = [2, 128], strides = [1, 1]} : vector<2x384xf32> to vector<2x128xf32>
    %779 = arith.mulf %778, %775 : vector<2x128xf32>
    %780 = arith.addf %777, %779 : vector<2x128xf32>
    %781 = vector.extract_strided_slice %773 {offsets = [0, 256], sizes = [2, 128], strides = [1, 1]} : vector<2x384xf32> to vector<2x128xf32>
    %782 = math.tanh %780 : vector<2x128xf32>
    %783 = arith.mulf %781, %782 : vector<2x128xf32>
    %784 = vector.extract_strided_slice %665 {offsets = [12, 0], sizes = [2, 512], strides = [1, 1]} : vector<16x512xf32> to vector<2x512xf32>
    %cst_147 = arith.constant dense<0.000000e+00> : vector<2x512xf32>
    %785 = tpu.matmul %783, %667, %cst_147 {dimension_numbers = #tpu.dot_dimension_numbers<[1], [0], [0], [1], [0, 0, 1, 1], [], []>} : vector<2x128xf32>, vector<128x512xf32>, vector<2x512xf32> -> vector<2x512xf32>
    %786 = arith.addf %784, %785 : vector<2x512xf32>
    %787 = vector.extract_strided_slice %786 {offsets = [0, 0], sizes = [2, 384], strides = [1, 1]} : vector<2x512xf32> to vector<2x384xf32>
    %788 = arith.negf %787 : vector<2x384xf32>
    %789 = math.exp %788 : vector<2x384xf32>
    %cst_148 = arith.constant 1.000000e+00 : f32
    %790 = vector.broadcast %cst_148 : f32 to vector<2x384xf32>
    %791 = arith.addf %790, %789 : vector<2x384xf32>
    %792 = arith.divf %790, %791 : vector<2x384xf32>
    %793 = vector.extract_strided_slice %786 {offsets = [0, 384], sizes = [2, 128], strides = [1, 1]} : vector<2x512xf32> to vector<2x128xf32>
    %794 = math.tanh %793 : vector<2x128xf32>
    %795 = vector.extract_strided_slice %792 {offsets = [0, 128], sizes = [2, 128], strides = [1, 1]} : vector<2x384xf32> to vector<2x128xf32>
    %796 = arith.mulf %795, %780 : vector<2x128xf32>
    %797 = vector.extract_strided_slice %792 {offsets = [0, 0], sizes = [2, 128], strides = [1, 1]} : vector<2x384xf32> to vector<2x128xf32>
    %798 = arith.mulf %797, %794 : vector<2x128xf32>
    %799 = arith.addf %796, %798 : vector<2x128xf32>
    %800 = vector.extract_strided_slice %792 {offsets = [0, 256], sizes = [2, 128], strides = [1, 1]} : vector<2x384xf32> to vector<2x128xf32>
    %801 = math.tanh %799 : vector<2x128xf32>
    %802 = arith.mulf %800, %801 : vector<2x128xf32>
    %803 = vector.extract_strided_slice %665 {offsets = [14, 0], sizes = [2, 512], strides = [1, 1]} : vector<16x512xf32> to vector<2x512xf32>
    %cst_149 = arith.constant dense<0.000000e+00> : vector<2x512xf32>
    %804 = tpu.matmul %802, %667, %cst_149 {dimension_numbers = #tpu.dot_dimension_numbers<[1], [0], [0], [1], [0, 0, 1, 1], [], []>} : vector<2x128xf32>, vector<128x512xf32>, vector<2x512xf32> -> vector<2x512xf32>
    %805 = arith.addf %803, %804 : vector<2x512xf32>
    %806 = vector.extract_strided_slice %805 {offsets = [0, 0], sizes = [2, 384], strides = [1, 1]} : vector<2x512xf32> to vector<2x384xf32>
    %807 = arith.negf %806 : vector<2x384xf32>
    %808 = math.exp %807 : vector<2x384xf32>
    %cst_150 = arith.constant 1.000000e+00 : f32
    %809 = vector.broadcast %cst_150 : f32 to vector<2x384xf32>
    %810 = arith.addf %809, %808 : vector<2x384xf32>
    %811 = arith.divf %809, %810 : vector<2x384xf32>
    %812 = vector.extract_strided_slice %805 {offsets = [0, 384], sizes = [2, 128], strides = [1, 1]} : vector<2x512xf32> to vector<2x128xf32>
    %813 = math.tanh %812 : vector<2x128xf32>
    %814 = vector.extract_strided_slice %811 {offsets = [0, 128], sizes = [2, 128], strides = [1, 1]} : vector<2x384xf32> to vector<2x128xf32>
    %815 = arith.mulf %814, %799 : vector<2x128xf32>
    %816 = vector.extract_strided_slice %811 {offsets = [0, 0], sizes = [2, 128], strides = [1, 1]} : vector<2x384xf32> to vector<2x128xf32>
    %817 = arith.mulf %816, %813 : vector<2x128xf32>
    %818 = arith.addf %815, %817 : vector<2x128xf32>
    %819 = vector.extract_strided_slice %811 {offsets = [0, 256], sizes = [2, 128], strides = [1, 1]} : vector<2x384xf32> to vector<2x128xf32>
    %820 = math.tanh %818 : vector<2x128xf32>
    %821 = arith.mulf %819, %820 : vector<2x128xf32>
    %c1_151 = arith.constant 1 : index
    %c1_152 = arith.constant 1 : index
    %c0_153 = arith.constant 0 : index
    %c0_154 = arith.constant 0 : index
    %822 = vector.load %arg2[%c1_151, %c1_152, %c0_153, %c0_154] : memref<2x2x256x512xf32, #tpu.memory_space<vmem>>, vector<1x1x256x512xf32>
    %823 = vector.shape_cast %822 : vector<1x1x256x512xf32> to vector<256x512xf32>
    %cst_155 = arith.constant dense<0.000000e+00> : vector<16x512xf32>
    %824 = tpu.matmul %658, %823, %cst_155 {dimension_numbers = #tpu.dot_dimension_numbers<[1], [0], [0], [1], [0, 0, 1, 1], [], []>} : vector<16x256xf32>, vector<256x512xf32>, vector<16x512xf32> -> vector<16x512xf32>
    %c2_156 = arith.constant 2 : index
    %c1_157 = arith.constant 1 : index
    %c0_158 = arith.constant 0 : index
    %c0_159 = arith.constant 0 : index
    %825 = vector.load %arg4[%c2_156, %c1_157, %c0_158, %c0_159] : memref<3x2x1x512xf32, #tpu.memory_space<vmem>>, vector<1x1x1x512xf32>
    %826 = vector.shape_cast %825 : vector<1x1x1x512xf32> to vector<1x512xf32>
    %827 = vector.broadcast %826 : vector<1x512xf32> to vector<16x512xf32>
    %828 = arith.addf %824, %827 : vector<16x512xf32>
    %c2_160 = arith.constant 2 : index
    %c1_161 = arith.constant 1 : index
    %c0_162 = arith.constant 0 : index
    %c0_163 = arith.constant 0 : index
    %829 = vector.load %arg3[%c2_160, %c1_161, %c0_162, %c0_163] : memref<3x2x128x512xf32, #tpu.memory_space<vmem>>, vector<1x1x128x512xf32>
    %830 = vector.shape_cast %829 : vector<1x1x128x512xf32> to vector<128x512xf32>
    %cst_164 = arith.constant 0.000000e+00 : f32
    %831 = vector.broadcast %cst_164 : f32 to vector<2x128xf32>
    %cst_165 = arith.constant 0.000000e+00 : f32
    %832 = vector.broadcast %cst_165 : f32 to vector<2x128xf32>
    %833 = vector.extract_strided_slice %828 {offsets = [14, 0], sizes = [2, 512], strides = [1, 1]} : vector<16x512xf32> to vector<2x512xf32>
    %cst_166 = arith.constant dense<0.000000e+00> : vector<2x512xf32>
    %834 = tpu.matmul %831, %830, %cst_166 {dimension_numbers = #tpu.dot_dimension_numbers<[1], [0], [0], [1], [0, 0, 1, 1], [], []>} : vector<2x128xf32>, vector<128x512xf32>, vector<2x512xf32> -> vector<2x512xf32>
    %835 = arith.addf %833, %834 : vector<2x512xf32>
    %836 = vector.extract_strided_slice %835 {offsets = [0, 0], sizes = [2, 384], strides = [1, 1]} : vector<2x512xf32> to vector<2x384xf32>
    %837 = arith.negf %836 : vector<2x384xf32>
    %838 = math.exp %837 : vector<2x384xf32>
    %cst_167 = arith.constant 1.000000e+00 : f32
    %839 = vector.broadcast %cst_167 : f32 to vector<2x384xf32>
    %840 = arith.addf %839, %838 : vector<2x384xf32>
    %841 = arith.divf %839, %840 : vector<2x384xf32>
    %842 = vector.extract_strided_slice %835 {offsets = [0, 384], sizes = [2, 128], strides = [1, 1]} : vector<2x512xf32> to vector<2x128xf32>
    %843 = math.tanh %842 : vector<2x128xf32>
    %844 = vector.extract_strided_slice %841 {offsets = [0, 128], sizes = [2, 128], strides = [1, 1]} : vector<2x384xf32> to vector<2x128xf32>
    %845 = arith.mulf %844, %832 : vector<2x128xf32>
    %846 = vector.extract_strided_slice %841 {offsets = [0, 0], sizes = [2, 128], strides = [1, 1]} : vector<2x384xf32> to vector<2x128xf32>
    %847 = arith.mulf %846, %843 : vector<2x128xf32>
    %848 = arith.addf %845, %847 : vector<2x128xf32>
    %849 = vector.extract_strided_slice %841 {offsets = [0, 256], sizes = [2, 128], strides = [1, 1]} : vector<2x384xf32> to vector<2x128xf32>
    %850 = math.tanh %848 : vector<2x128xf32>
    %851 = arith.mulf %849, %850 : vector<2x128xf32>
    %852 = vector.extract_strided_slice %828 {offsets = [12, 0], sizes = [2, 512], strides = [1, 1]} : vector<16x512xf32> to vector<2x512xf32>
    %cst_168 = arith.constant dense<0.000000e+00> : vector<2x512xf32>
    %853 = tpu.matmul %851, %830, %cst_168 {dimension_numbers = #tpu.dot_dimension_numbers<[1], [0], [0], [1], [0, 0, 1, 1], [], []>} : vector<2x128xf32>, vector<128x512xf32>, vector<2x512xf32> -> vector<2x512xf32>
    %854 = arith.addf %852, %853 : vector<2x512xf32>
    %855 = vector.extract_strided_slice %854 {offsets = [0, 0], sizes = [2, 384], strides = [1, 1]} : vector<2x512xf32> to vector<2x384xf32>
    %856 = arith.negf %855 : vector<2x384xf32>
    %857 = math.exp %856 : vector<2x384xf32>
    %cst_169 = arith.constant 1.000000e+00 : f32
    %858 = vector.broadcast %cst_169 : f32 to vector<2x384xf32>
    %859 = arith.addf %858, %857 : vector<2x384xf32>
    %860 = arith.divf %858, %859 : vector<2x384xf32>
    %861 = vector.extract_strided_slice %854 {offsets = [0, 384], sizes = [2, 128], strides = [1, 1]} : vector<2x512xf32> to vector<2x128xf32>
    %862 = math.tanh %861 : vector<2x128xf32>
    %863 = vector.extract_strided_slice %860 {offsets = [0, 128], sizes = [2, 128], strides = [1, 1]} : vector<2x384xf32> to vector<2x128xf32>
    %864 = arith.mulf %863, %848 : vector<2x128xf32>
    %865 = vector.extract_strided_slice %860 {offsets = [0, 0], sizes = [2, 128], strides = [1, 1]} : vector<2x384xf32> to vector<2x128xf32>
    %866 = arith.mulf %865, %862 : vector<2x128xf32>
    %867 = arith.addf %864, %866 : vector<2x128xf32>
    %868 = vector.extract_strided_slice %860 {offsets = [0, 256], sizes = [2, 128], strides = [1, 1]} : vector<2x384xf32> to vector<2x128xf32>
    %869 = math.tanh %867 : vector<2x128xf32>
    %870 = arith.mulf %868, %869 : vector<2x128xf32>
    %871 = tpu.concatenate %802, %870, %821, %851 in 1 : vector<2x128xf32>, vector<2x128xf32>, vector<2x128xf32>, vector<2x128xf32> -> vector<2x512xf32>
    %c0_170 = arith.constant 0 : index
    %c0_171 = arith.constant 0 : index
    %872 = vector.load %arg5[%c0_170, %c0_171] : memref<512x64xf32, #tpu.memory_space<vmem>>, vector<512x64xf32>
    %cst_172 = arith.constant dense<0.000000e+00> : vector<2x64xf32>
    %873 = tpu.matmul %871, %872, %cst_172 {dimension_numbers = #tpu.dot_dimension_numbers<[1], [0], [0], [1], [0, 0, 1, 1], [], []>} : vector<2x512xf32>, vector<512x64xf32>, vector<2x64xf32> -> vector<2x64xf32>
    %c0_173 = arith.constant 0 : index
    %c0_174 = arith.constant 0 : index
    %874 = vector.load %arg6[%c0_173, %c0_174] : memref<1x64xf32, #tpu.memory_space<vmem>>, vector<1x64xf32>
    %875 = vector.broadcast %874 : vector<1x64xf32> to vector<2x64xf32>
    %876 = arith.addf %873, %875 : vector<2x64xf32>
    %c0_175 = arith.constant 0 : index
    %c0_176 = arith.constant 0 : index
    %877 = vector.load %arg7[%c0_175, %c0_176] : memref<64x128xf32, #tpu.memory_space<vmem>>, vector<64x128xf32>
    %cst_177 = arith.constant dense<0.000000e+00> : vector<2x128xf32>
    %878 = tpu.matmul %876, %877, %cst_177 {dimension_numbers = #tpu.dot_dimension_numbers<[1], [0], [0], [1], [0, 0, 1, 1], [], []>} : vector<2x64xf32>, vector<64x128xf32>, vector<2x128xf32> -> vector<2x128xf32>
    %c0_178 = arith.constant 0 : index
    %c0_179 = arith.constant 0 : index
    %879 = vector.load %arg8[%c0_178, %c0_179] : memref<1x128xf32, #tpu.memory_space<vmem>>, vector<1x128xf32>
    %880 = vector.broadcast %879 : vector<1x128xf32> to vector<2x128xf32>
    %881 = arith.addf %878, %880 : vector<2x128xf32>
    %c0_180 = arith.constant 0 : index
    %c0_181 = arith.constant 0 : index
    %882 = vector.load %arg9[%c0_180, %c0_181] : memref<2x128xf32, #tpu.memory_space<vmem>>, vector<2x128xf32>
    tpu.vector_store %arg9[%c0_180, %c0_181], %881 {strides = array<i32>} : memref<2x128xf32, #tpu.memory_space<vmem>>, vector<2x128xf32>,
    return
  }
}

</mosaic_0001>

<llo_original>
// kernel: bilstm_forward.1
$region0: #{bilstm_forward.1}
  #allocation0 [shape = 'u32[]', space=smem, size = 0x4, offset = 0x4, fixed_abs, tag = 'smem constant byte address 0x4 - core index']
  #allocation1 [shape = 'u32[144,128]{1,0:T(1,128)}', space=vmem, size = 0x12000, scoped, tag = 'internal scratch']
  %s0 = inlined_call_operand.vmem [shape: f32[16,224], index: 0, kind: input, shape index: {}]
  %s1 = inlined_call_operand.hbm [shape: f32[2,224,512], index: 1, kind: input, shape index: {}]
  %s2 = inlined_call_operand.hbm [shape: f32[2,2,256,512], index: 2, kind: input, shape index: {}]
  %s3 = inlined_call_operand.hbm [shape: f32[3,2,128,512], index: 3, kind: input, shape index: {}]
  %s4 = inlined_call_operand.hbm [shape: f32[3,2,1,512], index: 4, kind: input, shape index: {}]
  %s5 = inlined_call_operand.vmem [shape: f32[512,64], index: 5, kind: input, shape index: {}]
  %s6 = inlined_call_operand.hbm [shape: f32[1,64], index: 6, kind: input, shape index: {}]
  %s7 = inlined_call_operand.hbm [shape: f32[64,128], index: 7, kind: input, shape index: {}]
  %s8 = inlined_call_operand.hbm [shape: f32[1,128], index: 8, kind: input, shape index: {}]
  %s9 = inlined_call_operand.hbm [shape: f32[2,128], index: 9, kind: output, shape index: {}]
  %s10 = sld [smem:[#allocation0]]
  $region74: #{bilstm_forward.1} parent=0
    _
  %s12 = ssub.s32 1, %s10
  %s13 = scalar_select 0, %s12, %s10
  $region1: #{bilstm_forward.1} parent=0
    #allocation2 [shape = 'u8[917504]{0}', space=vmem, size = 0xe0000, scoped, tag = 'input window, operand 1, single buffered']
    #allocation3 [shape = 's32[1]{0}', space=sflag, size = 0x4, scoped, tag = 'scoped memory for bilstm_forward.1']
    #allocation4 [shape = 's32[1]{0}', space=sflag, size = 0x4, scoped, tag = 'scoped memory for bilstm_forward.1']
    #allocation5 [shape = 'u8[2097152]{0}', space=vmem, size = 0x200000, scoped, tag = 'input window, operand 2, single buffered']
    #allocation6 [shape = 's32[1]{0}', space=sflag, size = 0x4, scoped, tag = 'scoped memory for bilstm_forward.1']
    #allocation7 [shape = 'u8[1572864]{0}', space=vmem, size = 0x180000, scoped, tag = 'input window, operand 3, single buffered']
    #allocation8 [shape = 'u8[12288]{0}', space=vmem, size = 0x3000, scoped, tag = 'input window, operand 4, single buffered']
    #allocation9 [shape = 's32[1]{0}', space=sflag, size = 0x4, scoped, tag = 'scoped memory for bilstm_forward.1']
    #allocation10 [shape = 'u8[512]{0}', space=vmem, size = 0x400, scoped, tag = 'input window, operand 6, single buffered']
    #allocation11 [shape = 'u8[32768]{0}', space=vmem, size = 0x8000, scoped, tag = 'input window, operand 7, single buffered']
    #allocation12 [shape = 's32[1]{0}', space=sflag, size = 0x4, scoped, tag = 'scoped memory for bilstm_forward.1']
    #allocation13 [shape = 'u8[512]{0}', space=vmem, size = 0x400, scoped, tag = 'input window, operand 8, single buffered']
    #allocation14 [shape = 'u8[1024]{0}', space=vmem, size = 0x400, scoped, tag = 'output window, operand 0, single buffered']
    %14 = vsyncpa [#allocation3], 0
    %15 = vsyncpa [#allocation6], 0
    %16 = vsyncpa [#allocation9], 0
    %17 = vsyncpa [#allocation12], 0
    %18 = vsyncpa [#allocation4], 0
    // Predicated region
    $region2: #{bilstm_forward.1} parent=1 // pred_check
      _
    $region3: #{bilstm_forward.1} parent=1 // pred_check_branch
      %20 = sbr.rel (0) target = $region5
    $region4: #{bilstm_forward.1} parent=1 // pred_region
      _
    $region5: #{bilstm_forward.1} parent=1 // pred_fallthru
      _
    // Predicated region
    $region6: #{bilstm_forward.1} parent=1 // pred_check
      _
    $region7: #{bilstm_forward.1} parent=1 // pred_check_branch
      %22 = sbr.rel (0) target = $region9
    $region8: #{bilstm_forward.1} parent=1 // pred_region
      %s24 = ssub.s32 28672, 28672
      %25 = vsyncadd [#allocation3], %s24
      %s26 = sshll.u32 [#allocation2], 4
      %s27 = int_to_ptr.vmem [resolvable:$true] %s26
      %32 = dma.hbm_to_vmem [thread:$0]  %s1, 28672, %s27, [#allocation3], 512, 512, 32
    $region9: #{bilstm_forward.1} parent=1 // pred_fallthru
      _
    // Predicated region
    $region10: #{bilstm_forward.1} parent=1 // pred_check
      _
    $region11: #{bilstm_forward.1} parent=1 // pred_check_branch
      %34 = sbr.rel (0) target = $region13
    $region12: #{bilstm_forward.1} parent=1 // pred_region
      %s36 = ssub.s32 65536, 65536
      %37 = vsyncadd [#allocation6], %s36
      %s38 = sshll.u32 [#allocation5], 4
      %s39 = int_to_ptr.vmem [resolvable:$true] %s38
      %44 = dma.hbm_to_vmem [thread:$0]  %s2, 65536, %s39, [#allocation6], 512, 512, 32
    $region13: #{bilstm_forward.1} parent=1 // pred_fallthru
      _
    // Predicated region
    $region14: #{bilstm_forward.1} parent=1 // pred_check
      _
    $region15: #{bilstm_forward.1} parent=1 // pred_check_branch
      %46 = sbr.rel (0) target = $region17
    $region16: #{bilstm_forward.1} parent=1 // pred_region
      %s48 = ssub.s32 49152, 49152
      %49 = vsyncadd [#allocation6], %s48
      %s50 = sshll.u32 [#allocation7], 4
      %s51 = int_to_ptr.vmem [resolvable:$true] %s50
      %56 = dma.hbm_to_vmem [thread:$0]  %s3, 49152, %s51, [#allocation6], 512, 512, 32
    $region17: #{bilstm_forward.1} parent=1 // pred_fallthru
      _
    // Predicated region
    $region18: #{bilstm_forward.1} parent=1 // pred_check
      _
    $region19: #{bilstm_forward.1} parent=1 // pred_check_branch
      %58 = sbr.rel (0) target = $region21
    $region20: #{bilstm_forward.1} parent=1 // pred_region
      %s60 = ssub.s32 384, 384
      %61 = vsyncadd [#allocation9], %s60
      %s62 = sshll.u32 [#allocation8], 4
      %s63 = int_to_ptr.vmem [resolvable:$true] %s62
      %68 = dma.hbm_to_vmem [thread:$0]  %s4, 384, %s63, [#allocation9], 64, 64, 4
    $region21: #{bilstm_forward.1} parent=1 // pred_fallthru
      _
    // Predicated region
    $region22: #{bilstm_forward.1} parent=1 // pred_check
      _
    $region23: #{bilstm_forward.1} parent=1 // pred_check_branch
      %70 = sbr.rel (0) target = $region25
    $region24: #{bilstm_forward.1} parent=1 // pred_region
      _
    $region25: #{bilstm_forward.1} parent=1 // pred_fallthru
      _
    // Predicated region
    $region26: #{bilstm_forward.1} parent=1 // pred_check
      _
    $region27: #{bilstm_forward.1} parent=1 // pred_check_branch
      %72 = sbr.rel (0) target = $region29
    $region28: #{bilstm_forward.1} parent=1 // pred_region
      %s74 = ssub.s32 16, 16
      %75 = vsyncadd [#allocation9], %s74
      %s77 = sshll.u32 [#allocation10], 4
      %s78 = int_to_ptr.vmem [resolvable:$true] %s77
      %80 = dma.hbm_to_vmem [thread:$0]  %s6, 16, %s78, [#allocation9]
    $region29: #{bilstm_forward.1} parent=1 // pred_fallthru
      _
    // Predicated region
    $region30: #{bilstm_forward.1} parent=1 // pred_check
      _
    $region31: #{bilstm_forward.1} parent=1 // pred_check_branch
      %82 = sbr.rel (0) target = $region33
    $region32: #{bilstm_forward.1} parent=1 // pred_region
      %s84 = ssub.s32 1024, 1024
      %85 = vsyncadd [#allocation12], %s84
      %s86 = sshll.u32 [#allocation11], 4
      %s87 = int_to_ptr.vmem [resolvable:$true] %s86
      %92 = dma.hbm_to_vmem [thread:$0]  %s7, 1024, %s87, [#allocation12], 128, 128, 8
    $region33: #{bilstm_forward.1} parent=1 // pred_fallthru
      _
    // Predicated region
    $region34: #{bilstm_forward.1} parent=1 // pred_check
      _
    $region35: #{bilstm_forward.1} parent=1 // pred_check_branch
      %94 = sbr.rel (0) target = $region37
    $region36: #{bilstm_forward.1} parent=1 // pred_region
      %s96 = ssub.s32 16, 16
      %97 = vsyncadd [#allocation12], %s96
      %s99 = sshll.u32 [#allocation13], 4
      %s100 = int_to_ptr.vmem [resolvable:$true] %s99
      %102 = dma.hbm_to_vmem [thread:$0]  %s8, 16, %s100, [#allocation12]
    $region37: #{bilstm_forward.1} parent=1 // pred_fallthru
      _
    // Predicated region
    $region38: #{bilstm_forward.1} parent=1 // pred_check
      _
    $region39: #{bilstm_forward.1} parent=1 // pred_check_branch
      %104 = sbr.rel (0) target = $region41
    $region40: #{bilstm_forward.1} parent=1 // pred_region
      %105 = dma.done [#allocation3], 28672
    $region41: #{bilstm_forward.1} parent=1 // pred_fallthru
      _
    // Predicated region
    $region42: #{bilstm_forward.1} parent=1 // pred_check
      _
    $region43: #{bilstm_forward.1} parent=1 // pred_check_branch
      %107 = sbr.rel (0) target = $region45
    $region44: #{bilstm_forward.1} parent=1 // pred_region
      %108 = dma.done [#allocation6], 65536
    $region45: #{bilstm_forward.1} parent=1 // pred_fallthru
      _
    // Predicated region
    $region46: #{bilstm_forward.1} parent=1 // pred_check
      _
    $region47: #{bilstm_forward.1} parent=1 // pred_check_branch
      %110 = sbr.rel (0) target = $region49
    $region48: #{bilstm_forward.1} parent=1 // pred_region
      %111 = dma.done [#allocation6], 49152
    $region49: #{bilstm_forward.1} parent=1 // pred_fallthru
      _
    // Predicated region
    $region50: #{bilstm_forward.1} parent=1 // pred_check
      _
    $region51: #{bilstm_forward.1} parent=1 // pred_check_branch
      %113 = sbr.rel (0) target = $region53
    $region52: #{bilstm_forward.1} parent=1 // pred_region
      %114 = dma.done [#allocation9], 384
    $region53: #{bilstm_forward.1} parent=1 // pred_fallthru
      _
    // Predicated region
    $region54: #{bilstm_forward.1} parent=1 // pred_check
      _
    $region55: #{bilstm_forward.1} parent=1 // pred_check_branch
      %116 = sbr.rel (0) target = $region57
    $region56: #{bilstm_forward.1} parent=1 // pred_region
      %117 = dma.done [#allocation9], 16
    $region57: #{bilstm_forward.1} parent=1 // pred_fallthru
      _
    // Predicated region
    $region58: #{bilstm_forward.1} parent=1 // pred_check
      _
    $region59: #{bilstm_forward.1} parent=1 // pred_check_branch
      %119 = sbr.rel (0) target = $region61
    $region60: #{bilstm_forward.1} parent=1 // pred_region
      %120 = dma.done [#allocation12], 1024
    $region61: #{bilstm_forward.1} parent=1 // pred_fallthru
      _
    // Predicated region
    $region62: #{bilstm_forward.1} parent=1 // pred_check
      _
    $region63: #{bilstm_forward.1} parent=1 // pred_check_branch
      %122 = sbr.rel (0) target = $region65
    $region64: #{bilstm_forward.1} parent=1 // pred_region
      %123 = dma.done [#allocation12], 16
    $region65: #{bilstm_forward.1} parent=1 // pred_fallthru
      _
    %v124 = vld [vmem:[%s0] sm:$0xff]
    %v125 = vld [vmem:[%s0 + $0x8] sm:$0xff]
    %v126 = vld [vmem:[%s0 + $0x10] sm:$0xff]
    %v127 = vld [vmem:[%s0 + $0x18] sm:$0xff]
    %v128 = vld [vmem:[#allocation2] sm:$0xff]
    %v129 = vld [vmem:[#allocation2 + $0x8] sm:$0xff]
    %v130 = vld [vmem:[#allocation2 + $0x10] sm:$0xff]
    %v131 = vld [vmem:[#allocation2 + $0x18] sm:$0xff]
    %v132 = vld [vmem:[#allocation2 + $0x20] sm:$0xff]
    %v133 = vld [vmem:[#allocation2 + $0x28] sm:$0xff]
    %v134 = vld [vmem:[#allocation2 + $0x30] sm:$0xff]
    %v135 = vld [vmem:[#allocation2 + $0x38] sm:$0xff]
    %v136 = vld [vmem:[#allocation2 + $0x40] sm:$0xff]
    %v137 = vld [vmem:[#allocation2 + $0x48] sm:$0xff]
    %v138 = vld [vmem:[#allocation2 + $0x50] sm:$0xff]
    %v139 = vld [vmem:[#allocation2 + $0x58] sm:$0xff]
    %v140 = vld [vmem:[#allocation2 + $0x60] sm:$0xff]
    %v141 = vld [vmem:[#allocation2 + $0x68] sm:$0xff]
    %v142 = vld [vmem:[#allocation2 + $0x70] sm:$0xff]
    %v143 = vld [vmem:[#allocation2 + $0x78] sm:$0xff]
    %v144 = vld [vmem:[#allocation2 + $0x80] sm:$0xff]
    %v145 = vld [vmem:[#allocation2 + $0x88] sm:$0xff]
    %v146 = vld [vmem:[#allocation2 + $0x90] sm:$0xff]
    %v147 = vld [vmem:[#allocation2 + $0x98] sm:$0xff]
    %v148 = vld [vmem:[#allocation2 + $0xa0] sm:$0xff]
    %v149 = vld [vmem:[#allocation2 + $0xa8] sm:$0xff]
    %v150 = vld [vmem:[#allocation2 + $0xb0] sm:$0xff]
    %v151 = vld [vmem:[#allocation2 + $0xb8] sm:$0xff]
    %v152 = vld [vmem:[#allocation2 + $0xc0] sm:$0xff]
    %v153 = vld [vmem:[#allocation2 + $0xc8] sm:$0xff]
    %v154 = vld [vmem:[#allocation2 + $0xd0] sm:$0xff]
    %v155 = vld [vmem:[#allocation2 + $0xd8] sm:$0xff]
    %v156 = vld [vmem:[#allocation2 + $0xe0] sm:$0xff]
    %v157 = vld [vmem:[#allocation2 + $0xe8] sm:$0xff]
    %v158 = vld [vmem:[#allocation2 + $0xf0] sm:$0xff]
    %v159 = vld [vmem:[#allocation2 + $0xf8] sm:$0xff]
    %v160 = vld [vmem:[#allocation2 + $0x100] sm:$0xff]
    %v161 = vld [vmem:[#allocation2 + $0x108] sm:$0xff]
    %v162 = vld [vmem:[#allocation2 + $0x110] sm:$0xff]
    %v163 = vld [vmem:[#allocation2 + $0x118] sm:$0xff]
    %v164 = vld [vmem:[#allocation2 + $0x120] sm:$0xff]
    %v165 = vld [vmem:[#allocation2 + $0x128] sm:$0xff]
    %v166 = vld [vmem:[#allocation2 + $0x130] sm:$0xff]
    %v167 = vld [vmem:[#allocation2 + $0x138] sm:$0xff]
    %v168 = vld [vmem:[#allocation2 + $0x140] sm:$0xff]
    %v169 = vld [vmem:[#allocation2 + $0x148] sm:$0xff]
    %v170 = vld [vmem:[#allocation2 + $0x150] sm:$0xff]
    %v171 = vld [vmem:[#allocation2 + $0x158] sm:$0xff]
    %v172 = vld [vmem:[#allocation2 + $0x160] sm:$0xff]
    %v173 = vld [vmem:[#allocation2 + $0x168] sm:$0xff]
    %v174 = vld [vmem:[#allocation2 + $0x170] sm:$0xff]
    %v175 = vld [vmem:[#allocation2 + $0x178] sm:$0xff]
    %v176 = vld [vmem:[#allocation2 + $0x180] sm:$0xff]
    %v177 = vld [vmem:[#allocation2 + $0x188] sm:$0xff]
    %v178 = vld [vmem:[#allocation2 + $0x190] sm:$0xff]
    %v179 = vld [vmem:[#allocation2 + $0x198] sm:$0xff]
    %v180 = vld [vmem:[#allocation2 + $0x1a0] sm:$0xff]
    %v181 = vld [vmem:[#allocation2 + $0x1a8] sm:$0xff]
    %v182 = vld [vmem:[#allocation2 + $0x1b0] sm:$0xff]
    %v183 = vld [vmem:[#allocation2 + $0x1b8] sm:$0xff]
    %v184 = vld [vmem:[#allocation2 + $0x1c0] sm:$0xff]
    %v185 = vld [vmem:[#allocation2 + $0x1c8] sm:$0xff]
    %v186 = vld [vmem:[#allocation2 + $0x1d0] sm:$0xff]
    %v187 = vld [vmem:[#allocation2 + $0x1d8] sm:$0xff]
    %v188 = vld [vmem:[#allocation2 + $0x1e0] sm:$0xff]
    %v189 = vld [vmem:[#allocation2 + $0x1e8] sm:$0xff]
    %v190 = vld [vmem:[#allocation2 + $0x1f0] sm:$0xff]
    %v191 = vld [vmem:[#allocation2 + $0x1f8] sm:$0xff]
    %v192 = vld [vmem:[#allocation2 + $0x200] sm:$0xff]
    %v193 = vld [vmem:[#allocation2 + $0x208] sm:$0xff]
    %v194 = vld [vmem:[#allocation2 + $0x210] sm:$0xff]
    %v195 = vld [vmem:[#allocation2 + $0x218] sm:$0xff]
    %v196 = vld [vmem:[#allocation2 + $0x220] sm:$0xff]
    %v197 = vld [vmem:[#allocation2 + $0x228] sm:$0xff]
    %v198 = vld [vmem:[#allocation2 + $0x230] sm:$0xff]
    %v199 = vld [vmem:[#allocation2 + $0x238] sm:$0xff]
    %v200 = vld [vmem:[#allocation2 + $0x240] sm:$0xff]
    %v201 = vld [vmem:[#allocation2 + $0x248] sm:$0xff]
    %v202 = vld [vmem:[#allocation2 + $0x250] sm:$0xff]
    %v203 = vld [vmem:[#allocation2 + $0x258] sm:$0xff]
    %v204 = vld [vmem:[#allocation2 + $0x260] sm:$0xff]
    %v205 = vld [vmem:[#allocation2 + $0x268] sm:$0xff]
    %v206 = vld [vmem:[#allocation2 + $0x270] sm:$0xff]
    %v207 = vld [vmem:[#allocation2 + $0x278] sm:$0xff]
    %v208 = vld [vmem:[#allocation2 + $0x280] sm:$0xff]
    %v209 = vld [vmem:[#allocation2 + $0x288] sm:$0xff]
    %v210 = vld [vmem:[#allocation2 + $0x290] sm:$0xff]
    %v211 = vld [vmem:[#allocation2 + $0x298] sm:$0xff]
    %v212 = vld [vmem:[#allocation2 + $0x2a0] sm:$0xff]
    %v213 = vld [vmem:[#allocation2 + $0x2a8] sm:$0xff]
    %v214 = vld [vmem:[#allocation2 + $0x2b0] sm:$0xff]
    %v215 = vld [vmem:[#allocation2 + $0x2b8] sm:$0xff]
    %v216 = vld [vmem:[#allocation2 + $0x2c0] sm:$0xff]
    %v217 = vld [vmem:[#allocation2 + $0x2c8] sm:$0xff]
    %v218 = vld [vmem:[#allocation2 + $0x2d0] sm:$0xff]
    %v219 = vld [vmem:[#allocation2 + $0x2d8] sm:$0xff]
    %v220 = vld [vmem:[#allocation2 + $0x2e0] sm:$0xff]
    %v221 = vld [vmem:[#allocation2 + $0x2e8] sm:$0xff]
    %v222 = vld [vmem:[#allocation2 + $0x2f0] sm:$0xff]
    %v223 = vld [vmem:[#allocation2 + $0x2f8] sm:$0xff]
    %v224 = vld [vmem:[#allocation2 + $0x300] sm:$0xff]
    %v225 = vld [vmem:[#allocation2 + $0x308] sm:$0xff]
    %v226 = vld [vmem:[#allocation2 + $0x310] sm:$0xff]
    %v227 = vld [vmem:[#allocation2 + $0x318] sm:$0xff]
    %v228 = vld [vmem:[#allocation2 + $0x320] sm:$0xff]
    %v229 = vld [vmem:[#allocation2 + $0x328] sm:$0xff]
    %v230 = vld [vmem:[#allocation2 + $0x330] sm:$0xff]
    %v231 = vld [vmem:[#allocation2 + $0x338] sm:$0xff]
    %v232 = vld [vmem:[#allocation2 + $0x340] sm:$0xff]
    %v233 = vld [vmem:[#allocation2 + $0x348] sm:$0xff]
    %v234 = vld [vmem:[#allocation2 + $0x350] sm:$0xff]
    %v235 = vld [vmem:[#allocation2 + $0x358] sm:$0xff]
    %v236 = vld [vmem:[#allocation2 + $0x360] sm:$0xff]
    %v237 = vld [vmem:[#allocation2 + $0x368] sm:$0xff]
    %v238 = vld [vmem:[#allocation2 + $0x370] sm:$0xff]
    %v239 = vld [vmem:[#allocation2 + $0x378] sm:$0xff]
    %v240 = vld [vmem:[#allocation8] sm:$0xf]
    %v242 = vlaneseq
    %v243 = vshrl.u32 %v242, 7
    %v244 = vsub.s32 0, %v243
    %v245 = vrot.slane %v240, %v244
    %v246 = vlaneseq
    %v247 = vshrl.u32 %v246, 7
    %v248 = vsub.s32 1, %v247
    %v249 = vrot.slane %v240, %v248
    %v250 = vlaneseq
    %v251 = vshrl.u32 %v250, 7
    %v252 = vsub.s32 2, %v251
    %v253 = vrot.slane %v240, %v252
    %v254 = vlaneseq
    %v255 = vshrl.u32 %v254, 7
    %v256 = vsub.s32 3, %v255
    %v257 = vrot.slane %v240, %v256
    %vm262 = vcmask 785408
    %v264 = vsel %vm262, %v125, 0
    %v267 = vsel %vm262, %v127, 0
    %269 = vmatprep.subr.mxu0 %v189
    %270 = vmatpush1.msra.mxu0 %v188
    %271 = vmatprep.subr.mxu0 %v185
    %272 = vmatpush1.msra.mxu0 %v184
    %273 = vmatprep.subr.mxu0 %v181
    %274 = vmatpush1.msra.mxu0 %v180
    %275 = vmatprep.subr.mxu0 %v177
    %276 = vmatpush1.msra.mxu0 %v176
    %277 = vmatprep.subr.mxu0 %v173
    %278 = vmatpush1.msra.mxu0 %v172
    %279 = vmatprep.subr.mxu0 %v169
    %280 = vmatpush1.msra.mxu0 %v168
    %281 = vmatprep.subr.mxu0 %v165
    %282 = vmatpush1.msra.mxu0 %v164
    %283 = vmatprep.subr.mxu0 %v161
    %284 = vmatpush1.msra.mxu0 %v160
    %285 = vmatprep.subr.mxu0 %v157
    %286 = vmatpush1.msra.mxu0 %v156
    %287 = vmatprep.subr.mxu0 %v153
    %288 = vmatpush1.msra.mxu0 %v152
    %289 = vmatprep.subr.mxu0 %v149
    %290 = vmatpush1.msra.mxu0 %v148
    %291 = vmatprep.subr.mxu0 %v145
    %292 = vmatpush1.msra.mxu0 %v144
    %293 = vmatprep.subr.mxu0 %v141
    %294 = vmatpush1.msra.mxu0 %v140
    %295 = vmatprep.subr.mxu0 %v137
    %296 = vmatpush1.msra.mxu0 %v136
    %297 = vmatprep.subr.mxu0 %v133
    %298 = vmatpush1.msra.mxu0 %v132
    %299 = vmatprep.subr.mxu0 %v129
    %300 = vmatpush1.msra.mxu0 %v128
    %301 = vmatprep.subr.mxu0 0.0
    %302 = vmatpush2.msra.mxu0 0.0
    %303 = vmatprep.subr.mxu0 0.0
    %304 = vmatpush2.msra.mxu0 0.0
    %305 = vmatprep.subr.mxu0 0.0
    %306 = vmatpush2.msra.mxu0 0.0
    %307 = vmatprep.subr.mxu0 0.0
    %308 = vmatpush2.msra.mxu0 0.0
    %309 = vmatprep.subr.mxu0 %v237
    %310 = vmatpush2.msra.mxu0 %v236
    %311 = vmatprep.subr.mxu0 %v233
    %312 = vmatpush2.msra.mxu0 %v232
    %313 = vmatprep.subr.mxu0 %v229
    %314 = vmatpush2.msra.mxu0 %v228
    %315 = vmatprep.subr.mxu0 %v225
    %316 = vmatpush2.msra.mxu0 %v224
    %317 = vmatprep.subr.mxu0 %v221
    %318 = vmatpush2.msra.mxu0 %v220
    %319 = vmatprep.subr.mxu0 %v217
    %320 = vmatpush2.msra.mxu0 %v216
    %321 = vmatprep.subr.mxu0 %v213
    %322 = vmatpush2.msra.mxu0 %v212
    %323 = vmatprep.subr.mxu0 %v209
    %324 = vmatpush2.msra.mxu0 %v208
    %325 = vmatprep.subr.mxu0 %v205
    %326 = vmatpush2.msra.mxu0 %v204
    %327 = vmatprep.subr.mxu0 %v201
    %328 = vmatpush2.msra.mxu0 %v200
    %329 = vmatprep.subr.mxu0 %v197
    %330 = vmatpush2.msra.mxu0 %v196
    %331 = vmatprep.subr.mxu0 %v193
    %332 = vmatpush2.msra.mxu0 %v192
    %333 = vmatprep.mubr.f32.mxu0 %v264
    %334 = vmatmul.mubr.f32.gmra.mxu0 %v124
    %v335 = vpop.f32.mrf.mxu0
    %v336 = vadd.f32 %v245, %v335
    %v337 = vpop.f32.mrf.mxu0
    %v338 = vadd.f32 %v249, %v337
    %339 = vmatprep.mubr.f32.mxu0 %v267
    %340 = vmatmul.mubr.f32.gmra.mxu0 %v126
    %v341 = vpop.f32.mrf.mxu0
    %v342 = vadd.f32 %v245, %v341
    %v343 = vpop.f32.mrf.mxu0
    %v344 = vadd.f32 %v249, %v343
    %345 = vdwg.mxu0
    %346 = vmatprep.subr.mxu0 %v191
    %347 = vmatpush1.msra.mxu0 %v190
    %348 = vmatprep.subr.mxu0 %v187
    %349 = vmatpush1.msra.mxu0 %v186
    %350 = vmatprep.subr.mxu0 %v183
    %351 = vmatpush1.msra.mxu0 %v182
    %352 = vmatprep.subr.mxu0 %v179
    %353 = vmatpush1.msra.mxu0 %v178
    %354 = vmatprep.subr.mxu0 %v175
    %355 = vmatpush1.msra.mxu0 %v174
    %356 = vmatprep.subr.mxu0 %v171
    %357 = vmatpush1.msra.mxu0 %v170
    %358 = vmatprep.subr.mxu0 %v167
    %359 = vmatpush1.msra.mxu0 %v166
    %360 = vmatprep.subr.mxu0 %v163
    %361 = vmatpush1.msra.mxu0 %v162
    %362 = vmatprep.subr.mxu0 %v159
    %363 = vmatpush1.msra.mxu0 %v158
    %364 = vmatprep.subr.mxu0 %v155
    %365 = vmatpush1.msra.mxu0 %v154
    %366 = vmatprep.subr.mxu0 %v151
    %367 = vmatpush1.msra.mxu0 %v150
    %368 = vmatprep.subr.mxu0 %v147
    %369 = vmatpush1.msra.mxu0 %v146
    %370 = vmatprep.subr.mxu0 %v143
    %371 = vmatpush1.msra.mxu0 %v142
    %372 = vmatprep.subr.mxu0 %v139
    %373 = vmatpush1.msra.mxu0 %v138
    %374 = vmatprep.subr.mxu0 %v135
    %375 = vmatpush1.msra.mxu0 %v134
    %376 = vmatprep.subr.mxu0 %v131
    %377 = vmatpush1.msra.mxu0 %v130
    %378 = vmatprep.subr.mxu0 0.0
    %379 = vmatpush2.msra.mxu0 0.0
    %380 = vmatprep.subr.mxu0 0.0
    %381 = vmatpush2.msra.mxu0 0.0
    %382 = vmatprep.subr.mxu0 0.0
    %383 = vmatpush2.msra.mxu0 0.0
    %384 = vmatprep.subr.mxu0 0.0
    %385 = vmatpush2.msra.mxu0 0.0
    %386 = vmatprep.subr.mxu0 %v239
    %387 = vmatpush2.msra.mxu0 %v238
    %388 = vmatprep.subr.mxu0 %v235
    %389 = vmatpush2.msra.mxu0 %v234
    %390 = vmatprep.subr.mxu0 %v231
    %391 = vmatpush2.msra.mxu0 %v230
    %392 = vmatprep.subr.mxu0 %v227
    %393 = vmatpush2.msra.mxu0 %v226
    %394 = vmatprep.subr.mxu0 %v223
    %395 = vmatpush2.msra.mxu0 %v222
    %396 = vmatprep.subr.mxu0 %v219
    %397 = vmatpush2.msra.mxu0 %v218
    %398 = vmatprep.subr.mxu0 %v215
    %399 = vmatpush2.msra.mxu0 %v214
    %400 = vmatprep.subr.mxu0 %v211
    %401 = vmatpush2.msra.mxu0 %v210
    %402 = vmatprep.subr.mxu0 %v207
    %403 = vmatpush2.msra.mxu0 %v206
    %404 = vmatprep.subr.mxu0 %v203
    %405 = vmatpush2.msra.mxu0 %v202
    %406 = vmatprep.subr.mxu0 %v199
    %407 = vmatpush2.msra.mxu0 %v198
    %408 = vmatprep.subr.mxu0 %v195
    %409 = vmatpush2.msra.mxu0 %v194
    %410 = vmatprep.mubr.f32.mxu0 %v264
    %411 = vmatmul.mubr.f32.gmra.mxu0 %v124
    %v412 = vpop.f32.mrf.mxu0
    %v413 = vadd.f32 %v253, %v412
    %v414 = vpop.f32.mrf.mxu0
    %v415 = vadd.f32 %v257, %v414
    %416 = vmatprep.mubr.f32.mxu0 %v267
    %417 = vmatmul.mubr.f32.gmra.mxu0 %v126
    %v418 = vpop.f32.mrf.mxu0
    %v419 = vadd.f32 %v253, %v418
    %v420 = vpop.f32.mrf.mxu0
    %v421 = vadd.f32 %v257, %v420
    %422 = vdwg.mxu0
    %v423 = vld [vmem:[#allocation7] sm:$0xff]
    %v424 = vld [vmem:[#allocation7 + $0x8] sm:$0xff]
    %v425 = vld [vmem:[#allocation7 + $0x10] sm:$0xff]
    %v426 = vld [vmem:[#allocation7 + $0x18] sm:$0xff]
    %v427 = vld [vmem:[#allocation7 + $0x20] sm:$0xff]
    %v428 = vld [vmem:[#allocation7 + $0x28] sm:$0xff]
    %v429 = vld [vmem:[#allocation7 + $0x30] sm:$0xff]
    %v430 = vld [vmem:[#allocation7 + $0x38] sm:$0xff]
    %v431 = vld [vmem:[#allocation7 + $0x40] sm:$0xff]
    %v432 = vld [vmem:[#allocation7 + $0x48] sm:$0xff]
    %v433 = vld [vmem:[#allocation7 + $0x50] sm:$0xff]
    %v434 = vld [vmem:[#allocation7 + $0x58] sm:$0xff]
    %v435 = vld [vmem:[#allocation7 + $0x60] sm:$0xff]
    %v436 = vld [vmem:[#allocation7 + $0x68] sm:$0xff]
    %v437 = vld [vmem:[#allocation7 + $0x70] sm:$0xff]
    %v438 = vld [vmem:[#allocation7 + $0x78] sm:$0xff]
    %v439 = vld [vmem:[#allocation7 + $0x80] sm:$0xff]
    %v440 = vld [vmem:[#allocation7 + $0x88] sm:$0xff]
    %v441 = vld [vmem:[#allocation7 + $0x90] sm:$0xff]
    %v442 = vld [vmem:[#allocation7 + $0x98] sm:$0xff]
    %v443 = vld [vmem:[#allocation7 + $0xa0] sm:$0xff]
    %v444 = vld [vmem:[#allocation7 + $0xa8] sm:$0xff]
    %v445 = vld [vmem:[#allocation7 + $0xb0] sm:$0xff]
    %v446 = vld [vmem:[#allocation7 + $0xb8] sm:$0xff]
    %v447 = vld [vmem:[#allocation7 + $0xc0] sm:$0xff]
    %v448 = vld [vmem:[#allocation7 + $0xc8] sm:$0xff]
    %v449 = vld [vmem:[#allocation7 + $0xd0] sm:$0xff]
    %v450 = vld [vmem:[#allocation7 + $0xd8] sm:$0xff]
    %v451 = vld [vmem:[#allocation7 + $0xe0] sm:$0xff]
    %v452 = vld [vmem:[#allocation7 + $0xe8] sm:$0xff]
    %v453 = vld [vmem:[#allocation7 + $0xf0] sm:$0xff]
    %v454 = vld [vmem:[#allocation7 + $0xf8] sm:$0xff]
    %v455 = vld [vmem:[#allocation7 + $0x100] sm:$0xff]
    %v456 = vld [vmem:[#allocation7 + $0x108] sm:$0xff]
    %v457 = vld [vmem:[#allocation7 + $0x110] sm:$0xff]
    %v458 = vld [vmem:[#allocation7 + $0x118] sm:$0xff]
    %v459 = vld [vmem:[#allocation7 + $0x120] sm:$0xff]
    %v460 = vld [vmem:[#allocation7 + $0x128] sm:$0xff]
    %v461 = vld [vmem:[#allocation7 + $0x130] sm:$0xff]
    %v462 = vld [vmem:[#allocation7 + $0x138] sm:$0xff]
    %v463 = vld [vmem:[#allocation7 + $0x140] sm:$0xff]
    %v464 = vld [vmem:[#allocation7 + $0x148] sm:$0xff]
    %v465 = vld [vmem:[#allocation7 + $0x150] sm:$0xff]
    %v466 = vld [vmem:[#allocation7 + $0x158] sm:$0xff]
    %v467 = vld [vmem:[#allocation7 + $0x160] sm:$0xff]
    %v468 = vld [vmem:[#allocation7 + $0x168] sm:$0xff]
    %v469 = vld [vmem:[#allocation7 + $0x170] sm:$0xff]
    %v470 = vld [vmem:[#allocation7 + $0x178] sm:$0xff]
    %v471 = vld [vmem:[#allocation7 + $0x180] sm:$0xff]
    %v472 = vld [vmem:[#allocation7 + $0x188] sm:$0xff]
    %v473 = vld [vmem:[#allocation7 + $0x190] sm:$0xff]
    %v474 = vld [vmem:[#allocation7 + $0x198] sm:$0xff]
    %v475 = vld [vmem:[#allocation7 + $0x1a0] sm:$0xff]
    %v476 = vld [vmem:[#allocation7 + $0x1a8] sm:$0xff]
    %v477 = vld [vmem:[#allocation7 + $0x1b0] sm:$0xff]
    %v478 = vld [vmem:[#allocation7 + $0x1b8] sm:$0xff]
    %v479 = vld [vmem:[#allocation7 + $0x1c0] sm:$0xff]
    %v480 = vld [vmem:[#allocation7 + $0x1c8] sm:$0xff]
    %v481 = vld [vmem:[#allocation7 + $0x1d0] sm:$0xff]
    %v482 = vld [vmem:[#allocation7 + $0x1d8] sm:$0xff]
    %v483 = vld [vmem:[#allocation7 + $0x1e0] sm:$0xff]
    %v484 = vld [vmem:[#allocation7 + $0x1e8] sm:$0xff]
    %v485 = vld [vmem:[#allocation7 + $0x1f0] sm:$0xff]
    %v486 = vld [vmem:[#allocation7 + $0x1f8] sm:$0xff]
    %487 = vmatprep.subr.mxu0 %v484
    %488 = vmatpush1.msra.mxu0 %v483
    %489 = vmatprep.subr.mxu0 %v480
    %490 = vmatpush1.msra.mxu0 %v479
    %491 = vmatprep.subr.mxu0 %v476
    %492 = vmatpush1.msra.mxu0 %v475
    %493 = vmatprep.subr.mxu0 %v472
    %494 = vmatpush1.msra.mxu0 %v471
    %495 = vmatprep.subr.mxu0 %v468
    %496 = vmatpush1.msra.mxu0 %v467
    %497 = vmatprep.subr.mxu0 %v464
    %498 = vmatpush1.msra.mxu0 %v463
    %499 = vmatprep.subr.mxu0 %v460
    %500 = vmatpush1.msra.mxu0 %v459
    %501 = vmatprep.subr.mxu0 %v456
    %502 = vmatpush1.msra.mxu0 %v455
    %503 = vmatprep.subr.mxu0 %v452
    %504 = vmatpush1.msra.mxu0 %v451
    %505 = vmatprep.subr.mxu0 %v448
    %506 = vmatpush1.msra.mxu0 %v447
    %507 = vmatprep.subr.mxu0 %v444
    %508 = vmatpush1.msra.mxu0 %v443
    %509 = vmatprep.subr.mxu0 %v440
    %510 = vmatpush1.msra.mxu0 %v439
    %511 = vmatprep.subr.mxu0 %v436
    %512 = vmatpush1.msra.mxu0 %v435
    %513 = vmatprep.subr.mxu0 %v432
    %514 = vmatpush1.msra.mxu0 %v431
    %515 = vmatprep.subr.mxu0 %v428
    %516 = vmatpush1.msra.mxu0 %v427
    %517 = vmatprep.subr.mxu0 %v424
    %518 = vmatpush1.msra.mxu0 %v423
    %519 = vmatprep.subr.mxu0 0.0
    %520 = vmatpush2.msra.mxu0 0.0
    %521 = vmatprep.subr.mxu0 0.0
    %522 = vmatpush2.msra.mxu0 0.0
    %523 = vmatprep.subr.mxu0 0.0
    %524 = vmatpush2.msra.mxu0 0.0
    %525 = vmatprep.subr.mxu0 0.0
    %526 = vmatpush2.msra.mxu0 0.0
    %527 = vmatprep.subr.mxu0 0.0
    %528 = vmatpush2.msra.mxu0 0.0
    %529 = vmatprep.subr.mxu0 0.0
    %530 = vmatpush2.msra.mxu0 0.0
    %531 = vmatprep.subr.mxu0 0.0
    %532 = vmatpush2.msra.mxu0 0.0
    %533 = vmatprep.subr.mxu0 0.0
    %534 = vmatpush2.msra.mxu0 0.0
    %535 = vmatprep.subr.mxu0 0.0
    %536 = vmatpush2.msra.mxu0 0.0
    %537 = vmatprep.subr.mxu0 0.0
    %538 = vmatpush2.msra.mxu0 0.0
    %539 = vmatprep.subr.mxu0 0.0
    %540 = vmatpush2.msra.mxu0 0.0
    %541 = vmatprep.subr.mxu0 0.0
    %542 = vmatpush2.msra.mxu0 0.0
    %543 = vmatprep.subr.mxu0 0.0
    %544 = vmatpush2.msra.mxu0 0.0
    %545 = vmatprep.subr.mxu0 0.0
    %546 = vmatpush2.msra.mxu0 0.0
    %547 = vmatprep.subr.mxu0 0.0
    %548 = vmatpush2.msra.mxu0 0.0
    %549 = vmatprep.subr.mxu0 0.0
    %550 = vmatpush2.msra.mxu0 0.0
    %551 = vmatprep.mubr.f32.mxu0 0.0
    %552 = vmatmul.mubr.f32.gmra.mxu0 0.0
    %v553 = vpop.f32.mrf.mxu0
    %v554 = vadd.f32 0.0, %v553
    %v555 = vpop.f32.mrf.mxu0
    %v556 = vadd.f32 0.0, %v555
    %557 = vdwg.mxu0
    %558 = vmatprep.subr.mxu0 %v486
    %559 = vmatpush1.msra.mxu0 %v485
    %560 = vmatprep.subr.mxu0 %v482
    %561 = vmatpush1.msra.mxu0 %v481
    %562 = vmatprep.subr.mxu0 %v478
    %563 = vmatpush1.msra.mxu0 %v477
    %564 = vmatprep.subr.mxu0 %v474
    %565 = vmatpush1.msra.mxu0 %v473
    %566 = vmatprep.subr.mxu0 %v470
    %567 = vmatpush1.msra.mxu0 %v469
    %568 = vmatprep.subr.mxu0 %v466
    %569 = vmatpush1.msra.mxu0 %v465
    %570 = vmatprep.subr.mxu0 %v462
    %571 = vmatpush1.msra.mxu0 %v461
    %572 = vmatprep.subr.mxu0 %v458
    %573 = vmatpush1.msra.mxu0 %v457
    %574 = vmatprep.subr.mxu0 %v454
    %575 = vmatpush1.msra.mxu0 %v453
    %576 = vmatprep.subr.mxu0 %v450
    %577 = vmatpush1.msra.mxu0 %v449
    %578 = vmatprep.subr.mxu0 %v446
    %579 = vmatpush1.msra.mxu0 %v445
    %580 = vmatprep.subr.mxu0 %v442
    %581 = vmatpush1.msra.mxu0 %v441
    %582 = vmatprep.subr.mxu0 %v438
    %583 = vmatpush1.msra.mxu0 %v437
    %584 = vmatprep.subr.mxu0 %v434
    %585 = vmatpush1.msra.mxu0 %v433
    %586 = vmatprep.subr.mxu0 %v430
    %587 = vmatpush1.msra.mxu0 %v429
    %588 = vmatprep.subr.mxu0 %v426
    %589 = vmatpush1.msra.mxu0 %v425
    %590 = vmatprep.subr.mxu0 0.0
    %591 = vmatpush2.msra.mxu0 0.0
    %592 = vmatprep.subr.mxu0 0.0
    %593 = vmatpush2.msra.mxu0 0.0
    %594 = vmatprep.subr.mxu0 0.0
    %595 = vmatpush2.msra.mxu0 0.0
    %596 = vmatprep.subr.mxu0 0.0
    %597 = vmatpush2.msra.mxu0 0.0
    %598 = vmatprep.subr.mxu0 0.0
    %599 = vmatpush2.msra.mxu0 0.0
    %600 = vmatprep.subr.mxu0 0.0
    %601 = vmatpush2.msra.mxu0 0.0
    %602 = vmatprep.subr.mxu0 0.0
    %603 = vmatpush2.msra.mxu0 0.0
    %604 = vmatprep.subr.mxu0 0.0
    %605 = vmatpush2.msra.mxu0 0.0
    %606 = vmatprep.subr.mxu0 0.0
    %607 = vmatpush2.msra.mxu0 0.0
    %608 = vmatprep.subr.mxu0 0.0
    %609 = vmatpush2.msra.mxu0 0.0
    %610 = vmatprep.subr.mxu0 0.0
    %611 = vmatpush2.msra.mxu0 0.0
    %612 = vmatprep.subr.mxu0 0.0
    %613 = vmatpush2.msra.mxu0 0.0
    %614 = vmatprep.subr.mxu0 0.0
    %615 = vmatpush2.msra.mxu0 0.0
    %616 = vmatprep.subr.mxu0 0.0
    %617 = vmatpush2.msra.mxu0 0.0
    %618 = vmatprep.subr.mxu0 0.0
    %619 = vmatpush2.msra.mxu0 0.0
    %620 = vmatprep.subr.mxu0 0.0
    %621 = vmatpush2.msra.mxu0 0.0
    %622 = vmatprep.mubr.f32.mxu0 0.0
    %623 = vmatmul.mubr.f32.gmra.mxu0 0.0
    %v624 = vpop.f32.mrf.mxu0
    %v625 = vadd.f32 0.0, %v624
    %v626 = vpop.f32.mrf.mxu0
    %v627 = vadd.f32 0.0, %v626
    %628 = vdwg.mxu0
    %v629 = vadd.f32 %v336, %v554
    %v630 = vadd.f32 %v338, %v556
    %v631 = vadd.f32 %v413, %v625
    %v632 = vadd.f32 %v415, %v627
    %v633 = vxor.u32 %v629, 2147483648
    %v634 = vxor.u32 %v630, 2147483648
    %v635 = vxor.u32 %v631, 2147483648
    %v636 = vmul.f32 %v633, 1.442695
    %v637 = vpow.pop %v636
    %v638 = vmul.f32 %v634, 1.442695
    %v639 = vpow.pop %v638
    %v640 = vmul.f32 %v635, 1.442695
    %v641 = vpow.pop %v640
    %v642 = vadd.f32 %v637, 1.0
    %v643 = vadd.f32 %v639, 1.0
    %v644 = vadd.f32 %v641, 1.0
    %v645 = vrcp.pop %v642
    %v646 = vmul.f32 1.0, %v645
    %v647 = vrcp.pop %v643
    %v648 = vmul.f32 1.0, %v647
    %v649 = vrcp.pop %v644
    %v650 = vmul.f32 1.0, %v649
    %v651 = vtanh.pop %v632
    %v652 = vmul.f32 %v648, 0.0
    %v653 = vmul.f32 %v646, %v651
    %v654 = vadd.f32 %v652, %v653
    %v655 = vtanh.pop %v654
    %v656 = vmul.f32 %v650, %v655
    %657 = vmatprep.subr.mxu0 %v484
    %658 = vmatpush1.msra.mxu0 %v483
    %659 = vmatprep.subr.mxu0 %v480
    %660 = vmatpush1.msra.mxu0 %v479
    %661 = vmatprep.subr.mxu0 %v476
    %662 = vmatpush1.msra.mxu0 %v475
    %663 = vmatprep.subr.mxu0 %v472
    %664 = vmatpush1.msra.mxu0 %v471
    %665 = vmatprep.subr.mxu0 %v468
    %666 = vmatpush1.msra.mxu0 %v467
    %667 = vmatprep.subr.mxu0 %v464
    %668 = vmatpush1.msra.mxu0 %v463
    %669 = vmatprep.subr.mxu0 %v460
    %670 = vmatpush1.msra.mxu0 %v459
    %671 = vmatprep.subr.mxu0 %v456
    %672 = vmatpush1.msra.mxu0 %v455
    %673 = vmatprep.subr.mxu0 %v452
    %674 = vmatpush1.msra.mxu0 %v451
    %675 = vmatprep.subr.mxu0 %v448
    %676 = vmatpush1.msra.mxu0 %v447
    %677 = vmatprep.subr.mxu0 %v444
    %678 = vmatpush1.msra.mxu0 %v443
    %679 = vmatprep.subr.mxu0 %v440
    %680 = vmatpush1.msra.mxu0 %v439
    %681 = vmatprep.subr.mxu0 %v436
    %682 = vmatpush1.msra.mxu0 %v435
    %683 = vmatprep.subr.mxu0 %v432
    %684 = vmatpush1.msra.mxu0 %v431
    %685 = vmatprep.subr.mxu0 %v428
    %686 = vmatpush1.msra.mxu0 %v427
    %687 = vmatprep.subr.mxu0 %v424
    %688 = vmatpush1.msra.mxu0 %v423
    %689 = vmatprep.subr.mxu0 0.0
    %690 = vmatpush2.msra.mxu0 0.0
    %691 = vmatprep.subr.mxu0 0.0
    %692 = vmatpush2.msra.mxu0 0.0
    %693 = vmatprep.subr.mxu0 0.0
    %694 = vmatpush2.msra.mxu0 0.0
    %695 = vmatprep.subr.mxu0 0.0
    %696 = vmatpush2.msra.mxu0 0.0
    %697 = vmatprep.subr.mxu0 0.0
    %698 = vmatpush2.msra.mxu0 0.0
    %699 = vmatprep.subr.mxu0 0.0
    %700 = vmatpush2.msra.mxu0 0.0
    %701 = vmatprep.subr.mxu0 0.0
    %702 = vmatpush2.msra.mxu0 0.0
    %703 = vmatprep.subr.mxu0 0.0
    %704 = vmatpush2.msra.mxu0 0.0
    %705 = vmatprep.subr.mxu0 0.0
    %706 = vmatpush2.msra.mxu0 0.0
    %707 = vmatprep.subr.mxu0 0.0
    %708 = vmatpush2.msra.mxu0 0.0
    %709 = vmatprep.subr.mxu0 0.0
    %710 = vmatpush2.msra.mxu0 0.0
    %711 = vmatprep.subr.mxu0 0.0
    %712 = vmatpush2.msra.mxu0 0.0
    %713 = vmatprep.subr.mxu0 0.0
    %714 = vmatpush2.msra.mxu0 0.0
    %715 = vmatprep.subr.mxu0 0.0
    %716 = vmatpush2.msra.mxu0 0.0
    %717 = vmatprep.subr.mxu0 0.0
    %718 = vmatpush2.msra.mxu0 0.0
    %719 = vmatprep.subr.mxu0 0.0
    %720 = vmatpush2.msra.mxu0 0.0
    %721 = vmatprep.mubr.f32.mxu0 0.0
    %722 = vmatmul.mubr.f32.gmra.mxu0 %v656
    %v723 = vpop.f32.mrf.mxu0
    %v724 = vadd.f32 0.0, %v723
    %v725 = vpop.f32.mrf.mxu0
    %v726 = vadd.f32 0.0, %v725
    %727 = vdwg.mxu0
    %728 = vmatprep.subr.mxu0 %v486
    %729 = vmatpush1.msra.mxu0 %v485
    %730 = vmatprep.subr.mxu0 %v482
    %731 = vmatpush1.msra.mxu0 %v481
    %732 = vmatprep.subr.mxu0 %v478
    %733 = vmatpush1.msra.mxu0 %v477
    %734 = vmatprep.subr.mxu0 %v474
    %735 = vmatpush1.msra.mxu0 %v473
    %736 = vmatprep.subr.mxu0 %v470
    %737 = vmatpush1.msra.mxu0 %v469
    %738 = vmatprep.subr.mxu0 %v466
    %739 = vmatpush1.msra.mxu0 %v465
    %740 = vmatprep.subr.mxu0 %v462
    %741 = vmatpush1.msra.mxu0 %v461
    %742 = vmatprep.subr.mxu0 %v458
    %743 = vmatpush1.msra.mxu0 %v457
    %744 = vmatprep.subr.mxu0 %v454
    %745 = vmatpush1.msra.mxu0 %v453
    %746 = vmatprep.subr.mxu0 %v450
    %747 = vmatpush1.msra.mxu0 %v449
    %748 = vmatprep.subr.mxu0 %v446
    %749 = vmatpush1.msra.mxu0 %v445
    %750 = vmatprep.subr.mxu0 %v442
    %751 = vmatpush1.msra.mxu0 %v441
    %752 = vmatprep.subr.mxu0 %v438
    %753 = vmatpush1.msra.mxu0 %v437
    %754 = vmatprep.subr.mxu0 %v434
    %755 = vmatpush1.msra.mxu0 %v433
    %756 = vmatprep.subr.mxu0 %v430
    %757 = vmatpush1.msra.mxu0 %v429
    %758 = vmatprep.subr.mxu0 %v426
    %759 = vmatpush1.msra.mxu0 %v425
    %760 = vmatprep.subr.mxu0 0.0
    %761 = vmatpush2.msra.mxu0 0.0
    %762 = vmatprep.subr.mxu0 0.0
    %763 = vmatpush2.msra.mxu0 0.0
    %764 = vmatprep.subr.mxu0 0.0
    %765 = vmatpush2.msra.mxu0 0.0
    %766 = vmatprep.subr.mxu0 0.0
    %767 = vmatpush2.msra.mxu0 0.0
    %768 = vmatprep.subr.mxu0 0.0
    %769 = vmatpush2.msra.mxu0 0.0
    %770 = vmatprep.subr.mxu0 0.0
    %771 = vmatpush2.msra.mxu0 0.0
    %772 = vmatprep.subr.mxu0 0.0
    %773 = vmatpush2.msra.mxu0 0.0
    %774 = vmatprep.subr.mxu0 0.0
    %775 = vmatpush2.msra.mxu0 0.0
    %776 = vmatprep.subr.mxu0 0.0
    %777 = vmatpush2.msra.mxu0 0.0
    %778 = vmatprep.subr.mxu0 0.0
    %779 = vmatpush2.msra.mxu0 0.0
    %780 = vmatprep.subr.mxu0 0.0
    %781 = vmatpush2.msra.mxu0 0.0
    %782 = vmatprep.subr.mxu0 0.0
    %783 = vmatpush2.msra.mxu0 0.0
    %784 = vmatprep.subr.mxu0 0.0
    %785 = vmatpush2.msra.mxu0 0.0
    %786 = vmatprep.subr.mxu0 0.0
    %787 = vmatpush2.msra.mxu0 0.0
    %788 = vmatprep.subr.mxu0 0.0
    %789 = vmatpush2.msra.mxu0 0.0
    %790 = vmatprep.subr.mxu0 0.0
    %791 = vmatpush2.msra.mxu0 0.0
    %792 = vmatprep.mubr.f32.mxu0 0.0
    %793 = vmatmul.mubr.f32.gmra.mxu0 %v656
    %v794 = vpop.f32.mrf.mxu0
    %v795 = vadd.f32 0.0, %v794
    %v796 = vpop.f32.mrf.mxu0
    %v797 = vadd.f32 0.0, %v796
    %798 = vdwg.mxu0
    %v803 = vrot.slane %v724, 6
    %v804 = vrot.slane %v726, 6
    %v805 = vrot.slane %v795, 6
    %v806 = vrot.slane %v797, 6
    %v811 = vadd.f32 %v336, %v803
    %v812 = vadd.f32 %v338, %v804
    %v813 = vadd.f32 %v413, %v805
    %v814 = vadd.f32 %v415, %v806
    %v815 = vxor.u32 %v811, 2147483648
    %v816 = vxor.u32 %v812, 2147483648
    %v817 = vxor.u32 %v813, 2147483648
    %v818 = vmul.f32 %v815, 1.442695
    %v819 = vpow.pop %v818
    %v820 = vmul.f32 %v816, 1.442695
    %v821 = vpow.pop %v820
    %v822 = vmul.f32 %v817, 1.442695
    %v823 = vpow.pop %v822
    %v824 = vadd.f32 %v819, 1.0
    %v825 = vadd.f32 %v821, 1.0
    %v826 = vadd.f32 %v823, 1.0
    %v827 = vrcp.pop %v824
    %v828 = vmul.f32 1.0, %v827
    %v829 = vrcp.pop %v825
    %v830 = vmul.f32 1.0, %v829
    %v831 = vrcp.pop %v826
    %v832 = vmul.f32 1.0, %v831
    %v833 = vtanh.pop %v814
    %v835 = vrot.slane %v654, 6
    %v837 = vmul.f32 %v830, %v835
    %v838 = vmul.f32 %v828, %v833
    %v839 = vadd.f32 %v837, %v838
    %v840 = vtanh.pop %v839
    %v841 = vmul.f32 %v832, %v840
    %v843 = vrot.slane %v841, 2
    %845 = vmatprep.subr.mxu0 %v484
    %846 = vmatpush1.msra.mxu0 %v483
    %847 = vmatprep.subr.mxu0 %v480
    %848 = vmatpush1.msra.mxu0 %v479
    %849 = vmatprep.subr.mxu0 %v476
    %850 = vmatpush1.msra.mxu0 %v475
    %851 = vmatprep.subr.mxu0 %v472
    %852 = vmatpush1.msra.mxu0 %v471
    %853 = vmatprep.subr.mxu0 %v468
    %854 = vmatpush1.msra.mxu0 %v467
    %855 = vmatprep.subr.mxu0 %v464
    %856 = vmatpush1.msra.mxu0 %v463
    %857 = vmatprep.subr.mxu0 %v460
    %858 = vmatpush1.msra.mxu0 %v459
    %859 = vmatprep.subr.mxu0 %v456
    %860 = vmatpush1.msra.mxu0 %v455
    %861 = vmatprep.subr.mxu0 %v452
    %862 = vmatpush1.msra.mxu0 %v451
    %863 = vmatprep.subr.mxu0 %v448
    %864 = vmatpush1.msra.mxu0 %v447
    %865 = vmatprep.subr.mxu0 %v444
    %866 = vmatpush1.msra.mxu0 %v443
    %867 = vmatprep.subr.mxu0 %v440
    %868 = vmatpush1.msra.mxu0 %v439
    %869 = vmatprep.subr.mxu0 %v436
    %870 = vmatpush1.msra.mxu0 %v435
    %871 = vmatprep.subr.mxu0 %v432
    %872 = vmatpush1.msra.mxu0 %v431
    %873 = vmatprep.subr.mxu0 %v428
    %874 = vmatpush1.msra.mxu0 %v427
    %875 = vmatprep.subr.mxu0 %v424
    %876 = vmatpush1.msra.mxu0 %v423
    %877 = vmatprep.subr.mxu0 0.0
    %878 = vmatpush2.msra.mxu0 0.0
    %879 = vmatprep.subr.mxu0 0.0
    %880 = vmatpush2.msra.mxu0 0.0
    %881 = vmatprep.subr.mxu0 0.0
    %882 = vmatpush2.msra.mxu0 0.0
    %883 = vmatprep.subr.mxu0 0.0
    %884 = vmatpush2.msra.mxu0 0.0
    %885 = vmatprep.subr.mxu0 0.0
    %886 = vmatpush2.msra.mxu0 0.0
    %887 = vmatprep.subr.mxu0 0.0
    %888 = vmatpush2.msra.mxu0 0.0
    %889 = vmatprep.subr.mxu0 0.0
    %890 = vmatpush2.msra.mxu0 0.0
    %891 = vmatprep.subr.mxu0 0.0
    %892 = vmatpush2.msra.mxu0 0.0
    %893 = vmatprep.subr.mxu0 0.0
    %894 = vmatpush2.msra.mxu0 0.0
    %895 = vmatprep.subr.mxu0 0.0
    %896 = vmatpush2.msra.mxu0 0.0
    %897 = vmatprep.subr.mxu0 0.0
    %898 = vmatpush2.msra.mxu0 0.0
    %899 = vmatprep.subr.mxu0 0.0
    %900 = vmatpush2.msra.mxu0 0.0
    %901 = vmatprep.subr.mxu0 0.0
    %902 = vmatpush2.msra.mxu0 0.0
    %903 = vmatprep.subr.mxu0 0.0
    %904 = vmatpush2.msra.mxu0 0.0
    %905 = vmatprep.subr.mxu0 0.0
    %906 = vmatpush2.msra.mxu0 0.0
    %907 = vmatprep.subr.mxu0 0.0
    %908 = vmatpush2.msra.mxu0 0.0
    %909 = vmatprep.mubr.f32.mxu0 0.0
    %910 = vmatmul.mubr.f32.gmra.mxu0 %v843
    %v911 = vpop.f32.mrf.mxu0
    %v912 = vadd.f32 0.0, %v911
    %v913 = vpop.f32.mrf.mxu0
    %v914 = vadd.f32 0.0, %v913
    %915 = vdwg.mxu0
    %916 = vmatprep.subr.mxu0 %v486
    %917 = vmatpush1.msra.mxu0 %v485
    %918 = vmatprep.subr.mxu0 %v482
    %919 = vmatpush1.msra.mxu0 %v481
    %920 = vmatprep.subr.mxu0 %v478
    %921 = vmatpush1.msra.mxu0 %v477
    %922 = vmatprep.subr.mxu0 %v474
    %923 = vmatpush1.msra.mxu0 %v473
    %924 = vmatprep.subr.mxu0 %v470
    %925 = vmatpush1.msra.mxu0 %v469
    %926 = vmatprep.subr.mxu0 %v466
    %927 = vmatpush1.msra.mxu0 %v465
    %928 = vmatprep.subr.mxu0 %v462
    %929 = vmatpush1.msra.mxu0 %v461
    %930 = vmatprep.subr.mxu0 %v458
    %931 = vmatpush1.msra.mxu0 %v457
    %932 = vmatprep.subr.mxu0 %v454
    %933 = vmatpush1.msra.mxu0 %v453
    %934 = vmatprep.subr.mxu0 %v450
    %935 = vmatpush1.msra.mxu0 %v449
    %936 = vmatprep.subr.mxu0 %v446
    %937 = vmatpush1.msra.mxu0 %v445
    %938 = vmatprep.subr.mxu0 %v442
    %939 = vmatpush1.msra.mxu0 %v441
    %940 = vmatprep.subr.mxu0 %v438
    %941 = vmatpush1.msra.mxu0 %v437
    %942 = vmatprep.subr.mxu0 %v434
    %943 = vmatpush1.msra.mxu0 %v433
    %944 = vmatprep.subr.mxu0 %v430
    %945 = vmatpush1.msra.mxu0 %v429
    %946 = vmatprep.subr.mxu0 %v426
    %947 = vmatpush1.msra.mxu0 %v425
    %948 = vmatprep.subr.mxu0 0.0
    %949 = vmatpush2.msra.mxu0 0.0
    %950 = vmatprep.subr.mxu0 0.0
    %951 = vmatpush2.msra.mxu0 0.0
    %952 = vmatprep.subr.mxu0 0.0
    %953 = vmatpush2.msra.mxu0 0.0
    %954 = vmatprep.subr.mxu0 0.0
    %955 = vmatpush2.msra.mxu0 0.0
    %956 = vmatprep.subr.mxu0 0.0
    %957 = vmatpush2.msra.mxu0 0.0
    %958 = vmatprep.subr.mxu0 0.0
    %959 = vmatpush2.msra.mxu0 0.0
    %960 = vmatprep.subr.mxu0 0.0
    %961 = vmatpush2.msra.mxu0 0.0
    %962 = vmatprep.subr.mxu0 0.0
    %963 = vmatpush2.msra.mxu0 0.0
    %964 = vmatprep.subr.mxu0 0.0
    %965 = vmatpush2.msra.mxu0 0.0
    %966 = vmatprep.subr.mxu0 0.0
    %967 = vmatpush2.msra.mxu0 0.0
    %968 = vmatprep.subr.mxu0 0.0
    %969 = vmatpush2.msra.mxu0 0.0
    %970 = vmatprep.subr.mxu0 0.0
    %971 = vmatpush2.msra.mxu0 0.0
    %972 = vmatprep.subr.mxu0 0.0
    %973 = vmatpush2.msra.mxu0 0.0
    %974 = vmatprep.subr.mxu0 0.0
    %975 = vmatpush2.msra.mxu0 0.0
    %976 = vmatprep.subr.mxu0 0.0
    %977 = vmatpush2.msra.mxu0 0.0
    %978 = vmatprep.subr.mxu0 0.0
    %979 = vmatpush2.msra.mxu0 0.0
    %980 = vmatprep.mubr.f32.mxu0 0.0
    %981 = vmatmul.mubr.f32.gmra.mxu0 %v843
    %v982 = vpop.f32.mrf.mxu0
    %v983 = vadd.f32 0.0, %v982
    %v984 = vpop.f32.mrf.mxu0
    %v985 = vadd.f32 0.0, %v984
    %986 = vdwg.mxu0
    %v991 = vrot.slane %v912, 4
    %v992 = vrot.slane %v914, 4
    %v993 = vrot.slane %v983, 4
    %v994 = vrot.slane %v985, 4
    %v999 = vadd.f32 %v336, %v991
    %v1000 = vadd.f32 %v338, %v992
    %v1001 = vadd.f32 %v413, %v993
    %v1002 = vadd.f32 %v415, %v994
    %v1003 = vxor.u32 %v999, 2147483648
    %v1004 = vxor.u32 %v1000, 2147483648
    %v1005 = vxor.u32 %v1001, 2147483648
    %v1006 = vmul.f32 %v1003, 1.442695
    %v1007 = vpow.pop %v1006
    %v1008 = vmul.f32 %v1004, 1.442695
    %v1009 = vpow.pop %v1008
    %v1010 = vmul.f32 %v1005, 1.442695
    %v1011 = vpow.pop %v1010
    %v1012 = vadd.f32 %v1007, 1.0
    %v1013 = vadd.f32 %v1009, 1.0
    %v1014 = vadd.f32 %v1011, 1.0
    %v1015 = vrcp.pop %v1012
    %v1016 = vmul.f32 1.0, %v1015
    %v1017 = vrcp.pop %v1013
    %v1018 = vmul.f32 1.0, %v1017
    %v1019 = vrcp.pop %v1014
    %v1020 = vmul.f32 1.0, %v1019
    %v1021 = vtanh.pop %v1002
    %v1023 = vrot.slane %v839, 6
    %v1025 = vmul.f32 %v1018, %v1023
    %v1026 = vmul.f32 %v1016, %v1021
    %v1027 = vadd.f32 %v1025, %v1026
    %v1028 = vtanh.pop %v1027
    %v1029 = vmul.f32 %v1020, %v1028
    %v1031 = vrot.slane %v1029, 4
    %1033 = vmatprep.subr.mxu0 %v484
    %1034 = vmatpush1.msra.mxu0 %v483
    %1035 = vmatprep.subr.mxu0 %v480
    %1036 = vmatpush1.msra.mxu0 %v479
    %1037 = vmatprep.subr.mxu0 %v476
    %1038 = vmatpush1.msra.mxu0 %v475
    %1039 = vmatprep.subr.mxu0 %v472
    %1040 = vmatpush1.msra.mxu0 %v471
    %1041 = vmatprep.subr.mxu0 %v468
    %1042 = vmatpush1.msra.mxu0 %v467
    %1043 = vmatprep.subr.mxu0 %v464
    %1044 = vmatpush1.msra.mxu0 %v463
    %1045 = vmatprep.subr.mxu0 %v460
    %1046 = vmatpush1.msra.mxu0 %v459
    %1047 = vmatprep.subr.mxu0 %v456
    %1048 = vmatpush1.msra.mxu0 %v455
    %1049 = vmatprep.subr.mxu0 %v452
    %1050 = vmatpush1.msra.mxu0 %v451
    %1051 = vmatprep.subr.mxu0 %v448
    %1052 = vmatpush1.msra.mxu0 %v447
    %1053 = vmatprep.subr.mxu0 %v444
    %1054 = vmatpush1.msra.mxu0 %v443
    %1055 = vmatprep.subr.mxu0 %v440
    %1056 = vmatpush1.msra.mxu0 %v439
    %1057 = vmatprep.subr.mxu0 %v436
    %1058 = vmatpush1.msra.mxu0 %v435
    %1059 = vmatprep.subr.mxu0 %v432
    %1060 = vmatpush1.msra.mxu0 %v431
    %1061 = vmatprep.subr.mxu0 %v428
    %1062 = vmatpush1.msra.mxu0 %v427
    %1063 = vmatprep.subr.mxu0 %v424
    %1064 = vmatpush1.msra.mxu0 %v423
    %1065 = vmatprep.subr.mxu0 0.0
    %1066 = vmatpush2.msra.mxu0 0.0
    %1067 = vmatprep.subr.mxu0 0.0
    %1068 = vmatpush2.msra.mxu0 0.0
    %1069 = vmatprep.subr.mxu0 0.0
    %1070 = vmatpush2.msra.mxu0 0.0
    %1071 = vmatprep.subr.mxu0 0.0
    %1072 = vmatpush2.msra.mxu0 0.0
    %1073 = vmatprep.subr.mxu0 0.0
    %1074 = vmatpush2.msra.mxu0 0.0
    %1075 = vmatprep.subr.mxu0 0.0
    %1076 = vmatpush2.msra.mxu0 0.0
    %1077 = vmatprep.subr.mxu0 0.0
    %1078 = vmatpush2.msra.mxu0 0.0
    %1079 = vmatprep.subr.mxu0 0.0
    %1080 = vmatpush2.msra.mxu0 0.0
    %1081 = vmatprep.subr.mxu0 0.0
    %1082 = vmatpush2.msra.mxu0 0.0
    %1083 = vmatprep.subr.mxu0 0.0
    %1084 = vmatpush2.msra.mxu0 0.0
    %1085 = vmatprep.subr.mxu0 0.0
    %1086 = vmatpush2.msra.mxu0 0.0
    %1087 = vmatprep.subr.mxu0 0.0
    %1088 = vmatpush2.msra.mxu0 0.0
    %1089 = vmatprep.subr.mxu0 0.0
    %1090 = vmatpush2.msra.mxu0 0.0
    %1091 = vmatprep.subr.mxu0 0.0
    %1092 = vmatpush2.msra.mxu0 0.0
    %1093 = vmatprep.subr.mxu0 0.0
    %1094 = vmatpush2.msra.mxu0 0.0
    %1095 = vmatprep.subr.mxu0 0.0
    %1096 = vmatpush2.msra.mxu0 0.0
    %1097 = vmatprep.mubr.f32.mxu0 0.0
    %1098 = vmatmul.mubr.f32.gmra.mxu0 %v1031
    %v1099 = vpop.f32.mrf.mxu0
    %v1100 = vadd.f32 0.0, %v1099
    %v1101 = vpop.f32.mrf.mxu0
    %v1102 = vadd.f32 0.0, %v1101
    %1103 = vdwg.mxu0
    %1104 = vmatprep.subr.mxu0 %v486
    %1105 = vmatpush1.msra.mxu0 %v485
    %1106 = vmatprep.subr.mxu0 %v482
    %1107 = vmatpush1.msra.mxu0 %v481
    %1108 = vmatprep.subr.mxu0 %v478
    %1109 = vmatpush1.msra.mxu0 %v477
    %1110 = vmatprep.subr.mxu0 %v474
    %1111 = vmatpush1.msra.mxu0 %v473
    %1112 = vmatprep.subr.mxu0 %v470
    %1113 = vmatpush1.msra.mxu0 %v469
    %1114 = vmatprep.subr.mxu0 %v466
    %1115 = vmatpush1.msra.mxu0 %v465
    %1116 = vmatprep.subr.mxu0 %v462
    %1117 = vmatpush1.msra.mxu0 %v461
    %1118 = vmatprep.subr.mxu0 %v458
    %1119 = vmatpush1.msra.mxu0 %v457
    %1120 = vmatprep.subr.mxu0 %v454
    %1121 = vmatpush1.msra.mxu0 %v453
    %1122 = vmatprep.subr.mxu0 %v450
    %1123 = vmatpush1.msra.mxu0 %v449
    %1124 = vmatprep.subr.mxu0 %v446
    %1125 = vmatpush1.msra.mxu0 %v445
    %1126 = vmatprep.subr.mxu0 %v442
    %1127 = vmatpush1.msra.mxu0 %v441
    %1128 = vmatprep.subr.mxu0 %v438
    %1129 = vmatpush1.msra.mxu0 %v437
    %1130 = vmatprep.subr.mxu0 %v434
    %1131 = vmatpush1.msra.mxu0 %v433
    %1132 = vmatprep.subr.mxu0 %v430
    %1133 = vmatpush1.msra.mxu0 %v429
    %1134 = vmatprep.subr.mxu0 %v426
    %1135 = vmatpush1.msra.mxu0 %v425
    %1136 = vmatprep.subr.mxu0 0.0
    %1137 = vmatpush2.msra.mxu0 0.0
    %1138 = vmatprep.subr.mxu0 0.0
    %1139 = vmatpush2.msra.mxu0 0.0
    %1140 = vmatprep.subr.mxu0 0.0
    %1141 = vmatpush2.msra.mxu0 0.0
    %1142 = vmatprep.subr.mxu0 0.0
    %1143 = vmatpush2.msra.mxu0 0.0
    %1144 = vmatprep.subr.mxu0 0.0
    %1145 = vmatpush2.msra.mxu0 0.0
    %1146 = vmatprep.subr.mxu0 0.0
    %1147 = vmatpush2.msra.mxu0 0.0
    %1148 = vmatprep.subr.mxu0 0.0
    %1149 = vmatpush2.msra.mxu0 0.0
    %1150 = vmatprep.subr.mxu0 0.0
    %1151 = vmatpush2.msra.mxu0 0.0
    %1152 = vmatprep.subr.mxu0 0.0
    %1153 = vmatpush2.msra.mxu0 0.0
    %1154 = vmatprep.subr.mxu0 0.0
    %1155 = vmatpush2.msra.mxu0 0.0
    %1156 = vmatprep.subr.mxu0 0.0
    %1157 = vmatpush2.msra.mxu0 0.0
    %1158 = vmatprep.subr.mxu0 0.0
    %1159 = vmatpush2.msra.mxu0 0.0
    %1160 = vmatprep.subr.mxu0 0.0
    %1161 = vmatpush2.msra.mxu0 0.0
    %1162 = vmatprep.subr.mxu0 0.0
    %1163 = vmatpush2.msra.mxu0 0.0
    %1164 = vmatprep.subr.mxu0 0.0
    %1165 = vmatpush2.msra.mxu0 0.0
    %1166 = vmatprep.subr.mxu0 0.0
    %1167 = vmatpush2.msra.mxu0 0.0
    %1168 = vmatprep.mubr.f32.mxu0 0.0
    %1169 = vmatmul.mubr.f32.gmra.mxu0 %v1031
    %v1170 = vpop.f32.mrf.mxu0
    %v1171 = vadd.f32 0.0, %v1170
    %v1172 = vpop.f32.mrf.mxu0
    %v1173 = vadd.f32 0.0, %v1172
    %1174 = vdwg.mxu0
    %v1179 = vrot.slane %v1100, 2
    %v1180 = vrot.slane %v1102, 2
    %v1181 = vrot.slane %v1171, 2
    %v1182 = vrot.slane %v1173, 2
    %v1187 = vadd.f32 %v336, %v1179
    %v1188 = vadd.f32 %v338, %v1180
    %v1189 = vadd.f32 %v413, %v1181
    %v1190 = vadd.f32 %v415, %v1182
    %v1191 = vxor.u32 %v1187, 2147483648
    %v1192 = vxor.u32 %v1188, 2147483648
    %v1193 = vxor.u32 %v1189, 2147483648
    %v1194 = vmul.f32 %v1191, 1.442695
    %v1195 = vpow.pop %v1194
    %v1196 = vmul.f32 %v1192, 1.442695
    %v1197 = vpow.pop %v1196
    %v1198 = vmul.f32 %v1193, 1.442695
    %v1199 = vpow.pop %v1198
    %v1200 = vadd.f32 %v1195, 1.0
    %v1201 = vadd.f32 %v1197, 1.0
    %v1202 = vadd.f32 %v1199, 1.0
    %v1203 = vrcp.pop %v1200
    %v1204 = vmul.f32 1.0, %v1203
    %v1205 = vrcp.pop %v1201
    %v1206 = vmul.f32 1.0, %v1205
    %v1207 = vrcp.pop %v1202
    %v1208 = vmul.f32 1.0, %v1207
    %v1209 = vtanh.pop %v1190
    %v1211 = vrot.slane %v1027, 6
    %v1213 = vmul.f32 %v1206, %v1211
    %v1214 = vmul.f32 %v1204, %v1209
    %v1215 = vadd.f32 %v1213, %v1214
    %v1216 = vtanh.pop %v1215
    %v1217 = vmul.f32 %v1208, %v1216
    %v1219 = vrot.slane %v1217, 6
    %1221 = vmatprep.subr.mxu0 %v484
    %1222 = vmatpush1.msra.mxu0 %v483
    %1223 = vmatprep.subr.mxu0 %v480
    %1224 = vmatpush1.msra.mxu0 %v479
    %1225 = vmatprep.subr.mxu0 %v476
    %1226 = vmatpush1.msra.mxu0 %v475
    %1227 = vmatprep.subr.mxu0 %v472
    %1228 = vmatpush1.msra.mxu0 %v471
    %1229 = vmatprep.subr.mxu0 %v468
    %1230 = vmatpush1.msra.mxu0 %v467
    %1231 = vmatprep.subr.mxu0 %v464
    %1232 = vmatpush1.msra.mxu0 %v463
    %1233 = vmatprep.subr.mxu0 %v460
    %1234 = vmatpush1.msra.mxu0 %v459
    %1235 = vmatprep.subr.mxu0 %v456
    %1236 = vmatpush1.msra.mxu0 %v455
    %1237 = vmatprep.subr.mxu0 %v452
    %1238 = vmatpush1.msra.mxu0 %v451
    %1239 = vmatprep.subr.mxu0 %v448
    %1240 = vmatpush1.msra.mxu0 %v447
    %1241 = vmatprep.subr.mxu0 %v444
    %1242 = vmatpush1.msra.mxu0 %v443
    %1243 = vmatprep.subr.mxu0 %v440
    %1244 = vmatpush1.msra.mxu0 %v439
    %1245 = vmatprep.subr.mxu0 %v436
    %1246 = vmatpush1.msra.mxu0 %v435
    %1247 = vmatprep.subr.mxu0 %v432
    %1248 = vmatpush1.msra.mxu0 %v431
    %1249 = vmatprep.subr.mxu0 %v428
    %1250 = vmatpush1.msra.mxu0 %v427
    %1251 = vmatprep.subr.mxu0 %v424
    %1252 = vmatpush1.msra.mxu0 %v423
    %1253 = vmatprep.subr.mxu0 0.0
    %1254 = vmatpush2.msra.mxu0 0.0
    %1255 = vmatprep.subr.mxu0 0.0
    %1256 = vmatpush2.msra.mxu0 0.0
    %1257 = vmatprep.subr.mxu0 0.0
    %1258 = vmatpush2.msra.mxu0 0.0
    %1259 = vmatprep.subr.mxu0 0.0
    %1260 = vmatpush2.msra.mxu0 0.0
    %1261 = vmatprep.subr.mxu0 0.0
    %1262 = vmatpush2.msra.mxu0 0.0
    %1263 = vmatprep.subr.mxu0 0.0
    %1264 = vmatpush2.msra.mxu0 0.0
    %1265 = vmatprep.subr.mxu0 0.0
    %1266 = vmatpush2.msra.mxu0 0.0
    %1267 = vmatprep.subr.mxu0 0.0
    %1268 = vmatpush2.msra.mxu0 0.0
    %1269 = vmatprep.subr.mxu0 0.0
    %1270 = vmatpush2.msra.mxu0 0.0
    %1271 = vmatprep.subr.mxu0 0.0
    %1272 = vmatpush2.msra.mxu0 0.0
    %1273 = vmatprep.subr.mxu0 0.0
    %1274 = vmatpush2.msra.mxu0 0.0
    %1275 = vmatprep.subr.mxu0 0.0
    %1276 = vmatpush2.msra.mxu0 0.0
    %1277 = vmatprep.subr.mxu0 0.0
    %1278 = vmatpush2.msra.mxu0 0.0
    %1279 = vmatprep.subr.mxu0 0.0
    %1280 = vmatpush2.msra.mxu0 0.0
    %1281 = vmatprep.subr.mxu0 0.0
    %1282 = vmatpush2.msra.mxu0 0.0
    %1283 = vmatprep.subr.mxu0 0.0
    %1284 = vmatpush2.msra.mxu0 0.0
    %1285 = vmatprep.mubr.f32.mxu0 0.0
    %1286 = vmatmul.mubr.f32.gmra.mxu0 %v1219
    %v1287 = vpop.f32.mrf.mxu0
    %v1288 = vadd.f32 0.0, %v1287
    %v1289 = vpop.f32.mrf.mxu0
    %v1290 = vadd.f32 0.0, %v1289
    %1291 = vdwg.mxu0
    %1292 = vmatprep.subr.mxu0 %v486
    %1293 = vmatpush1.msra.mxu0 %v485
    %1294 = vmatprep.subr.mxu0 %v482
    %1295 = vmatpush1.msra.mxu0 %v481
    %1296 = vmatprep.subr.mxu0 %v478
    %1297 = vmatpush1.msra.mxu0 %v477
    %1298 = vmatprep.subr.mxu0 %v474
    %1299 = vmatpush1.msra.mxu0 %v473
    %1300 = vmatprep.subr.mxu0 %v470
    %1301 = vmatpush1.msra.mxu0 %v469
    %1302 = vmatprep.subr.mxu0 %v466
    %1303 = vmatpush1.msra.mxu0 %v465
    %1304 = vmatprep.subr.mxu0 %v462
    %1305 = vmatpush1.msra.mxu0 %v461
    %1306 = vmatprep.subr.mxu0 %v458
    %1307 = vmatpush1.msra.mxu0 %v457
    %1308 = vmatprep.subr.mxu0 %v454
    %1309 = vmatpush1.msra.mxu0 %v453
    %1310 = vmatprep.subr.mxu0 %v450
    %1311 = vmatpush1.msra.mxu0 %v449
    %1312 = vmatprep.subr.mxu0 %v446
    %1313 = vmatpush1.msra.mxu0 %v445
    %1314 = vmatprep.subr.mxu0 %v442
    %1315 = vmatpush1.msra.mxu0 %v441
    %1316 = vmatprep.subr.mxu0 %v438
    %1317 = vmatpush1.msra.mxu0 %v437
    %1318 = vmatprep.subr.mxu0 %v434
    %1319 = vmatpush1.msra.mxu0 %v433
    %1320 = vmatprep.subr.mxu0 %v430
    %1321 = vmatpush1.msra.mxu0 %v429
    %1322 = vmatprep.subr.mxu0 %v426
    %1323 = vmatpush1.msra.mxu0 %v425
    %1324 = vmatprep.subr.mxu0 0.0
    %1325 = vmatpush2.msra.mxu0 0.0
    %1326 = vmatprep.subr.mxu0 0.0
    %1327 = vmatpush2.msra.mxu0 0.0
    %1328 = vmatprep.subr.mxu0 0.0
    %1329 = vmatpush2.msra.mxu0 0.0
    %1330 = vmatprep.subr.mxu0 0.0
    %1331 = vmatpush2.msra.mxu0 0.0
    %1332 = vmatprep.subr.mxu0 0.0
    %1333 = vmatpush2.msra.mxu0 0.0
    %1334 = vmatprep.subr.mxu0 0.0
    %1335 = vmatpush2.msra.mxu0 0.0
    %1336 = vmatprep.subr.mxu0 0.0
    %1337 = vmatpush2.msra.mxu0 0.0
    %1338 = vmatprep.subr.mxu0 0.0
    %1339 = vmatpush2.msra.mxu0 0.0
    %1340 = vmatprep.subr.mxu0 0.0
    %1341 = vmatpush2.msra.mxu0 0.0
    %1342 = vmatprep.subr.mxu0 0.0
    %1343 = vmatpush2.msra.mxu0 0.0
    %1344 = vmatprep.subr.mxu0 0.0
    %1345 = vmatpush2.msra.mxu0 0.0
    %1346 = vmatprep.subr.mxu0 0.0
    %1347 = vmatpush2.msra.mxu0 0.0
    %1348 = vmatprep.subr.mxu0 0.0
    %1349 = vmatpush2.msra.mxu0 0.0
    %1350 = vmatprep.subr.mxu0 0.0
    %1351 = vmatpush2.msra.mxu0 0.0
    %1352 = vmatprep.subr.mxu0 0.0
    %1353 = vmatpush2.msra.mxu0 0.0
    %1354 = vmatprep.subr.mxu0 0.0
    %1355 = vmatpush2.msra.mxu0 0.0
    %1356 = vmatprep.mubr.f32.mxu0 0.0
    %1357 = vmatmul.mubr.f32.gmra.mxu0 %v1219
    %v1358 = vpop.f32.mrf.mxu0
    %v1359 = vadd.f32 0.0, %v1358
    %v1360 = vpop.f32.mrf.mxu0
    %v1361 = vadd.f32 0.0, %v1360
    %1362 = vdwg.mxu0
    %v1363 = vadd.f32 %v342, %v1288
    %v1364 = vadd.f32 %v344, %v1290
    %v1365 = vadd.f32 %v419, %v1359
    %v1366 = vadd.f32 %v421, %v1361
    %v1367 = vxor.u32 %v1363, 2147483648
    %v1368 = vxor.u32 %v1364, 2147483648
    %v1369 = vxor.u32 %v1365, 2147483648
    %v1370 = vmul.f32 %v1367, 1.442695
    %v1371 = vpow.pop %v1370
    %v1372 = vmul.f32 %v1368, 1.442695
    %v1373 = vpow.pop %v1372
    %v1374 = vmul.f32 %v1369, 1.442695
    %v1375 = vpow.pop %v1374
    %v1376 = vadd.f32 %v1371, 1.0
    %v1377 = vadd.f32 %v1373, 1.0
    %v1378 = vadd.f32 %v1375, 1.0
    %v1379 = vrcp.pop %v1376
    %v1380 = vmul.f32 1.0, %v1379
    %v1381 = vrcp.pop %v1377
    %v1382 = vmul.f32 1.0, %v1381
    %v1383 = vrcp.pop %v1378
    %v1384 = vmul.f32 1.0, %v1383
    %v1385 = vtanh.pop %v1366
    %v1387 = vrot.slane %v1215, 6
    %v1389 = vmul.f32 %v1382, %v1387
    %v1390 = vmul.f32 %v1380, %v1385
    %v1391 = vadd.f32 %v1389, %v1390
    %v1392 = vtanh.pop %v1391
    %v1393 = vmul.f32 %v1384, %v1392
    %1394 = vmatprep.subr.mxu0 %v484
    %1395 = vmatpush1.msra.mxu0 %v483
    %1396 = vmatprep.subr.mxu0 %v480
    %1397 = vmatpush1.msra.mxu0 %v479
    %1398 = vmatprep.subr.mxu0 %v476
    %1399 = vmatpush1.msra.mxu0 %v475
    %1400 = vmatprep.subr.mxu0 %v472
    %1401 = vmatpush1.msra.mxu0 %v471
    %1402 = vmatprep.subr.mxu0 %v468
    %1403 = vmatpush1.msra.mxu0 %v467
    %1404 = vmatprep.subr.mxu0 %v464
    %1405 = vmatpush1.msra.mxu0 %v463
    %1406 = vmatprep.subr.mxu0 %v460
    %1407 = vmatpush1.msra.mxu0 %v459
    %1408 = vmatprep.subr.mxu0 %v456
    %1409 = vmatpush1.msra.mxu0 %v455
    %1410 = vmatprep.subr.mxu0 %v452
    %1411 = vmatpush1.msra.mxu0 %v451
    %1412 = vmatprep.subr.mxu0 %v448
    %1413 = vmatpush1.msra.mxu0 %v447
    %1414 = vmatprep.subr.mxu0 %v444
    %1415 = vmatpush1.msra.mxu0 %v443
    %1416 = vmatprep.subr.mxu0 %v440
    %1417 = vmatpush1.msra.mxu0 %v439
    %1418 = vmatprep.subr.mxu0 %v436
    %1419 = vmatpush1.msra.mxu0 %v435
    %1420 = vmatprep.subr.mxu0 %v432
    %1421 = vmatpush1.msra.mxu0 %v431
    %1422 = vmatprep.subr.mxu0 %v428
    %1423 = vmatpush1.msra.mxu0 %v427
    %1424 = vmatprep.subr.mxu0 %v424
    %1425 = vmatpush1.msra.mxu0 %v423
    %1426 = vmatprep.subr.mxu0 0.0
    %1427 = vmatpush2.msra.mxu0 0.0
    %1428 = vmatprep.subr.mxu0 0.0
    %1429 = vmatpush2.msra.mxu0 0.0
    %1430 = vmatprep.subr.mxu0 0.0
    %1431 = vmatpush2.msra.mxu0 0.0
    %1432 = vmatprep.subr.mxu0 0.0
    %1433 = vmatpush2.msra.mxu0 0.0
    %1434 = vmatprep.subr.mxu0 0.0
    %1435 = vmatpush2.msra.mxu0 0.0
    %1436 = vmatprep.subr.mxu0 0.0
    %1437 = vmatpush2.msra.mxu0 0.0
    %1438 = vmatprep.subr.mxu0 0.0
    %1439 = vmatpush2.msra.mxu0 0.0
    %1440 = vmatprep.subr.mxu0 0.0
    %1441 = vmatpush2.msra.mxu0 0.0
    %1442 = vmatprep.subr.mxu0 0.0
    %1443 = vmatpush2.msra.mxu0 0.0
    %1444 = vmatprep.subr.mxu0 0.0
    %1445 = vmatpush2.msra.mxu0 0.0
    %1446 = vmatprep.subr.mxu0 0.0
    %1447 = vmatpush2.msra.mxu0 0.0
    %1448 = vmatprep.subr.mxu0 0.0
    %1449 = vmatpush2.msra.mxu0 0.0
    %1450 = vmatprep.subr.mxu0 0.0
    %1451 = vmatpush2.msra.mxu0 0.0
    %1452 = vmatprep.subr.mxu0 0.0
    %1453 = vmatpush2.msra.mxu0 0.0
    %1454 = vmatprep.subr.mxu0 0.0
    %1455 = vmatpush2.msra.mxu0 0.0
    %1456 = vmatprep.subr.mxu0 0.0
    %1457 = vmatpush2.msra.mxu0 0.0
    %1458 = vmatprep.mubr.f32.mxu0 0.0
    %1459 = vmatmul.mubr.f32.gmra.mxu0 %v1393
    %v1460 = vpop.f32.mrf.mxu0
    %v1461 = vadd.f32 0.0, %v1460
    %v1462 = vpop.f32.mrf.mxu0
    %v1463 = vadd.f32 0.0, %v1462
    %1464 = vdwg.mxu0
    %1465 = vmatprep.subr.mxu0 %v486
    %1466 = vmatpush1.msra.mxu0 %v485
    %1467 = vmatprep.subr.mxu0 %v482
    %1468 = vmatpush1.msra.mxu0 %v481
    %1469 = vmatprep.subr.mxu0 %v478
    %1470 = vmatpush1.msra.mxu0 %v477
    %1471 = vmatprep.subr.mxu0 %v474
    %1472 = vmatpush1.msra.mxu0 %v473
    %1473 = vmatprep.subr.mxu0 %v470
    %1474 = vmatpush1.msra.mxu0 %v469
    %1475 = vmatprep.subr.mxu0 %v466
    %1476 = vmatpush1.msra.mxu0 %v465
    %1477 = vmatprep.subr.mxu0 %v462
    %1478 = vmatpush1.msra.mxu0 %v461
    %1479 = vmatprep.subr.mxu0 %v458
    %1480 = vmatpush1.msra.mxu0 %v457
    %1481 = vmatprep.subr.mxu0 %v454
    %1482 = vmatpush1.msra.mxu0 %v453
    %1483 = vmatprep.subr.mxu0 %v450
    %1484 = vmatpush1.msra.mxu0 %v449
    %1485 = vmatprep.subr.mxu0 %v446
    %1486 = vmatpush1.msra.mxu0 %v445
    %1487 = vmatprep.subr.mxu0 %v442
    %1488 = vmatpush1.msra.mxu0 %v441
    %1489 = vmatprep.subr.mxu0 %v438
    %1490 = vmatpush1.msra.mxu0 %v437
    %1491 = vmatprep.subr.mxu0 %v434
    %1492 = vmatpush1.msra.mxu0 %v433
    %1493 = vmatprep.subr.mxu0 %v430
    %1494 = vmatpush1.msra.mxu0 %v429
    %1495 = vmatprep.subr.mxu0 %v426
    %1496 = vmatpush1.msra.mxu0 %v425
    %1497 = vmatprep.subr.mxu0 0.0
    %1498 = vmatpush2.msra.mxu0 0.0
    %1499 = vmatprep.subr.mxu0 0.0
    %1500 = vmatpush2.msra.mxu0 0.0
    %1501 = vmatprep.subr.mxu0 0.0
    %1502 = vmatpush2.msra.mxu0 0.0
    %1503 = vmatprep.subr.mxu0 0.0
    %1504 = vmatpush2.msra.mxu0 0.0
    %1505 = vmatprep.subr.mxu0 0.0
    %1506 = vmatpush2.msra.mxu0 0.0
    %1507 = vmatprep.subr.mxu0 0.0
    %1508 = vmatpush2.msra.mxu0 0.0
    %1509 = vmatprep.subr.mxu0 0.0
    %1510 = vmatpush2.msra.mxu0 0.0
    %1511 = vmatprep.subr.mxu0 0.0
    %1512 = vmatpush2.msra.mxu0 0.0
    %1513 = vmatprep.subr.mxu0 0.0
    %1514 = vmatpush2.msra.mxu0 0.0
    %1515 = vmatprep.subr.mxu0 0.0
    %1516 = vmatpush2.msra.mxu0 0.0
    %1517 = vmatprep.subr.mxu0 0.0
    %1518 = vmatpush2.msra.mxu0 0.0
    %1519 = vmatprep.subr.mxu0 0.0
    %1520 = vmatpush2.msra.mxu0 0.0
    %1521 = vmatprep.subr.mxu0 0.0
    %1522 = vmatpush2.msra.mxu0 0.0
    %1523 = vmatprep.subr.mxu0 0.0
    %1524 = vmatpush2.msra.mxu0 0.0
    %1525 = vmatprep.subr.mxu0 0.0
    %1526 = vmatpush2.msra.mxu0 0.0
    %1527 = vmatprep.subr.mxu0 0.0
    %1528 = vmatpush2.msra.mxu0 0.0
    %1529 = vmatprep.mubr.f32.mxu0 0.0
    %1530 = vmatmul.mubr.f32.gmra.mxu0 %v1393
    %v1531 = vpop.f32.mrf.mxu0
    %v1532 = vadd.f32 0.0, %v1531
    %v1533 = vpop.f32.mrf.mxu0
    %v1534 = vadd.f32 0.0, %v1533
    %1535 = vdwg.mxu0
    %v1540 = vrot.slane %v1461, 6
    %v1541 = vrot.slane %v1463, 6
    %v1542 = vrot.slane %v1532, 6
    %v1543 = vrot.slane %v1534, 6
    %v1548 = vadd.f32 %v342, %v1540
    %v1549 = vadd.f32 %v344, %v1541
    %v1550 = vadd.f32 %v419, %v1542
    %v1551 = vadd.f32 %v421, %v1543
    %v1552 = vxor.u32 %v1548, 2147483648
    %v1553 = vxor.u32 %v1549, 2147483648
    %v1554 = vxor.u32 %v1550, 2147483648
    %v1555 = vmul.f32 %v1552, 1.442695
    %v1556 = vpow.pop %v1555
    %v1557 = vmul.f32 %v1553, 1.442695
    %v1558 = vpow.pop %v1557
    %v1559 = vmul.f32 %v1554, 1.442695
    %v1560 = vpow.pop %v1559
    %v1561 = vadd.f32 %v1556, 1.0
    %v1562 = vadd.f32 %v1558, 1.0
    %v1563 = vadd.f32 %v1560, 1.0
    %v1564 = vrcp.pop %v1561
    %v1565 = vmul.f32 1.0, %v1564
    %v1566 = vrcp.pop %v1562
    %v1567 = vmul.f32 1.0, %v1566
    %v1568 = vrcp.pop %v1563
    %v1569 = vmul.f32 1.0, %v1568
    %v1570 = vtanh.pop %v1551
    %v1572 = vrot.slane %v1391, 6
    %v1574 = vmul.f32 %v1567, %v1572
    %v1575 = vmul.f32 %v1565, %v1570
    %v1576 = vadd.f32 %v1574, %v1575
    %v1577 = vtanh.pop %v1576
    %v1578 = vmul.f32 %v1569, %v1577
    %v1580 = vrot.slane %v1578, 2
    %1582 = vmatprep.subr.mxu0 %v484
    %1583 = vmatpush1.msra.mxu0 %v483
    %1584 = vmatprep.subr.mxu0 %v480
    %1585 = vmatpush1.msra.mxu0 %v479
    %1586 = vmatprep.subr.mxu0 %v476
    %1587 = vmatpush1.msra.mxu0 %v475
    %1588 = vmatprep.subr.mxu0 %v472
    %1589 = vmatpush1.msra.mxu0 %v471
    %1590 = vmatprep.subr.mxu0 %v468
    %1591 = vmatpush1.msra.mxu0 %v467
    %1592 = vmatprep.subr.mxu0 %v464
    %1593 = vmatpush1.msra.mxu0 %v463
    %1594 = vmatprep.subr.mxu0 %v460
    %1595 = vmatpush1.msra.mxu0 %v459
    %1596 = vmatprep.subr.mxu0 %v456
    %1597 = vmatpush1.msra.mxu0 %v455
    %1598 = vmatprep.subr.mxu0 %v452
    %1599 = vmatpush1.msra.mxu0 %v451
    %1600 = vmatprep.subr.mxu0 %v448
    %1601 = vmatpush1.msra.mxu0 %v447
    %1602 = vmatprep.subr.mxu0 %v444
    %1603 = vmatpush1.msra.mxu0 %v443
    %1604 = vmatprep.subr.mxu0 %v440
    %1605 = vmatpush1.msra.mxu0 %v439
    %1606 = vmatprep.subr.mxu0 %v436
    %1607 = vmatpush1.msra.mxu0 %v435
    %1608 = vmatprep.subr.mxu0 %v432
    %1609 = vmatpush1.msra.mxu0 %v431
    %1610 = vmatprep.subr.mxu0 %v428
    %1611 = vmatpush1.msra.mxu0 %v427
    %1612 = vmatprep.subr.mxu0 %v424
    %1613 = vmatpush1.msra.mxu0 %v423
    %1614 = vmatprep.subr.mxu0 0.0
    %1615 = vmatpush2.msra.mxu0 0.0
    %1616 = vmatprep.subr.mxu0 0.0
    %1617 = vmatpush2.msra.mxu0 0.0
    %1618 = vmatprep.subr.mxu0 0.0
    %1619 = vmatpush2.msra.mxu0 0.0
    %1620 = vmatprep.subr.mxu0 0.0
    %1621 = vmatpush2.msra.mxu0 0.0
    %1622 = vmatprep.subr.mxu0 0.0
    %1623 = vmatpush2.msra.mxu0 0.0
    %1624 = vmatprep.subr.mxu0 0.0
    %1625 = vmatpush2.msra.mxu0 0.0
    %1626 = vmatprep.subr.mxu0 0.0
    %1627 = vmatpush2.msra.mxu0 0.0
    %1628 = vmatprep.subr.mxu0 0.0
    %1629 = vmatpush2.msra.mxu0 0.0
    %1630 = vmatprep.subr.mxu0 0.0
    %1631 = vmatpush2.msra.mxu0 0.0
    %1632 = vmatprep.subr.mxu0 0.0
    %1633 = vmatpush2.msra.mxu0 0.0
    %1634 = vmatprep.subr.mxu0 0.0
    %1635 = vmatpush2.msra.mxu0 0.0
    %1636 = vmatprep.subr.mxu0 0.0
    %1637 = vmatpush2.msra.mxu0 0.0
    %1638 = vmatprep.subr.mxu0 0.0
    %1639 = vmatpush2.msra.mxu0 0.0
    %1640 = vmatprep.subr.mxu0 0.0
    %1641 = vmatpush2.msra.mxu0 0.0
    %1642 = vmatprep.subr.mxu0 0.0
    %1643 = vmatpush2.msra.mxu0 0.0
    %1644 = vmatprep.subr.mxu0 0.0
    %1645 = vmatpush2.msra.mxu0 0.0
    %1646 = vmatprep.mubr.f32.mxu0 0.0
    %1647 = vmatmul.mubr.f32.gmra.mxu0 %v1580
    %v1648 = vpop.f32.mrf.mxu0
    %v1649 = vadd.f32 0.0, %v1648
    %v1650 = vpop.f32.mrf.mxu0
    %v1651 = vadd.f32 0.0, %v1650
    %1652 = vdwg.mxu0
    %1653 = vmatprep.subr.mxu0 %v486
    %1654 = vmatpush1.msra.mxu0 %v485
    %1655 = vmatprep.subr.mxu0 %v482
    %1656 = vmatpush1.msra.mxu0 %v481
    %1657 = vmatprep.subr.mxu0 %v478
    %1658 = vmatpush1.msra.mxu0 %v477
    %1659 = vmatprep.subr.mxu0 %v474
    %1660 = vmatpush1.msra.mxu0 %v473
    %1661 = vmatprep.subr.mxu0 %v470
    %1662 = vmatpush1.msra.mxu0 %v469
    %1663 = vmatprep.subr.mxu0 %v466
    %1664 = vmatpush1.msra.mxu0 %v465
    %1665 = vmatprep.subr.mxu0 %v462
    %1666 = vmatpush1.msra.mxu0 %v461
    %1667 = vmatprep.subr.mxu0 %v458
    %1668 = vmatpush1.msra.mxu0 %v457
    %1669 = vmatprep.subr.mxu0 %v454
    %1670 = vmatpush1.msra.mxu0 %v453
    %1671 = vmatprep.subr.mxu0 %v450
    %1672 = vmatpush1.msra.mxu0 %v449
    %1673 = vmatprep.subr.mxu0 %v446
    %1674 = vmatpush1.msra.mxu0 %v445
    %1675 = vmatprep.subr.mxu0 %v442
    %1676 = vmatpush1.msra.mxu0 %v441
    %1677 = vmatprep.subr.mxu0 %v438
    %1678 = vmatpush1.msra.mxu0 %v437
    %1679 = vmatprep.subr.mxu0 %v434
    %1680 = vmatpush1.msra.mxu0 %v433
    %1681 = vmatprep.subr.mxu0 %v430
    %1682 = vmatpush1.msra.mxu0 %v429
    %1683 = vmatprep.subr.mxu0 %v426
    %1684 = vmatpush1.msra.mxu0 %v425
    %1685 = vmatprep.subr.mxu0 0.0
    %1686 = vmatpush2.msra.mxu0 0.0
    %1687 = vmatprep.subr.mxu0 0.0
    %1688 = vmatpush2.msra.mxu0 0.0
    %1689 = vmatprep.subr.mxu0 0.0
    %1690 = vmatpush2.msra.mxu0 0.0
    %1691 = vmatprep.subr.mxu0 0.0
    %1692 = vmatpush2.msra.mxu0 0.0
    %1693 = vmatprep.subr.mxu0 0.0
    %1694 = vmatpush2.msra.mxu0 0.0
    %1695 = vmatprep.subr.mxu0 0.0
    %1696 = vmatpush2.msra.mxu0 0.0
    %1697 = vmatprep.subr.mxu0 0.0
    %1698 = vmatpush2.msra.mxu0 0.0
    %1699 = vmatprep.subr.mxu0 0.0
    %1700 = vmatpush2.msra.mxu0 0.0
    %1701 = vmatprep.subr.mxu0 0.0
    %1702 = vmatpush2.msra.mxu0 0.0
    %1703 = vmatprep.subr.mxu0 0.0
    %1704 = vmatpush2.msra.mxu0 0.0
    %1705 = vmatprep.subr.mxu0 0.0
    %1706 = vmatpush2.msra.mxu0 0.0
    %1707 = vmatprep.subr.mxu0 0.0
    %1708 = vmatpush2.msra.mxu0 0.0
    %1709 = vmatprep.subr.mxu0 0.0
    %1710 = vmatpush2.msra.mxu0 0.0
    %1711 = vmatprep.subr.mxu0 0.0
    %1712 = vmatpush2.msra.mxu0 0.0
    %1713 = vmatprep.subr.mxu0 0.0
    %1714 = vmatpush2.msra.mxu0 0.0
    %1715 = vmatprep.subr.mxu0 0.0
    %1716 = vmatpush2.msra.mxu0 0.0
    %1717 = vmatprep.mubr.f32.mxu0 0.0
    %1718 = vmatmul.mubr.f32.gmra.mxu0 %v1580
    %v1719 = vpop.f32.mrf.mxu0
    %v1720 = vadd.f32 0.0, %v1719
    %v1721 = vpop.f32.mrf.mxu0
    %v1722 = vadd.f32 0.0, %v1721
    %1723 = vdwg.mxu0
    %v1728 = vrot.slane %v1649, 4
    %v1729 = vrot.slane %v1651, 4
    %v1730 = vrot.slane %v1720, 4
    %v1731 = vrot.slane %v1722, 4
    %v1736 = vadd.f32 %v342, %v1728
    %v1737 = vadd.f32 %v344, %v1729
    %v1738 = vadd.f32 %v419, %v1730
    %v1739 = vadd.f32 %v421, %v1731
    %v1740 = vxor.u32 %v1736, 2147483648
    %v1741 = vxor.u32 %v1737, 2147483648
    %v1742 = vxor.u32 %v1738, 2147483648
    %v1743 = vmul.f32 %v1740, 1.442695
    %v1744 = vpow.pop %v1743
    %v1745 = vmul.f32 %v1741, 1.442695
    %v1746 = vpow.pop %v1745
    %v1747 = vmul.f32 %v1742, 1.442695
    %v1748 = vpow.pop %v1747
    %v1749 = vadd.f32 %v1744, 1.0
    %v1750 = vadd.f32 %v1746, 1.0
    %v1751 = vadd.f32 %v1748, 1.0
    %v1752 = vrcp.pop %v1749
    %v1753 = vmul.f32 1.0, %v1752
    %v1754 = vrcp.pop %v1750
    %v1755 = vmul.f32 1.0, %v1754
    %v1756 = vrcp.pop %v1751
    %v1757 = vmul.f32 1.0, %v1756
    %v1758 = vtanh.pop %v1739
    %v1760 = vrot.slane %v1576, 6
    %v1762 = vmul.f32 %v1755, %v1760
    %v1763 = vmul.f32 %v1753, %v1758
    %v1764 = vadd.f32 %v1762, %v1763
    %v1765 = vtanh.pop %v1764
    %v1766 = vmul.f32 %v1757, %v1765
    %v1768 = vrot.slane %v1766, 4
    %1770 = vmatprep.subr.mxu0 %v484
    %1771 = vmatpush1.msra.mxu0 %v483
    %1772 = vmatprep.subr.mxu0 %v480
    %1773 = vmatpush1.msra.mxu0 %v479
    %1774 = vmatprep.subr.mxu0 %v476
    %1775 = vmatpush1.msra.mxu0 %v475
    %1776 = vmatprep.subr.mxu0 %v472
    %1777 = vmatpush1.msra.mxu0 %v471
    %1778 = vmatprep.subr.mxu0 %v468
    %1779 = vmatpush1.msra.mxu0 %v467
    %1780 = vmatprep.subr.mxu0 %v464
    %1781 = vmatpush1.msra.mxu0 %v463
    %1782 = vmatprep.subr.mxu0 %v460
    %1783 = vmatpush1.msra.mxu0 %v459
    %1784 = vmatprep.subr.mxu0 %v456
    %1785 = vmatpush1.msra.mxu0 %v455
    %1786 = vmatprep.subr.mxu0 %v452
    %1787 = vmatpush1.msra.mxu0 %v451
    %1788 = vmatprep.subr.mxu0 %v448
    %1789 = vmatpush1.msra.mxu0 %v447
    %1790 = vmatprep.subr.mxu0 %v444
    %1791 = vmatpush1.msra.mxu0 %v443
    %1792 = vmatprep.subr.mxu0 %v440
    %1793 = vmatpush1.msra.mxu0 %v439
    %1794 = vmatprep.subr.mxu0 %v436
    %1795 = vmatpush1.msra.mxu0 %v435
    %1796 = vmatprep.subr.mxu0 %v432
    %1797 = vmatpush1.msra.mxu0 %v431
    %1798 = vmatprep.subr.mxu0 %v428
    %1799 = vmatpush1.msra.mxu0 %v427
    %1800 = vmatprep.subr.mxu0 %v424
    %1801 = vmatpush1.msra.mxu0 %v423
    %1802 = vmatprep.subr.mxu0 0.0
    %1803 = vmatpush2.msra.mxu0 0.0
    %1804 = vmatprep.subr.mxu0 0.0
    %1805 = vmatpush2.msra.mxu0 0.0
    %1806 = vmatprep.subr.mxu0 0.0
    %1807 = vmatpush2.msra.mxu0 0.0
    %1808 = vmatprep.subr.mxu0 0.0
    %1809 = vmatpush2.msra.mxu0 0.0
    %1810 = vmatprep.subr.mxu0 0.0
    %1811 = vmatpush2.msra.mxu0 0.0
    %1812 = vmatprep.subr.mxu0 0.0
    %1813 = vmatpush2.msra.mxu0 0.0
    %1814 = vmatprep.subr.mxu0 0.0
    %1815 = vmatpush2.msra.mxu0 0.0
    %1816 = vmatprep.subr.mxu0 0.0
    %1817 = vmatpush2.msra.mxu0 0.0
    %1818 = vmatprep.subr.mxu0 0.0
    %1819 = vmatpush2.msra.mxu0 0.0
    %1820 = vmatprep.subr.mxu0 0.0
    %1821 = vmatpush2.msra.mxu0 0.0
    %1822 = vmatprep.subr.mxu0 0.0
    %1823 = vmatpush2.msra.mxu0 0.0
    %1824 = vmatprep.subr.mxu0 0.0
    %1825 = vmatpush2.msra.mxu0 0.0
    %1826 = vmatprep.subr.mxu0 0.0
    %1827 = vmatpush2.msra.mxu0 0.0
    %1828 = vmatprep.subr.mxu0 0.0
    %1829 = vmatpush2.msra.mxu0 0.0
    %1830 = vmatprep.subr.mxu0 0.0
    %1831 = vmatpush2.msra.mxu0 0.0
    %1832 = vmatprep.subr.mxu0 0.0
    %1833 = vmatpush2.msra.mxu0 0.0
    %1834 = vmatprep.mubr.f32.mxu0 0.0
    %1835 = vmatmul.mubr.f32.gmra.mxu0 %v1768
    %v1836 = vpop.f32.mrf.mxu0
    %v1837 = vadd.f32 0.0, %v1836
    %v1838 = vpop.f32.mrf.mxu0
    %v1839 = vadd.f32 0.0, %v1838
    %1840 = vdwg.mxu0
    %1841 = vmatprep.subr.mxu0 %v486
    %1842 = vmatpush1.msra.mxu0 %v485
    %1843 = vmatprep.subr.mxu0 %v482
    %1844 = vmatpush1.msra.mxu0 %v481
    %1845 = vmatprep.subr.mxu0 %v478
    %1846 = vmatpush1.msra.mxu0 %v477
    %1847 = vmatprep.subr.mxu0 %v474
    %1848 = vmatpush1.msra.mxu0 %v473
    %1849 = vmatprep.subr.mxu0 %v470
    %1850 = vmatpush1.msra.mxu0 %v469
    %1851 = vmatprep.subr.mxu0 %v466
    %1852 = vmatpush1.msra.mxu0 %v465
    %1853 = vmatprep.subr.mxu0 %v462
    %1854 = vmatpush1.msra.mxu0 %v461
    %1855 = vmatprep.subr.mxu0 %v458
    %1856 = vmatpush1.msra.mxu0 %v457
    %1857 = vmatprep.subr.mxu0 %v454
    %1858 = vmatpush1.msra.mxu0 %v453
    %1859 = vmatprep.subr.mxu0 %v450
    %1860 = vmatpush1.msra.mxu0 %v449
    %1861 = vmatprep.subr.mxu0 %v446
    %1862 = vmatpush1.msra.mxu0 %v445
    %1863 = vmatprep.subr.mxu0 %v442
    %1864 = vmatpush1.msra.mxu0 %v441
    %1865 = vmatprep.subr.mxu0 %v438
    %1866 = vmatpush1.msra.mxu0 %v437
    %1867 = vmatprep.subr.mxu0 %v434
    %1868 = vmatpush1.msra.mxu0 %v433
    %1869 = vmatprep.subr.mxu0 %v430
    %1870 = vmatpush1.msra.mxu0 %v429
    %1871 = vmatprep.subr.mxu0 %v426
    %1872 = vmatpush1.msra.mxu0 %v425
    %1873 = vmatprep.subr.mxu0 0.0
    %1874 = vmatpush2.msra.mxu0 0.0
    %1875 = vmatprep.subr.mxu0 0.0
    %1876 = vmatpush2.msra.mxu0 0.0
    %1877 = vmatprep.subr.mxu0 0.0
    %1878 = vmatpush2.msra.mxu0 0.0
    %1879 = vmatprep.subr.mxu0 0.0
    %1880 = vmatpush2.msra.mxu0 0.0
    %1881 = vmatprep.subr.mxu0 0.0
    %1882 = vmatpush2.msra.mxu0 0.0
    %1883 = vmatprep.subr.mxu0 0.0
    %1884 = vmatpush2.msra.mxu0 0.0
    %1885 = vmatprep.subr.mxu0 0.0
    %1886 = vmatpush2.msra.mxu0 0.0
    %1887 = vmatprep.subr.mxu0 0.0
    %1888 = vmatpush2.msra.mxu0 0.0
    %1889 = vmatprep.subr.mxu0 0.0
    %1890 = vmatpush2.msra.mxu0 0.0
    %1891 = vmatprep.subr.mxu0 0.0
    %1892 = vmatpush2.msra.mxu0 0.0
    %1893 = vmatprep.subr.mxu0 0.0
    %1894 = vmatpush2.msra.mxu0 0.0
    %1895 = vmatprep.subr.mxu0 0.0
    %1896 = vmatpush2.msra.mxu0 0.0
    %1897 = vmatprep.subr.mxu0 0.0
    %1898 = vmatpush2.msra.mxu0 0.0
    %1899 = vmatprep.subr.mxu0 0.0
    %1900 = vmatpush2.msra.mxu0 0.0
    %1901 = vmatprep.subr.mxu0 0.0
    %1902 = vmatpush2.msra.mxu0 0.0
    %1903 = vmatprep.subr.mxu0 0.0
    %1904 = vmatpush2.msra.mxu0 0.0
    %1905 = vmatprep.mubr.f32.mxu0 0.0
    %1906 = vmatmul.mubr.f32.gmra.mxu0 %v1768
    %v1907 = vpop.f32.mrf.mxu0
    %v1908 = vadd.f32 0.0, %v1907
    %v1909 = vpop.f32.mrf.mxu0
    %v1910 = vadd.f32 0.0, %v1909
    %1911 = vdwg.mxu0
    %v1916 = vrot.slane %v1837, 2
    %v1917 = vrot.slane %v1839, 2
    %v1918 = vrot.slane %v1908, 2
    %v1919 = vrot.slane %v1910, 2
    %v1924 = vadd.f32 %v342, %v1916
    %v1925 = vadd.f32 %v344, %v1917
    %v1926 = vadd.f32 %v419, %v1918
    %v1927 = vadd.f32 %v421, %v1919
    %v1928 = vxor.u32 %v1924, 2147483648
    %v1929 = vxor.u32 %v1925, 2147483648
    %v1930 = vxor.u32 %v1926, 2147483648
    %v1931 = vmul.f32 %v1928, 1.442695
    %v1932 = vpow.pop %v1931
    %v1933 = vmul.f32 %v1929, 1.442695
    %v1934 = vpow.pop %v1933
    %v1935 = vmul.f32 %v1930, 1.442695
    %v1936 = vpow.pop %v1935
    %v1937 = vadd.f32 %v1932, 1.0
    %v1938 = vadd.f32 %v1934, 1.0
    %v1939 = vadd.f32 %v1936, 1.0
    %v1940 = vrcp.pop %v1937
    %v1941 = vmul.f32 1.0, %v1940
    %v1942 = vrcp.pop %v1938
    %v1943 = vmul.f32 1.0, %v1942
    %v1944 = vrcp.pop %v1939
    %v1945 = vmul.f32 1.0, %v1944
    %v1946 = vtanh.pop %v1927
    %v1948 = vrot.slane %v1764, 6
    %v1950 = vmul.f32 %v1943, %v1948
    %v1951 = vmul.f32 %v1941, %v1946
    %v1952 = vadd.f32 %v1950, %v1951
    %v1953 = vtanh.pop %v1952
    %v1954 = vmul.f32 %v1945, %v1953
    %s1955 = scalar_lea.vmem [#allocation2], 896
    %v1956 = vld [vmem:[%s1955] sm:$0xff]
    %v1957 = vld [vmem:[%s1955 + $0x8] sm:$0xff]
    %v1958 = vld [vmem:[%s1955 + $0x10] sm:$0xff]
    %v1959 = vld [vmem:[%s1955 + $0x18] sm:$0xff]
    %v1960 = vld [vmem:[%s1955 + $0x20] sm:$0xff]
    %v1961 = vld [vmem:[%s1955 + $0x28] sm:$0xff]
    %v1962 = vld [vmem:[%s1955 + $0x30] sm:$0xff]
    %v1963 = vld [vmem:[%s1955 + $0x38] sm:$0xff]
    %v1964 = vld [vmem:[%s1955 + $0x40] sm:$0xff]
    %v1965 = vld [vmem:[%s1955 + $0x48] sm:$0xff]
    %v1966 = vld [vmem:[%s1955 + $0x50] sm:$0xff]
    %v1967 = vld [vmem:[%s1955 + $0x58] sm:$0xff]
    %v1968 = vld [vmem:[%s1955 + $0x60] sm:$0xff]
    %v1969 = vld [vmem:[%s1955 + $0x68] sm:$0xff]
    %v1970 = vld [vmem:[%s1955 + $0x70] sm:$0xff]
    %v1971 = vld [vmem:[%s1955 + $0x78] sm:$0xff]
    %v1972 = vld [vmem:[%s1955 + $0x80] sm:$0xff]
    %v1973 = vld [vmem:[%s1955 + $0x88] sm:$0xff]
    %v1974 = vld [vmem:[%s1955 + $0x90] sm:$0xff]
    %v1975 = vld [vmem:[%s1955 + $0x98] sm:$0xff]
    %v1976 = vld [vmem:[%s1955 + $0xa0] sm:$0xff]
    %v1977 = vld [vmem:[%s1955 + $0xa8] sm:$0xff]
    %v1978 = vld [vmem:[%s1955 + $0xb0] sm:$0xff]
    %v1979 = vld [vmem:[%s1955 + $0xb8] sm:$0xff]
    %v1980 = vld [vmem:[%s1955 + $0xc0] sm:$0xff]
    %v1981 = vld [vmem:[%s1955 + $0xc8] sm:$0xff]
    %v1982 = vld [vmem:[%s1955 + $0xd0] sm:$0xff]
    %v1983 = vld [vmem:[%s1955 + $0xd8] sm:$0xff]
    %v1984 = vld [vmem:[%s1955 + $0xe0] sm:$0xff]
    %v1985 = vld [vmem:[%s1955 + $0xe8] sm:$0xff]
    %v1986 = vld [vmem:[%s1955 + $0xf0] sm:$0xff]
    %v1987 = vld [vmem:[%s1955 + $0xf8] sm:$0xff]
    %v1988 = vld [vmem:[%s1955 + $0x100] sm:$0xff]
    %v1989 = vld [vmem:[%s1955 + $0x108] sm:$0xff]
    %v1990 = vld [vmem:[%s1955 + $0x110] sm:$0xff]
    %v1991 = vld [vmem:[%s1955 + $0x118] sm:$0xff]
    %v1992 = vld [vmem:[%s1955 + $0x120] sm:$0xff]
    %v1993 = vld [vmem:[%s1955 + $0x128] sm:$0xff]
    %v1994 = vld [vmem:[%s1955 + $0x130] sm:$0xff]
    %v1995 = vld [vmem:[%s1955 + $0x138] sm:$0xff]
    %v1996 = vld [vmem:[%s1955 + $0x140] sm:$0xff]
    %v1997 = vld [vmem:[%s1955 + $0x148] sm:$0xff]
    %v1998 = vld [vmem:[%s1955 + $0x150] sm:$0xff]
    %v1999 = vld [vmem:[%s1955 + $0x158] sm:$0xff]
    %v2000 = vld [vmem:[%s1955 + $0x160] sm:$0xff]
    %v2001 = vld [vmem:[%s1955 + $0x168] sm:$0xff]
    %v2002 = vld [vmem:[%s1955 + $0x170] sm:$0xff]
    %v2003 = vld [vmem:[%s1955 + $0x178] sm:$0xff]
    %v2004 = vld [vmem:[%s1955 + $0x180] sm:$0xff]
    %v2005 = vld [vmem:[%s1955 + $0x188] sm:$0xff]
    %v2006 = vld [vmem:[%s1955 + $0x190] sm:$0xff]
    %v2007 = vld [vmem:[%s1955 + $0x198] sm:$0xff]
    %v2008 = vld [vmem:[%s1955 + $0x1a0] sm:$0xff]
    %v2009 = vld [vmem:[%s1955 + $0x1a8] sm:$0xff]
    %v2010 = vld [vmem:[%s1955 + $0x1b0] sm:$0xff]
    %v2011 = vld [vmem:[%s1955 + $0x1b8] sm:$0xff]
    %v2012 = vld [vmem:[%s1955 + $0x1c0] sm:$0xff]
    %v2013 = vld [vmem:[%s1955 + $0x1c8] sm:$0xff]
    %v2014 = vld [vmem:[%s1955 + $0x1d0] sm:$0xff]
    %v2015 = vld [vmem:[%s1955 + $0x1d8] sm:$0xff]
    %v2016 = vld [vmem:[%s1955 + $0x1e0] sm:$0xff]
    %v2017 = vld [vmem:[%s1955 + $0x1e8] sm:$0xff]
    %v2018 = vld [vmem:[%s1955 + $0x1f0] sm:$0xff]
    %v2019 = vld [vmem:[%s1955 + $0x1f8] sm:$0xff]
    %v2020 = vld [vmem:[%s1955 + $0x200] sm:$0xff]
    %v2021 = vld [vmem:[%s1955 + $0x208] sm:$0xff]
    %v2022 = vld [vmem:[%s1955 + $0x210] sm:$0xff]
    %v2023 = vld [vmem:[%s1955 + $0x218] sm:$0xff]
    %v2024 = vld [vmem:[%s1955 + $0x220] sm:$0xff]
    %v2025 = vld [vmem:[%s1955 + $0x228] sm:$0xff]
    %v2026 = vld [vmem:[%s1955 + $0x230] sm:$0xff]
    %v2027 = vld [vmem:[%s1955 + $0x238] sm:$0xff]
    %v2028 = vld [vmem:[%s1955 + $0x240] sm:$0xff]
    %v2029 = vld [vmem:[%s1955 + $0x248] sm:$0xff]
    %v2030 = vld [vmem:[%s1955 + $0x250] sm:$0xff]
    %v2031 = vld [vmem:[%s1955 + $0x258] sm:$0xff]
    %v2032 = vld [vmem:[%s1955 + $0x260] sm:$0xff]
    %v2033 = vld [vmem:[%s1955 + $0x268] sm:$0xff]
    %v2034 = vld [vmem:[%s1955 + $0x270] sm:$0xff]
    %v2035 = vld [vmem:[%s1955 + $0x278] sm:$0xff]
    %v2036 = vld [vmem:[%s1955 + $0x280] sm:$0xff]
    %v2037 = vld [vmem:[%s1955 + $0x288] sm:$0xff]
    %v2038 = vld [vmem:[%s1955 + $0x290] sm:$0xff]
    %v2039 = vld [vmem:[%s1955 + $0x298] sm:$0xff]
    %v2040 = vld [vmem:[%s1955 + $0x2a0] sm:$0xff]
    %v2041 = vld [vmem:[%s1955 + $0x2a8] sm:$0xff]
    %v2042 = vld [vmem:[%s1955 + $0x2b0] sm:$0xff]
    %v2043 = vld [vmem:[%s1955 + $0x2b8] sm:$0xff]
    %v2044 = vld [vmem:[%s1955 + $0x2c0] sm:$0xff]
    %v2045 = vld [vmem:[%s1955 + $0x2c8] sm:$0xff]
    %v2046 = vld [vmem:[%s1955 + $0x2d0] sm:$0xff]
    %v2047 = vld [vmem:[%s1955 + $0x2d8] sm:$0xff]
    %v2048 = vld [vmem:[%s1955 + $0x2e0] sm:$0xff]
    %v2049 = vld [vmem:[%s1955 + $0x2e8] sm:$0xff]
    %v2050 = vld [vmem:[%s1955 + $0x2f0] sm:$0xff]
    %v2051 = vld [vmem:[%s1955 + $0x2f8] sm:$0xff]
    %v2052 = vld [vmem:[%s1955 + $0x300] sm:$0xff]
    %v2053 = vld [vmem:[%s1955 + $0x308] sm:$0xff]
    %v2054 = vld [vmem:[%s1955 + $0x310] sm:$0xff]
    %v2055 = vld [vmem:[%s1955 + $0x318] sm:$0xff]
    %v2056 = vld [vmem:[%s1955 + $0x320] sm:$0xff]
    %v2057 = vld [vmem:[%s1955 + $0x328] sm:$0xff]
    %v2058 = vld [vmem:[%s1955 + $0x330] sm:$0xff]
    %v2059 = vld [vmem:[%s1955 + $0x338] sm:$0xff]
    %v2060 = vld [vmem:[%s1955 + $0x340] sm:$0xff]
    %v2061 = vld [vmem:[%s1955 + $0x348] sm:$0xff]
    %v2062 = vld [vmem:[%s1955 + $0x350] sm:$0xff]
    %v2063 = vld [vmem:[%s1955 + $0x358] sm:$0xff]
    %v2064 = vld [vmem:[%s1955 + $0x360] sm:$0xff]
    %v2065 = vld [vmem:[%s1955 + $0x368] sm:$0xff]
    %v2066 = vld [vmem:[%s1955 + $0x370] sm:$0xff]
    %v2067 = vld [vmem:[%s1955 + $0x378] sm:$0xff]
    %s2068 = scalar_lea.vmem [#allocation8], 4
    %v2069 = vld [vmem:[%s2068] sm:$0xf]
    %v2071 = vlaneseq
    %v2072 = vshrl.u32 %v2071, 7
    %v2073 = vsub.s32 0, %v2072
    %v2074 = vrot.slane %v2069, %v2073
    %v2075 = vlaneseq
    %v2076 = vshrl.u32 %v2075, 7
    %v2077 = vsub.s32 1, %v2076
    %v2078 = vrot.slane %v2069, %v2077
    %v2079 = vlaneseq
    %v2080 = vshrl.u32 %v2079, 7
    %v2081 = vsub.s32 2, %v2080
    %v2082 = vrot.slane %v2069, %v2081
    %v2083 = vlaneseq
    %v2084 = vshrl.u32 %v2083, 7
    %v2085 = vsub.s32 3, %v2084
    %v2086 = vrot.slane %v2069, %v2085
    %2091 = vmatprep.subr.mxu0 %v2017
    %2092 = vmatpush1.msra.mxu0 %v2016
    %2093 = vmatprep.subr.mxu0 %v2013
    %2094 = vmatpush1.msra.mxu0 %v2012
    %2095 = vmatprep.subr.mxu0 %v2009
    %2096 = vmatpush1.msra.mxu0 %v2008
    %2097 = vmatprep.subr.mxu0 %v2005
    %2098 = vmatpush1.msra.mxu0 %v2004
    %2099 = vmatprep.subr.mxu0 %v2001
    %2100 = vmatpush1.msra.mxu0 %v2000
    %2101 = vmatprep.subr.mxu0 %v1997
    %2102 = vmatpush1.msra.mxu0 %v1996
    %2103 = vmatprep.subr.mxu0 %v1993
    %2104 = vmatpush1.msra.mxu0 %v1992
    %2105 = vmatprep.subr.mxu0 %v1989
    %2106 = vmatpush1.msra.mxu0 %v1988
    %2107 = vmatprep.subr.mxu0 %v1985
    %2108 = vmatpush1.msra.mxu0 %v1984
    %2109 = vmatprep.subr.mxu0 %v1981
    %2110 = vmatpush1.msra.mxu0 %v1980
    %2111 = vmatprep.subr.mxu0 %v1977
    %2112 = vmatpush1.msra.mxu0 %v1976
    %2113 = vmatprep.subr.mxu0 %v1973
    %2114 = vmatpush1.msra.mxu0 %v1972
    %2115 = vmatprep.subr.mxu0 %v1969
    %2116 = vmatpush1.msra.mxu0 %v1968
    %2117 = vmatprep.subr.mxu0 %v1965
    %2118 = vmatpush1.msra.mxu0 %v1964
    %2119 = vmatprep.subr.mxu0 %v1961
    %2120 = vmatpush1.msra.mxu0 %v1960
    %2121 = vmatprep.subr.mxu0 %v1957
    %2122 = vmatpush1.msra.mxu0 %v1956
    %2123 = vmatprep.subr.mxu0 0.0
    %2124 = vmatpush2.msra.mxu0 0.0
    %2125 = vmatprep.subr.mxu0 0.0
    %2126 = vmatpush2.msra.mxu0 0.0
    %2127 = vmatprep.subr.mxu0 0.0
    %2128 = vmatpush2.msra.mxu0 0.0
    %2129 = vmatprep.subr.mxu0 0.0
    %2130 = vmatpush2.msra.mxu0 0.0
    %2131 = vmatprep.subr.mxu0 %v2065
    %2132 = vmatpush2.msra.mxu0 %v2064
    %2133 = vmatprep.subr.mxu0 %v2061
    %2134 = vmatpush2.msra.mxu0 %v2060
    %2135 = vmatprep.subr.mxu0 %v2057
    %2136 = vmatpush2.msra.mxu0 %v2056
    %2137 = vmatprep.subr.mxu0 %v2053
    %2138 = vmatpush2.msra.mxu0 %v2052
    %2139 = vmatprep.subr.mxu0 %v2049
    %2140 = vmatpush2.msra.mxu0 %v2048
    %2141 = vmatprep.subr.mxu0 %v2045
    %2142 = vmatpush2.msra.mxu0 %v2044
    %2143 = vmatprep.subr.mxu0 %v2041
    %2144 = vmatpush2.msra.mxu0 %v2040
    %2145 = vmatprep.subr.mxu0 %v2037
    %2146 = vmatpush2.msra.mxu0 %v2036
    %2147 = vmatprep.subr.mxu0 %v2033
    %2148 = vmatpush2.msra.mxu0 %v2032
    %2149 = vmatprep.subr.mxu0 %v2029
    %2150 = vmatpush2.msra.mxu0 %v2028
    %2151 = vmatprep.subr.mxu0 %v2025
    %2152 = vmatpush2.msra.mxu0 %v2024
    %2153 = vmatprep.subr.mxu0 %v2021
    %2154 = vmatpush2.msra.mxu0 %v2020
    %2155 = vmatprep.mubr.f32.mxu0 %v264
    %2156 = vmatmul.mubr.f32.gmra.mxu0 %v124
    %v2157 = vpop.f32.mrf.mxu0
    %v2158 = vadd.f32 %v2074, %v2157
    %v2159 = vpop.f32.mrf.mxu0
    %v2160 = vadd.f32 %v2078, %v2159
    %2161 = vmatprep.mubr.f32.mxu0 %v267
    %2162 = vmatmul.mubr.f32.gmra.mxu0 %v126
    %v2163 = vpop.f32.mrf.mxu0
    %v2164 = vadd.f32 %v2074, %v2163
    %v2165 = vpop.f32.mrf.mxu0
    %v2166 = vadd.f32 %v2078, %v2165
    %2167 = vdwg.mxu0
    %2168 = vmatprep.subr.mxu0 %v2019
    %2169 = vmatpush1.msra.mxu0 %v2018
    %2170 = vmatprep.subr.mxu0 %v2015
    %2171 = vmatpush1.msra.mxu0 %v2014
    %2172 = vmatprep.subr.mxu0 %v2011
    %2173 = vmatpush1.msra.mxu0 %v2010
    %2174 = vmatprep.subr.mxu0 %v2007
    %2175 = vmatpush1.msra.mxu0 %v2006
    %2176 = vmatprep.subr.mxu0 %v2003
    %2177 = vmatpush1.msra.mxu0 %v2002
    %2178 = vmatprep.subr.mxu0 %v1999
    %2179 = vmatpush1.msra.mxu0 %v1998
    %2180 = vmatprep.subr.mxu0 %v1995
    %2181 = vmatpush1.msra.mxu0 %v1994
    %2182 = vmatprep.subr.mxu0 %v1991
    %2183 = vmatpush1.msra.mxu0 %v1990
    %2184 = vmatprep.subr.mxu0 %v1987
    %2185 = vmatpush1.msra.mxu0 %v1986
    %2186 = vmatprep.subr.mxu0 %v1983
    %2187 = vmatpush1.msra.mxu0 %v1982
    %2188 = vmatprep.subr.mxu0 %v1979
    %2189 = vmatpush1.msra.mxu0 %v1978
    %2190 = vmatprep.subr.mxu0 %v1975
    %2191 = vmatpush1.msra.mxu0 %v1974
    %2192 = vmatprep.subr.mxu0 %v1971
    %2193 = vmatpush1.msra.mxu0 %v1970
    %2194 = vmatprep.subr.mxu0 %v1967
    %2195 = vmatpush1.msra.mxu0 %v1966
    %2196 = vmatprep.subr.mxu0 %v1963
    %2197 = vmatpush1.msra.mxu0 %v1962
    %2198 = vmatprep.subr.mxu0 %v1959
    %2199 = vmatpush1.msra.mxu0 %v1958
    %2200 = vmatprep.subr.mxu0 0.0
    %2201 = vmatpush2.msra.mxu0 0.0
    %2202 = vmatprep.subr.mxu0 0.0
    %2203 = vmatpush2.msra.mxu0 0.0
    %2204 = vmatprep.subr.mxu0 0.0
    %2205 = vmatpush2.msra.mxu0 0.0
    %2206 = vmatprep.subr.mxu0 0.0
    %2207 = vmatpush2.msra.mxu0 0.0
    %2208 = vmatprep.subr.mxu0 %v2067
    %2209 = vmatpush2.msra.mxu0 %v2066
    %2210 = vmatprep.subr.mxu0 %v2063
    %2211 = vmatpush2.msra.mxu0 %v2062
    %2212 = vmatprep.subr.mxu0 %v2059
    %2213 = vmatpush2.msra.mxu0 %v2058
    %2214 = vmatprep.subr.mxu0 %v2055
    %2215 = vmatpush2.msra.mxu0 %v2054
    %2216 = vmatprep.subr.mxu0 %v2051
    %2217 = vmatpush2.msra.mxu0 %v2050
    %2218 = vmatprep.subr.mxu0 %v2047
    %2219 = vmatpush2.msra.mxu0 %v2046
    %2220 = vmatprep.subr.mxu0 %v2043
    %2221 = vmatpush2.msra.mxu0 %v2042
    %2222 = vmatprep.subr.mxu0 %v2039
    %2223 = vmatpush2.msra.mxu0 %v2038
    %2224 = vmatprep.subr.mxu0 %v2035
    %2225 = vmatpush2.msra.mxu0 %v2034
    %2226 = vmatprep.subr.mxu0 %v2031
    %2227 = vmatpush2.msra.mxu0 %v2030
    %2228 = vmatprep.subr.mxu0 %v2027
    %2229 = vmatpush2.msra.mxu0 %v2026
    %2230 = vmatprep.subr.mxu0 %v2023
    %2231 = vmatpush2.msra.mxu0 %v2022
    %2232 = vmatprep.mubr.f32.mxu0 %v264
    %2233 = vmatmul.mubr.f32.gmra.mxu0 %v124
    %v2234 = vpop.f32.mrf.mxu0
    %v2235 = vadd.f32 %v2082, %v2234
    %v2236 = vpop.f32.mrf.mxu0
    %v2237 = vadd.f32 %v2086, %v2236
    %2238 = vmatprep.mubr.f32.mxu0 %v267
    %2239 = vmatmul.mubr.f32.gmra.mxu0 %v126
    %v2240 = vpop.f32.mrf.mxu0
    %v2241 = vadd.f32 %v2082, %v2240
    %v2242 = vpop.f32.mrf.mxu0
    %v2243 = vadd.f32 %v2086, %v2242
    %2244 = vdwg.mxu0
    %s2245 = scalar_lea.vmem [#allocation7], 512
    %v2246 = vld [vmem:[%s2245] sm:$0xff]
    %v2247 = vld [vmem:[%s2245 + $0x8] sm:$0xff]
    %v2248 = vld [vmem:[%s2245 + $0x10] sm:$0xff]
    %v2249 = vld [vmem:[%s2245 + $0x18] sm:$0xff]
    %v2250 = vld [vmem:[%s2245 + $0x20] sm:$0xff]
    %v2251 = vld [vmem:[%s2245 + $0x28] sm:$0xff]
    %v2252 = vld [vmem:[%s2245 + $0x30] sm:$0xff]
    %v2253 = vld [vmem:[%s2245 + $0x38] sm:$0xff]
    %v2254 = vld [vmem:[%s2245 + $0x40] sm:$0xff]
    %v2255 = vld [vmem:[%s2245 + $0x48] sm:$0xff]
    %v2256 = vld [vmem:[%s2245 + $0x50] sm:$0xff]
    %v2257 = vld [vmem:[%s2245 + $0x58] sm:$0xff]
    %v2258 = vld [vmem:[%s2245 + $0x60] sm:$0xff]
    %v2259 = vld [vmem:[%s2245 + $0x68] sm:$0xff]
    %v2260 = vld [vmem:[%s2245 + $0x70] sm:$0xff]
    %v2261 = vld [vmem:[%s2245 + $0x78] sm:$0xff]
    %v2262 = vld [vmem:[%s2245 + $0x80] sm:$0xff]
    %v2263 = vld [vmem:[%s2245 + $0x88] sm:$0xff]
    %v2264 = vld [vmem:[%s2245 + $0x90] sm:$0xff]
    %v2265 = vld [vmem:[%s2245 + $0x98] sm:$0xff]
    %v2266 = vld [vmem:[%s2245 + $0xa0] sm:$0xff]
    %v2267 = vld [vmem:[%s2245 + $0xa8] sm:$0xff]
    %v2268 = vld [vmem:[%s2245 + $0xb0] sm:$0xff]
    %v2269 = vld [vmem:[%s2245 + $0xb8] sm:$0xff]
    %v2270 = vld [vmem:[%s2245 + $0xc0] sm:$0xff]
    %v2271 = vld [vmem:[%s2245 + $0xc8] sm:$0xff]
    %v2272 = vld [vmem:[%s2245 + $0xd0] sm:$0xff]
    %v2273 = vld [vmem:[%s2245 + $0xd8] sm:$0xff]
    %v2274 = vld [vmem:[%s2245 + $0xe0] sm:$0xff]
    %v2275 = vld [vmem:[%s2245 + $0xe8] sm:$0xff]
    %v2276 = vld [vmem:[%s2245 + $0xf0] sm:$0xff]
    %v2277 = vld [vmem:[%s2245 + $0xf8] sm:$0xff]
    %v2278 = vld [vmem:[%s2245 + $0x100] sm:$0xff]
    %v2279 = vld [vmem:[%s2245 + $0x108] sm:$0xff]
    %v2280 = vld [vmem:[%s2245 + $0x110] sm:$0xff]
    %v2281 = vld [vmem:[%s2245 + $0x118] sm:$0xff]
    %v2282 = vld [vmem:[%s2245 + $0x120] sm:$0xff]
    %v2283 = vld [vmem:[%s2245 + $0x128] sm:$0xff]
    %v2284 = vld [vmem:[%s2245 + $0x130] sm:$0xff]
    %v2285 = vld [vmem:[%s2245 + $0x138] sm:$0xff]
    %v2286 = vld [vmem:[%s2245 + $0x140] sm:$0xff]
    %v2287 = vld [vmem:[%s2245 + $0x148] sm:$0xff]
    %v2288 = vld [vmem:[%s2245 + $0x150] sm:$0xff]
    %v2289 = vld [vmem:[%s2245 + $0x158] sm:$0xff]
    %v2290 = vld [vmem:[%s2245 + $0x160] sm:$0xff]
    %v2291 = vld [vmem:[%s2245 + $0x168] sm:$0xff]
    %v2292 = vld [vmem:[%s2245 + $0x170] sm:$0xff]
    %v2293 = vld [vmem:[%s2245 + $0x178] sm:$0xff]
    %v2294 = vld [vmem:[%s2245 + $0x180] sm:$0xff]
    %v2295 = vld [vmem:[%s2245 + $0x188] sm:$0xff]
    %v2296 = vld [vmem:[%s2245 + $0x190] sm:$0xff]
    %v2297 = vld [vmem:[%s2245 + $0x198] sm:$0xff]
    %v2298 = vld [vmem:[%s2245 + $0x1a0] sm:$0xff]
    %v2299 = vld [vmem:[%s2245 + $0x1a8] sm:$0xff]
    %v2300 = vld [vmem:[%s2245 + $0x1b0] sm:$0xff]
    %v2301 = vld [vmem:[%s2245 + $0x1b8] sm:$0xff]
    %v2302 = vld [vmem:[%s2245 + $0x1c0] sm:$0xff]
    %v2303 = vld [vmem:[%s2245 + $0x1c8] sm:$0xff]
    %v2304 = vld [vmem:[%s2245 + $0x1d0] sm:$0xff]
    %v2305 = vld [vmem:[%s2245 + $0x1d8] sm:$0xff]
    %v2306 = vld [vmem:[%s2245 + $0x1e0] sm:$0xff]
    %v2307 = vld [vmem:[%s2245 + $0x1e8] sm:$0xff]
    %v2308 = vld [vmem:[%s2245 + $0x1f0] sm:$0xff]
    %v2309 = vld [vmem:[%s2245 + $0x1f8] sm:$0xff]
    %2310 = vmatprep.subr.mxu0 %v2307
    %2311 = vmatpush1.msra.mxu0 %v2306
    %2312 = vmatprep.subr.mxu0 %v2303
    %2313 = vmatpush1.msra.mxu0 %v2302
    %2314 = vmatprep.subr.mxu0 %v2299
    %2315 = vmatpush1.msra.mxu0 %v2298
    %2316 = vmatprep.subr.mxu0 %v2295
    %2317 = vmatpush1.msra.mxu0 %v2294
    %2318 = vmatprep.subr.mxu0 %v2291
    %2319 = vmatpush1.msra.mxu0 %v2290
    %2320 = vmatprep.subr.mxu0 %v2287
    %2321 = vmatpush1.msra.mxu0 %v2286
    %2322 = vmatprep.subr.mxu0 %v2283
    %2323 = vmatpush1.msra.mxu0 %v2282
    %2324 = vmatprep.subr.mxu0 %v2279
    %2325 = vmatpush1.msra.mxu0 %v2278
    %2326 = vmatprep.subr.mxu0 %v2275
    %2327 = vmatpush1.msra.mxu0 %v2274
    %2328 = vmatprep.subr.mxu0 %v2271
    %2329 = vmatpush1.msra.mxu0 %v2270
    %2330 = vmatprep.subr.mxu0 %v2267
    %2331 = vmatpush1.msra.mxu0 %v2266
    %2332 = vmatprep.subr.mxu0 %v2263
    %2333 = vmatpush1.msra.mxu0 %v2262
    %2334 = vmatprep.subr.mxu0 %v2259
    %2335 = vmatpush1.msra.mxu0 %v2258
    %2336 = vmatprep.subr.mxu0 %v2255
    %2337 = vmatpush1.msra.mxu0 %v2254
    %2338 = vmatprep.subr.mxu0 %v2251
    %2339 = vmatpush1.msra.mxu0 %v2250
    %2340 = vmatprep.subr.mxu0 %v2247
    %2341 = vmatpush1.msra.mxu0 %v2246
    %2342 = vmatprep.subr.mxu0 0.0
    %2343 = vmatpush2.msra.mxu0 0.0
    %2344 = vmatprep.subr.mxu0 0.0
    %2345 = vmatpush2.msra.mxu0 0.0
    %2346 = vmatprep.subr.mxu0 0.0
    %2347 = vmatpush2.msra.mxu0 0.0
    %2348 = vmatprep.subr.mxu0 0.0
    %2349 = vmatpush2.msra.mxu0 0.0
    %2350 = vmatprep.subr.mxu0 0.0
    %2351 = vmatpush2.msra.mxu0 0.0
    %2352 = vmatprep.subr.mxu0 0.0
    %2353 = vmatpush2.msra.mxu0 0.0
    %2354 = vmatprep.subr.mxu0 0.0
    %2355 = vmatpush2.msra.mxu0 0.0
    %2356 = vmatprep.subr.mxu0 0.0
    %2357 = vmatpush2.msra.mxu0 0.0
    %2358 = vmatprep.subr.mxu0 0.0
    %2359 = vmatpush2.msra.mxu0 0.0
    %2360 = vmatprep.subr.mxu0 0.0
    %2361 = vmatpush2.msra.mxu0 0.0
    %2362 = vmatprep.subr.mxu0 0.0
    %2363 = vmatpush2.msra.mxu0 0.0
    %2364 = vmatprep.subr.mxu0 0.0
    %2365 = vmatpush2.msra.mxu0 0.0
    %2366 = vmatprep.subr.mxu0 0.0
    %2367 = vmatpush2.msra.mxu0 0.0
    %2368 = vmatprep.subr.mxu0 0.0
    %2369 = vmatpush2.msra.mxu0 0.0
    %2370 = vmatprep.subr.mxu0 0.0
    %2371 = vmatpush2.msra.mxu0 0.0
    %2372 = vmatprep.subr.mxu0 0.0
    %2373 = vmatpush2.msra.mxu0 0.0
    %2374 = vmatprep.mubr.f32.mxu0 0.0
    %2375 = vmatmul.mubr.f32.gmra.mxu0 0.0
    %v2376 = vpop.f32.mrf.mxu0
    %v2377 = vadd.f32 0.0, %v2376
    %v2378 = vpop.f32.mrf.mxu0
    %v2379 = vadd.f32 0.0, %v2378
    %2380 = vdwg.mxu0
    %2381 = vmatprep.subr.mxu0 %v2309
    %2382 = vmatpush1.msra.mxu0 %v2308
    %2383 = vmatprep.subr.mxu0 %v2305
    %2384 = vmatpush1.msra.mxu0 %v2304
    %2385 = vmatprep.subr.mxu0 %v2301
    %2386 = vmatpush1.msra.mxu0 %v2300
    %2387 = vmatprep.subr.mxu0 %v2297
    %2388 = vmatpush1.msra.mxu0 %v2296
    %2389 = vmatprep.subr.mxu0 %v2293
    %2390 = vmatpush1.msra.mxu0 %v2292
    %2391 = vmatprep.subr.mxu0 %v2289
    %2392 = vmatpush1.msra.mxu0 %v2288
    %2393 = vmatprep.subr.mxu0 %v2285
    %2394 = vmatpush1.msra.mxu0 %v2284
    %2395 = vmatprep.subr.mxu0 %v2281
    %2396 = vmatpush1.msra.mxu0 %v2280
    %2397 = vmatprep.subr.mxu0 %v2277
    %2398 = vmatpush1.msra.mxu0 %v2276
    %2399 = vmatprep.subr.mxu0 %v2273
    %2400 = vmatpush1.msra.mxu0 %v2272
    %2401 = vmatprep.subr.mxu0 %v2269
    %2402 = vmatpush1.msra.mxu0 %v2268
    %2403 = vmatprep.subr.mxu0 %v2265
    %2404 = vmatpush1.msra.mxu0 %v2264
    %2405 = vmatprep.subr.mxu0 %v2261
    %2406 = vmatpush1.msra.mxu0 %v2260
    %2407 = vmatprep.subr.mxu0 %v2257
    %2408 = vmatpush1.msra.mxu0 %v2256
    %2409 = vmatprep.subr.mxu0 %v2253
    %2410 = vmatpush1.msra.mxu0 %v2252
    %2411 = vmatprep.subr.mxu0 %v2249
    %2412 = vmatpush1.msra.mxu0 %v2248
    %2413 = vmatprep.subr.mxu0 0.0
    %2414 = vmatpush2.msra.mxu0 0.0
    %2415 = vmatprep.subr.mxu0 0.0
    %2416 = vmatpush2.msra.mxu0 0.0
    %2417 = vmatprep.subr.mxu0 0.0
    %2418 = vmatpush2.msra.mxu0 0.0
    %2419 = vmatprep.subr.mxu0 0.0
    %2420 = vmatpush2.msra.mxu0 0.0
    %2421 = vmatprep.subr.mxu0 0.0
    %2422 = vmatpush2.msra.mxu0 0.0
    %2423 = vmatprep.subr.mxu0 0.0
    %2424 = vmatpush2.msra.mxu0 0.0
    %2425 = vmatprep.subr.mxu0 0.0
    %2426 = vmatpush2.msra.mxu0 0.0
    %2427 = vmatprep.subr.mxu0 0.0
    %2428 = vmatpush2.msra.mxu0 0.0
    %2429 = vmatprep.subr.mxu0 0.0
    %2430 = vmatpush2.msra.mxu0 0.0
    %2431 = vmatprep.subr.mxu0 0.0
    %2432 = vmatpush2.msra.mxu0 0.0
    %2433 = vmatprep.subr.mxu0 0.0
    %2434 = vmatpush2.msra.mxu0 0.0
    %2435 = vmatprep.subr.mxu0 0.0
    %2436 = vmatpush2.msra.mxu0 0.0
    %2437 = vmatprep.subr.mxu0 0.0
    %2438 = vmatpush2.msra.mxu0 0.0
    %2439 = vmatprep.subr.mxu0 0.0
    %2440 = vmatpush2.msra.mxu0 0.0
    %2441 = vmatprep.subr.mxu0 0.0
    %2442 = vmatpush2.msra.mxu0 0.0
    %2443 = vmatprep.subr.mxu0 0.0
    %2444 = vmatpush2.msra.mxu0 0.0
    %2445 = vmatprep.mubr.f32.mxu0 0.0
    %2446 = vmatmul.mubr.f32.gmra.mxu0 0.0
    %v2447 = vpop.f32.mrf.mxu0
    %v2448 = vadd.f32 0.0, %v2447
    %v2449 = vpop.f32.mrf.mxu0
    %v2450 = vadd.f32 0.0, %v2449
    %2451 = vdwg.mxu0
    %v2456 = vrot.slane %v2377, 2
    %v2457 = vrot.slane %v2379, 2
    %v2458 = vrot.slane %v2448, 2
    %v2459 = vrot.slane %v2450, 2
    %v2464 = vadd.f32 %v2164, %v2456
    %v2465 = vadd.f32 %v2166, %v2457
    %v2466 = vadd.f32 %v2241, %v2458
    %v2467 = vadd.f32 %v2243, %v2459
    %v2468 = vxor.u32 %v2464, 2147483648
    %v2469 = vxor.u32 %v2465, 2147483648
    %v2470 = vxor.u32 %v2466, 2147483648
    %v2471 = vmul.f32 %v2468, 1.442695
    %v2472 = vpow.pop %v2471
    %v2473 = vmul.f32 %v2469, 1.442695
    %v2474 = vpow.pop %v2473
    %v2475 = vmul.f32 %v2470, 1.442695
    %v2476 = vpow.pop %v2475
    %v2477 = vadd.f32 %v2472, 1.0
    %v2478 = vadd.f32 %v2474, 1.0
    %v2479 = vadd.f32 %v2476, 1.0
    %v2480 = vrcp.pop %v2477
    %v2481 = vmul.f32 1.0, %v2480
    %v2482 = vrcp.pop %v2478
    %v2483 = vmul.f32 1.0, %v2482
    %v2484 = vrcp.pop %v2479
    %v2485 = vmul.f32 1.0, %v2484
    %v2486 = vtanh.pop %v2467
    %v2487 = vmul.f32 %v2483, 0.0
    %v2488 = vmul.f32 %v2481, %v2486
    %v2489 = vadd.f32 %v2487, %v2488
    %v2490 = vtanh.pop %v2489
    %v2491 = vmul.f32 %v2485, %v2490
    %v2493 = vrot.slane %v2491, 6
    %2495 = vmatprep.subr.mxu0 %v2307
    %2496 = vmatpush1.msra.mxu0 %v2306
    %2497 = vmatprep.subr.mxu0 %v2303
    %2498 = vmatpush1.msra.mxu0 %v2302
    %2499 = vmatprep.subr.mxu0 %v2299
    %2500 = vmatpush1.msra.mxu0 %v2298
    %2501 = vmatprep.subr.mxu0 %v2295
    %2502 = vmatpush1.msra.mxu0 %v2294
    %2503 = vmatprep.subr.mxu0 %v2291
    %2504 = vmatpush1.msra.mxu0 %v2290
    %2505 = vmatprep.subr.mxu0 %v2287
    %2506 = vmatpush1.msra.mxu0 %v2286
    %2507 = vmatprep.subr.mxu0 %v2283
    %2508 = vmatpush1.msra.mxu0 %v2282
    %2509 = vmatprep.subr.mxu0 %v2279
    %2510 = vmatpush1.msra.mxu0 %v2278
    %2511 = vmatprep.subr.mxu0 %v2275
    %2512 = vmatpush1.msra.mxu0 %v2274
    %2513 = vmatprep.subr.mxu0 %v2271
    %2514 = vmatpush1.msra.mxu0 %v2270
    %2515 = vmatprep.subr.mxu0 %v2267
    %2516 = vmatpush1.msra.mxu0 %v2266
    %2517 = vmatprep.subr.mxu0 %v2263
    %2518 = vmatpush1.msra.mxu0 %v2262
    %2519 = vmatprep.subr.mxu0 %v2259
    %2520 = vmatpush1.msra.mxu0 %v2258
    %2521 = vmatprep.subr.mxu0 %v2255
    %2522 = vmatpush1.msra.mxu0 %v2254
    %2523 = vmatprep.subr.mxu0 %v2251
    %2524 = vmatpush1.msra.mxu0 %v2250
    %2525 = vmatprep.subr.mxu0 %v2247
    %2526 = vmatpush1.msra.mxu0 %v2246
    %2527 = vmatprep.subr.mxu0 0.0
    %2528 = vmatpush2.msra.mxu0 0.0
    %2529 = vmatprep.subr.mxu0 0.0
    %2530 = vmatpush2.msra.mxu0 0.0
    %2531 = vmatprep.subr.mxu0 0.0
    %2532 = vmatpush2.msra.mxu0 0.0
    %2533 = vmatprep.subr.mxu0 0.0
    %2534 = vmatpush2.msra.mxu0 0.0
    %2535 = vmatprep.subr.mxu0 0.0
    %2536 = vmatpush2.msra.mxu0 0.0
    %2537 = vmatprep.subr.mxu0 0.0
    %2538 = vmatpush2.msra.mxu0 0.0
    %2539 = vmatprep.subr.mxu0 0.0
    %2540 = vmatpush2.msra.mxu0 0.0
    %2541 = vmatprep.subr.mxu0 0.0
    %2542 = vmatpush2.msra.mxu0 0.0
    %2543 = vmatprep.subr.mxu0 0.0
    %2544 = vmatpush2.msra.mxu0 0.0
    %2545 = vmatprep.subr.mxu0 0.0
    %2546 = vmatpush2.msra.mxu0 0.0
    %2547 = vmatprep.subr.mxu0 0.0
    %2548 = vmatpush2.msra.mxu0 0.0
    %2549 = vmatprep.subr.mxu0 0.0
    %2550 = vmatpush2.msra.mxu0 0.0
    %2551 = vmatprep.subr.mxu0 0.0
    %2552 = vmatpush2.msra.mxu0 0.0
    %2553 = vmatprep.subr.mxu0 0.0
    %2554 = vmatpush2.msra.mxu0 0.0
    %2555 = vmatprep.subr.mxu0 0.0
    %2556 = vmatpush2.msra.mxu0 0.0
    %2557 = vmatprep.subr.mxu0 0.0
    %2558 = vmatpush2.msra.mxu0 0.0
    %2559 = vmatprep.mubr.f32.mxu0 0.0
    %2560 = vmatmul.mubr.f32.gmra.mxu0 %v2493
    %v2561 = vpop.f32.mrf.mxu0
    %v2562 = vadd.f32 0.0, %v2561
    %v2563 = vpop.f32.mrf.mxu0
    %v2564 = vadd.f32 0.0, %v2563
    %2565 = vdwg.mxu0
    %2566 = vmatprep.subr.mxu0 %v2309
    %2567 = vmatpush1.msra.mxu0 %v2308
    %2568 = vmatprep.subr.mxu0 %v2305
    %2569 = vmatpush1.msra.mxu0 %v2304
    %2570 = vmatprep.subr.mxu0 %v2301
    %2571 = vmatpush1.msra.mxu0 %v2300
    %2572 = vmatprep.subr.mxu0 %v2297
    %2573 = vmatpush1.msra.mxu0 %v2296
    %2574 = vmatprep.subr.mxu0 %v2293
    %2575 = vmatpush1.msra.mxu0 %v2292
    %2576 = vmatprep.subr.mxu0 %v2289
    %2577 = vmatpush1.msra.mxu0 %v2288
    %2578 = vmatprep.subr.mxu0 %v2285
    %2579 = vmatpush1.msra.mxu0 %v2284
    %2580 = vmatprep.subr.mxu0 %v2281
    %2581 = vmatpush1.msra.mxu0 %v2280
    %2582 = vmatprep.subr.mxu0 %v2277
    %2583 = vmatpush1.msra.mxu0 %v2276
    %2584 = vmatprep.subr.mxu0 %v2273
    %2585 = vmatpush1.msra.mxu0 %v2272
    %2586 = vmatprep.subr.mxu0 %v2269
    %2587 = vmatpush1.msra.mxu0 %v2268
    %2588 = vmatprep.subr.mxu0 %v2265
    %2589 = vmatpush1.msra.mxu0 %v2264
    %2590 = vmatprep.subr.mxu0 %v2261
    %2591 = vmatpush1.msra.mxu0 %v2260
    %2592 = vmatprep.subr.mxu0 %v2257
    %2593 = vmatpush1.msra.mxu0 %v2256
    %2594 = vmatprep.subr.mxu0 %v2253
    %2595 = vmatpush1.msra.mxu0 %v2252
    %2596 = vmatprep.subr.mxu0 %v2249
    %2597 = vmatpush1.msra.mxu0 %v2248
    %2598 = vmatprep.subr.mxu0 0.0
    %2599 = vmatpush2.msra.mxu0 0.0
    %2600 = vmatprep.subr.mxu0 0.0
    %2601 = vmatpush2.msra.mxu0 0.0
    %2602 = vmatprep.subr.mxu0 0.0
    %2603 = vmatpush2.msra.mxu0 0.0
    %2604 = vmatprep.subr.mxu0 0.0
    %2605 = vmatpush2.msra.mxu0 0.0
    %2606 = vmatprep.subr.mxu0 0.0
    %2607 = vmatpush2.msra.mxu0 0.0
    %2608 = vmatprep.subr.mxu0 0.0
    %2609 = vmatpush2.msra.mxu0 0.0
    %2610 = vmatprep.subr.mxu0 0.0
    %2611 = vmatpush2.msra.mxu0 0.0
    %2612 = vmatprep.subr.mxu0 0.0
    %2613 = vmatpush2.msra.mxu0 0.0
    %2614 = vmatprep.subr.mxu0 0.0
    %2615 = vmatpush2.msra.mxu0 0.0
    %2616 = vmatprep.subr.mxu0 0.0
    %2617 = vmatpush2.msra.mxu0 0.0
    %2618 = vmatprep.subr.mxu0 0.0
    %2619 = vmatpush2.msra.mxu0 0.0
    %2620 = vmatprep.subr.mxu0 0.0
    %2621 = vmatpush2.msra.mxu0 0.0
    %2622 = vmatprep.subr.mxu0 0.0
    %2623 = vmatpush2.msra.mxu0 0.0
    %2624 = vmatprep.subr.mxu0 0.0
    %2625 = vmatpush2.msra.mxu0 0.0
    %2626 = vmatprep.subr.mxu0 0.0
    %2627 = vmatpush2.msra.mxu0 0.0
    %2628 = vmatprep.subr.mxu0 0.0
    %2629 = vmatpush2.msra.mxu0 0.0
    %2630 = vmatprep.mubr.f32.mxu0 0.0
    %2631 = vmatmul.mubr.f32.gmra.mxu0 %v2493
    %v2632 = vpop.f32.mrf.mxu0
    %v2633 = vadd.f32 0.0, %v2632
    %v2634 = vpop.f32.mrf.mxu0
    %v2635 = vadd.f32 0.0, %v2634
    %2636 = vdwg.mxu0
    %v2641 = vrot.slane %v2562, 4
    %v2642 = vrot.slane %v2564, 4
    %v2643 = vrot.slane %v2633, 4
    %v2644 = vrot.slane %v2635, 4
    %v2649 = vadd.f32 %v2164, %v2641
    %v2650 = vadd.f32 %v2166, %v2642
    %v2651 = vadd.f32 %v2241, %v2643
    %v2652 = vadd.f32 %v2243, %v2644
    %v2653 = vxor.u32 %v2649, 2147483648
    %v2654 = vxor.u32 %v2650, 2147483648
    %v2655 = vxor.u32 %v2651, 2147483648
    %v2656 = vmul.f32 %v2653, 1.442695
    %v2657 = vpow.pop %v2656
    %v2658 = vmul.f32 %v2654, 1.442695
    %v2659 = vpow.pop %v2658
    %v2660 = vmul.f32 %v2655, 1.442695
    %v2661 = vpow.pop %v2660
    %v2662 = vadd.f32 %v2657, 1.0
    %v2663 = vadd.f32 %v2659, 1.0
    %v2664 = vadd.f32 %v2661, 1.0
    %v2665 = vrcp.pop %v2662
    %v2666 = vmul.f32 1.0, %v2665
    %v2667 = vrcp.pop %v2663
    %v2668 = vmul.f32 1.0, %v2667
    %v2669 = vrcp.pop %v2664
    %v2670 = vmul.f32 1.0, %v2669
    %v2671 = vtanh.pop %v2652
    %v2673 = vrot.slane %v2489, 2
    %v2675 = vmul.f32 %v2668, %v2673
    %v2676 = vmul.f32 %v2666, %v2671
    %v2677 = vadd.f32 %v2675, %v2676
    %v2678 = vtanh.pop %v2677
    %v2679 = vmul.f32 %v2670, %v2678
    %v2681 = vrot.slane %v2679, 4
    %2683 = vmatprep.subr.mxu0 %v2307
    %2684 = vmatpush1.msra.mxu0 %v2306
    %2685 = vmatprep.subr.mxu0 %v2303
    %2686 = vmatpush1.msra.mxu0 %v2302
    %2687 = vmatprep.subr.mxu0 %v2299
    %2688 = vmatpush1.msra.mxu0 %v2298
    %2689 = vmatprep.subr.mxu0 %v2295
    %2690 = vmatpush1.msra.mxu0 %v2294
    %2691 = vmatprep.subr.mxu0 %v2291
    %2692 = vmatpush1.msra.mxu0 %v2290
    %2693 = vmatprep.subr.mxu0 %v2287
    %2694 = vmatpush1.msra.mxu0 %v2286
    %2695 = vmatprep.subr.mxu0 %v2283
    %2696 = vmatpush1.msra.mxu0 %v2282
    %2697 = vmatprep.subr.mxu0 %v2279
    %2698 = vmatpush1.msra.mxu0 %v2278
    %2699 = vmatprep.subr.mxu0 %v2275
    %2700 = vmatpush1.msra.mxu0 %v2274
    %2701 = vmatprep.subr.mxu0 %v2271
    %2702 = vmatpush1.msra.mxu0 %v2270
    %2703 = vmatprep.subr.mxu0 %v2267
    %2704 = vmatpush1.msra.mxu0 %v2266
    %2705 = vmatprep.subr.mxu0 %v2263
    %2706 = vmatpush1.msra.mxu0 %v2262
    %2707 = vmatprep.subr.mxu0 %v2259
    %2708 = vmatpush1.msra.mxu0 %v2258
    %2709 = vmatprep.subr.mxu0 %v2255
    %2710 = vmatpush1.msra.mxu0 %v2254
    %2711 = vmatprep.subr.mxu0 %v2251
    %2712 = vmatpush1.msra.mxu0 %v2250
    %2713 = vmatprep.subr.mxu0 %v2247
    %2714 = vmatpush1.msra.mxu0 %v2246
    %2715 = vmatprep.subr.mxu0 0.0
    %2716 = vmatpush2.msra.mxu0 0.0
    %2717 = vmatprep.subr.mxu0 0.0
    %2718 = vmatpush2.msra.mxu0 0.0
    %2719 = vmatprep.subr.mxu0 0.0
    %2720 = vmatpush2.msra.mxu0 0.0
    %2721 = vmatprep.subr.mxu0 0.0
    %2722 = vmatpush2.msra.mxu0 0.0
    %2723 = vmatprep.subr.mxu0 0.0
    %2724 = vmatpush2.msra.mxu0 0.0
    %2725 = vmatprep.subr.mxu0 0.0
    %2726 = vmatpush2.msra.mxu0 0.0
    %2727 = vmatprep.subr.mxu0 0.0
    %2728 = vmatpush2.msra.mxu0 0.0
    %2729 = vmatprep.subr.mxu0 0.0
    %2730 = vmatpush2.msra.mxu0 0.0
    %2731 = vmatprep.subr.mxu0 0.0
    %2732 = vmatpush2.msra.mxu0 0.0
    %2733 = vmatprep.subr.mxu0 0.0
    %2734 = vmatpush2.msra.mxu0 0.0
    %2735 = vmatprep.subr.mxu0 0.0
    %2736 = vmatpush2.msra.mxu0 0.0
    %2737 = vmatprep.subr.mxu0 0.0
    %2738 = vmatpush2.msra.mxu0 0.0
    %2739 = vmatprep.subr.mxu0 0.0
    %2740 = vmatpush2.msra.mxu0 0.0
    %2741 = vmatprep.subr.mxu0 0.0
    %2742 = vmatpush2.msra.mxu0 0.0
    %2743 = vmatprep.subr.mxu0 0.0
    %2744 = vmatpush2.msra.mxu0 0.0
    %2745 = vmatprep.subr.mxu0 0.0
    %2746 = vmatpush2.msra.mxu0 0.0
    %2747 = vmatprep.mubr.f32.mxu0 0.0
    %2748 = vmatmul.mubr.f32.gmra.mxu0 %v2681
    %v2749 = vpop.f32.mrf.mxu0
    %v2750 = vadd.f32 0.0, %v2749
    %v2751 = vpop.f32.mrf.mxu0
    %v2752 = vadd.f32 0.0, %v2751
    %2753 = vdwg.mxu0
    %2754 = vmatprep.subr.mxu0 %v2309
    %2755 = vmatpush1.msra.mxu0 %v2308
    %2756 = vmatprep.subr.mxu0 %v2305
    %2757 = vmatpush1.msra.mxu0 %v2304
    %2758 = vmatprep.subr.mxu0 %v2301
    %2759 = vmatpush1.msra.mxu0 %v2300
    %2760 = vmatprep.subr.mxu0 %v2297
    %2761 = vmatpush1.msra.mxu0 %v2296
    %2762 = vmatprep.subr.mxu0 %v2293
    %2763 = vmatpush1.msra.mxu0 %v2292
    %2764 = vmatprep.subr.mxu0 %v2289
    %2765 = vmatpush1.msra.mxu0 %v2288
    %2766 = vmatprep.subr.mxu0 %v2285
    %2767 = vmatpush1.msra.mxu0 %v2284
    %2768 = vmatprep.subr.mxu0 %v2281
    %2769 = vmatpush1.msra.mxu0 %v2280
    %2770 = vmatprep.subr.mxu0 %v2277
    %2771 = vmatpush1.msra.mxu0 %v2276
    %2772 = vmatprep.subr.mxu0 %v2273
    %2773 = vmatpush1.msra.mxu0 %v2272
    %2774 = vmatprep.subr.mxu0 %v2269
    %2775 = vmatpush1.msra.mxu0 %v2268
    %2776 = vmatprep.subr.mxu0 %v2265
    %2777 = vmatpush1.msra.mxu0 %v2264
    %2778 = vmatprep.subr.mxu0 %v2261
    %2779 = vmatpush1.msra.mxu0 %v2260
    %2780 = vmatprep.subr.mxu0 %v2257
    %2781 = vmatpush1.msra.mxu0 %v2256
    %2782 = vmatprep.subr.mxu0 %v2253
    %2783 = vmatpush1.msra.mxu0 %v2252
    %2784 = vmatprep.subr.mxu0 %v2249
    %2785 = vmatpush1.msra.mxu0 %v2248
    %2786 = vmatprep.subr.mxu0 0.0
    %2787 = vmatpush2.msra.mxu0 0.0
    %2788 = vmatprep.subr.mxu0 0.0
    %2789 = vmatpush2.msra.mxu0 0.0
    %2790 = vmatprep.subr.mxu0 0.0
    %2791 = vmatpush2.msra.mxu0 0.0
    %2792 = vmatprep.subr.mxu0 0.0
    %2793 = vmatpush2.msra.mxu0 0.0
    %2794 = vmatprep.subr.mxu0 0.0
    %2795 = vmatpush2.msra.mxu0 0.0
    %2796 = vmatprep.subr.mxu0 0.0
    %2797 = vmatpush2.msra.mxu0 0.0
    %2798 = vmatprep.subr.mxu0 0.0
    %2799 = vmatpush2.msra.mxu0 0.0
    %2800 = vmatprep.subr.mxu0 0.0
    %2801 = vmatpush2.msra.mxu0 0.0
    %2802 = vmatprep.subr.mxu0 0.0
    %2803 = vmatpush2.msra.mxu0 0.0
    %2804 = vmatprep.subr.mxu0 0.0
    %2805 = vmatpush2.msra.mxu0 0.0
    %2806 = vmatprep.subr.mxu0 0.0
    %2807 = vmatpush2.msra.mxu0 0.0
    %2808 = vmatprep.subr.mxu0 0.0
    %2809 = vmatpush2.msra.mxu0 0.0
    %2810 = vmatprep.subr.mxu0 0.0
    %2811 = vmatpush2.msra.mxu0 0.0
    %2812 = vmatprep.subr.mxu0 0.0
    %2813 = vmatpush2.msra.mxu0 0.0
    %2814 = vmatprep.subr.mxu0 0.0
    %2815 = vmatpush2.msra.mxu0 0.0
    %2816 = vmatprep.subr.mxu0 0.0
    %2817 = vmatpush2.msra.mxu0 0.0
    %2818 = vmatprep.mubr.f32.mxu0 0.0
    %2819 = vmatmul.mubr.f32.gmra.mxu0 %v2681
    %v2820 = vpop.f32.mrf.mxu0
    %v2821 = vadd.f32 0.0, %v2820
    %v2822 = vpop.f32.mrf.mxu0
    %v2823 = vadd.f32 0.0, %v2822
    %2824 = vdwg.mxu0
    %v2829 = vrot.slane %v2750, 6
    %v2830 = vrot.slane %v2752, 6
    %v2831 = vrot.slane %v2821, 6
    %v2832 = vrot.slane %v2823, 6
    %v2837 = vadd.f32 %v2164, %v2829
    %v2838 = vadd.f32 %v2166, %v2830
    %v2839 = vadd.f32 %v2241, %v2831
    %v2840 = vadd.f32 %v2243, %v2832
    %v2841 = vxor.u32 %v2837, 2147483648
    %v2842 = vxor.u32 %v2838, 2147483648
    %v2843 = vxor.u32 %v2839, 2147483648
    %v2844 = vmul.f32 %v2841, 1.442695
    %v2845 = vpow.pop %v2844
    %v2846 = vmul.f32 %v2842, 1.442695
    %v2847 = vpow.pop %v2846
    %v2848 = vmul.f32 %v2843, 1.442695
    %v2849 = vpow.pop %v2848
    %v2850 = vadd.f32 %v2845, 1.0
    %v2851 = vadd.f32 %v2847, 1.0
    %v2852 = vadd.f32 %v2849, 1.0
    %v2853 = vrcp.pop %v2850
    %v2854 = vmul.f32 1.0, %v2853
    %v2855 = vrcp.pop %v2851
    %v2856 = vmul.f32 1.0, %v2855
    %v2857 = vrcp.pop %v2852
    %v2858 = vmul.f32 1.0, %v2857
    %v2859 = vtanh.pop %v2840
    %v2861 = vrot.slane %v2677, 2
    %v2863 = vmul.f32 %v2856, %v2861
    %v2864 = vmul.f32 %v2854, %v2859
    %v2865 = vadd.f32 %v2863, %v2864
    %v2866 = vtanh.pop %v2865
    %v2867 = vmul.f32 %v2858, %v2866
    %v2869 = vrot.slane %v2867, 2
    %2871 = vmatprep.subr.mxu0 %v2307
    %2872 = vmatpush1.msra.mxu0 %v2306
    %2873 = vmatprep.subr.mxu0 %v2303
    %2874 = vmatpush1.msra.mxu0 %v2302
    %2875 = vmatprep.subr.mxu0 %v2299
    %2876 = vmatpush1.msra.mxu0 %v2298
    %2877 = vmatprep.subr.mxu0 %v2295
    %2878 = vmatpush1.msra.mxu0 %v2294
    %2879 = vmatprep.subr.mxu0 %v2291
    %2880 = vmatpush1.msra.mxu0 %v2290
    %2881 = vmatprep.subr.mxu0 %v2287
    %2882 = vmatpush1.msra.mxu0 %v2286
    %2883 = vmatprep.subr.mxu0 %v2283
    %2884 = vmatpush1.msra.mxu0 %v2282
    %2885 = vmatprep.subr.mxu0 %v2279
    %2886 = vmatpush1.msra.mxu0 %v2278
    %2887 = vmatprep.subr.mxu0 %v2275
    %2888 = vmatpush1.msra.mxu0 %v2274
    %2889 = vmatprep.subr.mxu0 %v2271
    %2890 = vmatpush1.msra.mxu0 %v2270
    %2891 = vmatprep.subr.mxu0 %v2267
    %2892 = vmatpush1.msra.mxu0 %v2266
    %2893 = vmatprep.subr.mxu0 %v2263
    %2894 = vmatpush1.msra.mxu0 %v2262
    %2895 = vmatprep.subr.mxu0 %v2259
    %2896 = vmatpush1.msra.mxu0 %v2258
    %2897 = vmatprep.subr.mxu0 %v2255
    %2898 = vmatpush1.msra.mxu0 %v2254
    %2899 = vmatprep.subr.mxu0 %v2251
    %2900 = vmatpush1.msra.mxu0 %v2250
    %2901 = vmatprep.subr.mxu0 %v2247
    %2902 = vmatpush1.msra.mxu0 %v2246
    %2903 = vmatprep.subr.mxu0 0.0
    %2904 = vmatpush2.msra.mxu0 0.0
    %2905 = vmatprep.subr.mxu0 0.0
    %2906 = vmatpush2.msra.mxu0 0.0
    %2907 = vmatprep.subr.mxu0 0.0
    %2908 = vmatpush2.msra.mxu0 0.0
    %2909 = vmatprep.subr.mxu0 0.0
    %2910 = vmatpush2.msra.mxu0 0.0
    %2911 = vmatprep.subr.mxu0 0.0
    %2912 = vmatpush2.msra.mxu0 0.0
    %2913 = vmatprep.subr.mxu0 0.0
    %2914 = vmatpush2.msra.mxu0 0.0
    %2915 = vmatprep.subr.mxu0 0.0
    %2916 = vmatpush2.msra.mxu0 0.0
    %2917 = vmatprep.subr.mxu0 0.0
    %2918 = vmatpush2.msra.mxu0 0.0
    %2919 = vmatprep.subr.mxu0 0.0
    %2920 = vmatpush2.msra.mxu0 0.0
    %2921 = vmatprep.subr.mxu0 0.0
    %2922 = vmatpush2.msra.mxu0 0.0
    %2923 = vmatprep.subr.mxu0 0.0
    %2924 = vmatpush2.msra.mxu0 0.0
    %2925 = vmatprep.subr.mxu0 0.0
    %2926 = vmatpush2.msra.mxu0 0.0
    %2927 = vmatprep.subr.mxu0 0.0
    %2928 = vmatpush2.msra.mxu0 0.0
    %2929 = vmatprep.subr.mxu0 0.0
    %2930 = vmatpush2.msra.mxu0 0.0
    %2931 = vmatprep.subr.mxu0 0.0
    %2932 = vmatpush2.msra.mxu0 0.0
    %2933 = vmatprep.subr.mxu0 0.0
    %2934 = vmatpush2.msra.mxu0 0.0
    %2935 = vmatprep.mubr.f32.mxu0 0.0
    %2936 = vmatmul.mubr.f32.gmra.mxu0 %v2869
    %v2937 = vpop.f32.mrf.mxu0
    %v2938 = vadd.f32 0.0, %v2937
    %v2939 = vpop.f32.mrf.mxu0
    %v2940 = vadd.f32 0.0, %v2939
    %2941 = vdwg.mxu0
    %2942 = vmatprep.subr.mxu0 %v2309
    %2943 = vmatpush1.msra.mxu0 %v2308
    %2944 = vmatprep.subr.mxu0 %v2305
    %2945 = vmatpush1.msra.mxu0 %v2304
    %2946 = vmatprep.subr.mxu0 %v2301
    %2947 = vmatpush1.msra.mxu0 %v2300
    %2948 = vmatprep.subr.mxu0 %v2297
    %2949 = vmatpush1.msra.mxu0 %v2296
    %2950 = vmatprep.subr.mxu0 %v2293
    %2951 = vmatpush1.msra.mxu0 %v2292
    %2952 = vmatprep.subr.mxu0 %v2289
    %2953 = vmatpush1.msra.mxu0 %v2288
    %2954 = vmatprep.subr.mxu0 %v2285
    %2955 = vmatpush1.msra.mxu0 %v2284
    %2956 = vmatprep.subr.mxu0 %v2281
    %2957 = vmatpush1.msra.mxu0 %v2280
    %2958 = vmatprep.subr.mxu0 %v2277
    %2959 = vmatpush1.msra.mxu0 %v2276
    %2960 = vmatprep.subr.mxu0 %v2273
    %2961 = vmatpush1.msra.mxu0 %v2272
    %2962 = vmatprep.subr.mxu0 %v2269
    %2963 = vmatpush1.msra.mxu0 %v2268
    %2964 = vmatprep.subr.mxu0 %v2265
    %2965 = vmatpush1.msra.mxu0 %v2264
    %2966 = vmatprep.subr.mxu0 %v2261
    %2967 = vmatpush1.msra.mxu0 %v2260
    %2968 = vmatprep.subr.mxu0 %v2257
    %2969 = vmatpush1.msra.mxu0 %v2256
    %2970 = vmatprep.subr.mxu0 %v2253
    %2971 = vmatpush1.msra.mxu0 %v2252
    %2972 = vmatprep.subr.mxu0 %v2249
    %2973 = vmatpush1.msra.mxu0 %v2248
    %2974 = vmatprep.subr.mxu0 0.0
    %2975 = vmatpush2.msra.mxu0 0.0
    %2976 = vmatprep.subr.mxu0 0.0
    %2977 = vmatpush2.msra.mxu0 0.0
    %2978 = vmatprep.subr.mxu0 0.0
    %2979 = vmatpush2.msra.mxu0 0.0
    %2980 = vmatprep.subr.mxu0 0.0
    %2981 = vmatpush2.msra.mxu0 0.0
    %2982 = vmatprep.subr.mxu0 0.0
    %2983 = vmatpush2.msra.mxu0 0.0
    %2984 = vmatprep.subr.mxu0 0.0
    %2985 = vmatpush2.msra.mxu0 0.0
    %2986 = vmatprep.subr.mxu0 0.0
    %2987 = vmatpush2.msra.mxu0 0.0
    %2988 = vmatprep.subr.mxu0 0.0
    %2989 = vmatpush2.msra.mxu0 0.0
    %2990 = vmatprep.subr.mxu0 0.0
    %2991 = vmatpush2.msra.mxu0 0.0
    %2992 = vmatprep.subr.mxu0 0.0
    %2993 = vmatpush2.msra.mxu0 0.0
    %2994 = vmatprep.subr.mxu0 0.0
    %2995 = vmatpush2.msra.mxu0 0.0
    %2996 = vmatprep.subr.mxu0 0.0
    %2997 = vmatpush2.msra.mxu0 0.0
    %2998 = vmatprep.subr.mxu0 0.0
    %2999 = vmatpush2.msra.mxu0 0.0
    %3000 = vmatprep.subr.mxu0 0.0
    %3001 = vmatpush2.msra.mxu0 0.0
    %3002 = vmatprep.subr.mxu0 0.0
    %3003 = vmatpush2.msra.mxu0 0.0
    %3004 = vmatprep.subr.mxu0 0.0
    %3005 = vmatpush2.msra.mxu0 0.0
    %3006 = vmatprep.mubr.f32.mxu0 0.0
    %3007 = vmatmul.mubr.f32.gmra.mxu0 %v2869
    %v3008 = vpop.f32.mrf.mxu0
    %v3009 = vadd.f32 0.0, %v3008
    %v3010 = vpop.f32.mrf.mxu0
    %v3011 = vadd.f32 0.0, %v3010
    %3012 = vdwg.mxu0
    %v3013 = vadd.f32 %v2164, %v2938
    %v3014 = vadd.f32 %v2166, %v2940
    %v3015 = vadd.f32 %v2241, %v3009
    %v3016 = vadd.f32 %v2243, %v3011
    %v3017 = vxor.u32 %v3013, 2147483648
    %v3018 = vxor.u32 %v3014, 2147483648
    %v3019 = vxor.u32 %v3015, 2147483648
    %v3020 = vmul.f32 %v3017, 1.442695
    %v3021 = vpow.pop %v3020
    %v3022 = vmul.f32 %v3018, 1.442695
    %v3023 = vpow.pop %v3022
    %v3024 = vmul.f32 %v3019, 1.442695
    %v3025 = vpow.pop %v3024
    %v3026 = vadd.f32 %v3021, 1.0
    %v3027 = vadd.f32 %v3023, 1.0
    %v3028 = vadd.f32 %v3025, 1.0
    %v3029 = vrcp.pop %v3026
    %v3030 = vmul.f32 1.0, %v3029
    %v3031 = vrcp.pop %v3027
    %v3032 = vmul.f32 1.0, %v3031
    %v3033 = vrcp.pop %v3028
    %v3034 = vmul.f32 1.0, %v3033
    %v3035 = vtanh.pop %v3016
    %v3037 = vrot.slane %v2865, 2
    %v3039 = vmul.f32 %v3032, %v3037
    %v3040 = vmul.f32 %v3030, %v3035
    %v3041 = vadd.f32 %v3039, %v3040
    %v3042 = vtanh.pop %v3041
    %v3043 = vmul.f32 %v3034, %v3042
    %3044 = vmatprep.subr.mxu0 %v2307
    %3045 = vmatpush1.msra.mxu0 %v2306
    %3046 = vmatprep.subr.mxu0 %v2303
    %3047 = vmatpush1.msra.mxu0 %v2302
    %3048 = vmatprep.subr.mxu0 %v2299
    %3049 = vmatpush1.msra.mxu0 %v2298
    %3050 = vmatprep.subr.mxu0 %v2295
    %3051 = vmatpush1.msra.mxu0 %v2294
    %3052 = vmatprep.subr.mxu0 %v2291
    %3053 = vmatpush1.msra.mxu0 %v2290
    %3054 = vmatprep.subr.mxu0 %v2287
    %3055 = vmatpush1.msra.mxu0 %v2286
    %3056 = vmatprep.subr.mxu0 %v2283
    %3057 = vmatpush1.msra.mxu0 %v2282
    %3058 = vmatprep.subr.mxu0 %v2279
    %3059 = vmatpush1.msra.mxu0 %v2278
    %3060 = vmatprep.subr.mxu0 %v2275
    %3061 = vmatpush1.msra.mxu0 %v2274
    %3062 = vmatprep.subr.mxu0 %v2271
    %3063 = vmatpush1.msra.mxu0 %v2270
    %3064 = vmatprep.subr.mxu0 %v2267
    %3065 = vmatpush1.msra.mxu0 %v2266
    %3066 = vmatprep.subr.mxu0 %v2263
    %3067 = vmatpush1.msra.mxu0 %v2262
    %3068 = vmatprep.subr.mxu0 %v2259
    %3069 = vmatpush1.msra.mxu0 %v2258
    %3070 = vmatprep.subr.mxu0 %v2255
    %3071 = vmatpush1.msra.mxu0 %v2254
    %3072 = vmatprep.subr.mxu0 %v2251
    %3073 = vmatpush1.msra.mxu0 %v2250
    %3074 = vmatprep.subr.mxu0 %v2247
    %3075 = vmatpush1.msra.mxu0 %v2246
    %3076 = vmatprep.subr.mxu0 0.0
    %3077 = vmatpush2.msra.mxu0 0.0
    %3078 = vmatprep.subr.mxu0 0.0
    %3079 = vmatpush2.msra.mxu0 0.0
    %3080 = vmatprep.subr.mxu0 0.0
    %3081 = vmatpush2.msra.mxu0 0.0
    %3082 = vmatprep.subr.mxu0 0.0
    %3083 = vmatpush2.msra.mxu0 0.0
    %3084 = vmatprep.subr.mxu0 0.0
    %3085 = vmatpush2.msra.mxu0 0.0
    %3086 = vmatprep.subr.mxu0 0.0
    %3087 = vmatpush2.msra.mxu0 0.0
    %3088 = vmatprep.subr.mxu0 0.0
    %3089 = vmatpush2.msra.mxu0 0.0
    %3090 = vmatprep.subr.mxu0 0.0
    %3091 = vmatpush2.msra.mxu0 0.0
    %3092 = vmatprep.subr.mxu0 0.0
    %3093 = vmatpush2.msra.mxu0 0.0
    %3094 = vmatprep.subr.mxu0 0.0
    %3095 = vmatpush2.msra.mxu0 0.0
    %3096 = vmatprep.subr.mxu0 0.0
    %3097 = vmatpush2.msra.mxu0 0.0
    %3098 = vmatprep.subr.mxu0 0.0
    %3099 = vmatpush2.msra.mxu0 0.0
    %3100 = vmatprep.subr.mxu0 0.0
    %3101 = vmatpush2.msra.mxu0 0.0
    %3102 = vmatprep.subr.mxu0 0.0
    %3103 = vmatpush2.msra.mxu0 0.0
    %3104 = vmatprep.subr.mxu0 0.0
    %3105 = vmatpush2.msra.mxu0 0.0
    %3106 = vmatprep.subr.mxu0 0.0
    %3107 = vmatpush2.msra.mxu0 0.0
    %3108 = vmatprep.mubr.f32.mxu0 0.0
    %3109 = vmatmul.mubr.f32.gmra.mxu0 %v3043
    %v3110 = vpop.f32.mrf.mxu0
    %v3111 = vadd.f32 0.0, %v3110
    %v3112 = vpop.f32.mrf.mxu0
    %v3113 = vadd.f32 0.0, %v3112
    %3114 = vdwg.mxu0
    %3115 = vmatprep.subr.mxu0 %v2309
    %3116 = vmatpush1.msra.mxu0 %v2308
    %3117 = vmatprep.subr.mxu0 %v2305
    %3118 = vmatpush1.msra.mxu0 %v2304
    %3119 = vmatprep.subr.mxu0 %v2301
    %3120 = vmatpush1.msra.mxu0 %v2300
    %3121 = vmatprep.subr.mxu0 %v2297
    %3122 = vmatpush1.msra.mxu0 %v2296
    %3123 = vmatprep.subr.mxu0 %v2293
    %3124 = vmatpush1.msra.mxu0 %v2292
    %3125 = vmatprep.subr.mxu0 %v2289
    %3126 = vmatpush1.msra.mxu0 %v2288
    %3127 = vmatprep.subr.mxu0 %v2285
    %3128 = vmatpush1.msra.mxu0 %v2284
    %3129 = vmatprep.subr.mxu0 %v2281
    %3130 = vmatpush1.msra.mxu0 %v2280
    %3131 = vmatprep.subr.mxu0 %v2277
    %3132 = vmatpush1.msra.mxu0 %v2276
    %3133 = vmatprep.subr.mxu0 %v2273
    %3134 = vmatpush1.msra.mxu0 %v2272
    %3135 = vmatprep.subr.mxu0 %v2269
    %3136 = vmatpush1.msra.mxu0 %v2268
    %3137 = vmatprep.subr.mxu0 %v2265
    %3138 = vmatpush1.msra.mxu0 %v2264
    %3139 = vmatprep.subr.mxu0 %v2261
    %3140 = vmatpush1.msra.mxu0 %v2260
    %3141 = vmatprep.subr.mxu0 %v2257
    %3142 = vmatpush1.msra.mxu0 %v2256
    %3143 = vmatprep.subr.mxu0 %v2253
    %3144 = vmatpush1.msra.mxu0 %v2252
    %3145 = vmatprep.subr.mxu0 %v2249
    %3146 = vmatpush1.msra.mxu0 %v2248
    %3147 = vmatprep.subr.mxu0 0.0
    %3148 = vmatpush2.msra.mxu0 0.0
    %3149 = vmatprep.subr.mxu0 0.0
    %3150 = vmatpush2.msra.mxu0 0.0
    %3151 = vmatprep.subr.mxu0 0.0
    %3152 = vmatpush2.msra.mxu0 0.0
    %3153 = vmatprep.subr.mxu0 0.0
    %3154 = vmatpush2.msra.mxu0 0.0
    %3155 = vmatprep.subr.mxu0 0.0
    %3156 = vmatpush2.msra.mxu0 0.0
    %3157 = vmatprep.subr.mxu0 0.0
    %3158 = vmatpush2.msra.mxu0 0.0
    %3159 = vmatprep.subr.mxu0 0.0
    %3160 = vmatpush2.msra.mxu0 0.0
    %3161 = vmatprep.subr.mxu0 0.0
    %3162 = vmatpush2.msra.mxu0 0.0
    %3163 = vmatprep.subr.mxu0 0.0
    %3164 = vmatpush2.msra.mxu0 0.0
    %3165 = vmatprep.subr.mxu0 0.0
    %3166 = vmatpush2.msra.mxu0 0.0
    %3167 = vmatprep.subr.mxu0 0.0
    %3168 = vmatpush2.msra.mxu0 0.0
    %3169 = vmatprep.subr.mxu0 0.0
    %3170 = vmatpush2.msra.mxu0 0.0
    %3171 = vmatprep.subr.mxu0 0.0
    %3172 = vmatpush2.msra.mxu0 0.0
    %3173 = vmatprep.subr.mxu0 0.0
    %3174 = vmatpush2.msra.mxu0 0.0
    %3175 = vmatprep.subr.mxu0 0.0
    %3176 = vmatpush2.msra.mxu0 0.0
    %3177 = vmatprep.subr.mxu0 0.0
    %3178 = vmatpush2.msra.mxu0 0.0
    %3179 = vmatprep.mubr.f32.mxu0 0.0
    %3180 = vmatmul.mubr.f32.gmra.mxu0 %v3043
    %v3181 = vpop.f32.mrf.mxu0
    %v3182 = vadd.f32 0.0, %v3181
    %v3183 = vpop.f32.mrf.mxu0
    %v3184 = vadd.f32 0.0, %v3183
    %3185 = vdwg.mxu0
    %v3190 = vrot.slane %v3111, 2
    %v3191 = vrot.slane %v3113, 2
    %v3192 = vrot.slane %v3182, 2
    %v3193 = vrot.slane %v3184, 2
    %v3198 = vadd.f32 %v2158, %v3190
    %v3199 = vadd.f32 %v2160, %v3191
    %v3200 = vadd.f32 %v2235, %v3192
    %v3201 = vadd.f32 %v2237, %v3193
    %v3202 = vxor.u32 %v3198, 2147483648
    %v3203 = vxor.u32 %v3199, 2147483648
    %v3204 = vxor.u32 %v3200, 2147483648
    %v3205 = vmul.f32 %v3202, 1.442695
    %v3206 = vpow.pop %v3205
    %v3207 = vmul.f32 %v3203, 1.442695
    %v3208 = vpow.pop %v3207
    %v3209 = vmul.f32 %v3204, 1.442695
    %v3210 = vpow.pop %v3209
    %v3211 = vadd.f32 %v3206, 1.0
    %v3212 = vadd.f32 %v3208, 1.0
    %v3213 = vadd.f32 %v3210, 1.0
    %v3214 = vrcp.pop %v3211
    %v3215 = vmul.f32 1.0, %v3214
    %v3216 = vrcp.pop %v3212
    %v3217 = vmul.f32 1.0, %v3216
    %v3218 = vrcp.pop %v3213
    %v3219 = vmul.f32 1.0, %v3218
    %v3220 = vtanh.pop %v3201
    %v3222 = vrot.slane %v3041, 2
    %v3224 = vmul.f32 %v3217, %v3222
    %v3225 = vmul.f32 %v3215, %v3220
    %v3226 = vadd.f32 %v3224, %v3225
    %v3227 = vtanh.pop %v3226
    %v3228 = vmul.f32 %v3219, %v3227
    %v3230 = vrot.slane %v3228, 6
    %3232 = vmatprep.subr.mxu0 %v2307
    %3233 = vmatpush1.msra.mxu0 %v2306
    %3234 = vmatprep.subr.mxu0 %v2303
    %3235 = vmatpush1.msra.mxu0 %v2302
    %3236 = vmatprep.subr.mxu0 %v2299
    %3237 = vmatpush1.msra.mxu0 %v2298
    %3238 = vmatprep.subr.mxu0 %v2295
    %3239 = vmatpush1.msra.mxu0 %v2294
    %3240 = vmatprep.subr.mxu0 %v2291
    %3241 = vmatpush1.msra.mxu0 %v2290
    %3242 = vmatprep.subr.mxu0 %v2287
    %3243 = vmatpush1.msra.mxu0 %v2286
    %3244 = vmatprep.subr.mxu0 %v2283
    %3245 = vmatpush1.msra.mxu0 %v2282
    %3246 = vmatprep.subr.mxu0 %v2279
    %3247 = vmatpush1.msra.mxu0 %v2278
    %3248 = vmatprep.subr.mxu0 %v2275
    %3249 = vmatpush1.msra.mxu0 %v2274
    %3250 = vmatprep.subr.mxu0 %v2271
    %3251 = vmatpush1.msra.mxu0 %v2270
    %3252 = vmatprep.subr.mxu0 %v2267
    %3253 = vmatpush1.msra.mxu0 %v2266
    %3254 = vmatprep.subr.mxu0 %v2263
    %3255 = vmatpush1.msra.mxu0 %v2262
    %3256 = vmatprep.subr.mxu0 %v2259
    %3257 = vmatpush1.msra.mxu0 %v2258
    %3258 = vmatprep.subr.mxu0 %v2255
    %3259 = vmatpush1.msra.mxu0 %v2254
    %3260 = vmatprep.subr.mxu0 %v2251
    %3261 = vmatpush1.msra.mxu0 %v2250
    %3262 = vmatprep.subr.mxu0 %v2247
    %3263 = vmatpush1.msra.mxu0 %v2246
    %3264 = vmatprep.subr.mxu0 0.0
    %3265 = vmatpush2.msra.mxu0 0.0
    %3266 = vmatprep.subr.mxu0 0.0
    %3267 = vmatpush2.msra.mxu0 0.0
    %3268 = vmatprep.subr.mxu0 0.0
    %3269 = vmatpush2.msra.mxu0 0.0
    %3270 = vmatprep.subr.mxu0 0.0
    %3271 = vmatpush2.msra.mxu0 0.0
    %3272 = vmatprep.subr.mxu0 0.0
    %3273 = vmatpush2.msra.mxu0 0.0
    %3274 = vmatprep.subr.mxu0 0.0
    %3275 = vmatpush2.msra.mxu0 0.0
    %3276 = vmatprep.subr.mxu0 0.0
    %3277 = vmatpush2.msra.mxu0 0.0
    %3278 = vmatprep.subr.mxu0 0.0
    %3279 = vmatpush2.msra.mxu0 0.0
    %3280 = vmatprep.subr.mxu0 0.0
    %3281 = vmatpush2.msra.mxu0 0.0
    %3282 = vmatprep.subr.mxu0 0.0
    %3283 = vmatpush2.msra.mxu0 0.0
    %3284 = vmatprep.subr.mxu0 0.0
    %3285 = vmatpush2.msra.mxu0 0.0
    %3286 = vmatprep.subr.mxu0 0.0
    %3287 = vmatpush2.msra.mxu0 0.0
    %3288 = vmatprep.subr.mxu0 0.0
    %3289 = vmatpush2.msra.mxu0 0.0
    %3290 = vmatprep.subr.mxu0 0.0
    %3291 = vmatpush2.msra.mxu0 0.0
    %3292 = vmatprep.subr.mxu0 0.0
    %3293 = vmatpush2.msra.mxu0 0.0
    %3294 = vmatprep.subr.mxu0 0.0
    %3295 = vmatpush2.msra.mxu0 0.0
    %3296 = vmatprep.mubr.f32.mxu0 0.0
    %3297 = vmatmul.mubr.f32.gmra.mxu0 %v3230
    %v3298 = vpop.f32.mrf.mxu0
    %v3299 = vadd.f32 0.0, %v3298
    %v3300 = vpop.f32.mrf.mxu0
    %v3301 = vadd.f32 0.0, %v3300
    %3302 = vdwg.mxu0
    %3303 = vmatprep.subr.mxu0 %v2309
    %3304 = vmatpush1.msra.mxu0 %v2308
    %3305 = vmatprep.subr.mxu0 %v2305
    %3306 = vmatpush1.msra.mxu0 %v2304
    %3307 = vmatprep.subr.mxu0 %v2301
    %3308 = vmatpush1.msra.mxu0 %v2300
    %3309 = vmatprep.subr.mxu0 %v2297
    %3310 = vmatpush1.msra.mxu0 %v2296
    %3311 = vmatprep.subr.mxu0 %v2293
    %3312 = vmatpush1.msra.mxu0 %v2292
    %3313 = vmatprep.subr.mxu0 %v2289
    %3314 = vmatpush1.msra.mxu0 %v2288
    %3315 = vmatprep.subr.mxu0 %v2285
    %3316 = vmatpush1.msra.mxu0 %v2284
    %3317 = vmatprep.subr.mxu0 %v2281
    %3318 = vmatpush1.msra.mxu0 %v2280
    %3319 = vmatprep.subr.mxu0 %v2277
    %3320 = vmatpush1.msra.mxu0 %v2276
    %3321 = vmatprep.subr.mxu0 %v2273
    %3322 = vmatpush1.msra.mxu0 %v2272
    %3323 = vmatprep.subr.mxu0 %v2269
    %3324 = vmatpush1.msra.mxu0 %v2268
    %3325 = vmatprep.subr.mxu0 %v2265
    %3326 = vmatpush1.msra.mxu0 %v2264
    %3327 = vmatprep.subr.mxu0 %v2261
    %3328 = vmatpush1.msra.mxu0 %v2260
    %3329 = vmatprep.subr.mxu0 %v2257
    %3330 = vmatpush1.msra.mxu0 %v2256
    %3331 = vmatprep.subr.mxu0 %v2253
    %3332 = vmatpush1.msra.mxu0 %v2252
    %3333 = vmatprep.subr.mxu0 %v2249
    %3334 = vmatpush1.msra.mxu0 %v2248
    %3335 = vmatprep.subr.mxu0 0.0
    %3336 = vmatpush2.msra.mxu0 0.0
    %3337 = vmatprep.subr.mxu0 0.0
    %3338 = vmatpush2.msra.mxu0 0.0
    %3339 = vmatprep.subr.mxu0 0.0
    %3340 = vmatpush2.msra.mxu0 0.0
    %3341 = vmatprep.subr.mxu0 0.0
    %3342 = vmatpush2.msra.mxu0 0.0
    %3343 = vmatprep.subr.mxu0 0.0
    %3344 = vmatpush2.msra.mxu0 0.0
    %3345 = vmatprep.subr.mxu0 0.0
    %3346 = vmatpush2.msra.mxu0 0.0
    %3347 = vmatprep.subr.mxu0 0.0
    %3348 = vmatpush2.msra.mxu0 0.0
    %3349 = vmatprep.subr.mxu0 0.0
    %3350 = vmatpush2.msra.mxu0 0.0
    %3351 = vmatprep.subr.mxu0 0.0
    %3352 = vmatpush2.msra.mxu0 0.0
    %3353 = vmatprep.subr.mxu0 0.0
    %3354 = vmatpush2.msra.mxu0 0.0
    %3355 = vmatprep.subr.mxu0 0.0
    %3356 = vmatpush2.msra.mxu0 0.0
    %3357 = vmatprep.subr.mxu0 0.0
    %3358 = vmatpush2.msra.mxu0 0.0
    %3359 = vmatprep.subr.mxu0 0.0
    %3360 = vmatpush2.msra.mxu0 0.0
    %3361 = vmatprep.subr.mxu0 0.0
    %3362 = vmatpush2.msra.mxu0 0.0
    %3363 = vmatprep.subr.mxu0 0.0
    %3364 = vmatpush2.msra.mxu0 0.0
    %3365 = vmatprep.subr.mxu0 0.0
    %3366 = vmatpush2.msra.mxu0 0.0
    %3367 = vmatprep.mubr.f32.mxu0 0.0
    %3368 = vmatmul.mubr.f32.gmra.mxu0 %v3230
    %v3369 = vpop.f32.mrf.mxu0
    %v3370 = vadd.f32 0.0, %v3369
    %v3371 = vpop.f32.mrf.mxu0
    %v3372 = vadd.f32 0.0, %v3371
    %3373 = vdwg.mxu0
    %v3378 = vrot.slane %v3299, 4
    %v3379 = vrot.slane %v3301, 4
    %v3380 = vrot.slane %v3370, 4
    %v3381 = vrot.slane %v3372, 4
    %v3386 = vadd.f32 %v2158, %v3378
    %v3387 = vadd.f32 %v2160, %v3379
    %v3388 = vadd.f32 %v2235, %v3380
    %v3389 = vadd.f32 %v2237, %v3381
    %v3390 = vxor.u32 %v3386, 2147483648
    %v3391 = vxor.u32 %v3387, 2147483648
    %v3392 = vxor.u32 %v3388, 2147483648
    %v3393 = vmul.f32 %v3390, 1.442695
    %v3394 = vpow.pop %v3393
    %v3395 = vmul.f32 %v3391, 1.442695
    %v3396 = vpow.pop %v3395
    %v3397 = vmul.f32 %v3392, 1.442695
    %v3398 = vpow.pop %v3397
    %v3399 = vadd.f32 %v3394, 1.0
    %v3400 = vadd.f32 %v3396, 1.0
    %v3401 = vadd.f32 %v3398, 1.0
    %v3402 = vrcp.pop %v3399
    %v3403 = vmul.f32 1.0, %v3402
    %v3404 = vrcp.pop %v3400
    %v3405 = vmul.f32 1.0, %v3404
    %v3406 = vrcp.pop %v3401
    %v3407 = vmul.f32 1.0, %v3406
    %v3408 = vtanh.pop %v3389
    %v3410 = vrot.slane %v3226, 2
    %v3412 = vmul.f32 %v3405, %v3410
    %v3413 = vmul.f32 %v3403, %v3408
    %v3414 = vadd.f32 %v3412, %v3413
    %v3415 = vtanh.pop %v3414
    %v3416 = vmul.f32 %v3407, %v3415
    %v3418 = vrot.slane %v3416, 4
    %3420 = vmatprep.subr.mxu0 %v2307
    %3421 = vmatpush1.msra.mxu0 %v2306
    %3422 = vmatprep.subr.mxu0 %v2303
    %3423 = vmatpush1.msra.mxu0 %v2302
    %3424 = vmatprep.subr.mxu0 %v2299
    %3425 = vmatpush1.msra.mxu0 %v2298
    %3426 = vmatprep.subr.mxu0 %v2295
    %3427 = vmatpush1.msra.mxu0 %v2294
    %3428 = vmatprep.subr.mxu0 %v2291
    %3429 = vmatpush1.msra.mxu0 %v2290
    %3430 = vmatprep.subr.mxu0 %v2287
    %3431 = vmatpush1.msra.mxu0 %v2286
    %3432 = vmatprep.subr.mxu0 %v2283
    %3433 = vmatpush1.msra.mxu0 %v2282
    %3434 = vmatprep.subr.mxu0 %v2279
    %3435 = vmatpush1.msra.mxu0 %v2278
    %3436 = vmatprep.subr.mxu0 %v2275
    %3437 = vmatpush1.msra.mxu0 %v2274
    %3438 = vmatprep.subr.mxu0 %v2271
    %3439 = vmatpush1.msra.mxu0 %v2270
    %3440 = vmatprep.subr.mxu0 %v2267
    %3441 = vmatpush1.msra.mxu0 %v2266
    %3442 = vmatprep.subr.mxu0 %v2263
    %3443 = vmatpush1.msra.mxu0 %v2262
    %3444 = vmatprep.subr.mxu0 %v2259
    %3445 = vmatpush1.msra.mxu0 %v2258
    %3446 = vmatprep.subr.mxu0 %v2255
    %3447 = vmatpush1.msra.mxu0 %v2254
    %3448 = vmatprep.subr.mxu0 %v2251
    %3449 = vmatpush1.msra.mxu0 %v2250
    %3450 = vmatprep.subr.mxu0 %v2247
    %3451 = vmatpush1.msra.mxu0 %v2246
    %3452 = vmatprep.subr.mxu0 0.0
    %3453 = vmatpush2.msra.mxu0 0.0
    %3454 = vmatprep.subr.mxu0 0.0
    %3455 = vmatpush2.msra.mxu0 0.0
    %3456 = vmatprep.subr.mxu0 0.0
    %3457 = vmatpush2.msra.mxu0 0.0
    %3458 = vmatprep.subr.mxu0 0.0
    %3459 = vmatpush2.msra.mxu0 0.0
    %3460 = vmatprep.subr.mxu0 0.0
    %3461 = vmatpush2.msra.mxu0 0.0
    %3462 = vmatprep.subr.mxu0 0.0
    %3463 = vmatpush2.msra.mxu0 0.0
    %3464 = vmatprep.subr.mxu0 0.0
    %3465 = vmatpush2.msra.mxu0 0.0
    %3466 = vmatprep.subr.mxu0 0.0
    %3467 = vmatpush2.msra.mxu0 0.0
    %3468 = vmatprep.subr.mxu0 0.0
    %3469 = vmatpush2.msra.mxu0 0.0
    %3470 = vmatprep.subr.mxu0 0.0
    %3471 = vmatpush2.msra.mxu0 0.0
    %3472 = vmatprep.subr.mxu0 0.0
    %3473 = vmatpush2.msra.mxu0 0.0
    %3474 = vmatprep.subr.mxu0 0.0
    %3475 = vmatpush2.msra.mxu0 0.0
    %3476 = vmatprep.subr.mxu0 0.0
    %3477 = vmatpush2.msra.mxu0 0.0
    %3478 = vmatprep.subr.mxu0 0.0
    %3479 = vmatpush2.msra.mxu0 0.0
    %3480 = vmatprep.subr.mxu0 0.0
    %3481 = vmatpush2.msra.mxu0 0.0
    %3482 = vmatprep.subr.mxu0 0.0
    %3483 = vmatpush2.msra.mxu0 0.0
    %3484 = vmatprep.mubr.f32.mxu0 0.0
    %3485 = vmatmul.mubr.f32.gmra.mxu0 %v3418
    %v3486 = vpop.f32.mrf.mxu0
    %v3487 = vadd.f32 0.0, %v3486
    %v3488 = vpop.f32.mrf.mxu0
    %v3489 = vadd.f32 0.0, %v3488
    %3490 = vdwg.mxu0
    %3491 = vmatprep.subr.mxu0 %v2309
    %3492 = vmatpush1.msra.mxu0 %v2308
    %3493 = vmatprep.subr.mxu0 %v2305
    %3494 = vmatpush1.msra.mxu0 %v2304
    %3495 = vmatprep.subr.mxu0 %v2301
    %3496 = vmatpush1.msra.mxu0 %v2300
    %3497 = vmatprep.subr.mxu0 %v2297
    %3498 = vmatpush1.msra.mxu0 %v2296
    %3499 = vmatprep.subr.mxu0 %v2293
    %3500 = vmatpush1.msra.mxu0 %v2292
    %3501 = vmatprep.subr.mxu0 %v2289
    %3502 = vmatpush1.msra.mxu0 %v2288
    %3503 = vmatprep.subr.mxu0 %v2285
    %3504 = vmatpush1.msra.mxu0 %v2284
    %3505 = vmatprep.subr.mxu0 %v2281
    %3506 = vmatpush1.msra.mxu0 %v2280
    %3507 = vmatprep.subr.mxu0 %v2277
    %3508 = vmatpush1.msra.mxu0 %v2276
    %3509 = vmatprep.subr.mxu0 %v2273
    %3510 = vmatpush1.msra.mxu0 %v2272
    %3511 = vmatprep.subr.mxu0 %v2269
    %3512 = vmatpush1.msra.mxu0 %v2268
    %3513 = vmatprep.subr.mxu0 %v2265
    %3514 = vmatpush1.msra.mxu0 %v2264
    %3515 = vmatprep.subr.mxu0 %v2261
    %3516 = vmatpush1.msra.mxu0 %v2260
    %3517 = vmatprep.subr.mxu0 %v2257
    %3518 = vmatpush1.msra.mxu0 %v2256
    %3519 = vmatprep.subr.mxu0 %v2253
    %3520 = vmatpush1.msra.mxu0 %v2252
    %3521 = vmatprep.subr.mxu0 %v2249
    %3522 = vmatpush1.msra.mxu0 %v2248
    %3523 = vmatprep.subr.mxu0 0.0
    %3524 = vmatpush2.msra.mxu0 0.0
    %3525 = vmatprep.subr.mxu0 0.0
    %3526 = vmatpush2.msra.mxu0 0.0
    %3527 = vmatprep.subr.mxu0 0.0
    %3528 = vmatpush2.msra.mxu0 0.0
    %3529 = vmatprep.subr.mxu0 0.0
    %3530 = vmatpush2.msra.mxu0 0.0
    %3531 = vmatprep.subr.mxu0 0.0
    %3532 = vmatpush2.msra.mxu0 0.0
    %3533 = vmatprep.subr.mxu0 0.0
    %3534 = vmatpush2.msra.mxu0 0.0
    %3535 = vmatprep.subr.mxu0 0.0
    %3536 = vmatpush2.msra.mxu0 0.0
    %3537 = vmatprep.subr.mxu0 0.0
    %3538 = vmatpush2.msra.mxu0 0.0
    %3539 = vmatprep.subr.mxu0 0.0
    %3540 = vmatpush2.msra.mxu0 0.0
    %3541 = vmatprep.subr.mxu0 0.0
    %3542 = vmatpush2.msra.mxu0 0.0
    %3543 = vmatprep.subr.mxu0 0.0
    %3544 = vmatpush2.msra.mxu0 0.0
    %3545 = vmatprep.subr.mxu0 0.0
    %3546 = vmatpush2.msra.mxu0 0.0
    %3547 = vmatprep.subr.mxu0 0.0
    %3548 = vmatpush2.msra.mxu0 0.0
    %3549 = vmatprep.subr.mxu0 0.0
    %3550 = vmatpush2.msra.mxu0 0.0
    %3551 = vmatprep.subr.mxu0 0.0
    %3552 = vmatpush2.msra.mxu0 0.0
    %3553 = vmatprep.subr.mxu0 0.0
    %3554 = vmatpush2.msra.mxu0 0.0
    %3555 = vmatprep.mubr.f32.mxu0 0.0
    %3556 = vmatmul.mubr.f32.gmra.mxu0 %v3418
    %v3557 = vpop.f32.mrf.mxu0
    %v3558 = vadd.f32 0.0, %v3557
    %v3559 = vpop.f32.mrf.mxu0
    %v3560 = vadd.f32 0.0, %v3559
    %3561 = vdwg.mxu0
    %v3566 = vrot.slane %v3487, 6
    %v3567 = vrot.slane %v3489, 6
    %v3568 = vrot.slane %v3558, 6
    %v3569 = vrot.slane %v3560, 6
    %v3574 = vadd.f32 %v2158, %v3566
    %v3575 = vadd.f32 %v2160, %v3567
    %v3576 = vadd.f32 %v2235, %v3568
    %v3577 = vadd.f32 %v2237, %v3569
    %v3578 = vxor.u32 %v3574, 2147483648
    %v3579 = vxor.u32 %v3575, 2147483648
    %v3580 = vxor.u32 %v3576, 2147483648
    %v3581 = vmul.f32 %v3578, 1.442695
    %v3582 = vpow.pop %v3581
    %v3583 = vmul.f32 %v3579, 1.442695
    %v3584 = vpow.pop %v3583
    %v3585 = vmul.f32 %v3580, 1.442695
    %v3586 = vpow.pop %v3585
    %v3587 = vadd.f32 %v3582, 1.0
    %v3588 = vadd.f32 %v3584, 1.0
    %v3589 = vadd.f32 %v3586, 1.0
    %v3590 = vrcp.pop %v3587
    %v3591 = vmul.f32 1.0, %v3590
    %v3592 = vrcp.pop %v3588
    %v3593 = vmul.f32 1.0, %v3592
    %v3594 = vrcp.pop %v3589
    %v3595 = vmul.f32 1.0, %v3594
    %v3596 = vtanh.pop %v3577
    %v3598 = vrot.slane %v3414, 2
    %v3600 = vmul.f32 %v3593, %v3598
    %v3601 = vmul.f32 %v3591, %v3596
    %v3602 = vadd.f32 %v3600, %v3601
    %v3603 = vtanh.pop %v3602
    %v3604 = vmul.f32 %v3595, %v3603
    %v3606 = vrot.slane %v3604, 2
    %3608 = vmatprep.subr.mxu0 %v2307
    %3609 = vmatpush1.msra.mxu0 %v2306
    %3610 = vmatprep.subr.mxu0 %v2303
    %3611 = vmatpush1.msra.mxu0 %v2302
    %3612 = vmatprep.subr.mxu0 %v2299
    %3613 = vmatpush1.msra.mxu0 %v2298
    %3614 = vmatprep.subr.mxu0 %v2295
    %3615 = vmatpush1.msra.mxu0 %v2294
    %3616 = vmatprep.subr.mxu0 %v2291
    %3617 = vmatpush1.msra.mxu0 %v2290
    %3618 = vmatprep.subr.mxu0 %v2287
    %3619 = vmatpush1.msra.mxu0 %v2286
    %3620 = vmatprep.subr.mxu0 %v2283
    %3621 = vmatpush1.msra.mxu0 %v2282
    %3622 = vmatprep.subr.mxu0 %v2279
    %3623 = vmatpush1.msra.mxu0 %v2278
    %3624 = vmatprep.subr.mxu0 %v2275
    %3625 = vmatpush1.msra.mxu0 %v2274
    %3626 = vmatprep.subr.mxu0 %v2271
    %3627 = vmatpush1.msra.mxu0 %v2270
    %3628 = vmatprep.subr.mxu0 %v2267
    %3629 = vmatpush1.msra.mxu0 %v2266
    %3630 = vmatprep.subr.mxu0 %v2263
    %3631 = vmatpush1.msra.mxu0 %v2262
    %3632 = vmatprep.subr.mxu0 %v2259
    %3633 = vmatpush1.msra.mxu0 %v2258
    %3634 = vmatprep.subr.mxu0 %v2255
    %3635 = vmatpush1.msra.mxu0 %v2254
    %3636 = vmatprep.subr.mxu0 %v2251
    %3637 = vmatpush1.msra.mxu0 %v2250
    %3638 = vmatprep.subr.mxu0 %v2247
    %3639 = vmatpush1.msra.mxu0 %v2246
    %3640 = vmatprep.subr.mxu0 0.0
    %3641 = vmatpush2.msra.mxu0 0.0
    %3642 = vmatprep.subr.mxu0 0.0
    %3643 = vmatpush2.msra.mxu0 0.0
    %3644 = vmatprep.subr.mxu0 0.0
    %3645 = vmatpush2.msra.mxu0 0.0
    %3646 = vmatprep.subr.mxu0 0.0
    %3647 = vmatpush2.msra.mxu0 0.0
    %3648 = vmatprep.subr.mxu0 0.0
    %3649 = vmatpush2.msra.mxu0 0.0
    %3650 = vmatprep.subr.mxu0 0.0
    %3651 = vmatpush2.msra.mxu0 0.0
    %3652 = vmatprep.subr.mxu0 0.0
    %3653 = vmatpush2.msra.mxu0 0.0
    %3654 = vmatprep.subr.mxu0 0.0
    %3655 = vmatpush2.msra.mxu0 0.0
    %3656 = vmatprep.subr.mxu0 0.0
    %3657 = vmatpush2.msra.mxu0 0.0
    %3658 = vmatprep.subr.mxu0 0.0
    %3659 = vmatpush2.msra.mxu0 0.0
    %3660 = vmatprep.subr.mxu0 0.0
    %3661 = vmatpush2.msra.mxu0 0.0
    %3662 = vmatprep.subr.mxu0 0.0
    %3663 = vmatpush2.msra.mxu0 0.0
    %3664 = vmatprep.subr.mxu0 0.0
    %3665 = vmatpush2.msra.mxu0 0.0
    %3666 = vmatprep.subr.mxu0 0.0
    %3667 = vmatpush2.msra.mxu0 0.0
    %3668 = vmatprep.subr.mxu0 0.0
    %3669 = vmatpush2.msra.mxu0 0.0
    %3670 = vmatprep.subr.mxu0 0.0
    %3671 = vmatpush2.msra.mxu0 0.0
    %3672 = vmatprep.mubr.f32.mxu0 0.0
    %3673 = vmatmul.mubr.f32.gmra.mxu0 %v3606
    %v3674 = vpop.f32.mrf.mxu0
    %v3675 = vadd.f32 0.0, %v3674
    %v3676 = vpop.f32.mrf.mxu0
    %v3677 = vadd.f32 0.0, %v3676
    %3678 = vdwg.mxu0
    %3679 = vmatprep.subr.mxu0 %v2309
    %3680 = vmatpush1.msra.mxu0 %v2308
    %3681 = vmatprep.subr.mxu0 %v2305
    %3682 = vmatpush1.msra.mxu0 %v2304
    %3683 = vmatprep.subr.mxu0 %v2301
    %3684 = vmatpush1.msra.mxu0 %v2300
    %3685 = vmatprep.subr.mxu0 %v2297
    %3686 = vmatpush1.msra.mxu0 %v2296
    %3687 = vmatprep.subr.mxu0 %v2293
    %3688 = vmatpush1.msra.mxu0 %v2292
    %3689 = vmatprep.subr.mxu0 %v2289
    %3690 = vmatpush1.msra.mxu0 %v2288
    %3691 = vmatprep.subr.mxu0 %v2285
    %3692 = vmatpush1.msra.mxu0 %v2284
    %3693 = vmatprep.subr.mxu0 %v2281
    %3694 = vmatpush1.msra.mxu0 %v2280
    %3695 = vmatprep.subr.mxu0 %v2277
    %3696 = vmatpush1.msra.mxu0 %v2276
    %3697 = vmatprep.subr.mxu0 %v2273
    %3698 = vmatpush1.msra.mxu0 %v2272
    %3699 = vmatprep.subr.mxu0 %v2269
    %3700 = vmatpush1.msra.mxu0 %v2268
    %3701 = vmatprep.subr.mxu0 %v2265
    %3702 = vmatpush1.msra.mxu0 %v2264
    %3703 = vmatprep.subr.mxu0 %v2261
    %3704 = vmatpush1.msra.mxu0 %v2260
    %3705 = vmatprep.subr.mxu0 %v2257
    %3706 = vmatpush1.msra.mxu0 %v2256
    %3707 = vmatprep.subr.mxu0 %v2253
    %3708 = vmatpush1.msra.mxu0 %v2252
    %3709 = vmatprep.subr.mxu0 %v2249
    %3710 = vmatpush1.msra.mxu0 %v2248
    %3711 = vmatprep.subr.mxu0 0.0
    %3712 = vmatpush2.msra.mxu0 0.0
    %3713 = vmatprep.subr.mxu0 0.0
    %3714 = vmatpush2.msra.mxu0 0.0
    %3715 = vmatprep.subr.mxu0 0.0
    %3716 = vmatpush2.msra.mxu0 0.0
    %3717 = vmatprep.subr.mxu0 0.0
    %3718 = vmatpush2.msra.mxu0 0.0
    %3719 = vmatprep.subr.mxu0 0.0
    %3720 = vmatpush2.msra.mxu0 0.0
    %3721 = vmatprep.subr.mxu0 0.0
    %3722 = vmatpush2.msra.mxu0 0.0
    %3723 = vmatprep.subr.mxu0 0.0
    %3724 = vmatpush2.msra.mxu0 0.0
    %3725 = vmatprep.subr.mxu0 0.0
    %3726 = vmatpush2.msra.mxu0 0.0
    %3727 = vmatprep.subr.mxu0 0.0
    %3728 = vmatpush2.msra.mxu0 0.0
    %3729 = vmatprep.subr.mxu0 0.0
    %3730 = vmatpush2.msra.mxu0 0.0
    %3731 = vmatprep.subr.mxu0 0.0
    %3732 = vmatpush2.msra.mxu0 0.0
    %3733 = vmatprep.subr.mxu0 0.0
    %3734 = vmatpush2.msra.mxu0 0.0
    %3735 = vmatprep.subr.mxu0 0.0
    %3736 = vmatpush2.msra.mxu0 0.0
    %3737 = vmatprep.subr.mxu0 0.0
    %3738 = vmatpush2.msra.mxu0 0.0
    %3739 = vmatprep.subr.mxu0 0.0
    %3740 = vmatpush2.msra.mxu0 0.0
    %3741 = vmatprep.subr.mxu0 0.0
    %3742 = vmatpush2.msra.mxu0 0.0
    %3743 = vmatprep.mubr.f32.mxu0 0.0
    %3744 = vmatmul.mubr.f32.gmra.mxu0 %v3606
    %v3745 = vpop.f32.mrf.mxu0
    %v3746 = vadd.f32 0.0, %v3745
    %v3747 = vpop.f32.mrf.mxu0
    %v3748 = vadd.f32 0.0, %v3747
    %3749 = vdwg.mxu0
    %v3750 = vadd.f32 %v2158, %v3675
    %v3751 = vadd.f32 %v2160, %v3677
    %v3752 = vadd.f32 %v2235, %v3746
    %v3753 = vadd.f32 %v2237, %v3748
    %v3754 = vxor.u32 %v3750, 2147483648
    %v3755 = vxor.u32 %v3751, 2147483648
    %v3756 = vxor.u32 %v3752, 2147483648
    %v3757 = vmul.f32 %v3754, 1.442695
    %v3758 = vpow.pop %v3757
    %v3759 = vmul.f32 %v3755, 1.442695
    %v3760 = vpow.pop %v3759
    %v3761 = vmul.f32 %v3756, 1.442695
    %v3762 = vpow.pop %v3761
    %v3763 = vadd.f32 %v3758, 1.0
    %v3764 = vadd.f32 %v3760, 1.0
    %v3765 = vadd.f32 %v3762, 1.0
    %v3766 = vrcp.pop %v3763
    %v3767 = vmul.f32 1.0, %v3766
    %v3768 = vrcp.pop %v3764
    %v3769 = vmul.f32 1.0, %v3768
    %v3770 = vrcp.pop %v3765
    %v3771 = vmul.f32 1.0, %v3770
    %v3772 = vtanh.pop %v3753
    %v3774 = vrot.slane %v3602, 2
    %v3776 = vmul.f32 %v3769, %v3774
    %v3777 = vmul.f32 %v3767, %v3772
    %v3778 = vadd.f32 %v3776, %v3777
    %v3779 = vtanh.pop %v3778
    %v3780 = vmul.f32 %v3771, %v3779
    %vm3781 = vcmask 1041408
    %v3782 = vsel %vm3781, %v656, %v841
    %vm3783 = vcmask 1043456
    %v3784 = vsel %vm3783, %v3782, %v1029
    %vm3785 = vcmask 1045504
    %v3786 = vsel %vm3785, %v3784, %v1217
    %v3787 = vsel %vm3781, %v1393, %v1578
    %v3788 = vsel %vm3783, %v3787, %v1766
    %v3789 = vsel %vm3785, %v3788, %v1954
    %v3790 = vsel %vm3781, %v3780, %v3604
    %v3791 = vsel %vm3783, %v3790, %v3416
    %v3792 = vsel %vm3785, %v3791, %v3228
    %v3793 = vsel %vm3781, %v3043, %v2867
    %v3794 = vsel %vm3783, %v3793, %v2679
    %v3795 = vsel %vm3785, %v3794, %v2491
    %v3796 = vld [vmem:[#allocation5] sm:$0xff]
    %v3797 = vld [vmem:[#allocation5 + $0x8] sm:$0xff]
    %v3798 = vld [vmem:[#allocation5 + $0x10] sm:$0xff]
    %v3799 = vld [vmem:[#allocation5 + $0x18] sm:$0xff]
    %v3800 = vld [vmem:[#allocation5 + $0x20] sm:$0xff]
    %v3801 = vld [vmem:[#allocation5 + $0x28] sm:$0xff]
    %v3802 = vld [vmem:[#allocation5 + $0x30] sm:$0xff]
    %v3803 = vld [vmem:[#allocation5 + $0x38] sm:$0xff]
    %v3804 = vld [vmem:[#allocation5 + $0x40] sm:$0xff]
    %v3805 = vld [vmem:[#allocation5 + $0x48] sm:$0xff]
    %v3806 = vld [vmem:[#allocation5 + $0x50] sm:$0xff]
    %v3807 = vld [vmem:[#allocation5 + $0x58] sm:$0xff]
    %v3808 = vld [vmem:[#allocation5 + $0x60] sm:$0xff]
    %v3809 = vld [vmem:[#allocation5 + $0x68] sm:$0xff]
    %v3810 = vld [vmem:[#allocation5 + $0x70] sm:$0xff]
    %v3811 = vld [vmem:[#allocation5 + $0x78] sm:$0xff]
    %v3812 = vld [vmem:[#allocation5 + $0x80] sm:$0xff]
    %v3813 = vld [vmem:[#allocation5 + $0x88] sm:$0xff]
    %v3814 = vld [vmem:[#allocation5 + $0x90] sm:$0xff]
    %v3815 = vld [vmem:[#allocation5 + $0x98] sm:$0xff]
    %v3816 = vld [vmem:[#allocation5 + $0xa0] sm:$0xff]
    %v3817 = vld [vmem:[#allocation5 + $0xa8] sm:$0xff]
    %v3818 = vld [vmem:[#allocation5 + $0xb0] sm:$0xff]
    %v3819 = vld [vmem:[#allocation5 + $0xb8] sm:$0xff]
    %v3820 = vld [vmem:[#allocation5 + $0xc0] sm:$0xff]
    %v3821 = vld [vmem:[#allocation5 + $0xc8] sm:$0xff]
    %v3822 = vld [vmem:[#allocation5 + $0xd0] sm:$0xff]
    %v3823 = vld [vmem:[#allocation5 + $0xd8] sm:$0xff]
    %v3824 = vld [vmem:[#allocation5 + $0xe0] sm:$0xff]
    %v3825 = vld [vmem:[#allocation5 + $0xe8] sm:$0xff]
    %v3826 = vld [vmem:[#allocation5 + $0xf0] sm:$0xff]
    %v3827 = vld [vmem:[#allocation5 + $0xf8] sm:$0xff]
    %v3828 = vld [vmem:[#allocation5 + $0x100] sm:$0xff]
    %v3829 = vld [vmem:[#allocation5 + $0x108] sm:$0xff]
    %v3830 = vld [vmem:[#allocation5 + $0x110] sm:$0xff]
    %v3831 = vld [vmem:[#allocation5 + $0x118] sm:$0xff]
    %v3832 = vld [vmem:[#allocation5 + $0x120] sm:$0xff]
    %v3833 = vld [vmem:[#allocation5 + $0x128] sm:$0xff]
    %v3834 = vld [vmem:[#allocation5 + $0x130] sm:$0xff]
    %v3835 = vld [vmem:[#allocation5 + $0x138] sm:$0xff]
    %v3836 = vld [vmem:[#allocation5 + $0x140] sm:$0xff]
    %v3837 = vld [vmem:[#allocation5 + $0x148] sm:$0xff]
    %v3838 = vld [vmem:[#allocation5 + $0x150] sm:$0xff]
    %v3839 = vld [vmem:[#allocation5 + $0x158] sm:$0xff]
    %v3840 = vld [vmem:[#allocation5 + $0x160] sm:$0xff]
    %v3841 = vld [vmem:[#allocation5 + $0x168] sm:$0xff]
    %v3842 = vld [vmem:[#allocation5 + $0x170] sm:$0xff]
    %v3843 = vld [vmem:[#allocation5 + $0x178] sm:$0xff]
    %v3844 = vld [vmem:[#allocation5 + $0x180] sm:$0xff]
    %v3845 = vld [vmem:[#allocation5 + $0x188] sm:$0xff]
    %v3846 = vld [vmem:[#allocation5 + $0x190] sm:$0xff]
    %v3847 = vld [vmem:[#allocation5 + $0x198] sm:$0xff]
    %v3848 = vld [vmem:[#allocation5 + $0x1a0] sm:$0xff]
    %v3849 = vld [vmem:[#allocation5 + $0x1a8] sm:$0xff]
    %v3850 = vld [vmem:[#allocation5 + $0x1b0] sm:$0xff]
    %v3851 = vld [vmem:[#allocation5 + $0x1b8] sm:$0xff]
    %v3852 = vld [vmem:[#allocation5 + $0x1c0] sm:$0xff]
    %v3853 = vld [vmem:[#allocation5 + $0x1c8] sm:$0xff]
    %v3854 = vld [vmem:[#allocation5 + $0x1d0] sm:$0xff]
    %v3855 = vld [vmem:[#allocation5 + $0x1d8] sm:$0xff]
    %v3856 = vld [vmem:[#allocation5 + $0x1e0] sm:$0xff]
    %v3857 = vld [vmem:[#allocation5 + $0x1e8] sm:$0xff]
    %v3858 = vld [vmem:[#allocation5 + $0x1f0] sm:$0xff]
    %v3859 = vld [vmem:[#allocation5 + $0x1f8] sm:$0xff]
    %v3860 = vld [vmem:[#allocation5 + $0x200] sm:$0xff]
    %v3861 = vld [vmem:[#allocation5 + $0x208] sm:$0xff]
    %v3862 = vld [vmem:[#allocation5 + $0x210] sm:$0xff]
    %v3863 = vld [vmem:[#allocation5 + $0x218] sm:$0xff]
    %v3864 = vld [vmem:[#allocation5 + $0x220] sm:$0xff]
    %v3865 = vld [vmem:[#allocation5 + $0x228] sm:$0xff]
    %v3866 = vld [vmem:[#allocation5 + $0x230] sm:$0xff]
    %v3867 = vld [vmem:[#allocation5 + $0x238] sm:$0xff]
    %v3868 = vld [vmem:[#allocation5 + $0x240] sm:$0xff]
    %v3869 = vld [vmem:[#allocation5 + $0x248] sm:$0xff]
    %v3870 = vld [vmem:[#allocation5 + $0x250] sm:$0xff]
    %v3871 = vld [vmem:[#allocation5 + $0x258] sm:$0xff]
    %v3872 = vld [vmem:[#allocation5 + $0x260] sm:$0xff]
    %v3873 = vld [vmem:[#allocation5 + $0x268] sm:$0xff]
    %v3874 = vld [vmem:[#allocation5 + $0x270] sm:$0xff]
    %v3875 = vld [vmem:[#allocation5 + $0x278] sm:$0xff]
    %v3876 = vld [vmem:[#allocation5 + $0x280] sm:$0xff]
    %v3877 = vld [vmem:[#allocation5 + $0x288] sm:$0xff]
    %v3878 = vld [vmem:[#allocation5 + $0x290] sm:$0xff]
    %v3879 = vld [vmem:[#allocation5 + $0x298] sm:$0xff]
    %v3880 = vld [vmem:[#allocation5 + $0x2a0] sm:$0xff]
    %v3881 = vld [vmem:[#allocation5 + $0x2a8] sm:$0xff]
    %v3882 = vld [vmem:[#allocation5 + $0x2b0] sm:$0xff]
    %v3883 = vld [vmem:[#allocation5 + $0x2b8] sm:$0xff]
    %v3884 = vld [vmem:[#allocation5 + $0x2c0] sm:$0xff]
    %v3885 = vld [vmem:[#allocation5 + $0x2c8] sm:$0xff]
    %v3886 = vld [vmem:[#allocation5 + $0x2d0] sm:$0xff]
    %v3887 = vld [vmem:[#allocation5 + $0x2d8] sm:$0xff]
    %v3888 = vld [vmem:[#allocation5 + $0x2e0] sm:$0xff]
    %v3889 = vld [vmem:[#allocation5 + $0x2e8] sm:$0xff]
    %v3890 = vld [vmem:[#allocation5 + $0x2f0] sm:$0xff]
    %v3891 = vld [vmem:[#allocation5 + $0x2f8] sm:$0xff]
    %v3892 = vld [vmem:[#allocation5 + $0x300] sm:$0xff]
    %v3893 = vld [vmem:[#allocation5 + $0x308] sm:$0xff]
    %v3894 = vld [vmem:[#allocation5 + $0x310] sm:$0xff]
    %v3895 = vld [vmem:[#allocation5 + $0x318] sm:$0xff]
    %v3896 = vld [vmem:[#allocation5 + $0x320] sm:$0xff]
    %v3897 = vld [vmem:[#allocation5 + $0x328] sm:$0xff]
    %v3898 = vld [vmem:[#allocation5 + $0x330] sm:$0xff]
    %v3899 = vld [vmem:[#allocation5 + $0x338] sm:$0xff]
    %v3900 = vld [vmem:[#allocation5 + $0x340] sm:$0xff]
    %v3901 = vld [vmem:[#allocation5 + $0x348] sm:$0xff]
    %v3902 = vld [vmem:[#allocation5 + $0x350] sm:$0xff]
    %v3903 = vld [vmem:[#allocation5 + $0x358] sm:$0xff]
    %v3904 = vld [vmem:[#allocation5 + $0x360] sm:$0xff]
    %v3905 = vld [vmem:[#allocation5 + $0x368] sm:$0xff]
    %v3906 = vld [vmem:[#allocation5 + $0x370] sm:$0xff]
    %v3907 = vld [vmem:[#allocation5 + $0x378] sm:$0xff]
    %v3908 = vld [vmem:[#allocation5 + $0x380] sm:$0xff]
    %v3909 = vld [vmem:[#allocation5 + $0x388] sm:$0xff]
    %v3910 = vld [vmem:[#allocation5 + $0x390] sm:$0xff]
    %v3911 = vld [vmem:[#allocation5 + $0x398] sm:$0xff]
    %v3912 = vld [vmem:[#allocation5 + $0x3a0] sm:$0xff]
    %v3913 = vld [vmem:[#allocation5 + $0x3a8] sm:$0xff]
    %v3914 = vld [vmem:[#allocation5 + $0x3b0] sm:$0xff]
    %v3915 = vld [vmem:[#allocation5 + $0x3b8] sm:$0xff]
    %v3916 = vld [vmem:[#allocation5 + $0x3c0] sm:$0xff]
    %v3917 = vld [vmem:[#allocation5 + $0x3c8] sm:$0xff]
    %v3918 = vld [vmem:[#allocation5 + $0x3d0] sm:$0xff]
    %v3919 = vld [vmem:[#allocation5 + $0x3d8] sm:$0xff]
    %v3920 = vld [vmem:[#allocation5 + $0x3e0] sm:$0xff]
    %v3921 = vld [vmem:[#allocation5 + $0x3e8] sm:$0xff]
    %v3922 = vld [vmem:[#allocation5 + $0x3f0] sm:$0xff]
    %v3923 = vld [vmem:[#allocation5 + $0x3f8] sm:$0xff]
    %s3924 = scalar_lea.vmem [#allocation8], 8
    %v3925 = vld [vmem:[%s3924] sm:$0xf]
    %v3927 = vlaneseq
    %v3928 = vshrl.u32 %v3927, 7
    %v3929 = vsub.s32 0, %v3928
    %v3930 = vrot.slane %v3925, %v3929
    %v3931 = vlaneseq
    %v3932 = vshrl.u32 %v3931, 7
    %v3933 = vsub.s32 1, %v3932
    %v3934 = vrot.slane %v3925, %v3933
    %v3935 = vlaneseq
    %v3936 = vshrl.u32 %v3935, 7
    %v3937 = vsub.s32 2, %v3936
    %v3938 = vrot.slane %v3925, %v3937
    %v3939 = vlaneseq
    %v3940 = vshrl.u32 %v3939, 7
    %v3941 = vsub.s32 3, %v3940
    %v3942 = vrot.slane %v3925, %v3941
    %3947 = vmatprep.subr.mxu0 %v3857
    %3948 = vmatpush1.msra.mxu0 %v3856
    %3949 = vmatprep.subr.mxu0 %v3853
    %3950 = vmatpush1.msra.mxu0 %v3852
    %3951 = vmatprep.subr.mxu0 %v3849
    %3952 = vmatpush1.msra.mxu0 %v3848
    %3953 = vmatprep.subr.mxu0 %v3845
    %3954 = vmatpush1.msra.mxu0 %v3844
    %3955 = vmatprep.subr.mxu0 %v3841
    %3956 = vmatpush1.msra.mxu0 %v3840
    %3957 = vmatprep.subr.mxu0 %v3837
    %3958 = vmatpush1.msra.mxu0 %v3836
    %3959 = vmatprep.subr.mxu0 %v3833
    %3960 = vmatpush1.msra.mxu0 %v3832
    %3961 = vmatprep.subr.mxu0 %v3829
    %3962 = vmatpush1.msra.mxu0 %v3828
    %3963 = vmatprep.subr.mxu0 %v3825
    %3964 = vmatpush1.msra.mxu0 %v3824
    %3965 = vmatprep.subr.mxu0 %v3821
    %3966 = vmatpush1.msra.mxu0 %v3820
    %3967 = vmatprep.subr.mxu0 %v3817
    %3968 = vmatpush1.msra.mxu0 %v3816
    %3969 = vmatprep.subr.mxu0 %v3813
    %3970 = vmatpush1.msra.mxu0 %v3812
    %3971 = vmatprep.subr.mxu0 %v3809
    %3972 = vmatpush1.msra.mxu0 %v3808
    %3973 = vmatprep.subr.mxu0 %v3805
    %3974 = vmatpush1.msra.mxu0 %v3804
    %3975 = vmatprep.subr.mxu0 %v3801
    %3976 = vmatpush1.msra.mxu0 %v3800
    %3977 = vmatprep.subr.mxu0 %v3797
    %3978 = vmatpush1.msra.mxu0 %v3796
    %3979 = vmatprep.subr.mxu0 %v3921
    %3980 = vmatpush2.msra.mxu0 %v3920
    %3981 = vmatprep.subr.mxu0 %v3917
    %3982 = vmatpush2.msra.mxu0 %v3916
    %3983 = vmatprep.subr.mxu0 %v3913
    %3984 = vmatpush2.msra.mxu0 %v3912
    %3985 = vmatprep.subr.mxu0 %v3909
    %3986 = vmatpush2.msra.mxu0 %v3908
    %3987 = vmatprep.subr.mxu0 %v3905
    %3988 = vmatpush2.msra.mxu0 %v3904
    %3989 = vmatprep.subr.mxu0 %v3901
    %3990 = vmatpush2.msra.mxu0 %v3900
    %3991 = vmatprep.subr.mxu0 %v3897
    %3992 = vmatpush2.msra.mxu0 %v3896
    %3993 = vmatprep.subr.mxu0 %v3893
    %3994 = vmatpush2.msra.mxu0 %v3892
    %3995 = vmatprep.subr.mxu0 %v3889
    %3996 = vmatpush2.msra.mxu0 %v3888
    %3997 = vmatprep.subr.mxu0 %v3885
    %3998 = vmatpush2.msra.mxu0 %v3884
    %3999 = vmatprep.subr.mxu0 %v3881
    %4000 = vmatpush2.msra.mxu0 %v3880
    %4001 = vmatprep.subr.mxu0 %v3877
    %4002 = vmatpush2.msra.mxu0 %v3876
    %4003 = vmatprep.subr.mxu0 %v3873
    %4004 = vmatpush2.msra.mxu0 %v3872
    %4005 = vmatprep.subr.mxu0 %v3869
    %4006 = vmatpush2.msra.mxu0 %v3868
    %4007 = vmatprep.subr.mxu0 %v3865
    %4008 = vmatpush2.msra.mxu0 %v3864
    %4009 = vmatprep.subr.mxu0 %v3861
    %4010 = vmatpush2.msra.mxu0 %v3860
    %4011 = vmatprep.mubr.f32.mxu0 %v3792
    %4012 = vmatmul.mubr.f32.gmra.mxu0 %v3786
    %v4013 = vpop.f32.mrf.mxu0
    %v4014 = vadd.f32 %v3930, %v4013
    %v4015 = vpop.f32.mrf.mxu0
    %v4016 = vadd.f32 %v3934, %v4015
    %4017 = vmatprep.mubr.f32.mxu0 %v3795
    %4018 = vmatmul.mubr.f32.gmra.mxu0 %v3789
    %v4019 = vpop.f32.mrf.mxu0
    %v4020 = vadd.f32 %v3930, %v4019
    %v4021 = vpop.f32.mrf.mxu0
    %v4022 = vadd.f32 %v3934, %v4021
    %4023 = vdwg.mxu0
    %4024 = vmatprep.subr.mxu0 %v3859
    %4025 = vmatpush1.msra.mxu0 %v3858
    %4026 = vmatprep.subr.mxu0 %v3855
    %4027 = vmatpush1.msra.mxu0 %v3854
    %4028 = vmatprep.subr.mxu0 %v3851
    %4029 = vmatpush1.msra.mxu0 %v3850
    %4030 = vmatprep.subr.mxu0 %v3847
    %4031 = vmatpush1.msra.mxu0 %v3846
    %4032 = vmatprep.subr.mxu0 %v3843
    %4033 = vmatpush1.msra.mxu0 %v3842
    %4034 = vmatprep.subr.mxu0 %v3839
    %4035 = vmatpush1.msra.mxu0 %v3838
    %4036 = vmatprep.subr.mxu0 %v3835
    %4037 = vmatpush1.msra.mxu0 %v3834
    %4038 = vmatprep.subr.mxu0 %v3831
    %4039 = vmatpush1.msra.mxu0 %v3830
    %4040 = vmatprep.subr.mxu0 %v3827
    %4041 = vmatpush1.msra.mxu0 %v3826
    %4042 = vmatprep.subr.mxu0 %v3823
    %4043 = vmatpush1.msra.mxu0 %v3822
    %4044 = vmatprep.subr.mxu0 %v3819
    %4045 = vmatpush1.msra.mxu0 %v3818
    %4046 = vmatprep.subr.mxu0 %v3815
    %4047 = vmatpush1.msra.mxu0 %v3814
    %4048 = vmatprep.subr.mxu0 %v3811
    %4049 = vmatpush1.msra.mxu0 %v3810
    %4050 = vmatprep.subr.mxu0 %v3807
    %4051 = vmatpush1.msra.mxu0 %v3806
    %4052 = vmatprep.subr.mxu0 %v3803
    %4053 = vmatpush1.msra.mxu0 %v3802
    %4054 = vmatprep.subr.mxu0 %v3799
    %4055 = vmatpush1.msra.mxu0 %v3798
    %4056 = vmatprep.subr.mxu0 %v3923
    %4057 = vmatpush2.msra.mxu0 %v3922
    %4058 = vmatprep.subr.mxu0 %v3919
    %4059 = vmatpush2.msra.mxu0 %v3918
    %4060 = vmatprep.subr.mxu0 %v3915
    %4061 = vmatpush2.msra.mxu0 %v3914
    %4062 = vmatprep.subr.mxu0 %v3911
    %4063 = vmatpush2.msra.mxu0 %v3910
    %4064 = vmatprep.subr.mxu0 %v3907
    %4065 = vmatpush2.msra.mxu0 %v3906
    %4066 = vmatprep.subr.mxu0 %v3903
    %4067 = vmatpush2.msra.mxu0 %v3902
    %4068 = vmatprep.subr.mxu0 %v3899
    %4069 = vmatpush2.msra.mxu0 %v3898
    %4070 = vmatprep.subr.mxu0 %v3895
    %4071 = vmatpush2.msra.mxu0 %v3894
    %4072 = vmatprep.subr.mxu0 %v3891
    %4073 = vmatpush2.msra.mxu0 %v3890
    %4074 = vmatprep.subr.mxu0 %v3887
    %4075 = vmatpush2.msra.mxu0 %v3886
    %4076 = vmatprep.subr.mxu0 %v3883
    %4077 = vmatpush2.msra.mxu0 %v3882
    %4078 = vmatprep.subr.mxu0 %v3879
    %4079 = vmatpush2.msra.mxu0 %v3878
    %4080 = vmatprep.subr.mxu0 %v3875
    %4081 = vmatpush2.msra.mxu0 %v3874
    %4082 = vmatprep.subr.mxu0 %v3871
    %4083 = vmatpush2.msra.mxu0 %v3870
    %4084 = vmatprep.subr.mxu0 %v3867
    %4085 = vmatpush2.msra.mxu0 %v3866
    %4086 = vmatprep.subr.mxu0 %v3863
    %4087 = vmatpush2.msra.mxu0 %v3862
    %4088 = vmatprep.mubr.f32.mxu0 %v3792
    %4089 = vmatmul.mubr.f32.gmra.mxu0 %v3786
    %v4090 = vpop.f32.mrf.mxu0
    %v4091 = vadd.f32 %v3938, %v4090
    %v4092 = vpop.f32.mrf.mxu0
    %v4093 = vadd.f32 %v3942, %v4092
    %4094 = vmatprep.mubr.f32.mxu0 %v3795
    %4095 = vmatmul.mubr.f32.gmra.mxu0 %v3789
    %v4096 = vpop.f32.mrf.mxu0
    %v4097 = vadd.f32 %v3938, %v4096
    %v4098 = vpop.f32.mrf.mxu0
    %v4099 = vadd.f32 %v3942, %v4098
    %4100 = vdwg.mxu0
    %s4101 = scalar_lea.vmem [#allocation7], 1024
    %v4102 = vld [vmem:[%s4101] sm:$0xff]
    %v4103 = vld [vmem:[%s4101 + $0x8] sm:$0xff]
    %v4104 = vld [vmem:[%s4101 + $0x10] sm:$0xff]
    %v4105 = vld [vmem:[%s4101 + $0x18] sm:$0xff]
    %v4106 = vld [vmem:[%s4101 + $0x20] sm:$0xff]
    %v4107 = vld [vmem:[%s4101 + $0x28] sm:$0xff]
    %v4108 = vld [vmem:[%s4101 + $0x30] sm:$0xff]
    %v4109 = vld [vmem:[%s4101 + $0x38] sm:$0xff]
    %v4110 = vld [vmem:[%s4101 + $0x40] sm:$0xff]
    %v4111 = vld [vmem:[%s4101 + $0x48] sm:$0xff]
    %v4112 = vld [vmem:[%s4101 + $0x50] sm:$0xff]
    %v4113 = vld [vmem:[%s4101 + $0x58] sm:$0xff]
    %v4114 = vld [vmem:[%s4101 + $0x60] sm:$0xff]
    %v4115 = vld [vmem:[%s4101 + $0x68] sm:$0xff]
    %v4116 = vld [vmem:[%s4101 + $0x70] sm:$0xff]
    %v4117 = vld [vmem:[%s4101 + $0x78] sm:$0xff]
    %v4118 = vld [vmem:[%s4101 + $0x80] sm:$0xff]
    %v4119 = vld [vmem:[%s4101 + $0x88] sm:$0xff]
    %v4120 = vld [vmem:[%s4101 + $0x90] sm:$0xff]
    %v4121 = vld [vmem:[%s4101 + $0x98] sm:$0xff]
    %v4122 = vld [vmem:[%s4101 + $0xa0] sm:$0xff]
    %v4123 = vld [vmem:[%s4101 + $0xa8] sm:$0xff]
    %v4124 = vld [vmem:[%s4101 + $0xb0] sm:$0xff]
    %v4125 = vld [vmem:[%s4101 + $0xb8] sm:$0xff]
    %v4126 = vld [vmem:[%s4101 + $0xc0] sm:$0xff]
    %v4127 = vld [vmem:[%s4101 + $0xc8] sm:$0xff]
    %v4128 = vld [vmem:[%s4101 + $0xd0] sm:$0xff]
    %v4129 = vld [vmem:[%s4101 + $0xd8] sm:$0xff]
    %v4130 = vld [vmem:[%s4101 + $0xe0] sm:$0xff]
    %v4131 = vld [vmem:[%s4101 + $0xe8] sm:$0xff]
    %v4132 = vld [vmem:[%s4101 + $0xf0] sm:$0xff]
    %v4133 = vld [vmem:[%s4101 + $0xf8] sm:$0xff]
    %v4134 = vld [vmem:[%s4101 + $0x100] sm:$0xff]
    %v4135 = vld [vmem:[%s4101 + $0x108] sm:$0xff]
    %v4136 = vld [vmem:[%s4101 + $0x110] sm:$0xff]
    %v4137 = vld [vmem:[%s4101 + $0x118] sm:$0xff]
    %v4138 = vld [vmem:[%s4101 + $0x120] sm:$0xff]
    %v4139 = vld [vmem:[%s4101 + $0x128] sm:$0xff]
    %v4140 = vld [vmem:[%s4101 + $0x130] sm:$0xff]
    %v4141 = vld [vmem:[%s4101 + $0x138] sm:$0xff]
    %v4142 = vld [vmem:[%s4101 + $0x140] sm:$0xff]
    %v4143 = vld [vmem:[%s4101 + $0x148] sm:$0xff]
    %v4144 = vld [vmem:[%s4101 + $0x150] sm:$0xff]
    %v4145 = vld [vmem:[%s4101 + $0x158] sm:$0xff]
    %v4146 = vld [vmem:[%s4101 + $0x160] sm:$0xff]
    %v4147 = vld [vmem:[%s4101 + $0x168] sm:$0xff]
    %v4148 = vld [vmem:[%s4101 + $0x170] sm:$0xff]
    %v4149 = vld [vmem:[%s4101 + $0x178] sm:$0xff]
    %v4150 = vld [vmem:[%s4101 + $0x180] sm:$0xff]
    %v4151 = vld [vmem:[%s4101 + $0x188] sm:$0xff]
    %v4152 = vld [vmem:[%s4101 + $0x190] sm:$0xff]
    %v4153 = vld [vmem:[%s4101 + $0x198] sm:$0xff]
    %v4154 = vld [vmem:[%s4101 + $0x1a0] sm:$0xff]
    %v4155 = vld [vmem:[%s4101 + $0x1a8] sm:$0xff]
    %v4156 = vld [vmem:[%s4101 + $0x1b0] sm:$0xff]
    %v4157 = vld [vmem:[%s4101 + $0x1b8] sm:$0xff]
    %v4158 = vld [vmem:[%s4101 + $0x1c0] sm:$0xff]
    %v4159 = vld [vmem:[%s4101 + $0x1c8] sm:$0xff]
    %v4160 = vld [vmem:[%s4101 + $0x1d0] sm:$0xff]
    %v4161 = vld [vmem:[%s4101 + $0x1d8] sm:$0xff]
    %v4162 = vld [vmem:[%s4101 + $0x1e0] sm:$0xff]
    %v4163 = vld [vmem:[%s4101 + $0x1e8] sm:$0xff]
    %v4164 = vld [vmem:[%s4101 + $0x1f0] sm:$0xff]
    %v4165 = vld [vmem:[%s4101 + $0x1f8] sm:$0xff]
    %4166 = vmatprep.subr.mxu0 %v4163
    %4167 = vmatpush1.msra.mxu0 %v4162
    %4168 = vmatprep.subr.mxu0 %v4159
    %4169 = vmatpush1.msra.mxu0 %v4158
    %4170 = vmatprep.subr.mxu0 %v4155
    %4171 = vmatpush1.msra.mxu0 %v4154
    %4172 = vmatprep.subr.mxu0 %v4151
    %4173 = vmatpush1.msra.mxu0 %v4150
    %4174 = vmatprep.subr.mxu0 %v4147
    %4175 = vmatpush1.msra.mxu0 %v4146
    %4176 = vmatprep.subr.mxu0 %v4143
    %4177 = vmatpush1.msra.mxu0 %v4142
    %4178 = vmatprep.subr.mxu0 %v4139
    %4179 = vmatpush1.msra.mxu0 %v4138
    %4180 = vmatprep.subr.mxu0 %v4135
    %4181 = vmatpush1.msra.mxu0 %v4134
    %4182 = vmatprep.subr.mxu0 %v4131
    %4183 = vmatpush1.msra.mxu0 %v4130
    %4184 = vmatprep.subr.mxu0 %v4127
    %4185 = vmatpush1.msra.mxu0 %v4126
    %4186 = vmatprep.subr.mxu0 %v4123
    %4187 = vmatpush1.msra.mxu0 %v4122
    %4188 = vmatprep.subr.mxu0 %v4119
    %4189 = vmatpush1.msra.mxu0 %v4118
    %4190 = vmatprep.subr.mxu0 %v4115
    %4191 = vmatpush1.msra.mxu0 %v4114
    %4192 = vmatprep.subr.mxu0 %v4111
    %4193 = vmatpush1.msra.mxu0 %v4110
    %4194 = vmatprep.subr.mxu0 %v4107
    %4195 = vmatpush1.msra.mxu0 %v4106
    %4196 = vmatprep.subr.mxu0 %v4103
    %4197 = vmatpush1.msra.mxu0 %v4102
    %4198 = vmatprep.subr.mxu0 0.0
    %4199 = vmatpush2.msra.mxu0 0.0
    %4200 = vmatprep.subr.mxu0 0.0
    %4201 = vmatpush2.msra.mxu0 0.0
    %4202 = vmatprep.subr.mxu0 0.0
    %4203 = vmatpush2.msra.mxu0 0.0
    %4204 = vmatprep.subr.mxu0 0.0
    %4205 = vmatpush2.msra.mxu0 0.0
    %4206 = vmatprep.subr.mxu0 0.0
    %4207 = vmatpush2.msra.mxu0 0.0
    %4208 = vmatprep.subr.mxu0 0.0
    %4209 = vmatpush2.msra.mxu0 0.0
    %4210 = vmatprep.subr.mxu0 0.0
    %4211 = vmatpush2.msra.mxu0 0.0
    %4212 = vmatprep.subr.mxu0 0.0
    %4213 = vmatpush2.msra.mxu0 0.0
    %4214 = vmatprep.subr.mxu0 0.0
    %4215 = vmatpush2.msra.mxu0 0.0
    %4216 = vmatprep.subr.mxu0 0.0
    %4217 = vmatpush2.msra.mxu0 0.0
    %4218 = vmatprep.subr.mxu0 0.0
    %4219 = vmatpush2.msra.mxu0 0.0
    %4220 = vmatprep.subr.mxu0 0.0
    %4221 = vmatpush2.msra.mxu0 0.0
    %4222 = vmatprep.subr.mxu0 0.0
    %4223 = vmatpush2.msra.mxu0 0.0
    %4224 = vmatprep.subr.mxu0 0.0
    %4225 = vmatpush2.msra.mxu0 0.0
    %4226 = vmatprep.subr.mxu0 0.0
    %4227 = vmatpush2.msra.mxu0 0.0
    %4228 = vmatprep.subr.mxu0 0.0
    %4229 = vmatpush2.msra.mxu0 0.0
    %4230 = vmatprep.mubr.f32.mxu0 0.0
    %4231 = vmatmul.mubr.f32.gmra.mxu0 0.0
    %v4232 = vpop.f32.mrf.mxu0
    %v4233 = vadd.f32 0.0, %v4232
    %v4234 = vpop.f32.mrf.mxu0
    %v4235 = vadd.f32 0.0, %v4234
    %4236 = vdwg.mxu0
    %4237 = vmatprep.subr.mxu0 %v4165
    %4238 = vmatpush1.msra.mxu0 %v4164
    %4239 = vmatprep.subr.mxu0 %v4161
    %4240 = vmatpush1.msra.mxu0 %v4160
    %4241 = vmatprep.subr.mxu0 %v4157
    %4242 = vmatpush1.msra.mxu0 %v4156
    %4243 = vmatprep.subr.mxu0 %v4153
    %4244 = vmatpush1.msra.mxu0 %v4152
    %4245 = vmatprep.subr.mxu0 %v4149
    %4246 = vmatpush1.msra.mxu0 %v4148
    %4247 = vmatprep.subr.mxu0 %v4145
    %4248 = vmatpush1.msra.mxu0 %v4144
    %4249 = vmatprep.subr.mxu0 %v4141
    %4250 = vmatpush1.msra.mxu0 %v4140
    %4251 = vmatprep.subr.mxu0 %v4137
    %4252 = vmatpush1.msra.mxu0 %v4136
    %4253 = vmatprep.subr.mxu0 %v4133
    %4254 = vmatpush1.msra.mxu0 %v4132
    %4255 = vmatprep.subr.mxu0 %v4129
    %4256 = vmatpush1.msra.mxu0 %v4128
    %4257 = vmatprep.subr.mxu0 %v4125
    %4258 = vmatpush1.msra.mxu0 %v4124
    %4259 = vmatprep.subr.mxu0 %v4121
    %4260 = vmatpush1.msra.mxu0 %v4120
    %4261 = vmatprep.subr.mxu0 %v4117
    %4262 = vmatpush1.msra.mxu0 %v4116
    %4263 = vmatprep.subr.mxu0 %v4113
    %4264 = vmatpush1.msra.mxu0 %v4112
    %4265 = vmatprep.subr.mxu0 %v4109
    %4266 = vmatpush1.msra.mxu0 %v4108
    %4267 = vmatprep.subr.mxu0 %v4105
    %4268 = vmatpush1.msra.mxu0 %v4104
    %4269 = vmatprep.subr.mxu0 0.0
    %4270 = vmatpush2.msra.mxu0 0.0
    %4271 = vmatprep.subr.mxu0 0.0
    %4272 = vmatpush2.msra.mxu0 0.0
    %4273 = vmatprep.subr.mxu0 0.0
    %4274 = vmatpush2.msra.mxu0 0.0
    %4275 = vmatprep.subr.mxu0 0.0
    %4276 = vmatpush2.msra.mxu0 0.0
    %4277 = vmatprep.subr.mxu0 0.0
    %4278 = vmatpush2.msra.mxu0 0.0
    %4279 = vmatprep.subr.mxu0 0.0
    %4280 = vmatpush2.msra.mxu0 0.0
    %4281 = vmatprep.subr.mxu0 0.0
    %4282 = vmatpush2.msra.mxu0 0.0
    %4283 = vmatprep.subr.mxu0 0.0
    %4284 = vmatpush2.msra.mxu0 0.0
    %4285 = vmatprep.subr.mxu0 0.0
    %4286 = vmatpush2.msra.mxu0 0.0
    %4287 = vmatprep.subr.mxu0 0.0
    %4288 = vmatpush2.msra.mxu0 0.0
    %4289 = vmatprep.subr.mxu0 0.0
    %4290 = vmatpush2.msra.mxu0 0.0
    %4291 = vmatprep.subr.mxu0 0.0
    %4292 = vmatpush2.msra.mxu0 0.0
    %4293 = vmatprep.subr.mxu0 0.0
    %4294 = vmatpush2.msra.mxu0 0.0
    %4295 = vmatprep.subr.mxu0 0.0
    %4296 = vmatpush2.msra.mxu0 0.0
    %4297 = vmatprep.subr.mxu0 0.0
    %4298 = vmatpush2.msra.mxu0 0.0
    %4299 = vmatprep.subr.mxu0 0.0
    %4300 = vmatpush2.msra.mxu0 0.0
    %4301 = vmatprep.mubr.f32.mxu0 0.0
    %4302 = vmatmul.mubr.f32.gmra.mxu0 0.0
    %v4303 = vpop.f32.mrf.mxu0
    %v4304 = vadd.f32 0.0, %v4303
    %v4305 = vpop.f32.mrf.mxu0
    %v4306 = vadd.f32 0.0, %v4305
    %4307 = vdwg.mxu0
    %v4308 = vadd.f32 %v4014, %v4233
    %v4309 = vadd.f32 %v4016, %v4235
    %v4310 = vadd.f32 %v4091, %v4304
    %v4311 = vadd.f32 %v4093, %v4306
    %v4312 = vxor.u32 %v4308, 2147483648
    %v4313 = vxor.u32 %v4309, 2147483648
    %v4314 = vxor.u32 %v4310, 2147483648
    %v4315 = vmul.f32 %v4312, 1.442695
    %v4316 = vpow.pop %v4315
    %v4317 = vmul.f32 %v4313, 1.442695
    %v4318 = vpow.pop %v4317
    %v4319 = vmul.f32 %v4314, 1.442695
    %v4320 = vpow.pop %v4319
    %v4321 = vadd.f32 %v4316, 1.0
    %v4322 = vadd.f32 %v4318, 1.0
    %v4323 = vadd.f32 %v4320, 1.0
    %v4324 = vrcp.pop %v4321
    %v4325 = vmul.f32 1.0, %v4324
    %v4326 = vrcp.pop %v4322
    %v4327 = vmul.f32 1.0, %v4326
    %v4328 = vrcp.pop %v4323
    %v4329 = vmul.f32 1.0, %v4328
    %v4330 = vtanh.pop %v4311
    %v4331 = vmul.f32 %v4327, 0.0
    %v4332 = vmul.f32 %v4325, %v4330
    %v4333 = vadd.f32 %v4331, %v4332
    %v4334 = vtanh.pop %v4333
    %v4335 = vmul.f32 %v4329, %v4334
    %4336 = vmatprep.subr.mxu0 %v4163
    %4337 = vmatpush1.msra.mxu0 %v4162
    %4338 = vmatprep.subr.mxu0 %v4159
    %4339 = vmatpush1.msra.mxu0 %v4158
    %4340 = vmatprep.subr.mxu0 %v4155
    %4341 = vmatpush1.msra.mxu0 %v4154
    %4342 = vmatprep.subr.mxu0 %v4151
    %4343 = vmatpush1.msra.mxu0 %v4150
    %4344 = vmatprep.subr.mxu0 %v4147
    %4345 = vmatpush1.msra.mxu0 %v4146
    %4346 = vmatprep.subr.mxu0 %v4143
    %4347 = vmatpush1.msra.mxu0 %v4142
    %4348 = vmatprep.subr.mxu0 %v4139
    %4349 = vmatpush1.msra.mxu0 %v4138
    %4350 = vmatprep.subr.mxu0 %v4135
    %4351 = vmatpush1.msra.mxu0 %v4134
    %4352 = vmatprep.subr.mxu0 %v4131
    %4353 = vmatpush1.msra.mxu0 %v4130
    %4354 = vmatprep.subr.mxu0 %v4127
    %4355 = vmatpush1.msra.mxu0 %v4126
    %4356 = vmatprep.subr.mxu0 %v4123
    %4357 = vmatpush1.msra.mxu0 %v4122
    %4358 = vmatprep.subr.mxu0 %v4119
    %4359 = vmatpush1.msra.mxu0 %v4118
    %4360 = vmatprep.subr.mxu0 %v4115
    %4361 = vmatpush1.msra.mxu0 %v4114
    %4362 = vmatprep.subr.mxu0 %v4111
    %4363 = vmatpush1.msra.mxu0 %v4110
    %4364 = vmatprep.subr.mxu0 %v4107
    %4365 = vmatpush1.msra.mxu0 %v4106
    %4366 = vmatprep.subr.mxu0 %v4103
    %4367 = vmatpush1.msra.mxu0 %v4102
    %4368 = vmatprep.subr.mxu0 0.0
    %4369 = vmatpush2.msra.mxu0 0.0
    %4370 = vmatprep.subr.mxu0 0.0
    %4371 = vmatpush2.msra.mxu0 0.0
    %4372 = vmatprep.subr.mxu0 0.0
    %4373 = vmatpush2.msra.mxu0 0.0
    %4374 = vmatprep.subr.mxu0 0.0
    %4375 = vmatpush2.msra.mxu0 0.0
    %4376 = vmatprep.subr.mxu0 0.0
    %4377 = vmatpush2.msra.mxu0 0.0
    %4378 = vmatprep.subr.mxu0 0.0
    %4379 = vmatpush2.msra.mxu0 0.0
    %4380 = vmatprep.subr.mxu0 0.0
    %4381 = vmatpush2.msra.mxu0 0.0
    %4382 = vmatprep.subr.mxu0 0.0
    %4383 = vmatpush2.msra.mxu0 0.0
    %4384 = vmatprep.subr.mxu0 0.0
    %4385 = vmatpush2.msra.mxu0 0.0
    %4386 = vmatprep.subr.mxu0 0.0
    %4387 = vmatpush2.msra.mxu0 0.0
    %4388 = vmatprep.subr.mxu0 0.0
    %4389 = vmatpush2.msra.mxu0 0.0
    %4390 = vmatprep.subr.mxu0 0.0
    %4391 = vmatpush2.msra.mxu0 0.0
    %4392 = vmatprep.subr.mxu0 0.0
    %4393 = vmatpush2.msra.mxu0 0.0
    %4394 = vmatprep.subr.mxu0 0.0
    %4395 = vmatpush2.msra.mxu0 0.0
    %4396 = vmatprep.subr.mxu0 0.0
    %4397 = vmatpush2.msra.mxu0 0.0
    %4398 = vmatprep.subr.mxu0 0.0
    %4399 = vmatpush2.msra.mxu0 0.0
    %4400 = vmatprep.mubr.f32.mxu0 0.0
    %4401 = vmatmul.mubr.f32.gmra.mxu0 %v4335
    %v4402 = vpop.f32.mrf.mxu0
    %v4403 = vadd.f32 0.0, %v4402
    %v4404 = vpop.f32.mrf.mxu0
    %v4405 = vadd.f32 0.0, %v4404
    %4406 = vdwg.mxu0
    %4407 = vmatprep.subr.mxu0 %v4165
    %4408 = vmatpush1.msra.mxu0 %v4164
    %4409 = vmatprep.subr.mxu0 %v4161
    %4410 = vmatpush1.msra.mxu0 %v4160
    %4411 = vmatprep.subr.mxu0 %v4157
    %4412 = vmatpush1.msra.mxu0 %v4156
    %4413 = vmatprep.subr.mxu0 %v4153
    %4414 = vmatpush1.msra.mxu0 %v4152
    %4415 = vmatprep.subr.mxu0 %v4149
    %4416 = vmatpush1.msra.mxu0 %v4148
    %4417 = vmatprep.subr.mxu0 %v4145
    %4418 = vmatpush1.msra.mxu0 %v4144
    %4419 = vmatprep.subr.mxu0 %v4141
    %4420 = vmatpush1.msra.mxu0 %v4140
    %4421 = vmatprep.subr.mxu0 %v4137
    %4422 = vmatpush1.msra.mxu0 %v4136
    %4423 = vmatprep.subr.mxu0 %v4133
    %4424 = vmatpush1.msra.mxu0 %v4132
    %4425 = vmatprep.subr.mxu0 %v4129
    %4426 = vmatpush1.msra.mxu0 %v4128
    %4427 = vmatprep.subr.mxu0 %v4125
    %4428 = vmatpush1.msra.mxu0 %v4124
    %4429 = vmatprep.subr.mxu0 %v4121
    %4430 = vmatpush1.msra.mxu0 %v4120
    %4431 = vmatprep.subr.mxu0 %v4117
    %4432 = vmatpush1.msra.mxu0 %v4116
    %4433 = vmatprep.subr.mxu0 %v4113
    %4434 = vmatpush1.msra.mxu0 %v4112
    %4435 = vmatprep.subr.mxu0 %v4109
    %4436 = vmatpush1.msra.mxu0 %v4108
    %4437 = vmatprep.subr.mxu0 %v4105
    %4438 = vmatpush1.msra.mxu0 %v4104
    %4439 = vmatprep.subr.mxu0 0.0
    %4440 = vmatpush2.msra.mxu0 0.0
    %4441 = vmatprep.subr.mxu0 0.0
    %4442 = vmatpush2.msra.mxu0 0.0
    %4443 = vmatprep.subr.mxu0 0.0
    %4444 = vmatpush2.msra.mxu0 0.0
    %4445 = vmatprep.subr.mxu0 0.0
    %4446 = vmatpush2.msra.mxu0 0.0
    %4447 = vmatprep.subr.mxu0 0.0
    %4448 = vmatpush2.msra.mxu0 0.0
    %4449 = vmatprep.subr.mxu0 0.0
    %4450 = vmatpush2.msra.mxu0 0.0
    %4451 = vmatprep.subr.mxu0 0.0
    %4452 = vmatpush2.msra.mxu0 0.0
    %4453 = vmatprep.subr.mxu0 0.0
    %4454 = vmatpush2.msra.mxu0 0.0
    %4455 = vmatprep.subr.mxu0 0.0
    %4456 = vmatpush2.msra.mxu0 0.0
    %4457 = vmatprep.subr.mxu0 0.0
    %4458 = vmatpush2.msra.mxu0 0.0
    %4459 = vmatprep.subr.mxu0 0.0
    %4460 = vmatpush2.msra.mxu0 0.0
    %4461 = vmatprep.subr.mxu0 0.0
    %4462 = vmatpush2.msra.mxu0 0.0
    %4463 = vmatprep.subr.mxu0 0.0
    %4464 = vmatpush2.msra.mxu0 0.0
    %4465 = vmatprep.subr.mxu0 0.0
    %4466 = vmatpush2.msra.mxu0 0.0
    %4467 = vmatprep.subr.mxu0 0.0
    %4468 = vmatpush2.msra.mxu0 0.0
    %4469 = vmatprep.subr.mxu0 0.0
    %4470 = vmatpush2.msra.mxu0 0.0
    %4471 = vmatprep.mubr.f32.mxu0 0.0
    %4472 = vmatmul.mubr.f32.gmra.mxu0 %v4335
    %v4473 = vpop.f32.mrf.mxu0
    %v4474 = vadd.f32 0.0, %v4473
    %v4475 = vpop.f32.mrf.mxu0
    %v4476 = vadd.f32 0.0, %v4475
    %4477 = vdwg.mxu0
    %v4482 = vrot.slane %v4403, 6
    %v4483 = vrot.slane %v4405, 6
    %v4484 = vrot.slane %v4474, 6
    %v4485 = vrot.slane %v4476, 6
    %v4490 = vadd.f32 %v4014, %v4482
    %v4491 = vadd.f32 %v4016, %v4483
    %v4492 = vadd.f32 %v4091, %v4484
    %v4493 = vadd.f32 %v4093, %v4485
    %v4494 = vxor.u32 %v4490, 2147483648
    %v4495 = vxor.u32 %v4491, 2147483648
    %v4496 = vxor.u32 %v4492, 2147483648
    %v4497 = vmul.f32 %v4494, 1.442695
    %v4498 = vpow.pop %v4497
    %v4499 = vmul.f32 %v4495, 1.442695
    %v4500 = vpow.pop %v4499
    %v4501 = vmul.f32 %v4496, 1.442695
    %v4502 = vpow.pop %v4501
    %v4503 = vadd.f32 %v4498, 1.0
    %v4504 = vadd.f32 %v4500, 1.0
    %v4505 = vadd.f32 %v4502, 1.0
    %v4506 = vrcp.pop %v4503
    %v4507 = vmul.f32 1.0, %v4506
    %v4508 = vrcp.pop %v4504
    %v4509 = vmul.f32 1.0, %v4508
    %v4510 = vrcp.pop %v4505
    %v4511 = vmul.f32 1.0, %v4510
    %v4512 = vtanh.pop %v4493
    %v4514 = vrot.slane %v4333, 6
    %v4516 = vmul.f32 %v4509, %v4514
    %v4517 = vmul.f32 %v4507, %v4512
    %v4518 = vadd.f32 %v4516, %v4517
    %v4519 = vtanh.pop %v4518
    %v4520 = vmul.f32 %v4511, %v4519
    %v4522 = vrot.slane %v4520, 2
    %4524 = vmatprep.subr.mxu0 %v4163
    %4525 = vmatpush1.msra.mxu0 %v4162
    %4526 = vmatprep.subr.mxu0 %v4159
    %4527 = vmatpush1.msra.mxu0 %v4158
    %4528 = vmatprep.subr.mxu0 %v4155
    %4529 = vmatpush1.msra.mxu0 %v4154
    %4530 = vmatprep.subr.mxu0 %v4151
    %4531 = vmatpush1.msra.mxu0 %v4150
    %4532 = vmatprep.subr.mxu0 %v4147
    %4533 = vmatpush1.msra.mxu0 %v4146
    %4534 = vmatprep.subr.mxu0 %v4143
    %4535 = vmatpush1.msra.mxu0 %v4142
    %4536 = vmatprep.subr.mxu0 %v4139
    %4537 = vmatpush1.msra.mxu0 %v4138
    %4538 = vmatprep.subr.mxu0 %v4135
    %4539 = vmatpush1.msra.mxu0 %v4134
    %4540 = vmatprep.subr.mxu0 %v4131
    %4541 = vmatpush1.msra.mxu0 %v4130
    %4542 = vmatprep.subr.mxu0 %v4127
    %4543 = vmatpush1.msra.mxu0 %v4126
    %4544 = vmatprep.subr.mxu0 %v4123
    %4545 = vmatpush1.msra.mxu0 %v4122
    %4546 = vmatprep.subr.mxu0 %v4119
    %4547 = vmatpush1.msra.mxu0 %v4118
    %4548 = vmatprep.subr.mxu0 %v4115
    %4549 = vmatpush1.msra.mxu0 %v4114
    %4550 = vmatprep.subr.mxu0 %v4111
    %4551 = vmatpush1.msra.mxu0 %v4110
    %4552 = vmatprep.subr.mxu0 %v4107
    %4553 = vmatpush1.msra.mxu0 %v4106
    %4554 = vmatprep.subr.mxu0 %v4103
    %4555 = vmatpush1.msra.mxu0 %v4102
    %4556 = vmatprep.subr.mxu0 0.0
    %4557 = vmatpush2.msra.mxu0 0.0
    %4558 = vmatprep.subr.mxu0 0.0
    %4559 = vmatpush2.msra.mxu0 0.0
    %4560 = vmatprep.subr.mxu0 0.0
    %4561 = vmatpush2.msra.mxu0 0.0
    %4562 = vmatprep.subr.mxu0 0.0
    %4563 = vmatpush2.msra.mxu0 0.0
    %4564 = vmatprep.subr.mxu0 0.0
    %4565 = vmatpush2.msra.mxu0 0.0
    %4566 = vmatprep.subr.mxu0 0.0
    %4567 = vmatpush2.msra.mxu0 0.0
    %4568 = vmatprep.subr.mxu0 0.0
    %4569 = vmatpush2.msra.mxu0 0.0
    %4570 = vmatprep.subr.mxu0 0.0
    %4571 = vmatpush2.msra.mxu0 0.0
    %4572 = vmatprep.subr.mxu0 0.0
    %4573 = vmatpush2.msra.mxu0 0.0
    %4574 = vmatprep.subr.mxu0 0.0
    %4575 = vmatpush2.msra.mxu0 0.0
    %4576 = vmatprep.subr.mxu0 0.0
    %4577 = vmatpush2.msra.mxu0 0.0
    %4578 = vmatprep.subr.mxu0 0.0
    %4579 = vmatpush2.msra.mxu0 0.0
    %4580 = vmatprep.subr.mxu0 0.0
    %4581 = vmatpush2.msra.mxu0 0.0
    %4582 = vmatprep.subr.mxu0 0.0
    %4583 = vmatpush2.msra.mxu0 0.0
    %4584 = vmatprep.subr.mxu0 0.0
    %4585 = vmatpush2.msra.mxu0 0.0
    %4586 = vmatprep.subr.mxu0 0.0
    %4587 = vmatpush2.msra.mxu0 0.0
    %4588 = vmatprep.mubr.f32.mxu0 0.0
    %4589 = vmatmul.mubr.f32.gmra.mxu0 %v4522
    %v4590 = vpop.f32.mrf.mxu0
    %v4591 = vadd.f32 0.0, %v4590
    %v4592 = vpop.f32.mrf.mxu0
    %v4593 = vadd.f32 0.0, %v4592
    %4594 = vdwg.mxu0
    %4595 = vmatprep.subr.mxu0 %v4165
    %4596 = vmatpush1.msra.mxu0 %v4164
    %4597 = vmatprep.subr.mxu0 %v4161
    %4598 = vmatpush1.msra.mxu0 %v4160
    %4599 = vmatprep.subr.mxu0 %v4157
    %4600 = vmatpush1.msra.mxu0 %v4156
    %4601 = vmatprep.subr.mxu0 %v4153
    %4602 = vmatpush1.msra.mxu0 %v4152
    %4603 = vmatprep.subr.mxu0 %v4149
    %4604 = vmatpush1.msra.mxu0 %v4148
    %4605 = vmatprep.subr.mxu0 %v4145
    %4606 = vmatpush1.msra.mxu0 %v4144
    %4607 = vmatprep.subr.mxu0 %v4141
    %4608 = vmatpush1.msra.mxu0 %v4140
    %4609 = vmatprep.subr.mxu0 %v4137
    %4610 = vmatpush1.msra.mxu0 %v4136
    %4611 = vmatprep.subr.mxu0 %v4133
    %4612 = vmatpush1.msra.mxu0 %v4132
    %4613 = vmatprep.subr.mxu0 %v4129
    %4614 = vmatpush1.msra.mxu0 %v4128
    %4615 = vmatprep.subr.mxu0 %v4125
    %4616 = vmatpush1.msra.mxu0 %v4124
    %4617 = vmatprep.subr.mxu0 %v4121
    %4618 = vmatpush1.msra.mxu0 %v4120
    %4619 = vmatprep.subr.mxu0 %v4117
    %4620 = vmatpush1.msra.mxu0 %v4116
    %4621 = vmatprep.subr.mxu0 %v4113
    %4622 = vmatpush1.msra.mxu0 %v4112
    %4623 = vmatprep.subr.mxu0 %v4109
    %4624 = vmatpush1.msra.mxu0 %v4108
    %4625 = vmatprep.subr.mxu0 %v4105
    %4626 = vmatpush1.msra.mxu0 %v4104
    %4627 = vmatprep.subr.mxu0 0.0
    %4628 = vmatpush2.msra.mxu0 0.0
    %4629 = vmatprep.subr.mxu0 0.0
    %4630 = vmatpush2.msra.mxu0 0.0
    %4631 = vmatprep.subr.mxu0 0.0
    %4632 = vmatpush2.msra.mxu0 0.0
    %4633 = vmatprep.subr.mxu0 0.0
    %4634 = vmatpush2.msra.mxu0 0.0
    %4635 = vmatprep.subr.mxu0 0.0
    %4636 = vmatpush2.msra.mxu0 0.0
    %4637 = vmatprep.subr.mxu0 0.0
    %4638 = vmatpush2.msra.mxu0 0.0
    %4639 = vmatprep.subr.mxu0 0.0
    %4640 = vmatpush2.msra.mxu0 0.0
    %4641 = vmatprep.subr.mxu0 0.0
    %4642 = vmatpush2.msra.mxu0 0.0
    %4643 = vmatprep.subr.mxu0 0.0
    %4644 = vmatpush2.msra.mxu0 0.0
    %4645 = vmatprep.subr.mxu0 0.0
    %4646 = vmatpush2.msra.mxu0 0.0
    %4647 = vmatprep.subr.mxu0 0.0
    %4648 = vmatpush2.msra.mxu0 0.0
    %4649 = vmatprep.subr.mxu0 0.0
    %4650 = vmatpush2.msra.mxu0 0.0
    %4651 = vmatprep.subr.mxu0 0.0
    %4652 = vmatpush2.msra.mxu0 0.0
    %4653 = vmatprep.subr.mxu0 0.0
    %4654 = vmatpush2.msra.mxu0 0.0
    %4655 = vmatprep.subr.mxu0 0.0
    %4656 = vmatpush2.msra.mxu0 0.0
    %4657 = vmatprep.subr.mxu0 0.0
    %4658 = vmatpush2.msra.mxu0 0.0
    %4659 = vmatprep.mubr.f32.mxu0 0.0
    %4660 = vmatmul.mubr.f32.gmra.mxu0 %v4522
    %v4661 = vpop.f32.mrf.mxu0
    %v4662 = vadd.f32 0.0, %v4661
    %v4663 = vpop.f32.mrf.mxu0
    %v4664 = vadd.f32 0.0, %v4663
    %4665 = vdwg.mxu0
    %v4670 = vrot.slane %v4591, 4
    %v4671 = vrot.slane %v4593, 4
    %v4672 = vrot.slane %v4662, 4
    %v4673 = vrot.slane %v4664, 4
    %v4678 = vadd.f32 %v4014, %v4670
    %v4679 = vadd.f32 %v4016, %v4671
    %v4680 = vadd.f32 %v4091, %v4672
    %v4681 = vadd.f32 %v4093, %v4673
    %v4682 = vxor.u32 %v4678, 2147483648
    %v4683 = vxor.u32 %v4679, 2147483648
    %v4684 = vxor.u32 %v4680, 2147483648
    %v4685 = vmul.f32 %v4682, 1.442695
    %v4686 = vpow.pop %v4685
    %v4687 = vmul.f32 %v4683, 1.442695
    %v4688 = vpow.pop %v4687
    %v4689 = vmul.f32 %v4684, 1.442695
    %v4690 = vpow.pop %v4689
    %v4691 = vadd.f32 %v4686, 1.0
    %v4692 = vadd.f32 %v4688, 1.0
    %v4693 = vadd.f32 %v4690, 1.0
    %v4694 = vrcp.pop %v4691
    %v4695 = vmul.f32 1.0, %v4694
    %v4696 = vrcp.pop %v4692
    %v4697 = vmul.f32 1.0, %v4696
    %v4698 = vrcp.pop %v4693
    %v4699 = vmul.f32 1.0, %v4698
    %v4700 = vtanh.pop %v4681
    %v4702 = vrot.slane %v4518, 6
    %v4704 = vmul.f32 %v4697, %v4702
    %v4705 = vmul.f32 %v4695, %v4700
    %v4706 = vadd.f32 %v4704, %v4705
    %v4707 = vtanh.pop %v4706
    %v4708 = vmul.f32 %v4699, %v4707
    %v4710 = vrot.slane %v4708, 4
    %4712 = vmatprep.subr.mxu0 %v4163
    %4713 = vmatpush1.msra.mxu0 %v4162
    %4714 = vmatprep.subr.mxu0 %v4159
    %4715 = vmatpush1.msra.mxu0 %v4158
    %4716 = vmatprep.subr.mxu0 %v4155
    %4717 = vmatpush1.msra.mxu0 %v4154
    %4718 = vmatprep.subr.mxu0 %v4151
    %4719 = vmatpush1.msra.mxu0 %v4150
    %4720 = vmatprep.subr.mxu0 %v4147
    %4721 = vmatpush1.msra.mxu0 %v4146
    %4722 = vmatprep.subr.mxu0 %v4143
    %4723 = vmatpush1.msra.mxu0 %v4142
    %4724 = vmatprep.subr.mxu0 %v4139
    %4725 = vmatpush1.msra.mxu0 %v4138
    %4726 = vmatprep.subr.mxu0 %v4135
    %4727 = vmatpush1.msra.mxu0 %v4134
    %4728 = vmatprep.subr.mxu0 %v4131
    %4729 = vmatpush1.msra.mxu0 %v4130
    %4730 = vmatprep.subr.mxu0 %v4127
    %4731 = vmatpush1.msra.mxu0 %v4126
    %4732 = vmatprep.subr.mxu0 %v4123
    %4733 = vmatpush1.msra.mxu0 %v4122
    %4734 = vmatprep.subr.mxu0 %v4119
    %4735 = vmatpush1.msra.mxu0 %v4118
    %4736 = vmatprep.subr.mxu0 %v4115
    %4737 = vmatpush1.msra.mxu0 %v4114
    %4738 = vmatprep.subr.mxu0 %v4111
    %4739 = vmatpush1.msra.mxu0 %v4110
    %4740 = vmatprep.subr.mxu0 %v4107
    %4741 = vmatpush1.msra.mxu0 %v4106
    %4742 = vmatprep.subr.mxu0 %v4103
    %4743 = vmatpush1.msra.mxu0 %v4102
    %4744 = vmatprep.subr.mxu0 0.0
    %4745 = vmatpush2.msra.mxu0 0.0
    %4746 = vmatprep.subr.mxu0 0.0
    %4747 = vmatpush2.msra.mxu0 0.0
    %4748 = vmatprep.subr.mxu0 0.0
    %4749 = vmatpush2.msra.mxu0 0.0
    %4750 = vmatprep.subr.mxu0 0.0
    %4751 = vmatpush2.msra.mxu0 0.0
    %4752 = vmatprep.subr.mxu0 0.0
    %4753 = vmatpush2.msra.mxu0 0.0
    %4754 = vmatprep.subr.mxu0 0.0
    %4755 = vmatpush2.msra.mxu0 0.0
    %4756 = vmatprep.subr.mxu0 0.0
    %4757 = vmatpush2.msra.mxu0 0.0
    %4758 = vmatprep.subr.mxu0 0.0
    %4759 = vmatpush2.msra.mxu0 0.0
    %4760 = vmatprep.subr.mxu0 0.0
    %4761 = vmatpush2.msra.mxu0 0.0
    %4762 = vmatprep.subr.mxu0 0.0
    %4763 = vmatpush2.msra.mxu0 0.0
    %4764 = vmatprep.subr.mxu0 0.0
    %4765 = vmatpush2.msra.mxu0 0.0
    %4766 = vmatprep.subr.mxu0 0.0
    %4767 = vmatpush2.msra.mxu0 0.0
    %4768 = vmatprep.subr.mxu0 0.0
    %4769 = vmatpush2.msra.mxu0 0.0
    %4770 = vmatprep.subr.mxu0 0.0
    %4771 = vmatpush2.msra.mxu0 0.0
    %4772 = vmatprep.subr.mxu0 0.0
    %4773 = vmatpush2.msra.mxu0 0.0
    %4774 = vmatprep.subr.mxu0 0.0
    %4775 = vmatpush2.msra.mxu0 0.0
    %4776 = vmatprep.mubr.f32.mxu0 0.0
    %4777 = vmatmul.mubr.f32.gmra.mxu0 %v4710
    %v4778 = vpop.f32.mrf.mxu0
    %v4779 = vadd.f32 0.0, %v4778
    %v4780 = vpop.f32.mrf.mxu0
    %v4781 = vadd.f32 0.0, %v4780
    %4782 = vdwg.mxu0
    %4783 = vmatprep.subr.mxu0 %v4165
    %4784 = vmatpush1.msra.mxu0 %v4164
    %4785 = vmatprep.subr.mxu0 %v4161
    %4786 = vmatpush1.msra.mxu0 %v4160
    %4787 = vmatprep.subr.mxu0 %v4157
    %4788 = vmatpush1.msra.mxu0 %v4156
    %4789 = vmatprep.subr.mxu0 %v4153
    %4790 = vmatpush1.msra.mxu0 %v4152
    %4791 = vmatprep.subr.mxu0 %v4149
    %4792 = vmatpush1.msra.mxu0 %v4148
    %4793 = vmatprep.subr.mxu0 %v4145
    %4794 = vmatpush1.msra.mxu0 %v4144
    %4795 = vmatprep.subr.mxu0 %v4141
    %4796 = vmatpush1.msra.mxu0 %v4140
    %4797 = vmatprep.subr.mxu0 %v4137
    %4798 = vmatpush1.msra.mxu0 %v4136
    %4799 = vmatprep.subr.mxu0 %v4133
    %4800 = vmatpush1.msra.mxu0 %v4132
    %4801 = vmatprep.subr.mxu0 %v4129
    %4802 = vmatpush1.msra.mxu0 %v4128
    %4803 = vmatprep.subr.mxu0 %v4125
    %4804 = vmatpush1.msra.mxu0 %v4124
    %4805 = vmatprep.subr.mxu0 %v4121
    %4806 = vmatpush1.msra.mxu0 %v4120
    %4807 = vmatprep.subr.mxu0 %v4117
    %4808 = vmatpush1.msra.mxu0 %v4116
    %4809 = vmatprep.subr.mxu0 %v4113
    %4810 = vmatpush1.msra.mxu0 %v4112
    %4811 = vmatprep.subr.mxu0 %v4109
    %4812 = vmatpush1.msra.mxu0 %v4108
    %4813 = vmatprep.subr.mxu0 %v4105
    %4814 = vmatpush1.msra.mxu0 %v4104
    %4815 = vmatprep.subr.mxu0 0.0
    %4816 = vmatpush2.msra.mxu0 0.0
    %4817 = vmatprep.subr.mxu0 0.0
    %4818 = vmatpush2.msra.mxu0 0.0
    %4819 = vmatprep.subr.mxu0 0.0
    %4820 = vmatpush2.msra.mxu0 0.0
    %4821 = vmatprep.subr.mxu0 0.0
    %4822 = vmatpush2.msra.mxu0 0.0
    %4823 = vmatprep.subr.mxu0 0.0
    %4824 = vmatpush2.msra.mxu0 0.0
    %4825 = vmatprep.subr.mxu0 0.0
    %4826 = vmatpush2.msra.mxu0 0.0
    %4827 = vmatprep.subr.mxu0 0.0
    %4828 = vmatpush2.msra.mxu0 0.0
    %4829 = vmatprep.subr.mxu0 0.0
    %4830 = vmatpush2.msra.mxu0 0.0
    %4831 = vmatprep.subr.mxu0 0.0
    %4832 = vmatpush2.msra.mxu0 0.0
    %4833 = vmatprep.subr.mxu0 0.0
    %4834 = vmatpush2.msra.mxu0 0.0
    %4835 = vmatprep.subr.mxu0 0.0
    %4836 = vmatpush2.msra.mxu0 0.0
    %4837 = vmatprep.subr.mxu0 0.0
    %4838 = vmatpush2.msra.mxu0 0.0
    %4839 = vmatprep.subr.mxu0 0.0
    %4840 = vmatpush2.msra.mxu0 0.0
    %4841 = vmatprep.subr.mxu0 0.0
    %4842 = vmatpush2.msra.mxu0 0.0
    %4843 = vmatprep.subr.mxu0 0.0
    %4844 = vmatpush2.msra.mxu0 0.0
    %4845 = vmatprep.subr.mxu0 0.0
    %4846 = vmatpush2.msra.mxu0 0.0
    %4847 = vmatprep.mubr.f32.mxu0 0.0
    %4848 = vmatmul.mubr.f32.gmra.mxu0 %v4710
    %v4849 = vpop.f32.mrf.mxu0
    %v4850 = vadd.f32 0.0, %v4849
    %v4851 = vpop.f32.mrf.mxu0
    %v4852 = vadd.f32 0.0, %v4851
    %4853 = vdwg.mxu0
    %v4858 = vrot.slane %v4779, 2
    %v4859 = vrot.slane %v4781, 2
    %v4860 = vrot.slane %v4850, 2
    %v4861 = vrot.slane %v4852, 2
    %v4866 = vadd.f32 %v4014, %v4858
    %v4867 = vadd.f32 %v4016, %v4859
    %v4868 = vadd.f32 %v4091, %v4860
    %v4869 = vadd.f32 %v4093, %v4861
    %v4870 = vxor.u32 %v4866, 2147483648
    %v4871 = vxor.u32 %v4867, 2147483648
    %v4872 = vxor.u32 %v4868, 2147483648
    %v4873 = vmul.f32 %v4870, 1.442695
    %v4874 = vpow.pop %v4873
    %v4875 = vmul.f32 %v4871, 1.442695
    %v4876 = vpow.pop %v4875
    %v4877 = vmul.f32 %v4872, 1.442695
    %v4878 = vpow.pop %v4877
    %v4879 = vadd.f32 %v4874, 1.0
    %v4880 = vadd.f32 %v4876, 1.0
    %v4881 = vadd.f32 %v4878, 1.0
    %v4882 = vrcp.pop %v4879
    %v4883 = vmul.f32 1.0, %v4882
    %v4884 = vrcp.pop %v4880
    %v4885 = vmul.f32 1.0, %v4884
    %v4886 = vrcp.pop %v4881
    %v4887 = vmul.f32 1.0, %v4886
    %v4888 = vtanh.pop %v4869
    %v4890 = vrot.slane %v4706, 6
    %v4892 = vmul.f32 %v4885, %v4890
    %v4893 = vmul.f32 %v4883, %v4888
    %v4894 = vadd.f32 %v4892, %v4893
    %v4895 = vtanh.pop %v4894
    %v4896 = vmul.f32 %v4887, %v4895
    %v4898 = vrot.slane %v4896, 6
    %4900 = vmatprep.subr.mxu0 %v4163
    %4901 = vmatpush1.msra.mxu0 %v4162
    %4902 = vmatprep.subr.mxu0 %v4159
    %4903 = vmatpush1.msra.mxu0 %v4158
    %4904 = vmatprep.subr.mxu0 %v4155
    %4905 = vmatpush1.msra.mxu0 %v4154
    %4906 = vmatprep.subr.mxu0 %v4151
    %4907 = vmatpush1.msra.mxu0 %v4150
    %4908 = vmatprep.subr.mxu0 %v4147
    %4909 = vmatpush1.msra.mxu0 %v4146
    %4910 = vmatprep.subr.mxu0 %v4143
    %4911 = vmatpush1.msra.mxu0 %v4142
    %4912 = vmatprep.subr.mxu0 %v4139
    %4913 = vmatpush1.msra.mxu0 %v4138
    %4914 = vmatprep.subr.mxu0 %v4135
    %4915 = vmatpush1.msra.mxu0 %v4134
    %4916 = vmatprep.subr.mxu0 %v4131
    %4917 = vmatpush1.msra.mxu0 %v4130
    %4918 = vmatprep.subr.mxu0 %v4127
    %4919 = vmatpush1.msra.mxu0 %v4126
    %4920 = vmatprep.subr.mxu0 %v4123
    %4921 = vmatpush1.msra.mxu0 %v4122
    %4922 = vmatprep.subr.mxu0 %v4119
    %4923 = vmatpush1.msra.mxu0 %v4118
    %4924 = vmatprep.subr.mxu0 %v4115
    %4925 = vmatpush1.msra.mxu0 %v4114
    %4926 = vmatprep.subr.mxu0 %v4111
    %4927 = vmatpush1.msra.mxu0 %v4110
    %4928 = vmatprep.subr.mxu0 %v4107
    %4929 = vmatpush1.msra.mxu0 %v4106
    %4930 = vmatprep.subr.mxu0 %v4103
    %4931 = vmatpush1.msra.mxu0 %v4102
    %4932 = vmatprep.subr.mxu0 0.0
    %4933 = vmatpush2.msra.mxu0 0.0
    %4934 = vmatprep.subr.mxu0 0.0
    %4935 = vmatpush2.msra.mxu0 0.0
    %4936 = vmatprep.subr.mxu0 0.0
    %4937 = vmatpush2.msra.mxu0 0.0
    %4938 = vmatprep.subr.mxu0 0.0
    %4939 = vmatpush2.msra.mxu0 0.0
    %4940 = vmatprep.subr.mxu0 0.0
    %4941 = vmatpush2.msra.mxu0 0.0
    %4942 = vmatprep.subr.mxu0 0.0
    %4943 = vmatpush2.msra.mxu0 0.0
    %4944 = vmatprep.subr.mxu0 0.0
    %4945 = vmatpush2.msra.mxu0 0.0
    %4946 = vmatprep.subr.mxu0 0.0
    %4947 = vmatpush2.msra.mxu0 0.0
    %4948 = vmatprep.subr.mxu0 0.0
    %4949 = vmatpush2.msra.mxu0 0.0
    %4950 = vmatprep.subr.mxu0 0.0
    %4951 = vmatpush2.msra.mxu0 0.0
    %4952 = vmatprep.subr.mxu0 0.0
    %4953 = vmatpush2.msra.mxu0 0.0
    %4954 = vmatprep.subr.mxu0 0.0
    %4955 = vmatpush2.msra.mxu0 0.0
    %4956 = vmatprep.subr.mxu0 0.0
    %4957 = vmatpush2.msra.mxu0 0.0
    %4958 = vmatprep.subr.mxu0 0.0
    %4959 = vmatpush2.msra.mxu0 0.0
    %4960 = vmatprep.subr.mxu0 0.0
    %4961 = vmatpush2.msra.mxu0 0.0
    %4962 = vmatprep.subr.mxu0 0.0
    %4963 = vmatpush2.msra.mxu0 0.0
    %4964 = vmatprep.mubr.f32.mxu0 0.0
    %4965 = vmatmul.mubr.f32.gmra.mxu0 %v4898
    %v4966 = vpop.f32.mrf.mxu0
    %v4967 = vadd.f32 0.0, %v4966
    %v4968 = vpop.f32.mrf.mxu0
    %v4969 = vadd.f32 0.0, %v4968
    %4970 = vdwg.mxu0
    %4971 = vmatprep.subr.mxu0 %v4165
    %4972 = vmatpush1.msra.mxu0 %v4164
    %4973 = vmatprep.subr.mxu0 %v4161
    %4974 = vmatpush1.msra.mxu0 %v4160
    %4975 = vmatprep.subr.mxu0 %v4157
    %4976 = vmatpush1.msra.mxu0 %v4156
    %4977 = vmatprep.subr.mxu0 %v4153
    %4978 = vmatpush1.msra.mxu0 %v4152
    %4979 = vmatprep.subr.mxu0 %v4149
    %4980 = vmatpush1.msra.mxu0 %v4148
    %4981 = vmatprep.subr.mxu0 %v4145
    %4982 = vmatpush1.msra.mxu0 %v4144
    %4983 = vmatprep.subr.mxu0 %v4141
    %4984 = vmatpush1.msra.mxu0 %v4140
    %4985 = vmatprep.subr.mxu0 %v4137
    %4986 = vmatpush1.msra.mxu0 %v4136
    %4987 = vmatprep.subr.mxu0 %v4133
    %4988 = vmatpush1.msra.mxu0 %v4132
    %4989 = vmatprep.subr.mxu0 %v4129
    %4990 = vmatpush1.msra.mxu0 %v4128
    %4991 = vmatprep.subr.mxu0 %v4125
    %4992 = vmatpush1.msra.mxu0 %v4124
    %4993 = vmatprep.subr.mxu0 %v4121
    %4994 = vmatpush1.msra.mxu0 %v4120
    %4995 = vmatprep.subr.mxu0 %v4117
    %4996 = vmatpush1.msra.mxu0 %v4116
    %4997 = vmatprep.subr.mxu0 %v4113
    %4998 = vmatpush1.msra.mxu0 %v4112
    %4999 = vmatprep.subr.mxu0 %v4109
    %5000 = vmatpush1.msra.mxu0 %v4108
    %5001 = vmatprep.subr.mxu0 %v4105
    %5002 = vmatpush1.msra.mxu0 %v4104
    %5003 = vmatprep.subr.mxu0 0.0
    %5004 = vmatpush2.msra.mxu0 0.0
    %5005 = vmatprep.subr.mxu0 0.0
    %5006 = vmatpush2.msra.mxu0 0.0
    %5007 = vmatprep.subr.mxu0 0.0
    %5008 = vmatpush2.msra.mxu0 0.0
    %5009 = vmatprep.subr.mxu0 0.0
    %5010 = vmatpush2.msra.mxu0 0.0
    %5011 = vmatprep.subr.mxu0 0.0
    %5012 = vmatpush2.msra.mxu0 0.0
    %5013 = vmatprep.subr.mxu0 0.0
    %5014 = vmatpush2.msra.mxu0 0.0
    %5015 = vmatprep.subr.mxu0 0.0
    %5016 = vmatpush2.msra.mxu0 0.0
    %5017 = vmatprep.subr.mxu0 0.0
    %5018 = vmatpush2.msra.mxu0 0.0
    %5019 = vmatprep.subr.mxu0 0.0
    %5020 = vmatpush2.msra.mxu0 0.0
    %5021 = vmatprep.subr.mxu0 0.0
    %5022 = vmatpush2.msra.mxu0 0.0
    %5023 = vmatprep.subr.mxu0 0.0
    %5024 = vmatpush2.msra.mxu0 0.0
    %5025 = vmatprep.subr.mxu0 0.0
    %5026 = vmatpush2.msra.mxu0 0.0
    %5027 = vmatprep.subr.mxu0 0.0
    %5028 = vmatpush2.msra.mxu0 0.0
    %5029 = vmatprep.subr.mxu0 0.0
    %5030 = vmatpush2.msra.mxu0 0.0
    %5031 = vmatprep.subr.mxu0 0.0
    %5032 = vmatpush2.msra.mxu0 0.0
    %5033 = vmatprep.subr.mxu0 0.0
    %5034 = vmatpush2.msra.mxu0 0.0
    %5035 = vmatprep.mubr.f32.mxu0 0.0
    %5036 = vmatmul.mubr.f32.gmra.mxu0 %v4898
    %v5037 = vpop.f32.mrf.mxu0
    %v5038 = vadd.f32 0.0, %v5037
    %v5039 = vpop.f32.mrf.mxu0
    %v5040 = vadd.f32 0.0, %v5039
    %5041 = vdwg.mxu0
    %v5042 = vadd.f32 %v4020, %v4967
    %v5043 = vadd.f32 %v4022, %v4969
    %v5044 = vadd.f32 %v4097, %v5038
    %v5045 = vadd.f32 %v4099, %v5040
    %v5046 = vxor.u32 %v5042, 2147483648
    %v5047 = vxor.u32 %v5043, 2147483648
    %v5048 = vxor.u32 %v5044, 2147483648
    %v5049 = vmul.f32 %v5046, 1.442695
    %v5050 = vpow.pop %v5049
    %v5051 = vmul.f32 %v5047, 1.442695
    %v5052 = vpow.pop %v5051
    %v5053 = vmul.f32 %v5048, 1.442695
    %v5054 = vpow.pop %v5053
    %v5055 = vadd.f32 %v5050, 1.0
    %v5056 = vadd.f32 %v5052, 1.0
    %v5057 = vadd.f32 %v5054, 1.0
    %v5058 = vrcp.pop %v5055
    %v5059 = vmul.f32 1.0, %v5058
    %v5060 = vrcp.pop %v5056
    %v5061 = vmul.f32 1.0, %v5060
    %v5062 = vrcp.pop %v5057
    %v5063 = vmul.f32 1.0, %v5062
    %v5064 = vtanh.pop %v5045
    %v5066 = vrot.slane %v4894, 6
    %v5068 = vmul.f32 %v5061, %v5066
    %v5069 = vmul.f32 %v5059, %v5064
    %v5070 = vadd.f32 %v5068, %v5069
    %v5071 = vtanh.pop %v5070
    %v5072 = vmul.f32 %v5063, %v5071
    %5073 = vmatprep.subr.mxu0 %v4163
    %5074 = vmatpush1.msra.mxu0 %v4162
    %5075 = vmatprep.subr.mxu0 %v4159
    %5076 = vmatpush1.msra.mxu0 %v4158
    %5077 = vmatprep.subr.mxu0 %v4155
    %5078 = vmatpush1.msra.mxu0 %v4154
    %5079 = vmatprep.subr.mxu0 %v4151
    %5080 = vmatpush1.msra.mxu0 %v4150
    %5081 = vmatprep.subr.mxu0 %v4147
    %5082 = vmatpush1.msra.mxu0 %v4146
    %5083 = vmatprep.subr.mxu0 %v4143
    %5084 = vmatpush1.msra.mxu0 %v4142
    %5085 = vmatprep.subr.mxu0 %v4139
    %5086 = vmatpush1.msra.mxu0 %v4138
    %5087 = vmatprep.subr.mxu0 %v4135
    %5088 = vmatpush1.msra.mxu0 %v4134
    %5089 = vmatprep.subr.mxu0 %v4131
    %5090 = vmatpush1.msra.mxu0 %v4130
    %5091 = vmatprep.subr.mxu0 %v4127
    %5092 = vmatpush1.msra.mxu0 %v4126
    %5093 = vmatprep.subr.mxu0 %v4123
    %5094 = vmatpush1.msra.mxu0 %v4122
    %5095 = vmatprep.subr.mxu0 %v4119
    %5096 = vmatpush1.msra.mxu0 %v4118
    %5097 = vmatprep.subr.mxu0 %v4115
    %5098 = vmatpush1.msra.mxu0 %v4114
    %5099 = vmatprep.subr.mxu0 %v4111
    %5100 = vmatpush1.msra.mxu0 %v4110
    %5101 = vmatprep.subr.mxu0 %v4107
    %5102 = vmatpush1.msra.mxu0 %v4106
    %5103 = vmatprep.subr.mxu0 %v4103
    %5104 = vmatpush1.msra.mxu0 %v4102
    %5105 = vmatprep.subr.mxu0 0.0
    %5106 = vmatpush2.msra.mxu0 0.0
    %5107 = vmatprep.subr.mxu0 0.0
    %5108 = vmatpush2.msra.mxu0 0.0
    %5109 = vmatprep.subr.mxu0 0.0
    %5110 = vmatpush2.msra.mxu0 0.0
    %5111 = vmatprep.subr.mxu0 0.0
    %5112 = vmatpush2.msra.mxu0 0.0
    %5113 = vmatprep.subr.mxu0 0.0
    %5114 = vmatpush2.msra.mxu0 0.0
    %5115 = vmatprep.subr.mxu0 0.0
    %5116 = vmatpush2.msra.mxu0 0.0
    %5117 = vmatprep.subr.mxu0 0.0
    %5118 = vmatpush2.msra.mxu0 0.0
    %5119 = vmatprep.subr.mxu0 0.0
    %5120 = vmatpush2.msra.mxu0 0.0
    %5121 = vmatprep.subr.mxu0 0.0
    %5122 = vmatpush2.msra.mxu0 0.0
    %5123 = vmatprep.subr.mxu0 0.0
    %5124 = vmatpush2.msra.mxu0 0.0
    %5125 = vmatprep.subr.mxu0 0.0
    %5126 = vmatpush2.msra.mxu0 0.0
    %5127 = vmatprep.subr.mxu0 0.0
    %5128 = vmatpush2.msra.mxu0 0.0
    %5129 = vmatprep.subr.mxu0 0.0
    %5130 = vmatpush2.msra.mxu0 0.0
    %5131 = vmatprep.subr.mxu0 0.0
    %5132 = vmatpush2.msra.mxu0 0.0
    %5133 = vmatprep.subr.mxu0 0.0
    %5134 = vmatpush2.msra.mxu0 0.0
    %5135 = vmatprep.subr.mxu0 0.0
    %5136 = vmatpush2.msra.mxu0 0.0
    %5137 = vmatprep.mubr.f32.mxu0 0.0
    %5138 = vmatmul.mubr.f32.gmra.mxu0 %v5072
    %v5139 = vpop.f32.mrf.mxu0
    %v5140 = vadd.f32 0.0, %v5139
    %v5141 = vpop.f32.mrf.mxu0
    %v5142 = vadd.f32 0.0, %v5141
    %5143 = vdwg.mxu0
    %5144 = vmatprep.subr.mxu0 %v4165
    %5145 = vmatpush1.msra.mxu0 %v4164
    %5146 = vmatprep.subr.mxu0 %v4161
    %5147 = vmatpush1.msra.mxu0 %v4160
    %5148 = vmatprep.subr.mxu0 %v4157
    %5149 = vmatpush1.msra.mxu0 %v4156
    %5150 = vmatprep.subr.mxu0 %v4153
    %5151 = vmatpush1.msra.mxu0 %v4152
    %5152 = vmatprep.subr.mxu0 %v4149
    %5153 = vmatpush1.msra.mxu0 %v4148
    %5154 = vmatprep.subr.mxu0 %v4145
    %5155 = vmatpush1.msra.mxu0 %v4144
    %5156 = vmatprep.subr.mxu0 %v4141
    %5157 = vmatpush1.msra.mxu0 %v4140
    %5158 = vmatprep.subr.mxu0 %v4137
    %5159 = vmatpush1.msra.mxu0 %v4136
    %5160 = vmatprep.subr.mxu0 %v4133
    %5161 = vmatpush1.msra.mxu0 %v4132
    %5162 = vmatprep.subr.mxu0 %v4129
    %5163 = vmatpush1.msra.mxu0 %v4128
    %5164 = vmatprep.subr.mxu0 %v4125
    %5165 = vmatpush1.msra.mxu0 %v4124
    %5166 = vmatprep.subr.mxu0 %v4121
    %5167 = vmatpush1.msra.mxu0 %v4120
    %5168 = vmatprep.subr.mxu0 %v4117
    %5169 = vmatpush1.msra.mxu0 %v4116
    %5170 = vmatprep.subr.mxu0 %v4113
    %5171 = vmatpush1.msra.mxu0 %v4112
    %5172 = vmatprep.subr.mxu0 %v4109
    %5173 = vmatpush1.msra.mxu0 %v4108
    %5174 = vmatprep.subr.mxu0 %v4105
    %5175 = vmatpush1.msra.mxu0 %v4104
    %5176 = vmatprep.subr.mxu0 0.0
    %5177 = vmatpush2.msra.mxu0 0.0
    %5178 = vmatprep.subr.mxu0 0.0
    %5179 = vmatpush2.msra.mxu0 0.0
    %5180 = vmatprep.subr.mxu0 0.0
    %5181 = vmatpush2.msra.mxu0 0.0
    %5182 = vmatprep.subr.mxu0 0.0
    %5183 = vmatpush2.msra.mxu0 0.0
    %5184 = vmatprep.subr.mxu0 0.0
    %5185 = vmatpush2.msra.mxu0 0.0
    %5186 = vmatprep.subr.mxu0 0.0
    %5187 = vmatpush2.msra.mxu0 0.0
    %5188 = vmatprep.subr.mxu0 0.0
    %5189 = vmatpush2.msra.mxu0 0.0
    %5190 = vmatprep.subr.mxu0 0.0
    %5191 = vmatpush2.msra.mxu0 0.0
    %5192 = vmatprep.subr.mxu0 0.0
    %5193 = vmatpush2.msra.mxu0 0.0
    %5194 = vmatprep.subr.mxu0 0.0
    %5195 = vmatpush2.msra.mxu0 0.0
    %5196 = vmatprep.subr.mxu0 0.0
    %5197 = vmatpush2.msra.mxu0 0.0
    %5198 = vmatprep.subr.mxu0 0.0
    %5199 = vmatpush2.msra.mxu0 0.0
    %5200 = vmatprep.subr.mxu0 0.0
    %5201 = vmatpush2.msra.mxu0 0.0
    %5202 = vmatprep.subr.mxu0 0.0
    %5203 = vmatpush2.msra.mxu0 0.0
    %5204 = vmatprep.subr.mxu0 0.0
    %5205 = vmatpush2.msra.mxu0 0.0
    %5206 = vmatprep.subr.mxu0 0.0
    %5207 = vmatpush2.msra.mxu0 0.0
    %5208 = vmatprep.mubr.f32.mxu0 0.0
    %5209 = vmatmul.mubr.f32.gmra.mxu0 %v5072
    %v5210 = vpop.f32.mrf.mxu0
    %v5211 = vadd.f32 0.0, %v5210
    %v5212 = vpop.f32.mrf.mxu0
    %v5213 = vadd.f32 0.0, %v5212
    %5214 = vdwg.mxu0
    %v5219 = vrot.slane %v5140, 6
    %v5220 = vrot.slane %v5142, 6
    %v5221 = vrot.slane %v5211, 6
    %v5222 = vrot.slane %v5213, 6
    %v5227 = vadd.f32 %v4020, %v5219
    %v5228 = vadd.f32 %v4022, %v5220
    %v5229 = vadd.f32 %v4097, %v5221
    %v5230 = vadd.f32 %v4099, %v5222
    %v5231 = vxor.u32 %v5227, 2147483648
    %v5232 = vxor.u32 %v5228, 2147483648
    %v5233 = vxor.u32 %v5229, 2147483648
    %v5234 = vmul.f32 %v5231, 1.442695
    %v5235 = vpow.pop %v5234
    %v5236 = vmul.f32 %v5232, 1.442695
    %v5237 = vpow.pop %v5236
    %v5238 = vmul.f32 %v5233, 1.442695
    %v5239 = vpow.pop %v5238
    %v5240 = vadd.f32 %v5235, 1.0
    %v5241 = vadd.f32 %v5237, 1.0
    %v5242 = vadd.f32 %v5239, 1.0
    %v5243 = vrcp.pop %v5240
    %v5244 = vmul.f32 1.0, %v5243
    %v5245 = vrcp.pop %v5241
    %v5246 = vmul.f32 1.0, %v5245
    %v5247 = vrcp.pop %v5242
    %v5248 = vmul.f32 1.0, %v5247
    %v5249 = vtanh.pop %v5230
    %v5251 = vrot.slane %v5070, 6
    %v5253 = vmul.f32 %v5246, %v5251
    %v5254 = vmul.f32 %v5244, %v5249
    %v5255 = vadd.f32 %v5253, %v5254
    %v5256 = vtanh.pop %v5255
    %v5257 = vmul.f32 %v5248, %v5256
    %v5259 = vrot.slane %v5257, 2
    %5261 = vmatprep.subr.mxu0 %v4163
    %5262 = vmatpush1.msra.mxu0 %v4162
    %5263 = vmatprep.subr.mxu0 %v4159
    %5264 = vmatpush1.msra.mxu0 %v4158
    %5265 = vmatprep.subr.mxu0 %v4155
    %5266 = vmatpush1.msra.mxu0 %v4154
    %5267 = vmatprep.subr.mxu0 %v4151
    %5268 = vmatpush1.msra.mxu0 %v4150
    %5269 = vmatprep.subr.mxu0 %v4147
    %5270 = vmatpush1.msra.mxu0 %v4146
    %5271 = vmatprep.subr.mxu0 %v4143
    %5272 = vmatpush1.msra.mxu0 %v4142
    %5273 = vmatprep.subr.mxu0 %v4139
    %5274 = vmatpush1.msra.mxu0 %v4138
    %5275 = vmatprep.subr.mxu0 %v4135
    %5276 = vmatpush1.msra.mxu0 %v4134
    %5277 = vmatprep.subr.mxu0 %v4131
    %5278 = vmatpush1.msra.mxu0 %v4130
    %5279 = vmatprep.subr.mxu0 %v4127
    %5280 = vmatpush1.msra.mxu0 %v4126
    %5281 = vmatprep.subr.mxu0 %v4123
    %5282 = vmatpush1.msra.mxu0 %v4122
    %5283 = vmatprep.subr.mxu0 %v4119
    %5284 = vmatpush1.msra.mxu0 %v4118
    %5285 = vmatprep.subr.mxu0 %v4115
    %5286 = vmatpush1.msra.mxu0 %v4114
    %5287 = vmatprep.subr.mxu0 %v4111
    %5288 = vmatpush1.msra.mxu0 %v4110
    %5289 = vmatprep.subr.mxu0 %v4107
    %5290 = vmatpush1.msra.mxu0 %v4106
    %5291 = vmatprep.subr.mxu0 %v4103
    %5292 = vmatpush1.msra.mxu0 %v4102
    %5293 = vmatprep.subr.mxu0 0.0
    %5294 = vmatpush2.msra.mxu0 0.0
    %5295 = vmatprep.subr.mxu0 0.0
    %5296 = vmatpush2.msra.mxu0 0.0
    %5297 = vmatprep.subr.mxu0 0.0
    %5298 = vmatpush2.msra.mxu0 0.0
    %5299 = vmatprep.subr.mxu0 0.0
    %5300 = vmatpush2.msra.mxu0 0.0
    %5301 = vmatprep.subr.mxu0 0.0
    %5302 = vmatpush2.msra.mxu0 0.0
    %5303 = vmatprep.subr.mxu0 0.0
    %5304 = vmatpush2.msra.mxu0 0.0
    %5305 = vmatprep.subr.mxu0 0.0
    %5306 = vmatpush2.msra.mxu0 0.0
    %5307 = vmatprep.subr.mxu0 0.0
    %5308 = vmatpush2.msra.mxu0 0.0
    %5309 = vmatprep.subr.mxu0 0.0
    %5310 = vmatpush2.msra.mxu0 0.0
    %5311 = vmatprep.subr.mxu0 0.0
    %5312 = vmatpush2.msra.mxu0 0.0
    %5313 = vmatprep.subr.mxu0 0.0
    %5314 = vmatpush2.msra.mxu0 0.0
    %5315 = vmatprep.subr.mxu0 0.0
    %5316 = vmatpush2.msra.mxu0 0.0
    %5317 = vmatprep.subr.mxu0 0.0
    %5318 = vmatpush2.msra.mxu0 0.0
    %5319 = vmatprep.subr.mxu0 0.0
    %5320 = vmatpush2.msra.mxu0 0.0
    %5321 = vmatprep.subr.mxu0 0.0
    %5322 = vmatpush2.msra.mxu0 0.0
    %5323 = vmatprep.subr.mxu0 0.0
    %5324 = vmatpush2.msra.mxu0 0.0
    %5325 = vmatprep.mubr.f32.mxu0 0.0
    %5326 = vmatmul.mubr.f32.gmra.mxu0 %v5259
    %v5327 = vpop.f32.mrf.mxu0
    %v5328 = vadd.f32 0.0, %v5327
    %v5329 = vpop.f32.mrf.mxu0
    %v5330 = vadd.f32 0.0, %v5329
    %5331 = vdwg.mxu0
    %5332 = vmatprep.subr.mxu0 %v4165
    %5333 = vmatpush1.msra.mxu0 %v4164
    %5334 = vmatprep.subr.mxu0 %v4161
    %5335 = vmatpush1.msra.mxu0 %v4160
    %5336 = vmatprep.subr.mxu0 %v4157
    %5337 = vmatpush1.msra.mxu0 %v4156
    %5338 = vmatprep.subr.mxu0 %v4153
    %5339 = vmatpush1.msra.mxu0 %v4152
    %5340 = vmatprep.subr.mxu0 %v4149
    %5341 = vmatpush1.msra.mxu0 %v4148
    %5342 = vmatprep.subr.mxu0 %v4145
    %5343 = vmatpush1.msra.mxu0 %v4144
    %5344 = vmatprep.subr.mxu0 %v4141
    %5345 = vmatpush1.msra.mxu0 %v4140
    %5346 = vmatprep.subr.mxu0 %v4137
    %5347 = vmatpush1.msra.mxu0 %v4136
    %5348 = vmatprep.subr.mxu0 %v4133
    %5349 = vmatpush1.msra.mxu0 %v4132
    %5350 = vmatprep.subr.mxu0 %v4129
    %5351 = vmatpush1.msra.mxu0 %v4128
    %5352 = vmatprep.subr.mxu0 %v4125
    %5353 = vmatpush1.msra.mxu0 %v4124
    %5354 = vmatprep.subr.mxu0 %v4121
    %5355 = vmatpush1.msra.mxu0 %v4120
    %5356 = vmatprep.subr.mxu0 %v4117
    %5357 = vmatpush1.msra.mxu0 %v4116
    %5358 = vmatprep.subr.mxu0 %v4113
    %5359 = vmatpush1.msra.mxu0 %v4112
    %5360 = vmatprep.subr.mxu0 %v4109
    %5361 = vmatpush1.msra.mxu0 %v4108
    %5362 = vmatprep.subr.mxu0 %v4105
    %5363 = vmatpush1.msra.mxu0 %v4104
    %5364 = vmatprep.subr.mxu0 0.0
    %5365 = vmatpush2.msra.mxu0 0.0
    %5366 = vmatprep.subr.mxu0 0.0
    %5367 = vmatpush2.msra.mxu0 0.0
    %5368 = vmatprep.subr.mxu0 0.0
    %5369 = vmatpush2.msra.mxu0 0.0
    %5370 = vmatprep.subr.mxu0 0.0
    %5371 = vmatpush2.msra.mxu0 0.0
    %5372 = vmatprep.subr.mxu0 0.0
    %5373 = vmatpush2.msra.mxu0 0.0
    %5374 = vmatprep.subr.mxu0 0.0
    %5375 = vmatpush2.msra.mxu0 0.0
    %5376 = vmatprep.subr.mxu0 0.0
    %5377 = vmatpush2.msra.mxu0 0.0
    %5378 = vmatprep.subr.mxu0 0.0
    %5379 = vmatpush2.msra.mxu0 0.0
    %5380 = vmatprep.subr.mxu0 0.0
    %5381 = vmatpush2.msra.mxu0 0.0
    %5382 = vmatprep.subr.mxu0 0.0
    %5383 = vmatpush2.msra.mxu0 0.0
    %5384 = vmatprep.subr.mxu0 0.0
    %5385 = vmatpush2.msra.mxu0 0.0
    %5386 = vmatprep.subr.mxu0 0.0
    %5387 = vmatpush2.msra.mxu0 0.0
    %5388 = vmatprep.subr.mxu0 0.0
    %5389 = vmatpush2.msra.mxu0 0.0
    %5390 = vmatprep.subr.mxu0 0.0
    %5391 = vmatpush2.msra.mxu0 0.0
    %5392 = vmatprep.subr.mxu0 0.0
    %5393 = vmatpush2.msra.mxu0 0.0
    %5394 = vmatprep.subr.mxu0 0.0
    %5395 = vmatpush2.msra.mxu0 0.0
    %5396 = vmatprep.mubr.f32.mxu0 0.0
    %5397 = vmatmul.mubr.f32.gmra.mxu0 %v5259
    %v5398 = vpop.f32.mrf.mxu0
    %v5399 = vadd.f32 0.0, %v5398
    %v5400 = vpop.f32.mrf.mxu0
    %v5401 = vadd.f32 0.0, %v5400
    %5402 = vdwg.mxu0
    %v5407 = vrot.slane %v5328, 4
    %v5408 = vrot.slane %v5330, 4
    %v5409 = vrot.slane %v5399, 4
    %v5410 = vrot.slane %v5401, 4
    %v5415 = vadd.f32 %v4020, %v5407
    %v5416 = vadd.f32 %v4022, %v5408
    %v5417 = vadd.f32 %v4097, %v5409
    %v5418 = vadd.f32 %v4099, %v5410
    %v5419 = vxor.u32 %v5415, 2147483648
    %v5420 = vxor.u32 %v5416, 2147483648
    %v5421 = vxor.u32 %v5417, 2147483648
    %v5422 = vmul.f32 %v5419, 1.442695
    %v5423 = vpow.pop %v5422
    %v5424 = vmul.f32 %v5420, 1.442695
    %v5425 = vpow.pop %v5424
    %v5426 = vmul.f32 %v5421, 1.442695
    %v5427 = vpow.pop %v5426
    %v5428 = vadd.f32 %v5423, 1.0
    %v5429 = vadd.f32 %v5425, 1.0
    %v5430 = vadd.f32 %v5427, 1.0
    %v5431 = vrcp.pop %v5428
    %v5432 = vmul.f32 1.0, %v5431
    %v5433 = vrcp.pop %v5429
    %v5434 = vmul.f32 1.0, %v5433
    %v5435 = vrcp.pop %v5430
    %v5436 = vmul.f32 1.0, %v5435
    %v5437 = vtanh.pop %v5418
    %v5439 = vrot.slane %v5255, 6
    %v5441 = vmul.f32 %v5434, %v5439
    %v5442 = vmul.f32 %v5432, %v5437
    %v5443 = vadd.f32 %v5441, %v5442
    %v5444 = vtanh.pop %v5443
    %v5445 = vmul.f32 %v5436, %v5444
    %v5447 = vrot.slane %v5445, 4
    %5449 = vmatprep.subr.mxu0 %v4163
    %5450 = vmatpush1.msra.mxu0 %v4162
    %5451 = vmatprep.subr.mxu0 %v4159
    %5452 = vmatpush1.msra.mxu0 %v4158
    %5453 = vmatprep.subr.mxu0 %v4155
    %5454 = vmatpush1.msra.mxu0 %v4154
    %5455 = vmatprep.subr.mxu0 %v4151
    %5456 = vmatpush1.msra.mxu0 %v4150
    %5457 = vmatprep.subr.mxu0 %v4147
    %5458 = vmatpush1.msra.mxu0 %v4146
    %5459 = vmatprep.subr.mxu0 %v4143
    %5460 = vmatpush1.msra.mxu0 %v4142
    %5461 = vmatprep.subr.mxu0 %v4139
    %5462 = vmatpush1.msra.mxu0 %v4138
    %5463 = vmatprep.subr.mxu0 %v4135
    %5464 = vmatpush1.msra.mxu0 %v4134
    %5465 = vmatprep.subr.mxu0 %v4131
    %5466 = vmatpush1.msra.mxu0 %v4130
    %5467 = vmatprep.subr.mxu0 %v4127
    %5468 = vmatpush1.msra.mxu0 %v4126
    %5469 = vmatprep.subr.mxu0 %v4123
    %5470 = vmatpush1.msra.mxu0 %v4122
    %5471 = vmatprep.subr.mxu0 %v4119
    %5472 = vmatpush1.msra.mxu0 %v4118
    %5473 = vmatprep.subr.mxu0 %v4115
    %5474 = vmatpush1.msra.mxu0 %v4114
    %5475 = vmatprep.subr.mxu0 %v4111
    %5476 = vmatpush1.msra.mxu0 %v4110
    %5477 = vmatprep.subr.mxu0 %v4107
    %5478 = vmatpush1.msra.mxu0 %v4106
    %5479 = vmatprep.subr.mxu0 %v4103
    %5480 = vmatpush1.msra.mxu0 %v4102
    %5481 = vmatprep.subr.mxu0 0.0
    %5482 = vmatpush2.msra.mxu0 0.0
    %5483 = vmatprep.subr.mxu0 0.0
    %5484 = vmatpush2.msra.mxu0 0.0
    %5485 = vmatprep.subr.mxu0 0.0
    %5486 = vmatpush2.msra.mxu0 0.0
    %5487 = vmatprep.subr.mxu0 0.0
    %5488 = vmatpush2.msra.mxu0 0.0
    %5489 = vmatprep.subr.mxu0 0.0
    %5490 = vmatpush2.msra.mxu0 0.0
    %5491 = vmatprep.subr.mxu0 0.0
    %5492 = vmatpush2.msra.mxu0 0.0
    %5493 = vmatprep.subr.mxu0 0.0
    %5494 = vmatpush2.msra.mxu0 0.0
    %5495 = vmatprep.subr.mxu0 0.0
    %5496 = vmatpush2.msra.mxu0 0.0
    %5497 = vmatprep.subr.mxu0 0.0
    %5498 = vmatpush2.msra.mxu0 0.0
    %5499 = vmatprep.subr.mxu0 0.0
    %5500 = vmatpush2.msra.mxu0 0.0
    %5501 = vmatprep.subr.mxu0 0.0
    %5502 = vmatpush2.msra.mxu0 0.0
    %5503 = vmatprep.subr.mxu0 0.0
    %5504 = vmatpush2.msra.mxu0 0.0
    %5505 = vmatprep.subr.mxu0 0.0
    %5506 = vmatpush2.msra.mxu0 0.0
    %5507 = vmatprep.subr.mxu0 0.0
    %5508 = vmatpush2.msra.mxu0 0.0
    %5509 = vmatprep.subr.mxu0 0.0
    %5510 = vmatpush2.msra.mxu0 0.0
    %5511 = vmatprep.subr.mxu0 0.0
    %5512 = vmatpush2.msra.mxu0 0.0
    %5513 = vmatprep.mubr.f32.mxu0 0.0
    %5514 = vmatmul.mubr.f32.gmra.mxu0 %v5447
    %v5515 = vpop.f32.mrf.mxu0
    %v5516 = vadd.f32 0.0, %v5515
    %v5517 = vpop.f32.mrf.mxu0
    %v5518 = vadd.f32 0.0, %v5517
    %5519 = vdwg.mxu0
    %5520 = vmatprep.subr.mxu0 %v4165
    %5521 = vmatpush1.msra.mxu0 %v4164
    %5522 = vmatprep.subr.mxu0 %v4161
    %5523 = vmatpush1.msra.mxu0 %v4160
    %5524 = vmatprep.subr.mxu0 %v4157
    %5525 = vmatpush1.msra.mxu0 %v4156
    %5526 = vmatprep.subr.mxu0 %v4153
    %5527 = vmatpush1.msra.mxu0 %v4152
    %5528 = vmatprep.subr.mxu0 %v4149
    %5529 = vmatpush1.msra.mxu0 %v4148
    %5530 = vmatprep.subr.mxu0 %v4145
    %5531 = vmatpush1.msra.mxu0 %v4144
    %5532 = vmatprep.subr.mxu0 %v4141
    %5533 = vmatpush1.msra.mxu0 %v4140
    %5534 = vmatprep.subr.mxu0 %v4137
    %5535 = vmatpush1.msra.mxu0 %v4136
    %5536 = vmatprep.subr.mxu0 %v4133
    %5537 = vmatpush1.msra.mxu0 %v4132
    %5538 = vmatprep.subr.mxu0 %v4129
    %5539 = vmatpush1.msra.mxu0 %v4128
    %5540 = vmatprep.subr.mxu0 %v4125
    %5541 = vmatpush1.msra.mxu0 %v4124
    %5542 = vmatprep.subr.mxu0 %v4121
    %5543 = vmatpush1.msra.mxu0 %v4120
    %5544 = vmatprep.subr.mxu0 %v4117
    %5545 = vmatpush1.msra.mxu0 %v4116
    %5546 = vmatprep.subr.mxu0 %v4113
    %5547 = vmatpush1.msra.mxu0 %v4112
    %5548 = vmatprep.subr.mxu0 %v4109
    %5549 = vmatpush1.msra.mxu0 %v4108
    %5550 = vmatprep.subr.mxu0 %v4105
    %5551 = vmatpush1.msra.mxu0 %v4104
    %5552 = vmatprep.subr.mxu0 0.0
    %5553 = vmatpush2.msra.mxu0 0.0
    %5554 = vmatprep.subr.mxu0 0.0
    %5555 = vmatpush2.msra.mxu0 0.0
    %5556 = vmatprep.subr.mxu0 0.0
    %5557 = vmatpush2.msra.mxu0 0.0
    %5558 = vmatprep.subr.mxu0 0.0
    %5559 = vmatpush2.msra.mxu0 0.0
    %5560 = vmatprep.subr.mxu0 0.0
    %5561 = vmatpush2.msra.mxu0 0.0
    %5562 = vmatprep.subr.mxu0 0.0
    %5563 = vmatpush2.msra.mxu0 0.0
    %5564 = vmatprep.subr.mxu0 0.0
    %5565 = vmatpush2.msra.mxu0 0.0
    %5566 = vmatprep.subr.mxu0 0.0
    %5567 = vmatpush2.msra.mxu0 0.0
    %5568 = vmatprep.subr.mxu0 0.0
    %5569 = vmatpush2.msra.mxu0 0.0
    %5570 = vmatprep.subr.mxu0 0.0
    %5571 = vmatpush2.msra.mxu0 0.0
    %5572 = vmatprep.subr.mxu0 0.0
    %5573 = vmatpush2.msra.mxu0 0.0
    %5574 = vmatprep.subr.mxu0 0.0
    %5575 = vmatpush2.msra.mxu0 0.0
    %5576 = vmatprep.subr.mxu0 0.0
    %5577 = vmatpush2.msra.mxu0 0.0
    %5578 = vmatprep.subr.mxu0 0.0
    %5579 = vmatpush2.msra.mxu0 0.0
    %5580 = vmatprep.subr.mxu0 0.0
    %5581 = vmatpush2.msra.mxu0 0.0
    %5582 = vmatprep.subr.mxu0 0.0
    %5583 = vmatpush2.msra.mxu0 0.0
    %5584 = vmatprep.mubr.f32.mxu0 0.0
    %5585 = vmatmul.mubr.f32.gmra.mxu0 %v5447
    %v5586 = vpop.f32.mrf.mxu0
    %v5587 = vadd.f32 0.0, %v5586
    %v5588 = vpop.f32.mrf.mxu0
    %v5589 = vadd.f32 0.0, %v5588
    %5590 = vdwg.mxu0
    %v5595 = vrot.slane %v5516, 2
    %v5596 = vrot.slane %v5518, 2
    %v5597 = vrot.slane %v5587, 2
    %v5598 = vrot.slane %v5589, 2
    %v5603 = vadd.f32 %v4020, %v5595
    %v5604 = vadd.f32 %v4022, %v5596
    %v5605 = vadd.f32 %v4097, %v5597
    %v5606 = vadd.f32 %v4099, %v5598
    %v5607 = vxor.u32 %v5603, 2147483648
    %v5608 = vxor.u32 %v5604, 2147483648
    %v5609 = vxor.u32 %v5605, 2147483648
    %v5610 = vmul.f32 %v5607, 1.442695
    %v5611 = vpow.pop %v5610
    %v5612 = vmul.f32 %v5608, 1.442695
    %v5613 = vpow.pop %v5612
    %v5614 = vmul.f32 %v5609, 1.442695
    %v5615 = vpow.pop %v5614
    %v5616 = vadd.f32 %v5611, 1.0
    %v5617 = vadd.f32 %v5613, 1.0
    %v5618 = vadd.f32 %v5615, 1.0
    %v5619 = vrcp.pop %v5616
    %v5620 = vmul.f32 1.0, %v5619
    %v5621 = vrcp.pop %v5617
    %v5622 = vmul.f32 1.0, %v5621
    %v5623 = vrcp.pop %v5618
    %v5624 = vmul.f32 1.0, %v5623
    %v5625 = vtanh.pop %v5606
    %v5627 = vrot.slane %v5443, 6
    %v5629 = vmul.f32 %v5622, %v5627
    %v5630 = vmul.f32 %v5620, %v5625
    %v5631 = vadd.f32 %v5629, %v5630
    %v5632 = vtanh.pop %v5631
    %v5633 = vmul.f32 %v5624, %v5632
    %s5634 = scalar_lea.vmem [#allocation5], 1024
    %v5635 = vld [vmem:[%s5634] sm:$0xff]
    %v5636 = vld [vmem:[%s5634 + $0x8] sm:$0xff]
    %v5637 = vld [vmem:[%s5634 + $0x10] sm:$0xff]
    %v5638 = vld [vmem:[%s5634 + $0x18] sm:$0xff]
    %v5639 = vld [vmem:[%s5634 + $0x20] sm:$0xff]
    %v5640 = vld [vmem:[%s5634 + $0x28] sm:$0xff]
    %v5641 = vld [vmem:[%s5634 + $0x30] sm:$0xff]
    %v5642 = vld [vmem:[%s5634 + $0x38] sm:$0xff]
    %v5643 = vld [vmem:[%s5634 + $0x40] sm:$0xff]
    %v5644 = vld [vmem:[%s5634 + $0x48] sm:$0xff]
    %v5645 = vld [vmem:[%s5634 + $0x50] sm:$0xff]
    %v5646 = vld [vmem:[%s5634 + $0x58] sm:$0xff]
    %v5647 = vld [vmem:[%s5634 + $0x60] sm:$0xff]
    %v5648 = vld [vmem:[%s5634 + $0x68] sm:$0xff]
    %v5649 = vld [vmem:[%s5634 + $0x70] sm:$0xff]
    %v5650 = vld [vmem:[%s5634 + $0x78] sm:$0xff]
    %v5651 = vld [vmem:[%s5634 + $0x80] sm:$0xff]
    %v5652 = vld [vmem:[%s5634 + $0x88] sm:$0xff]
    %v5653 = vld [vmem:[%s5634 + $0x90] sm:$0xff]
    %v5654 = vld [vmem:[%s5634 + $0x98] sm:$0xff]
    %v5655 = vld [vmem:[%s5634 + $0xa0] sm:$0xff]
    %v5656 = vld [vmem:[%s5634 + $0xa8] sm:$0xff]
    %v5657 = vld [vmem:[%s5634 + $0xb0] sm:$0xff]
    %v5658 = vld [vmem:[%s5634 + $0xb8] sm:$0xff]
    %v5659 = vld [vmem:[%s5634 + $0xc0] sm:$0xff]
    %v5660 = vld [vmem:[%s5634 + $0xc8] sm:$0xff]
    %v5661 = vld [vmem:[%s5634 + $0xd0] sm:$0xff]
    %v5662 = vld [vmem:[%s5634 + $0xd8] sm:$0xff]
    %v5663 = vld [vmem:[%s5634 + $0xe0] sm:$0xff]
    %v5664 = vld [vmem:[%s5634 + $0xe8] sm:$0xff]
    %v5665 = vld [vmem:[%s5634 + $0xf0] sm:$0xff]
    %v5666 = vld [vmem:[%s5634 + $0xf8] sm:$0xff]
    %v5667 = vld [vmem:[%s5634 + $0x100] sm:$0xff]
    %v5668 = vld [vmem:[%s5634 + $0x108] sm:$0xff]
    %v5669 = vld [vmem:[%s5634 + $0x110] sm:$0xff]
    %v5670 = vld [vmem:[%s5634 + $0x118] sm:$0xff]
    %v5671 = vld [vmem:[%s5634 + $0x120] sm:$0xff]
    %v5672 = vld [vmem:[%s5634 + $0x128] sm:$0xff]
    %v5673 = vld [vmem:[%s5634 + $0x130] sm:$0xff]
    %v5674 = vld [vmem:[%s5634 + $0x138] sm:$0xff]
    %v5675 = vld [vmem:[%s5634 + $0x140] sm:$0xff]
    %v5676 = vld [vmem:[%s5634 + $0x148] sm:$0xff]
    %v5677 = vld [vmem:[%s5634 + $0x150] sm:$0xff]
    %v5678 = vld [vmem:[%s5634 + $0x158] sm:$0xff]
    %v5679 = vld [vmem:[%s5634 + $0x160] sm:$0xff]
    %v5680 = vld [vmem:[%s5634 + $0x168] sm:$0xff]
    %v5681 = vld [vmem:[%s5634 + $0x170] sm:$0xff]
    %v5682 = vld [vmem:[%s5634 + $0x178] sm:$0xff]
    %v5683 = vld [vmem:[%s5634 + $0x180] sm:$0xff]
    %v5684 = vld [vmem:[%s5634 + $0x188] sm:$0xff]
    %v5685 = vld [vmem:[%s5634 + $0x190] sm:$0xff]
    %v5686 = vld [vmem:[%s5634 + $0x198] sm:$0xff]
    %v5687 = vld [vmem:[%s5634 + $0x1a0] sm:$0xff]
    %v5688 = vld [vmem:[%s5634 + $0x1a8] sm:$0xff]
    %v5689 = vld [vmem:[%s5634 + $0x1b0] sm:$0xff]
    %v5690 = vld [vmem:[%s5634 + $0x1b8] sm:$0xff]
    %v5691 = vld [vmem:[%s5634 + $0x1c0] sm:$0xff]
    %v5692 = vld [vmem:[%s5634 + $0x1c8] sm:$0xff]
    %v5693 = vld [vmem:[%s5634 + $0x1d0] sm:$0xff]
    %v5694 = vld [vmem:[%s5634 + $0x1d8] sm:$0xff]
    %v5695 = vld [vmem:[%s5634 + $0x1e0] sm:$0xff]
    %v5696 = vld [vmem:[%s5634 + $0x1e8] sm:$0xff]
    %v5697 = vld [vmem:[%s5634 + $0x1f0] sm:$0xff]
    %v5698 = vld [vmem:[%s5634 + $0x1f8] sm:$0xff]
    %v5699 = vld [vmem:[%s5634 + $0x200] sm:$0xff]
    %v5700 = vld [vmem:[%s5634 + $0x208] sm:$0xff]
    %v5701 = vld [vmem:[%s5634 + $0x210] sm:$0xff]
    %v5702 = vld [vmem:[%s5634 + $0x218] sm:$0xff]
    %v5703 = vld [vmem:[%s5634 + $0x220] sm:$0xff]
    %v5704 = vld [vmem:[%s5634 + $0x228] sm:$0xff]
    %v5705 = vld [vmem:[%s5634 + $0x230] sm:$0xff]
    %v5706 = vld [vmem:[%s5634 + $0x238] sm:$0xff]
    %v5707 = vld [vmem:[%s5634 + $0x240] sm:$0xff]
    %v5708 = vld [vmem:[%s5634 + $0x248] sm:$0xff]
    %v5709 = vld [vmem:[%s5634 + $0x250] sm:$0xff]
    %v5710 = vld [vmem:[%s5634 + $0x258] sm:$0xff]
    %v5711 = vld [vmem:[%s5634 + $0x260] sm:$0xff]
    %v5712 = vld [vmem:[%s5634 + $0x268] sm:$0xff]
    %v5713 = vld [vmem:[%s5634 + $0x270] sm:$0xff]
    %v5714 = vld [vmem:[%s5634 + $0x278] sm:$0xff]
    %v5715 = vld [vmem:[%s5634 + $0x280] sm:$0xff]
    %v5716 = vld [vmem:[%s5634 + $0x288] sm:$0xff]
    %v5717 = vld [vmem:[%s5634 + $0x290] sm:$0xff]
    %v5718 = vld [vmem:[%s5634 + $0x298] sm:$0xff]
    %v5719 = vld [vmem:[%s5634 + $0x2a0] sm:$0xff]
    %v5720 = vld [vmem:[%s5634 + $0x2a8] sm:$0xff]
    %v5721 = vld [vmem:[%s5634 + $0x2b0] sm:$0xff]
    %v5722 = vld [vmem:[%s5634 + $0x2b8] sm:$0xff]
    %v5723 = vld [vmem:[%s5634 + $0x2c0] sm:$0xff]
    %v5724 = vld [vmem:[%s5634 + $0x2c8] sm:$0xff]
    %v5725 = vld [vmem:[%s5634 + $0x2d0] sm:$0xff]
    %v5726 = vld [vmem:[%s5634 + $0x2d8] sm:$0xff]
    %v5727 = vld [vmem:[%s5634 + $0x2e0] sm:$0xff]
    %v5728 = vld [vmem:[%s5634 + $0x2e8] sm:$0xff]
    %v5729 = vld [vmem:[%s5634 + $0x2f0] sm:$0xff]
    %v5730 = vld [vmem:[%s5634 + $0x2f8] sm:$0xff]
    %v5731 = vld [vmem:[%s5634 + $0x300] sm:$0xff]
    %v5732 = vld [vmem:[%s5634 + $0x308] sm:$0xff]
    %v5733 = vld [vmem:[%s5634 + $0x310] sm:$0xff]
    %v5734 = vld [vmem:[%s5634 + $0x318] sm:$0xff]
    %v5735 = vld [vmem:[%s5634 + $0x320] sm:$0xff]
    %v5736 = vld [vmem:[%s5634 + $0x328] sm:$0xff]
    %v5737 = vld [vmem:[%s5634 + $0x330] sm:$0xff]
    %v5738 = vld [vmem:[%s5634 + $0x338] sm:$0xff]
    %v5739 = vld [vmem:[%s5634 + $0x340] sm:$0xff]
    %v5740 = vld [vmem:[%s5634 + $0x348] sm:$0xff]
    %v5741 = vld [vmem:[%s5634 + $0x350] sm:$0xff]
    %v5742 = vld [vmem:[%s5634 + $0x358] sm:$0xff]
    %v5743 = vld [vmem:[%s5634 + $0x360] sm:$0xff]
    %v5744 = vld [vmem:[%s5634 + $0x368] sm:$0xff]
    %v5745 = vld [vmem:[%s5634 + $0x370] sm:$0xff]
    %v5746 = vld [vmem:[%s5634 + $0x378] sm:$0xff]
    %v5747 = vld [vmem:[%s5634 + $0x380] sm:$0xff]
    %v5748 = vld [vmem:[%s5634 + $0x388] sm:$0xff]
    %v5749 = vld [vmem:[%s5634 + $0x390] sm:$0xff]
    %v5750 = vld [vmem:[%s5634 + $0x398] sm:$0xff]
    %v5751 = vld [vmem:[%s5634 + $0x3a0] sm:$0xff]
    %v5752 = vld [vmem:[%s5634 + $0x3a8] sm:$0xff]
    %v5753 = vld [vmem:[%s5634 + $0x3b0] sm:$0xff]
    %v5754 = vld [vmem:[%s5634 + $0x3b8] sm:$0xff]
    %v5755 = vld [vmem:[%s5634 + $0x3c0] sm:$0xff]
    %v5756 = vld [vmem:[%s5634 + $0x3c8] sm:$0xff]
    %v5757 = vld [vmem:[%s5634 + $0x3d0] sm:$0xff]
    %v5758 = vld [vmem:[%s5634 + $0x3d8] sm:$0xff]
    %v5759 = vld [vmem:[%s5634 + $0x3e0] sm:$0xff]
    %v5760 = vld [vmem:[%s5634 + $0x3e8] sm:$0xff]
    %v5761 = vld [vmem:[%s5634 + $0x3f0] sm:$0xff]
    %v5762 = vld [vmem:[%s5634 + $0x3f8] sm:$0xff]
    %s5763 = scalar_lea.vmem [#allocation8], 12
    %v5764 = vld [vmem:[%s5763] sm:$0xf]
    %v5766 = vlaneseq
    %v5767 = vshrl.u32 %v5766, 7
    %v5768 = vsub.s32 0, %v5767
    %v5769 = vrot.slane %v5764, %v5768
    %v5770 = vlaneseq
    %v5771 = vshrl.u32 %v5770, 7
    %v5772 = vsub.s32 1, %v5771
    %v5773 = vrot.slane %v5764, %v5772
    %v5774 = vlaneseq
    %v5775 = vshrl.u32 %v5774, 7
    %v5776 = vsub.s32 2, %v5775
    %v5777 = vrot.slane %v5764, %v5776
    %v5778 = vlaneseq
    %v5779 = vshrl.u32 %v5778, 7
    %v5780 = vsub.s32 3, %v5779
    %v5781 = vrot.slane %v5764, %v5780
    %5786 = vmatprep.subr.mxu0 %v5696
    %5787 = vmatpush1.msra.mxu0 %v5695
    %5788 = vmatprep.subr.mxu0 %v5692
    %5789 = vmatpush1.msra.mxu0 %v5691
    %5790 = vmatprep.subr.mxu0 %v5688
    %5791 = vmatpush1.msra.mxu0 %v5687
    %5792 = vmatprep.subr.mxu0 %v5684
    %5793 = vmatpush1.msra.mxu0 %v5683
    %5794 = vmatprep.subr.mxu0 %v5680
    %5795 = vmatpush1.msra.mxu0 %v5679
    %5796 = vmatprep.subr.mxu0 %v5676
    %5797 = vmatpush1.msra.mxu0 %v5675
    %5798 = vmatprep.subr.mxu0 %v5672
    %5799 = vmatpush1.msra.mxu0 %v5671
    %5800 = vmatprep.subr.mxu0 %v5668
    %5801 = vmatpush1.msra.mxu0 %v5667
    %5802 = vmatprep.subr.mxu0 %v5664
    %5803 = vmatpush1.msra.mxu0 %v5663
    %5804 = vmatprep.subr.mxu0 %v5660
    %5805 = vmatpush1.msra.mxu0 %v5659
    %5806 = vmatprep.subr.mxu0 %v5656
    %5807 = vmatpush1.msra.mxu0 %v5655
    %5808 = vmatprep.subr.mxu0 %v5652
    %5809 = vmatpush1.msra.mxu0 %v5651
    %5810 = vmatprep.subr.mxu0 %v5648
    %5811 = vmatpush1.msra.mxu0 %v5647
    %5812 = vmatprep.subr.mxu0 %v5644
    %5813 = vmatpush1.msra.mxu0 %v5643
    %5814 = vmatprep.subr.mxu0 %v5640
    %5815 = vmatpush1.msra.mxu0 %v5639
    %5816 = vmatprep.subr.mxu0 %v5636
    %5817 = vmatpush1.msra.mxu0 %v5635
    %5818 = vmatprep.subr.mxu0 %v5760
    %5819 = vmatpush2.msra.mxu0 %v5759
    %5820 = vmatprep.subr.mxu0 %v5756
    %5821 = vmatpush2.msra.mxu0 %v5755
    %5822 = vmatprep.subr.mxu0 %v5752
    %5823 = vmatpush2.msra.mxu0 %v5751
    %5824 = vmatprep.subr.mxu0 %v5748
    %5825 = vmatpush2.msra.mxu0 %v5747
    %5826 = vmatprep.subr.mxu0 %v5744
    %5827 = vmatpush2.msra.mxu0 %v5743
    %5828 = vmatprep.subr.mxu0 %v5740
    %5829 = vmatpush2.msra.mxu0 %v5739
    %5830 = vmatprep.subr.mxu0 %v5736
    %5831 = vmatpush2.msra.mxu0 %v5735
    %5832 = vmatprep.subr.mxu0 %v5732
    %5833 = vmatpush2.msra.mxu0 %v5731
    %5834 = vmatprep.subr.mxu0 %v5728
    %5835 = vmatpush2.msra.mxu0 %v5727
    %5836 = vmatprep.subr.mxu0 %v5724
    %5837 = vmatpush2.msra.mxu0 %v5723
    %5838 = vmatprep.subr.mxu0 %v5720
    %5839 = vmatpush2.msra.mxu0 %v5719
    %5840 = vmatprep.subr.mxu0 %v5716
    %5841 = vmatpush2.msra.mxu0 %v5715
    %5842 = vmatprep.subr.mxu0 %v5712
    %5843 = vmatpush2.msra.mxu0 %v5711
    %5844 = vmatprep.subr.mxu0 %v5708
    %5845 = vmatpush2.msra.mxu0 %v5707
    %5846 = vmatprep.subr.mxu0 %v5704
    %5847 = vmatpush2.msra.mxu0 %v5703
    %5848 = vmatprep.subr.mxu0 %v5700
    %5849 = vmatpush2.msra.mxu0 %v5699
    %5850 = vmatprep.mubr.f32.mxu0 %v3792
    %5851 = vmatmul.mubr.f32.gmra.mxu0 %v3786
    %v5852 = vpop.f32.mrf.mxu0
    %v5853 = vadd.f32 %v5769, %v5852
    %v5854 = vpop.f32.mrf.mxu0
    %v5855 = vadd.f32 %v5773, %v5854
    %5856 = vmatprep.mubr.f32.mxu0 %v3795
    %5857 = vmatmul.mubr.f32.gmra.mxu0 %v3789
    %v5858 = vpop.f32.mrf.mxu0
    %v5859 = vadd.f32 %v5769, %v5858
    %v5860 = vpop.f32.mrf.mxu0
    %v5861 = vadd.f32 %v5773, %v5860
    %5862 = vdwg.mxu0
    %5863 = vmatprep.subr.mxu0 %v5698
    %5864 = vmatpush1.msra.mxu0 %v5697
    %5865 = vmatprep.subr.mxu0 %v5694
    %5866 = vmatpush1.msra.mxu0 %v5693
    %5867 = vmatprep.subr.mxu0 %v5690
    %5868 = vmatpush1.msra.mxu0 %v5689
    %5869 = vmatprep.subr.mxu0 %v5686
    %5870 = vmatpush1.msra.mxu0 %v5685
    %5871 = vmatprep.subr.mxu0 %v5682
    %5872 = vmatpush1.msra.mxu0 %v5681
    %5873 = vmatprep.subr.mxu0 %v5678
    %5874 = vmatpush1.msra.mxu0 %v5677
    %5875 = vmatprep.subr.mxu0 %v5674
    %5876 = vmatpush1.msra.mxu0 %v5673
    %5877 = vmatprep.subr.mxu0 %v5670
    %5878 = vmatpush1.msra.mxu0 %v5669
    %5879 = vmatprep.subr.mxu0 %v5666
    %5880 = vmatpush1.msra.mxu0 %v5665
    %5881 = vmatprep.subr.mxu0 %v5662
    %5882 = vmatpush1.msra.mxu0 %v5661
    %5883 = vmatprep.subr.mxu0 %v5658
    %5884 = vmatpush1.msra.mxu0 %v5657
    %5885 = vmatprep.subr.mxu0 %v5654
    %5886 = vmatpush1.msra.mxu0 %v5653
    %5887 = vmatprep.subr.mxu0 %v5650
    %5888 = vmatpush1.msra.mxu0 %v5649
    %5889 = vmatprep.subr.mxu0 %v5646
    %5890 = vmatpush1.msra.mxu0 %v5645
    %5891 = vmatprep.subr.mxu0 %v5642
    %5892 = vmatpush1.msra.mxu0 %v5641
    %5893 = vmatprep.subr.mxu0 %v5638
    %5894 = vmatpush1.msra.mxu0 %v5637
    %5895 = vmatprep.subr.mxu0 %v5762
    %5896 = vmatpush2.msra.mxu0 %v5761
    %5897 = vmatprep.subr.mxu0 %v5758
    %5898 = vmatpush2.msra.mxu0 %v5757
    %5899 = vmatprep.subr.mxu0 %v5754
    %5900 = vmatpush2.msra.mxu0 %v5753
    %5901 = vmatprep.subr.mxu0 %v5750
    %5902 = vmatpush2.msra.mxu0 %v5749
    %5903 = vmatprep.subr.mxu0 %v5746
    %5904 = vmatpush2.msra.mxu0 %v5745
    %5905 = vmatprep.subr.mxu0 %v5742
    %5906 = vmatpush2.msra.mxu0 %v5741
    %5907 = vmatprep.subr.mxu0 %v5738
    %5908 = vmatpush2.msra.mxu0 %v5737
    %5909 = vmatprep.subr.mxu0 %v5734
    %5910 = vmatpush2.msra.mxu0 %v5733
    %5911 = vmatprep.subr.mxu0 %v5730
    %5912 = vmatpush2.msra.mxu0 %v5729
    %5913 = vmatprep.subr.mxu0 %v5726
    %5914 = vmatpush2.msra.mxu0 %v5725
    %5915 = vmatprep.subr.mxu0 %v5722
    %5916 = vmatpush2.msra.mxu0 %v5721
    %5917 = vmatprep.subr.mxu0 %v5718
    %5918 = vmatpush2.msra.mxu0 %v5717
    %5919 = vmatprep.subr.mxu0 %v5714
    %5920 = vmatpush2.msra.mxu0 %v5713
    %5921 = vmatprep.subr.mxu0 %v5710
    %5922 = vmatpush2.msra.mxu0 %v5709
    %5923 = vmatprep.subr.mxu0 %v5706
    %5924 = vmatpush2.msra.mxu0 %v5705
    %5925 = vmatprep.subr.mxu0 %v5702
    %5926 = vmatpush2.msra.mxu0 %v5701
    %5927 = vmatprep.mubr.f32.mxu0 %v3792
    %5928 = vmatmul.mubr.f32.gmra.mxu0 %v3786
    %v5929 = vpop.f32.mrf.mxu0
    %v5930 = vadd.f32 %v5777, %v5929
    %v5931 = vpop.f32.mrf.mxu0
    %v5932 = vadd.f32 %v5781, %v5931
    %5933 = vmatprep.mubr.f32.mxu0 %v3795
    %5934 = vmatmul.mubr.f32.gmra.mxu0 %v3789
    %v5935 = vpop.f32.mrf.mxu0
    %v5936 = vadd.f32 %v5777, %v5935
    %v5937 = vpop.f32.mrf.mxu0
    %v5938 = vadd.f32 %v5781, %v5937
    %5939 = vdwg.mxu0
    %s5940 = scalar_lea.vmem [#allocation7], 1536
    %v5941 = vld [vmem:[%s5940] sm:$0xff]
    %v5942 = vld [vmem:[%s5940 + $0x8] sm:$0xff]
    %v5943 = vld [vmem:[%s5940 + $0x10] sm:$0xff]
    %v5944 = vld [vmem:[%s5940 + $0x18] sm:$0xff]
    %v5945 = vld [vmem:[%s5940 + $0x20] sm:$0xff]
    %v5946 = vld [vmem:[%s5940 + $0x28] sm:$0xff]
    %v5947 = vld [vmem:[%s5940 + $0x30] sm:$0xff]
    %v5948 = vld [vmem:[%s5940 + $0x38] sm:$0xff]
    %v5949 = vld [vmem:[%s5940 + $0x40] sm:$0xff]
    %v5950 = vld [vmem:[%s5940 + $0x48] sm:$0xff]
    %v5951 = vld [vmem:[%s5940 + $0x50] sm:$0xff]
    %v5952 = vld [vmem:[%s5940 + $0x58] sm:$0xff]
    %v5953 = vld [vmem:[%s5940 + $0x60] sm:$0xff]
    %v5954 = vld [vmem:[%s5940 + $0x68] sm:$0xff]
    %v5955 = vld [vmem:[%s5940 + $0x70] sm:$0xff]
    %v5956 = vld [vmem:[%s5940 + $0x78] sm:$0xff]
    %v5957 = vld [vmem:[%s5940 + $0x80] sm:$0xff]
    %v5958 = vld [vmem:[%s5940 + $0x88] sm:$0xff]
    %v5959 = vld [vmem:[%s5940 + $0x90] sm:$0xff]
    %v5960 = vld [vmem:[%s5940 + $0x98] sm:$0xff]
    %v5961 = vld [vmem:[%s5940 + $0xa0] sm:$0xff]
    %v5962 = vld [vmem:[%s5940 + $0xa8] sm:$0xff]
    %v5963 = vld [vmem:[%s5940 + $0xb0] sm:$0xff]
    %v5964 = vld [vmem:[%s5940 + $0xb8] sm:$0xff]
    %v5965 = vld [vmem:[%s5940 + $0xc0] sm:$0xff]
    %v5966 = vld [vmem:[%s5940 + $0xc8] sm:$0xff]
    %v5967 = vld [vmem:[%s5940 + $0xd0] sm:$0xff]
    %v5968 = vld [vmem:[%s5940 + $0xd8] sm:$0xff]
    %v5969 = vld [vmem:[%s5940 + $0xe0] sm:$0xff]
    %v5970 = vld [vmem:[%s5940 + $0xe8] sm:$0xff]
    %v5971 = vld [vmem:[%s5940 + $0xf0] sm:$0xff]
    %v5972 = vld [vmem:[%s5940 + $0xf8] sm:$0xff]
    %v5973 = vld [vmem:[%s5940 + $0x100] sm:$0xff]
    %v5974 = vld [vmem:[%s5940 + $0x108] sm:$0xff]
    %v5975 = vld [vmem:[%s5940 + $0x110] sm:$0xff]
    %v5976 = vld [vmem:[%s5940 + $0x118] sm:$0xff]
    %v5977 = vld [vmem:[%s5940 + $0x120] sm:$0xff]
    %v5978 = vld [vmem:[%s5940 + $0x128] sm:$0xff]
    %v5979 = vld [vmem:[%s5940 + $0x130] sm:$0xff]
    %v5980 = vld [vmem:[%s5940 + $0x138] sm:$0xff]
    %v5981 = vld [vmem:[%s5940 + $0x140] sm:$0xff]
    %v5982 = vld [vmem:[%s5940 + $0x148] sm:$0xff]
    %v5983 = vld [vmem:[%s5940 + $0x150] sm:$0xff]
    %v5984 = vld [vmem:[%s5940 + $0x158] sm:$0xff]
    %v5985 = vld [vmem:[%s5940 + $0x160] sm:$0xff]
    %v5986 = vld [vmem:[%s5940 + $0x168] sm:$0xff]
    %v5987 = vld [vmem:[%s5940 + $0x170] sm:$0xff]
    %v5988 = vld [vmem:[%s5940 + $0x178] sm:$0xff]
    %v5989 = vld [vmem:[%s5940 + $0x180] sm:$0xff]
    %v5990 = vld [vmem:[%s5940 + $0x188] sm:$0xff]
    %v5991 = vld [vmem:[%s5940 + $0x190] sm:$0xff]
    %v5992 = vld [vmem:[%s5940 + $0x198] sm:$0xff]
    %v5993 = vld [vmem:[%s5940 + $0x1a0] sm:$0xff]
    %v5994 = vld [vmem:[%s5940 + $0x1a8] sm:$0xff]
    %v5995 = vld [vmem:[%s5940 + $0x1b0] sm:$0xff]
    %v5996 = vld [vmem:[%s5940 + $0x1b8] sm:$0xff]
    %v5997 = vld [vmem:[%s5940 + $0x1c0] sm:$0xff]
    %v5998 = vld [vmem:[%s5940 + $0x1c8] sm:$0xff]
    %v5999 = vld [vmem:[%s5940 + $0x1d0] sm:$0xff]
    %v6000 = vld [vmem:[%s5940 + $0x1d8] sm:$0xff]
    %v6001 = vld [vmem:[%s5940 + $0x1e0] sm:$0xff]
    %v6002 = vld [vmem:[%s5940 + $0x1e8] sm:$0xff]
    %v6003 = vld [vmem:[%s5940 + $0x1f0] sm:$0xff]
    %v6004 = vld [vmem:[%s5940 + $0x1f8] sm:$0xff]
    %6005 = vmatprep.subr.mxu0 %v6002
    %6006 = vmatpush1.msra.mxu0 %v6001
    %6007 = vmatprep.subr.mxu0 %v5998
    %6008 = vmatpush1.msra.mxu0 %v5997
    %6009 = vmatprep.subr.mxu0 %v5994
    %6010 = vmatpush1.msra.mxu0 %v5993
    %6011 = vmatprep.subr.mxu0 %v5990
    %6012 = vmatpush1.msra.mxu0 %v5989
    %6013 = vmatprep.subr.mxu0 %v5986
    %6014 = vmatpush1.msra.mxu0 %v5985
    %6015 = vmatprep.subr.mxu0 %v5982
    %6016 = vmatpush1.msra.mxu0 %v5981
    %6017 = vmatprep.subr.mxu0 %v5978
    %6018 = vmatpush1.msra.mxu0 %v5977
    %6019 = vmatprep.subr.mxu0 %v5974
    %6020 = vmatpush1.msra.mxu0 %v5973
    %6021 = vmatprep.subr.mxu0 %v5970
    %6022 = vmatpush1.msra.mxu0 %v5969
    %6023 = vmatprep.subr.mxu0 %v5966
    %6024 = vmatpush1.msra.mxu0 %v5965
    %6025 = vmatprep.subr.mxu0 %v5962
    %6026 = vmatpush1.msra.mxu0 %v5961
    %6027 = vmatprep.subr.mxu0 %v5958
    %6028 = vmatpush1.msra.mxu0 %v5957
    %6029 = vmatprep.subr.mxu0 %v5954
    %6030 = vmatpush1.msra.mxu0 %v5953
    %6031 = vmatprep.subr.mxu0 %v5950
    %6032 = vmatpush1.msra.mxu0 %v5949
    %6033 = vmatprep.subr.mxu0 %v5946
    %6034 = vmatpush1.msra.mxu0 %v5945
    %6035 = vmatprep.subr.mxu0 %v5942
    %6036 = vmatpush1.msra.mxu0 %v5941
    %6037 = vmatprep.subr.mxu0 0.0
    %6038 = vmatpush2.msra.mxu0 0.0
    %6039 = vmatprep.subr.mxu0 0.0
    %6040 = vmatpush2.msra.mxu0 0.0
    %6041 = vmatprep.subr.mxu0 0.0
    %6042 = vmatpush2.msra.mxu0 0.0
    %6043 = vmatprep.subr.mxu0 0.0
    %6044 = vmatpush2.msra.mxu0 0.0
    %6045 = vmatprep.subr.mxu0 0.0
    %6046 = vmatpush2.msra.mxu0 0.0
    %6047 = vmatprep.subr.mxu0 0.0
    %6048 = vmatpush2.msra.mxu0 0.0
    %6049 = vmatprep.subr.mxu0 0.0
    %6050 = vmatpush2.msra.mxu0 0.0
    %6051 = vmatprep.subr.mxu0 0.0
    %6052 = vmatpush2.msra.mxu0 0.0
    %6053 = vmatprep.subr.mxu0 0.0
    %6054 = vmatpush2.msra.mxu0 0.0
    %6055 = vmatprep.subr.mxu0 0.0
    %6056 = vmatpush2.msra.mxu0 0.0
    %6057 = vmatprep.subr.mxu0 0.0
    %6058 = vmatpush2.msra.mxu0 0.0
    %6059 = vmatprep.subr.mxu0 0.0
    %6060 = vmatpush2.msra.mxu0 0.0
    %6061 = vmatprep.subr.mxu0 0.0
    %6062 = vmatpush2.msra.mxu0 0.0
    %6063 = vmatprep.subr.mxu0 0.0
    %6064 = vmatpush2.msra.mxu0 0.0
    %6065 = vmatprep.subr.mxu0 0.0
    %6066 = vmatpush2.msra.mxu0 0.0
    %6067 = vmatprep.subr.mxu0 0.0
    %6068 = vmatpush2.msra.mxu0 0.0
    %6069 = vmatprep.mubr.f32.mxu0 0.0
    %6070 = vmatmul.mubr.f32.gmra.mxu0 0.0
    %v6071 = vpop.f32.mrf.mxu0
    %v6072 = vadd.f32 0.0, %v6071
    %v6073 = vpop.f32.mrf.mxu0
    %v6074 = vadd.f32 0.0, %v6073
    %6075 = vdwg.mxu0
    %6076 = vmatprep.subr.mxu0 %v6004
    %6077 = vmatpush1.msra.mxu0 %v6003
    %6078 = vmatprep.subr.mxu0 %v6000
    %6079 = vmatpush1.msra.mxu0 %v5999
    %6080 = vmatprep.subr.mxu0 %v5996
    %6081 = vmatpush1.msra.mxu0 %v5995
    %6082 = vmatprep.subr.mxu0 %v5992
    %6083 = vmatpush1.msra.mxu0 %v5991
    %6084 = vmatprep.subr.mxu0 %v5988
    %6085 = vmatpush1.msra.mxu0 %v5987
    %6086 = vmatprep.subr.mxu0 %v5984
    %6087 = vmatpush1.msra.mxu0 %v5983
    %6088 = vmatprep.subr.mxu0 %v5980
    %6089 = vmatpush1.msra.mxu0 %v5979
    %6090 = vmatprep.subr.mxu0 %v5976
    %6091 = vmatpush1.msra.mxu0 %v5975
    %6092 = vmatprep.subr.mxu0 %v5972
    %6093 = vmatpush1.msra.mxu0 %v5971
    %6094 = vmatprep.subr.mxu0 %v5968
    %6095 = vmatpush1.msra.mxu0 %v5967
    %6096 = vmatprep.subr.mxu0 %v5964
    %6097 = vmatpush1.msra.mxu0 %v5963
    %6098 = vmatprep.subr.mxu0 %v5960
    %6099 = vmatpush1.msra.mxu0 %v5959
    %6100 = vmatprep.subr.mxu0 %v5956
    %6101 = vmatpush1.msra.mxu0 %v5955
    %6102 = vmatprep.subr.mxu0 %v5952
    %6103 = vmatpush1.msra.mxu0 %v5951
    %6104 = vmatprep.subr.mxu0 %v5948
    %6105 = vmatpush1.msra.mxu0 %v5947
    %6106 = vmatprep.subr.mxu0 %v5944
    %6107 = vmatpush1.msra.mxu0 %v5943
    %6108 = vmatprep.subr.mxu0 0.0
    %6109 = vmatpush2.msra.mxu0 0.0
    %6110 = vmatprep.subr.mxu0 0.0
    %6111 = vmatpush2.msra.mxu0 0.0
    %6112 = vmatprep.subr.mxu0 0.0
    %6113 = vmatpush2.msra.mxu0 0.0
    %6114 = vmatprep.subr.mxu0 0.0
    %6115 = vmatpush2.msra.mxu0 0.0
    %6116 = vmatprep.subr.mxu0 0.0
    %6117 = vmatpush2.msra.mxu0 0.0
    %6118 = vmatprep.subr.mxu0 0.0
    %6119 = vmatpush2.msra.mxu0 0.0
    %6120 = vmatprep.subr.mxu0 0.0
    %6121 = vmatpush2.msra.mxu0 0.0
    %6122 = vmatprep.subr.mxu0 0.0
    %6123 = vmatpush2.msra.mxu0 0.0
    %6124 = vmatprep.subr.mxu0 0.0
    %6125 = vmatpush2.msra.mxu0 0.0
    %6126 = vmatprep.subr.mxu0 0.0
    %6127 = vmatpush2.msra.mxu0 0.0
    %6128 = vmatprep.subr.mxu0 0.0
    %6129 = vmatpush2.msra.mxu0 0.0
    %6130 = vmatprep.subr.mxu0 0.0
    %6131 = vmatpush2.msra.mxu0 0.0
    %6132 = vmatprep.subr.mxu0 0.0
    %6133 = vmatpush2.msra.mxu0 0.0
    %6134 = vmatprep.subr.mxu0 0.0
    %6135 = vmatpush2.msra.mxu0 0.0
    %6136 = vmatprep.subr.mxu0 0.0
    %6137 = vmatpush2.msra.mxu0 0.0
    %6138 = vmatprep.subr.mxu0 0.0
    %6139 = vmatpush2.msra.mxu0 0.0
    %6140 = vmatprep.mubr.f32.mxu0 0.0
    %6141 = vmatmul.mubr.f32.gmra.mxu0 0.0
    %v6142 = vpop.f32.mrf.mxu0
    %v6143 = vadd.f32 0.0, %v6142
    %v6144 = vpop.f32.mrf.mxu0
    %v6145 = vadd.f32 0.0, %v6144
    %6146 = vdwg.mxu0
    %v6151 = vrot.slane %v6072, 2
    %v6152 = vrot.slane %v6074, 2
    %v6153 = vrot.slane %v6143, 2
    %v6154 = vrot.slane %v6145, 2
    %v6159 = vadd.f32 %v5859, %v6151
    %v6160 = vadd.f32 %v5861, %v6152
    %v6161 = vadd.f32 %v5936, %v6153
    %v6162 = vadd.f32 %v5938, %v6154
    %v6163 = vxor.u32 %v6159, 2147483648
    %v6164 = vxor.u32 %v6160, 2147483648
    %v6165 = vxor.u32 %v6161, 2147483648
    %v6166 = vmul.f32 %v6163, 1.442695
    %v6167 = vpow.pop %v6166
    %v6168 = vmul.f32 %v6164, 1.442695
    %v6169 = vpow.pop %v6168
    %v6170 = vmul.f32 %v6165, 1.442695
    %v6171 = vpow.pop %v6170
    %v6172 = vadd.f32 %v6167, 1.0
    %v6173 = vadd.f32 %v6169, 1.0
    %v6174 = vadd.f32 %v6171, 1.0
    %v6175 = vrcp.pop %v6172
    %v6176 = vmul.f32 1.0, %v6175
    %v6177 = vrcp.pop %v6173
    %v6178 = vmul.f32 1.0, %v6177
    %v6179 = vrcp.pop %v6174
    %v6180 = vmul.f32 1.0, %v6179
    %v6181 = vtanh.pop %v6162
    %v6182 = vmul.f32 %v6178, 0.0
    %v6183 = vmul.f32 %v6176, %v6181
    %v6184 = vadd.f32 %v6182, %v6183
    %v6185 = vtanh.pop %v6184
    %v6186 = vmul.f32 %v6180, %v6185
    %v6188 = vrot.slane %v6186, 6
    %6190 = vmatprep.subr.mxu0 %v6002
    %6191 = vmatpush1.msra.mxu0 %v6001
    %6192 = vmatprep.subr.mxu0 %v5998
    %6193 = vmatpush1.msra.mxu0 %v5997
    %6194 = vmatprep.subr.mxu0 %v5994
    %6195 = vmatpush1.msra.mxu0 %v5993
    %6196 = vmatprep.subr.mxu0 %v5990
    %6197 = vmatpush1.msra.mxu0 %v5989
    %6198 = vmatprep.subr.mxu0 %v5986
    %6199 = vmatpush1.msra.mxu0 %v5985
    %6200 = vmatprep.subr.mxu0 %v5982
    %6201 = vmatpush1.msra.mxu0 %v5981
    %6202 = vmatprep.subr.mxu0 %v5978
    %6203 = vmatpush1.msra.mxu0 %v5977
    %6204 = vmatprep.subr.mxu0 %v5974
    %6205 = vmatpush1.msra.mxu0 %v5973
    %6206 = vmatprep.subr.mxu0 %v5970
    %6207 = vmatpush1.msra.mxu0 %v5969
    %6208 = vmatprep.subr.mxu0 %v5966
    %6209 = vmatpush1.msra.mxu0 %v5965
    %6210 = vmatprep.subr.mxu0 %v5962
    %6211 = vmatpush1.msra.mxu0 %v5961
    %6212 = vmatprep.subr.mxu0 %v5958
    %6213 = vmatpush1.msra.mxu0 %v5957
    %6214 = vmatprep.subr.mxu0 %v5954
    %6215 = vmatpush1.msra.mxu0 %v5953
    %6216 = vmatprep.subr.mxu0 %v5950
    %6217 = vmatpush1.msra.mxu0 %v5949
    %6218 = vmatprep.subr.mxu0 %v5946
    %6219 = vmatpush1.msra.mxu0 %v5945
    %6220 = vmatprep.subr.mxu0 %v5942
    %6221 = vmatpush1.msra.mxu0 %v5941
    %6222 = vmatprep.subr.mxu0 0.0
    %6223 = vmatpush2.msra.mxu0 0.0
    %6224 = vmatprep.subr.mxu0 0.0
    %6225 = vmatpush2.msra.mxu0 0.0
    %6226 = vmatprep.subr.mxu0 0.0
    %6227 = vmatpush2.msra.mxu0 0.0
    %6228 = vmatprep.subr.mxu0 0.0
    %6229 = vmatpush2.msra.mxu0 0.0
    %6230 = vmatprep.subr.mxu0 0.0
    %6231 = vmatpush2.msra.mxu0 0.0
    %6232 = vmatprep.subr.mxu0 0.0
    %6233 = vmatpush2.msra.mxu0 0.0
    %6234 = vmatprep.subr.mxu0 0.0
    %6235 = vmatpush2.msra.mxu0 0.0
    %6236 = vmatprep.subr.mxu0 0.0
    %6237 = vmatpush2.msra.mxu0 0.0
    %6238 = vmatprep.subr.mxu0 0.0
    %6239 = vmatpush2.msra.mxu0 0.0
    %6240 = vmatprep.subr.mxu0 0.0
    %6241 = vmatpush2.msra.mxu0 0.0
    %6242 = vmatprep.subr.mxu0 0.0
    %6243 = vmatpush2.msra.mxu0 0.0
    %6244 = vmatprep.subr.mxu0 0.0
    %6245 = vmatpush2.msra.mxu0 0.0
    %6246 = vmatprep.subr.mxu0 0.0
    %6247 = vmatpush2.msra.mxu0 0.0
    %6248 = vmatprep.subr.mxu0 0.0
    %6249 = vmatpush2.msra.mxu0 0.0
    %6250 = vmatprep.subr.mxu0 0.0
    %6251 = vmatpush2.msra.mxu0 0.0
    %6252 = vmatprep.subr.mxu0 0.0
    %6253 = vmatpush2.msra.mxu0 0.0
    %6254 = vmatprep.mubr.f32.mxu0 0.0
    %6255 = vmatmul.mubr.f32.gmra.mxu0 %v6188
    %v6256 = vpop.f32.mrf.mxu0
    %v6257 = vadd.f32 0.0, %v6256
    %v6258 = vpop.f32.mrf.mxu0
    %v6259 = vadd.f32 0.0, %v6258
    %6260 = vdwg.mxu0
    %6261 = vmatprep.subr.mxu0 %v6004
    %6262 = vmatpush1.msra.mxu0 %v6003
    %6263 = vmatprep.subr.mxu0 %v6000
    %6264 = vmatpush1.msra.mxu0 %v5999
    %6265 = vmatprep.subr.mxu0 %v5996
    %6266 = vmatpush1.msra.mxu0 %v5995
    %6267 = vmatprep.subr.mxu0 %v5992
    %6268 = vmatpush1.msra.mxu0 %v5991
    %6269 = vmatprep.subr.mxu0 %v5988
    %6270 = vmatpush1.msra.mxu0 %v5987
    %6271 = vmatprep.subr.mxu0 %v5984
    %6272 = vmatpush1.msra.mxu0 %v5983
    %6273 = vmatprep.subr.mxu0 %v5980
    %6274 = vmatpush1.msra.mxu0 %v5979
    %6275 = vmatprep.subr.mxu0 %v5976
    %6276 = vmatpush1.msra.mxu0 %v5975
    %6277 = vmatprep.subr.mxu0 %v5972
    %6278 = vmatpush1.msra.mxu0 %v5971
    %6279 = vmatprep.subr.mxu0 %v5968
    %6280 = vmatpush1.msra.mxu0 %v5967
    %6281 = vmatprep.subr.mxu0 %v5964
    %6282 = vmatpush1.msra.mxu0 %v5963
    %6283 = vmatprep.subr.mxu0 %v5960
    %6284 = vmatpush1.msra.mxu0 %v5959
    %6285 = vmatprep.subr.mxu0 %v5956
    %6286 = vmatpush1.msra.mxu0 %v5955
    %6287 = vmatprep.subr.mxu0 %v5952
    %6288 = vmatpush1.msra.mxu0 %v5951
    %6289 = vmatprep.subr.mxu0 %v5948
    %6290 = vmatpush1.msra.mxu0 %v5947
    %6291 = vmatprep.subr.mxu0 %v5944
    %6292 = vmatpush1.msra.mxu0 %v5943
    %6293 = vmatprep.subr.mxu0 0.0
    %6294 = vmatpush2.msra.mxu0 0.0
    %6295 = vmatprep.subr.mxu0 0.0
    %6296 = vmatpush2.msra.mxu0 0.0
    %6297 = vmatprep.subr.mxu0 0.0
    %6298 = vmatpush2.msra.mxu0 0.0
    %6299 = vmatprep.subr.mxu0 0.0
    %6300 = vmatpush2.msra.mxu0 0.0
    %6301 = vmatprep.subr.mxu0 0.0
    %6302 = vmatpush2.msra.mxu0 0.0
    %6303 = vmatprep.subr.mxu0 0.0
    %6304 = vmatpush2.msra.mxu0 0.0
    %6305 = vmatprep.subr.mxu0 0.0
    %6306 = vmatpush2.msra.mxu0 0.0
    %6307 = vmatprep.subr.mxu0 0.0
    %6308 = vmatpush2.msra.mxu0 0.0
    %6309 = vmatprep.subr.mxu0 0.0
    %6310 = vmatpush2.msra.mxu0 0.0
    %6311 = vmatprep.subr.mxu0 0.0
    %6312 = vmatpush2.msra.mxu0 0.0
    %6313 = vmatprep.subr.mxu0 0.0
    %6314 = vmatpush2.msra.mxu0 0.0
    %6315 = vmatprep.subr.mxu0 0.0
    %6316 = vmatpush2.msra.mxu0 0.0
    %6317 = vmatprep.subr.mxu0 0.0
    %6318 = vmatpush2.msra.mxu0 0.0
    %6319 = vmatprep.subr.mxu0 0.0
    %6320 = vmatpush2.msra.mxu0 0.0
    %6321 = vmatprep.subr.mxu0 0.0
    %6322 = vmatpush2.msra.mxu0 0.0
    %6323 = vmatprep.subr.mxu0 0.0
    %6324 = vmatpush2.msra.mxu0 0.0
    %6325 = vmatprep.mubr.f32.mxu0 0.0
    %6326 = vmatmul.mubr.f32.gmra.mxu0 %v6188
    %v6327 = vpop.f32.mrf.mxu0
    %v6328 = vadd.f32 0.0, %v6327
    %v6329 = vpop.f32.mrf.mxu0
    %v6330 = vadd.f32 0.0, %v6329
    %6331 = vdwg.mxu0
    %v6336 = vrot.slane %v6257, 4
    %v6337 = vrot.slane %v6259, 4
    %v6338 = vrot.slane %v6328, 4
    %v6339 = vrot.slane %v6330, 4
    %v6344 = vadd.f32 %v5859, %v6336
    %v6345 = vadd.f32 %v5861, %v6337
    %v6346 = vadd.f32 %v5936, %v6338
    %v6347 = vadd.f32 %v5938, %v6339
    %v6348 = vxor.u32 %v6344, 2147483648
    %v6349 = vxor.u32 %v6345, 2147483648
    %v6350 = vxor.u32 %v6346, 2147483648
    %v6351 = vmul.f32 %v6348, 1.442695
    %v6352 = vpow.pop %v6351
    %v6353 = vmul.f32 %v6349, 1.442695
    %v6354 = vpow.pop %v6353
    %v6355 = vmul.f32 %v6350, 1.442695
    %v6356 = vpow.pop %v6355
    %v6357 = vadd.f32 %v6352, 1.0
    %v6358 = vadd.f32 %v6354, 1.0
    %v6359 = vadd.f32 %v6356, 1.0
    %v6360 = vrcp.pop %v6357
    %v6361 = vmul.f32 1.0, %v6360
    %v6362 = vrcp.pop %v6358
    %v6363 = vmul.f32 1.0, %v6362
    %v6364 = vrcp.pop %v6359
    %v6365 = vmul.f32 1.0, %v6364
    %v6366 = vtanh.pop %v6347
    %v6368 = vrot.slane %v6184, 2
    %v6370 = vmul.f32 %v6363, %v6368
    %v6371 = vmul.f32 %v6361, %v6366
    %v6372 = vadd.f32 %v6370, %v6371
    %v6373 = vtanh.pop %v6372
    %v6374 = vmul.f32 %v6365, %v6373
    %v6376 = vrot.slane %v6374, 4
    %6378 = vmatprep.subr.mxu0 %v6002
    %6379 = vmatpush1.msra.mxu0 %v6001
    %6380 = vmatprep.subr.mxu0 %v5998
    %6381 = vmatpush1.msra.mxu0 %v5997
    %6382 = vmatprep.subr.mxu0 %v5994
    %6383 = vmatpush1.msra.mxu0 %v5993
    %6384 = vmatprep.subr.mxu0 %v5990
    %6385 = vmatpush1.msra.mxu0 %v5989
    %6386 = vmatprep.subr.mxu0 %v5986
    %6387 = vmatpush1.msra.mxu0 %v5985
    %6388 = vmatprep.subr.mxu0 %v5982
    %6389 = vmatpush1.msra.mxu0 %v5981
    %6390 = vmatprep.subr.mxu0 %v5978
    %6391 = vmatpush1.msra.mxu0 %v5977
    %6392 = vmatprep.subr.mxu0 %v5974
    %6393 = vmatpush1.msra.mxu0 %v5973
    %6394 = vmatprep.subr.mxu0 %v5970
    %6395 = vmatpush1.msra.mxu0 %v5969
    %6396 = vmatprep.subr.mxu0 %v5966
    %6397 = vmatpush1.msra.mxu0 %v5965
    %6398 = vmatprep.subr.mxu0 %v5962
    %6399 = vmatpush1.msra.mxu0 %v5961
    %6400 = vmatprep.subr.mxu0 %v5958
    %6401 = vmatpush1.msra.mxu0 %v5957
    %6402 = vmatprep.subr.mxu0 %v5954
    %6403 = vmatpush1.msra.mxu0 %v5953
    %6404 = vmatprep.subr.mxu0 %v5950
    %6405 = vmatpush1.msra.mxu0 %v5949
    %6406 = vmatprep.subr.mxu0 %v5946
    %6407 = vmatpush1.msra.mxu0 %v5945
    %6408 = vmatprep.subr.mxu0 %v5942
    %6409 = vmatpush1.msra.mxu0 %v5941
    %6410 = vmatprep.subr.mxu0 0.0
    %6411 = vmatpush2.msra.mxu0 0.0
    %6412 = vmatprep.subr.mxu0 0.0
    %6413 = vmatpush2.msra.mxu0 0.0
    %6414 = vmatprep.subr.mxu0 0.0
    %6415 = vmatpush2.msra.mxu0 0.0
    %6416 = vmatprep.subr.mxu0 0.0
    %6417 = vmatpush2.msra.mxu0 0.0
    %6418 = vmatprep.subr.mxu0 0.0
    %6419 = vmatpush2.msra.mxu0 0.0
    %6420 = vmatprep.subr.mxu0 0.0
    %6421 = vmatpush2.msra.mxu0 0.0
    %6422 = vmatprep.subr.mxu0 0.0
    %6423 = vmatpush2.msra.mxu0 0.0
    %6424 = vmatprep.subr.mxu0 0.0
    %6425 = vmatpush2.msra.mxu0 0.0
    %6426 = vmatprep.subr.mxu0 0.0
    %6427 = vmatpush2.msra.mxu0 0.0
    %6428 = vmatprep.subr.mxu0 0.0
    %6429 = vmatpush2.msra.mxu0 0.0
    %6430 = vmatprep.subr.mxu0 0.0
    %6431 = vmatpush2.msra.mxu0 0.0
    %6432 = vmatprep.subr.mxu0 0.0
    %6433 = vmatpush2.msra.mxu0 0.0
    %6434 = vmatprep.subr.mxu0 0.0
    %6435 = vmatpush2.msra.mxu0 0.0
    %6436 = vmatprep.subr.mxu0 0.0
    %6437 = vmatpush2.msra.mxu0 0.0
    %6438 = vmatprep.subr.mxu0 0.0
    %6439 = vmatpush2.msra.mxu0 0.0
    %6440 = vmatprep.subr.mxu0 0.0
    %6441 = vmatpush2.msra.mxu0 0.0
    %6442 = vmatprep.mubr.f32.mxu0 0.0
    %6443 = vmatmul.mubr.f32.gmra.mxu0 %v6376
    %v6444 = vpop.f32.mrf.mxu0
    %v6445 = vadd.f32 0.0, %v6444
    %v6446 = vpop.f32.mrf.mxu0
    %v6447 = vadd.f32 0.0, %v6446
    %6448 = vdwg.mxu0
    %6449 = vmatprep.subr.mxu0 %v6004
    %6450 = vmatpush1.msra.mxu0 %v6003
    %6451 = vmatprep.subr.mxu0 %v6000
    %6452 = vmatpush1.msra.mxu0 %v5999
    %6453 = vmatprep.subr.mxu0 %v5996
    %6454 = vmatpush1.msra.mxu0 %v5995
    %6455 = vmatprep.subr.mxu0 %v5992
    %6456 = vmatpush1.msra.mxu0 %v5991
    %6457 = vmatprep.subr.mxu0 %v5988
    %6458 = vmatpush1.msra.mxu0 %v5987
    %6459 = vmatprep.subr.mxu0 %v5984
    %6460 = vmatpush1.msra.mxu0 %v5983
    %6461 = vmatprep.subr.mxu0 %v5980
    %6462 = vmatpush1.msra.mxu0 %v5979
    %6463 = vmatprep.subr.mxu0 %v5976
    %6464 = vmatpush1.msra.mxu0 %v5975
    %6465 = vmatprep.subr.mxu0 %v5972
    %6466 = vmatpush1.msra.mxu0 %v5971
    %6467 = vmatprep.subr.mxu0 %v5968
    %6468 = vmatpush1.msra.mxu0 %v5967
    %6469 = vmatprep.subr.mxu0 %v5964
    %6470 = vmatpush1.msra.mxu0 %v5963
    %6471 = vmatprep.subr.mxu0 %v5960
    %6472 = vmatpush1.msra.mxu0 %v5959
    %6473 = vmatprep.subr.mxu0 %v5956
    %6474 = vmatpush1.msra.mxu0 %v5955
    %6475 = vmatprep.subr.mxu0 %v5952
    %6476 = vmatpush1.msra.mxu0 %v5951
    %6477 = vmatprep.subr.mxu0 %v5948
    %6478 = vmatpush1.msra.mxu0 %v5947
    %6479 = vmatprep.subr.mxu0 %v5944
    %6480 = vmatpush1.msra.mxu0 %v5943
    %6481 = vmatprep.subr.mxu0 0.0
    %6482 = vmatpush2.msra.mxu0 0.0
    %6483 = vmatprep.subr.mxu0 0.0
    %6484 = vmatpush2.msra.mxu0 0.0
    %6485 = vmatprep.subr.mxu0 0.0
    %6486 = vmatpush2.msra.mxu0 0.0
    %6487 = vmatprep.subr.mxu0 0.0
    %6488 = vmatpush2.msra.mxu0 0.0
    %6489 = vmatprep.subr.mxu0 0.0
    %6490 = vmatpush2.msra.mxu0 0.0
    %6491 = vmatprep.subr.mxu0 0.0
    %6492 = vmatpush2.msra.mxu0 0.0
    %6493 = vmatprep.subr.mxu0 0.0
    %6494 = vmatpush2.msra.mxu0 0.0
    %6495 = vmatprep.subr.mxu0 0.0
    %6496 = vmatpush2.msra.mxu0 0.0
    %6497 = vmatprep.subr.mxu0 0.0
    %6498 = vmatpush2.msra.mxu0 0.0
    %6499 = vmatprep.subr.mxu0 0.0
    %6500 = vmatpush2.msra.mxu0 0.0
    %6501 = vmatprep.subr.mxu0 0.0
    %6502 = vmatpush2.msra.mxu0 0.0
    %6503 = vmatprep.subr.mxu0 0.0
    %6504 = vmatpush2.msra.mxu0 0.0
    %6505 = vmatprep.subr.mxu0 0.0
    %6506 = vmatpush2.msra.mxu0 0.0
    %6507 = vmatprep.subr.mxu0 0.0
    %6508 = vmatpush2.msra.mxu0 0.0
    %6509 = vmatprep.subr.mxu0 0.0
    %6510 = vmatpush2.msra.mxu0 0.0
    %6511 = vmatprep.subr.mxu0 0.0
    %6512 = vmatpush2.msra.mxu0 0.0
    %6513 = vmatprep.mubr.f32.mxu0 0.0
    %6514 = vmatmul.mubr.f32.gmra.mxu0 %v6376
    %v6515 = vpop.f32.mrf.mxu0
    %v6516 = vadd.f32 0.0, %v6515
    %v6517 = vpop.f32.mrf.mxu0
    %v6518 = vadd.f32 0.0, %v6517
    %6519 = vdwg.mxu0
    %v6524 = vrot.slane %v6445, 6
    %v6525 = vrot.slane %v6447, 6
    %v6526 = vrot.slane %v6516, 6
    %v6527 = vrot.slane %v6518, 6
    %v6532 = vadd.f32 %v5859, %v6524
    %v6533 = vadd.f32 %v5861, %v6525
    %v6534 = vadd.f32 %v5936, %v6526
    %v6535 = vadd.f32 %v5938, %v6527
    %v6536 = vxor.u32 %v6532, 2147483648
    %v6537 = vxor.u32 %v6533, 2147483648
    %v6538 = vxor.u32 %v6534, 2147483648
    %v6539 = vmul.f32 %v6536, 1.442695
    %v6540 = vpow.pop %v6539
    %v6541 = vmul.f32 %v6537, 1.442695
    %v6542 = vpow.pop %v6541
    %v6543 = vmul.f32 %v6538, 1.442695
    %v6544 = vpow.pop %v6543
    %v6545 = vadd.f32 %v6540, 1.0
    %v6546 = vadd.f32 %v6542, 1.0
    %v6547 = vadd.f32 %v6544, 1.0
    %v6548 = vrcp.pop %v6545
    %v6549 = vmul.f32 1.0, %v6548
    %v6550 = vrcp.pop %v6546
    %v6551 = vmul.f32 1.0, %v6550
    %v6552 = vrcp.pop %v6547
    %v6553 = vmul.f32 1.0, %v6552
    %v6554 = vtanh.pop %v6535
    %v6556 = vrot.slane %v6372, 2
    %v6558 = vmul.f32 %v6551, %v6556
    %v6559 = vmul.f32 %v6549, %v6554
    %v6560 = vadd.f32 %v6558, %v6559
    %v6561 = vtanh.pop %v6560
    %v6562 = vmul.f32 %v6553, %v6561
    %v6564 = vrot.slane %v6562, 2
    %6566 = vmatprep.subr.mxu0 %v6002
    %6567 = vmatpush1.msra.mxu0 %v6001
    %6568 = vmatprep.subr.mxu0 %v5998
    %6569 = vmatpush1.msra.mxu0 %v5997
    %6570 = vmatprep.subr.mxu0 %v5994
    %6571 = vmatpush1.msra.mxu0 %v5993
    %6572 = vmatprep.subr.mxu0 %v5990
    %6573 = vmatpush1.msra.mxu0 %v5989
    %6574 = vmatprep.subr.mxu0 %v5986
    %6575 = vmatpush1.msra.mxu0 %v5985
    %6576 = vmatprep.subr.mxu0 %v5982
    %6577 = vmatpush1.msra.mxu0 %v5981
    %6578 = vmatprep.subr.mxu0 %v5978
    %6579 = vmatpush1.msra.mxu0 %v5977
    %6580 = vmatprep.subr.mxu0 %v5974
    %6581 = vmatpush1.msra.mxu0 %v5973
    %6582 = vmatprep.subr.mxu0 %v5970
    %6583 = vmatpush1.msra.mxu0 %v5969
    %6584 = vmatprep.subr.mxu0 %v5966
    %6585 = vmatpush1.msra.mxu0 %v5965
    %6586 = vmatprep.subr.mxu0 %v5962
    %6587 = vmatpush1.msra.mxu0 %v5961
    %6588 = vmatprep.subr.mxu0 %v5958
    %6589 = vmatpush1.msra.mxu0 %v5957
    %6590 = vmatprep.subr.mxu0 %v5954
    %6591 = vmatpush1.msra.mxu0 %v5953
    %6592 = vmatprep.subr.mxu0 %v5950
    %6593 = vmatpush1.msra.mxu0 %v5949
    %6594 = vmatprep.subr.mxu0 %v5946
    %6595 = vmatpush1.msra.mxu0 %v5945
    %6596 = vmatprep.subr.mxu0 %v5942
    %6597 = vmatpush1.msra.mxu0 %v5941
    %6598 = vmatprep.subr.mxu0 0.0
    %6599 = vmatpush2.msra.mxu0 0.0
    %6600 = vmatprep.subr.mxu0 0.0
    %6601 = vmatpush2.msra.mxu0 0.0
    %6602 = vmatprep.subr.mxu0 0.0
    %6603 = vmatpush2.msra.mxu0 0.0
    %6604 = vmatprep.subr.mxu0 0.0
    %6605 = vmatpush2.msra.mxu0 0.0
    %6606 = vmatprep.subr.mxu0 0.0
    %6607 = vmatpush2.msra.mxu0 0.0
    %6608 = vmatprep.subr.mxu0 0.0
    %6609 = vmatpush2.msra.mxu0 0.0
    %6610 = vmatprep.subr.mxu0 0.0
    %6611 = vmatpush2.msra.mxu0 0.0
    %6612 = vmatprep.subr.mxu0 0.0
    %6613 = vmatpush2.msra.mxu0 0.0
    %6614 = vmatprep.subr.mxu0 0.0
    %6615 = vmatpush2.msra.mxu0 0.0
    %6616 = vmatprep.subr.mxu0 0.0
    %6617 = vmatpush2.msra.mxu0 0.0
    %6618 = vmatprep.subr.mxu0 0.0
    %6619 = vmatpush2.msra.mxu0 0.0
    %6620 = vmatprep.subr.mxu0 0.0
    %6621 = vmatpush2.msra.mxu0 0.0
    %6622 = vmatprep.subr.mxu0 0.0
    %6623 = vmatpush2.msra.mxu0 0.0
    %6624 = vmatprep.subr.mxu0 0.0
    %6625 = vmatpush2.msra.mxu0 0.0
    %6626 = vmatprep.subr.mxu0 0.0
    %6627 = vmatpush2.msra.mxu0 0.0
    %6628 = vmatprep.subr.mxu0 0.0
    %6629 = vmatpush2.msra.mxu0 0.0
    %6630 = vmatprep.mubr.f32.mxu0 0.0
    %6631 = vmatmul.mubr.f32.gmra.mxu0 %v6564
    %v6632 = vpop.f32.mrf.mxu0
    %v6633 = vadd.f32 0.0, %v6632
    %v6634 = vpop.f32.mrf.mxu0
    %v6635 = vadd.f32 0.0, %v6634
    %6636 = vdwg.mxu0
    %6637 = vmatprep.subr.mxu0 %v6004
    %6638 = vmatpush1.msra.mxu0 %v6003
    %6639 = vmatprep.subr.mxu0 %v6000
    %6640 = vmatpush1.msra.mxu0 %v5999
    %6641 = vmatprep.subr.mxu0 %v5996
    %6642 = vmatpush1.msra.mxu0 %v5995
    %6643 = vmatprep.subr.mxu0 %v5992
    %6644 = vmatpush1.msra.mxu0 %v5991
    %6645 = vmatprep.subr.mxu0 %v5988
    %6646 = vmatpush1.msra.mxu0 %v5987
    %6647 = vmatprep.subr.mxu0 %v5984
    %6648 = vmatpush1.msra.mxu0 %v5983
    %6649 = vmatprep.subr.mxu0 %v5980
    %6650 = vmatpush1.msra.mxu0 %v5979
    %6651 = vmatprep.subr.mxu0 %v5976
    %6652 = vmatpush1.msra.mxu0 %v5975
    %6653 = vmatprep.subr.mxu0 %v5972
    %6654 = vmatpush1.msra.mxu0 %v5971
    %6655 = vmatprep.subr.mxu0 %v5968
    %6656 = vmatpush1.msra.mxu0 %v5967
    %6657 = vmatprep.subr.mxu0 %v5964
    %6658 = vmatpush1.msra.mxu0 %v5963
    %6659 = vmatprep.subr.mxu0 %v5960
    %6660 = vmatpush1.msra.mxu0 %v5959
    %6661 = vmatprep.subr.mxu0 %v5956
    %6662 = vmatpush1.msra.mxu0 %v5955
    %6663 = vmatprep.subr.mxu0 %v5952
    %6664 = vmatpush1.msra.mxu0 %v5951
    %6665 = vmatprep.subr.mxu0 %v5948
    %6666 = vmatpush1.msra.mxu0 %v5947
    %6667 = vmatprep.subr.mxu0 %v5944
    %6668 = vmatpush1.msra.mxu0 %v5943
    %6669 = vmatprep.subr.mxu0 0.0
    %6670 = vmatpush2.msra.mxu0 0.0
    %6671 = vmatprep.subr.mxu0 0.0
    %6672 = vmatpush2.msra.mxu0 0.0
    %6673 = vmatprep.subr.mxu0 0.0
    %6674 = vmatpush2.msra.mxu0 0.0
    %6675 = vmatprep.subr.mxu0 0.0
    %6676 = vmatpush2.msra.mxu0 0.0
    %6677 = vmatprep.subr.mxu0 0.0
    %6678 = vmatpush2.msra.mxu0 0.0
    %6679 = vmatprep.subr.mxu0 0.0
    %6680 = vmatpush2.msra.mxu0 0.0
    %6681 = vmatprep.subr.mxu0 0.0
    %6682 = vmatpush2.msra.mxu0 0.0
    %6683 = vmatprep.subr.mxu0 0.0
    %6684 = vmatpush2.msra.mxu0 0.0
    %6685 = vmatprep.subr.mxu0 0.0
    %6686 = vmatpush2.msra.mxu0 0.0
    %6687 = vmatprep.subr.mxu0 0.0
    %6688 = vmatpush2.msra.mxu0 0.0
    %6689 = vmatprep.subr.mxu0 0.0
    %6690 = vmatpush2.msra.mxu0 0.0
    %6691 = vmatprep.subr.mxu0 0.0
    %6692 = vmatpush2.msra.mxu0 0.0
    %6693 = vmatprep.subr.mxu0 0.0
    %6694 = vmatpush2.msra.mxu0 0.0
    %6695 = vmatprep.subr.mxu0 0.0
    %6696 = vmatpush2.msra.mxu0 0.0
    %6697 = vmatprep.subr.mxu0 0.0
    %6698 = vmatpush2.msra.mxu0 0.0
    %6699 = vmatprep.subr.mxu0 0.0
    %6700 = vmatpush2.msra.mxu0 0.0
    %6701 = vmatprep.mubr.f32.mxu0 0.0
    %6702 = vmatmul.mubr.f32.gmra.mxu0 %v6564
    %v6703 = vpop.f32.mrf.mxu0
    %v6704 = vadd.f32 0.0, %v6703
    %v6705 = vpop.f32.mrf.mxu0
    %v6706 = vadd.f32 0.0, %v6705
    %6707 = vdwg.mxu0
    %v6708 = vadd.f32 %v5859, %v6633
    %v6709 = vadd.f32 %v5861, %v6635
    %v6710 = vadd.f32 %v5936, %v6704
    %v6711 = vadd.f32 %v5938, %v6706
    %v6712 = vxor.u32 %v6708, 2147483648
    %v6713 = vxor.u32 %v6709, 2147483648
    %v6714 = vxor.u32 %v6710, 2147483648
    %v6715 = vmul.f32 %v6712, 1.442695
    %v6716 = vpow.pop %v6715
    %v6717 = vmul.f32 %v6713, 1.442695
    %v6718 = vpow.pop %v6717
    %v6719 = vmul.f32 %v6714, 1.442695
    %v6720 = vpow.pop %v6719
    %v6721 = vadd.f32 %v6716, 1.0
    %v6722 = vadd.f32 %v6718, 1.0
    %v6723 = vadd.f32 %v6720, 1.0
    %v6724 = vrcp.pop %v6721
    %v6725 = vmul.f32 1.0, %v6724
    %v6726 = vrcp.pop %v6722
    %v6727 = vmul.f32 1.0, %v6726
    %v6728 = vrcp.pop %v6723
    %v6729 = vmul.f32 1.0, %v6728
    %v6730 = vtanh.pop %v6711
    %v6732 = vrot.slane %v6560, 2
    %v6734 = vmul.f32 %v6727, %v6732
    %v6735 = vmul.f32 %v6725, %v6730
    %v6736 = vadd.f32 %v6734, %v6735
    %v6737 = vtanh.pop %v6736
    %v6738 = vmul.f32 %v6729, %v6737
    %6739 = vmatprep.subr.mxu0 %v6002
    %6740 = vmatpush1.msra.mxu0 %v6001
    %6741 = vmatprep.subr.mxu0 %v5998
    %6742 = vmatpush1.msra.mxu0 %v5997
    %6743 = vmatprep.subr.mxu0 %v5994
    %6744 = vmatpush1.msra.mxu0 %v5993
    %6745 = vmatprep.subr.mxu0 %v5990
    %6746 = vmatpush1.msra.mxu0 %v5989
    %6747 = vmatprep.subr.mxu0 %v5986
    %6748 = vmatpush1.msra.mxu0 %v5985
    %6749 = vmatprep.subr.mxu0 %v5982
    %6750 = vmatpush1.msra.mxu0 %v5981
    %6751 = vmatprep.subr.mxu0 %v5978
    %6752 = vmatpush1.msra.mxu0 %v5977
    %6753 = vmatprep.subr.mxu0 %v5974
    %6754 = vmatpush1.msra.mxu0 %v5973
    %6755 = vmatprep.subr.mxu0 %v5970
    %6756 = vmatpush1.msra.mxu0 %v5969
    %6757 = vmatprep.subr.mxu0 %v5966
    %6758 = vmatpush1.msra.mxu0 %v5965
    %6759 = vmatprep.subr.mxu0 %v5962
    %6760 = vmatpush1.msra.mxu0 %v5961
    %6761 = vmatprep.subr.mxu0 %v5958
    %6762 = vmatpush1.msra.mxu0 %v5957
    %6763 = vmatprep.subr.mxu0 %v5954
    %6764 = vmatpush1.msra.mxu0 %v5953
    %6765 = vmatprep.subr.mxu0 %v5950
    %6766 = vmatpush1.msra.mxu0 %v5949
    %6767 = vmatprep.subr.mxu0 %v5946
    %6768 = vmatpush1.msra.mxu0 %v5945
    %6769 = vmatprep.subr.mxu0 %v5942
    %6770 = vmatpush1.msra.mxu0 %v5941
    %6771 = vmatprep.subr.mxu0 0.0
    %6772 = vmatpush2.msra.mxu0 0.0
    %6773 = vmatprep.subr.mxu0 0.0
    %6774 = vmatpush2.msra.mxu0 0.0
    %6775 = vmatprep.subr.mxu0 0.0
    %6776 = vmatpush2.msra.mxu0 0.0
    %6777 = vmatprep.subr.mxu0 0.0
    %6778 = vmatpush2.msra.mxu0 0.0
    %6779 = vmatprep.subr.mxu0 0.0
    %6780 = vmatpush2.msra.mxu0 0.0
    %6781 = vmatprep.subr.mxu0 0.0
    %6782 = vmatpush2.msra.mxu0 0.0
    %6783 = vmatprep.subr.mxu0 0.0
    %6784 = vmatpush2.msra.mxu0 0.0
    %6785 = vmatprep.subr.mxu0 0.0
    %6786 = vmatpush2.msra.mxu0 0.0
    %6787 = vmatprep.subr.mxu0 0.0
    %6788 = vmatpush2.msra.mxu0 0.0
    %6789 = vmatprep.subr.mxu0 0.0
    %6790 = vmatpush2.msra.mxu0 0.0
    %6791 = vmatprep.subr.mxu0 0.0
    %6792 = vmatpush2.msra.mxu0 0.0
    %6793 = vmatprep.subr.mxu0 0.0
    %6794 = vmatpush2.msra.mxu0 0.0
    %6795 = vmatprep.subr.mxu0 0.0
    %6796 = vmatpush2.msra.mxu0 0.0
    %6797 = vmatprep.subr.mxu0 0.0
    %6798 = vmatpush2.msra.mxu0 0.0
    %6799 = vmatprep.subr.mxu0 0.0
    %6800 = vmatpush2.msra.mxu0 0.0
    %6801 = vmatprep.subr.mxu0 0.0
    %6802 = vmatpush2.msra.mxu0 0.0
    %6803 = vmatprep.mubr.f32.mxu0 0.0
    %6804 = vmatmul.mubr.f32.gmra.mxu0 %v6738
    %v6805 = vpop.f32.mrf.mxu0
    %v6806 = vadd.f32 0.0, %v6805
    %v6807 = vpop.f32.mrf.mxu0
    %v6808 = vadd.f32 0.0, %v6807
    %6809 = vdwg.mxu0
    %6810 = vmatprep.subr.mxu0 %v6004
    %6811 = vmatpush1.msra.mxu0 %v6003
    %6812 = vmatprep.subr.mxu0 %v6000
    %6813 = vmatpush1.msra.mxu0 %v5999
    %6814 = vmatprep.subr.mxu0 %v5996
    %6815 = vmatpush1.msra.mxu0 %v5995
    %6816 = vmatprep.subr.mxu0 %v5992
    %6817 = vmatpush1.msra.mxu0 %v5991
    %6818 = vmatprep.subr.mxu0 %v5988
    %6819 = vmatpush1.msra.mxu0 %v5987
    %6820 = vmatprep.subr.mxu0 %v5984
    %6821 = vmatpush1.msra.mxu0 %v5983
    %6822 = vmatprep.subr.mxu0 %v5980
    %6823 = vmatpush1.msra.mxu0 %v5979
    %6824 = vmatprep.subr.mxu0 %v5976
    %6825 = vmatpush1.msra.mxu0 %v5975
    %6826 = vmatprep.subr.mxu0 %v5972
    %6827 = vmatpush1.msra.mxu0 %v5971
    %6828 = vmatprep.subr.mxu0 %v5968
    %6829 = vmatpush1.msra.mxu0 %v5967
    %6830 = vmatprep.subr.mxu0 %v5964
    %6831 = vmatpush1.msra.mxu0 %v5963
    %6832 = vmatprep.subr.mxu0 %v5960
    %6833 = vmatpush1.msra.mxu0 %v5959
    %6834 = vmatprep.subr.mxu0 %v5956
    %6835 = vmatpush1.msra.mxu0 %v5955
    %6836 = vmatprep.subr.mxu0 %v5952
    %6837 = vmatpush1.msra.mxu0 %v5951
    %6838 = vmatprep.subr.mxu0 %v5948
    %6839 = vmatpush1.msra.mxu0 %v5947
    %6840 = vmatprep.subr.mxu0 %v5944
    %6841 = vmatpush1.msra.mxu0 %v5943
    %6842 = vmatprep.subr.mxu0 0.0
    %6843 = vmatpush2.msra.mxu0 0.0
    %6844 = vmatprep.subr.mxu0 0.0
    %6845 = vmatpush2.msra.mxu0 0.0
    %6846 = vmatprep.subr.mxu0 0.0
    %6847 = vmatpush2.msra.mxu0 0.0
    %6848 = vmatprep.subr.mxu0 0.0
    %6849 = vmatpush2.msra.mxu0 0.0
    %6850 = vmatprep.subr.mxu0 0.0
    %6851 = vmatpush2.msra.mxu0 0.0
    %6852 = vmatprep.subr.mxu0 0.0
    %6853 = vmatpush2.msra.mxu0 0.0
    %6854 = vmatprep.subr.mxu0 0.0
    %6855 = vmatpush2.msra.mxu0 0.0
    %6856 = vmatprep.subr.mxu0 0.0
    %6857 = vmatpush2.msra.mxu0 0.0
    %6858 = vmatprep.subr.mxu0 0.0
    %6859 = vmatpush2.msra.mxu0 0.0
    %6860 = vmatprep.subr.mxu0 0.0
    %6861 = vmatpush2.msra.mxu0 0.0
    %6862 = vmatprep.subr.mxu0 0.0
    %6863 = vmatpush2.msra.mxu0 0.0
    %6864 = vmatprep.subr.mxu0 0.0
    %6865 = vmatpush2.msra.mxu0 0.0
    %6866 = vmatprep.subr.mxu0 0.0
    %6867 = vmatpush2.msra.mxu0 0.0
    %6868 = vmatprep.subr.mxu0 0.0
    %6869 = vmatpush2.msra.mxu0 0.0
    %6870 = vmatprep.subr.mxu0 0.0
    %6871 = vmatpush2.msra.mxu0 0.0
    %6872 = vmatprep.subr.mxu0 0.0
    %6873 = vmatpush2.msra.mxu0 0.0
    %6874 = vmatprep.mubr.f32.mxu0 0.0
    %6875 = vmatmul.mubr.f32.gmra.mxu0 %v6738
    %v6876 = vpop.f32.mrf.mxu0
    %v6877 = vadd.f32 0.0, %v6876
    %v6878 = vpop.f32.mrf.mxu0
    %v6879 = vadd.f32 0.0, %v6878
    %6880 = vdwg.mxu0
    %v6885 = vrot.slane %v6806, 2
    %v6886 = vrot.slane %v6808, 2
    %v6887 = vrot.slane %v6877, 2
    %v6888 = vrot.slane %v6879, 2
    %v6893 = vadd.f32 %v5853, %v6885
    %v6894 = vadd.f32 %v5855, %v6886
    %v6895 = vadd.f32 %v5930, %v6887
    %v6896 = vadd.f32 %v5932, %v6888
    %v6897 = vxor.u32 %v6893, 2147483648
    %v6898 = vxor.u32 %v6894, 2147483648
    %v6899 = vxor.u32 %v6895, 2147483648
    %v6900 = vmul.f32 %v6897, 1.442695
    %v6901 = vpow.pop %v6900
    %v6902 = vmul.f32 %v6898, 1.442695
    %v6903 = vpow.pop %v6902
    %v6904 = vmul.f32 %v6899, 1.442695
    %v6905 = vpow.pop %v6904
    %v6906 = vadd.f32 %v6901, 1.0
    %v6907 = vadd.f32 %v6903, 1.0
    %v6908 = vadd.f32 %v6905, 1.0
    %v6909 = vrcp.pop %v6906
    %v6910 = vmul.f32 1.0, %v6909
    %v6911 = vrcp.pop %v6907
    %v6912 = vmul.f32 1.0, %v6911
    %v6913 = vrcp.pop %v6908
    %v6914 = vmul.f32 1.0, %v6913
    %v6915 = vtanh.pop %v6896
    %v6917 = vrot.slane %v6736, 2
    %v6919 = vmul.f32 %v6912, %v6917
    %v6920 = vmul.f32 %v6910, %v6915
    %v6921 = vadd.f32 %v6919, %v6920
    %v6922 = vtanh.pop %v6921
    %v6923 = vmul.f32 %v6914, %v6922
    %v6925 = vrot.slane %v6923, 6
    %6927 = vmatprep.subr.mxu0 %v6002
    %6928 = vmatpush1.msra.mxu0 %v6001
    %6929 = vmatprep.subr.mxu0 %v5998
    %6930 = vmatpush1.msra.mxu0 %v5997
    %6931 = vmatprep.subr.mxu0 %v5994
    %6932 = vmatpush1.msra.mxu0 %v5993
    %6933 = vmatprep.subr.mxu0 %v5990
    %6934 = vmatpush1.msra.mxu0 %v5989
    %6935 = vmatprep.subr.mxu0 %v5986
    %6936 = vmatpush1.msra.mxu0 %v5985
    %6937 = vmatprep.subr.mxu0 %v5982
    %6938 = vmatpush1.msra.mxu0 %v5981
    %6939 = vmatprep.subr.mxu0 %v5978
    %6940 = vmatpush1.msra.mxu0 %v5977
    %6941 = vmatprep.subr.mxu0 %v5974
    %6942 = vmatpush1.msra.mxu0 %v5973
    %6943 = vmatprep.subr.mxu0 %v5970
    %6944 = vmatpush1.msra.mxu0 %v5969
    %6945 = vmatprep.subr.mxu0 %v5966
    %6946 = vmatpush1.msra.mxu0 %v5965
    %6947 = vmatprep.subr.mxu0 %v5962
    %6948 = vmatpush1.msra.mxu0 %v5961
    %6949 = vmatprep.subr.mxu0 %v5958
    %6950 = vmatpush1.msra.mxu0 %v5957
    %6951 = vmatprep.subr.mxu0 %v5954
    %6952 = vmatpush1.msra.mxu0 %v5953
    %6953 = vmatprep.subr.mxu0 %v5950
    %6954 = vmatpush1.msra.mxu0 %v5949
    %6955 = vmatprep.subr.mxu0 %v5946
    %6956 = vmatpush1.msra.mxu0 %v5945
    %6957 = vmatprep.subr.mxu0 %v5942
    %6958 = vmatpush1.msra.mxu0 %v5941
    %6959 = vmatprep.subr.mxu0 0.0
    %6960 = vmatpush2.msra.mxu0 0.0
    %6961 = vmatprep.subr.mxu0 0.0
    %6962 = vmatpush2.msra.mxu0 0.0
    %6963 = vmatprep.subr.mxu0 0.0
    %6964 = vmatpush2.msra.mxu0 0.0
    %6965 = vmatprep.subr.mxu0 0.0
    %6966 = vmatpush2.msra.mxu0 0.0
    %6967 = vmatprep.subr.mxu0 0.0
    %6968 = vmatpush2.msra.mxu0 0.0
    %6969 = vmatprep.subr.mxu0 0.0
    %6970 = vmatpush2.msra.mxu0 0.0
    %6971 = vmatprep.subr.mxu0 0.0
    %6972 = vmatpush2.msra.mxu0 0.0
    %6973 = vmatprep.subr.mxu0 0.0
    %6974 = vmatpush2.msra.mxu0 0.0
    %6975 = vmatprep.subr.mxu0 0.0
    %6976 = vmatpush2.msra.mxu0 0.0
    %6977 = vmatprep.subr.mxu0 0.0
    %6978 = vmatpush2.msra.mxu0 0.0
    %6979 = vmatprep.subr.mxu0 0.0
    %6980 = vmatpush2.msra.mxu0 0.0
    %6981 = vmatprep.subr.mxu0 0.0
    %6982 = vmatpush2.msra.mxu0 0.0
    %6983 = vmatprep.subr.mxu0 0.0
    %6984 = vmatpush2.msra.mxu0 0.0
    %6985 = vmatprep.subr.mxu0 0.0
    %6986 = vmatpush2.msra.mxu0 0.0
    %6987 = vmatprep.subr.mxu0 0.0
    %6988 = vmatpush2.msra.mxu0 0.0
    %6989 = vmatprep.subr.mxu0 0.0
    %6990 = vmatpush2.msra.mxu0 0.0
    %6991 = vmatprep.mubr.f32.mxu0 0.0
    %6992 = vmatmul.mubr.f32.gmra.mxu0 %v6925
    %v6993 = vpop.f32.mrf.mxu0
    %v6994 = vadd.f32 0.0, %v6993
    %v6995 = vpop.f32.mrf.mxu0
    %v6996 = vadd.f32 0.0, %v6995
    %6997 = vdwg.mxu0
    %6998 = vmatprep.subr.mxu0 %v6004
    %6999 = vmatpush1.msra.mxu0 %v6003
    %7000 = vmatprep.subr.mxu0 %v6000
    %7001 = vmatpush1.msra.mxu0 %v5999
    %7002 = vmatprep.subr.mxu0 %v5996
    %7003 = vmatpush1.msra.mxu0 %v5995
    %7004 = vmatprep.subr.mxu0 %v5992
    %7005 = vmatpush1.msra.mxu0 %v5991
    %7006 = vmatprep.subr.mxu0 %v5988
    %7007 = vmatpush1.msra.mxu0 %v5987
    %7008 = vmatprep.subr.mxu0 %v5984
    %7009 = vmatpush1.msra.mxu0 %v5983
    %7010 = vmatprep.subr.mxu0 %v5980
    %7011 = vmatpush1.msra.mxu0 %v5979
    %7012 = vmatprep.subr.mxu0 %v5976
    %7013 = vmatpush1.msra.mxu0 %v5975
    %7014 = vmatprep.subr.mxu0 %v5972
    %7015 = vmatpush1.msra.mxu0 %v5971
    %7016 = vmatprep.subr.mxu0 %v5968
    %7017 = vmatpush1.msra.mxu0 %v5967
    %7018 = vmatprep.subr.mxu0 %v5964
    %7019 = vmatpush1.msra.mxu0 %v5963
    %7020 = vmatprep.subr.mxu0 %v5960
    %7021 = vmatpush1.msra.mxu0 %v5959
    %7022 = vmatprep.subr.mxu0 %v5956
    %7023 = vmatpush1.msra.mxu0 %v5955
    %7024 = vmatprep.subr.mxu0 %v5952
    %7025 = vmatpush1.msra.mxu0 %v5951
    %7026 = vmatprep.subr.mxu0 %v5948
    %7027 = vmatpush1.msra.mxu0 %v5947
    %7028 = vmatprep.subr.mxu0 %v5944
    %7029 = vmatpush1.msra.mxu0 %v5943
    %7030 = vmatprep.subr.mxu0 0.0
    %7031 = vmatpush2.msra.mxu0 0.0
    %7032 = vmatprep.subr.mxu0 0.0
    %7033 = vmatpush2.msra.mxu0 0.0
    %7034 = vmatprep.subr.mxu0 0.0
    %7035 = vmatpush2.msra.mxu0 0.0
    %7036 = vmatprep.subr.mxu0 0.0
    %7037 = vmatpush2.msra.mxu0 0.0
    %7038 = vmatprep.subr.mxu0 0.0
    %7039 = vmatpush2.msra.mxu0 0.0
    %7040 = vmatprep.subr.mxu0 0.0
    %7041 = vmatpush2.msra.mxu0 0.0
    %7042 = vmatprep.subr.mxu0 0.0
    %7043 = vmatpush2.msra.mxu0 0.0
    %7044 = vmatprep.subr.mxu0 0.0
    %7045 = vmatpush2.msra.mxu0 0.0
    %7046 = vmatprep.subr.mxu0 0.0
    %7047 = vmatpush2.msra.mxu0 0.0
    %7048 = vmatprep.subr.mxu0 0.0
    %7049 = vmatpush2.msra.mxu0 0.0
    %7050 = vmatprep.subr.mxu0 0.0
    %7051 = vmatpush2.msra.mxu0 0.0
    %7052 = vmatprep.subr.mxu0 0.0
    %7053 = vmatpush2.msra.mxu0 0.0
    %7054 = vmatprep.subr.mxu0 0.0
    %7055 = vmatpush2.msra.mxu0 0.0
    %7056 = vmatprep.subr.mxu0 0.0
    %7057 = vmatpush2.msra.mxu0 0.0
    %7058 = vmatprep.subr.mxu0 0.0
    %7059 = vmatpush2.msra.mxu0 0.0
    %7060 = vmatprep.subr.mxu0 0.0
    %7061 = vmatpush2.msra.mxu0 0.0
    %7062 = vmatprep.mubr.f32.mxu0 0.0
    %7063 = vmatmul.mubr.f32.gmra.mxu0 %v6925
    %v7064 = vpop.f32.mrf.mxu0
    %v7065 = vadd.f32 0.0, %v7064
    %v7066 = vpop.f32.mrf.mxu0
    %v7067 = vadd.f32 0.0, %v7066
    %7068 = vdwg.mxu0
    %v7073 = vrot.slane %v6994, 4
    %v7074 = vrot.slane %v6996, 4
    %v7075 = vrot.slane %v7065, 4
    %v7076 = vrot.slane %v7067, 4
    %v7081 = vadd.f32 %v5853, %v7073
    %v7082 = vadd.f32 %v5855, %v7074
    %v7083 = vadd.f32 %v5930, %v7075
    %v7084 = vadd.f32 %v5932, %v7076
    %v7085 = vxor.u32 %v7081, 2147483648
    %v7086 = vxor.u32 %v7082, 2147483648
    %v7087 = vxor.u32 %v7083, 2147483648
    %v7088 = vmul.f32 %v7085, 1.442695
    %v7089 = vpow.pop %v7088
    %v7090 = vmul.f32 %v7086, 1.442695
    %v7091 = vpow.pop %v7090
    %v7092 = vmul.f32 %v7087, 1.442695
    %v7093 = vpow.pop %v7092
    %v7094 = vadd.f32 %v7089, 1.0
    %v7095 = vadd.f32 %v7091, 1.0
    %v7096 = vadd.f32 %v7093, 1.0
    %v7097 = vrcp.pop %v7094
    %v7098 = vmul.f32 1.0, %v7097
    %v7099 = vrcp.pop %v7095
    %v7100 = vmul.f32 1.0, %v7099
    %v7101 = vrcp.pop %v7096
    %v7102 = vmul.f32 1.0, %v7101
    %v7103 = vtanh.pop %v7084
    %v7105 = vrot.slane %v6921, 2
    %v7107 = vmul.f32 %v7100, %v7105
    %v7108 = vmul.f32 %v7098, %v7103
    %v7109 = vadd.f32 %v7107, %v7108
    %v7110 = vtanh.pop %v7109
    %v7111 = vmul.f32 %v7102, %v7110
    %v7113 = vrot.slane %v7111, 4
    %7115 = vmatprep.subr.mxu0 %v6002
    %7116 = vmatpush1.msra.mxu0 %v6001
    %7117 = vmatprep.subr.mxu0 %v5998
    %7118 = vmatpush1.msra.mxu0 %v5997
    %7119 = vmatprep.subr.mxu0 %v5994
    %7120 = vmatpush1.msra.mxu0 %v5993
    %7121 = vmatprep.subr.mxu0 %v5990
    %7122 = vmatpush1.msra.mxu0 %v5989
    %7123 = vmatprep.subr.mxu0 %v5986
    %7124 = vmatpush1.msra.mxu0 %v5985
    %7125 = vmatprep.subr.mxu0 %v5982
    %7126 = vmatpush1.msra.mxu0 %v5981
    %7127 = vmatprep.subr.mxu0 %v5978
    %7128 = vmatpush1.msra.mxu0 %v5977
    %7129 = vmatprep.subr.mxu0 %v5974
    %7130 = vmatpush1.msra.mxu0 %v5973
    %7131 = vmatprep.subr.mxu0 %v5970
    %7132 = vmatpush1.msra.mxu0 %v5969
    %7133 = vmatprep.subr.mxu0 %v5966
    %7134 = vmatpush1.msra.mxu0 %v5965
    %7135 = vmatprep.subr.mxu0 %v5962
    %7136 = vmatpush1.msra.mxu0 %v5961
    %7137 = vmatprep.subr.mxu0 %v5958
    %7138 = vmatpush1.msra.mxu0 %v5957
    %7139 = vmatprep.subr.mxu0 %v5954
    %7140 = vmatpush1.msra.mxu0 %v5953
    %7141 = vmatprep.subr.mxu0 %v5950
    %7142 = vmatpush1.msra.mxu0 %v5949
    %7143 = vmatprep.subr.mxu0 %v5946
    %7144 = vmatpush1.msra.mxu0 %v5945
    %7145 = vmatprep.subr.mxu0 %v5942
    %7146 = vmatpush1.msra.mxu0 %v5941
    %7147 = vmatprep.subr.mxu0 0.0
    %7148 = vmatpush2.msra.mxu0 0.0
    %7149 = vmatprep.subr.mxu0 0.0
    %7150 = vmatpush2.msra.mxu0 0.0
    %7151 = vmatprep.subr.mxu0 0.0
    %7152 = vmatpush2.msra.mxu0 0.0
    %7153 = vmatprep.subr.mxu0 0.0
    %7154 = vmatpush2.msra.mxu0 0.0
    %7155 = vmatprep.subr.mxu0 0.0
    %7156 = vmatpush2.msra.mxu0 0.0
    %7157 = vmatprep.subr.mxu0 0.0
    %7158 = vmatpush2.msra.mxu0 0.0
    %7159 = vmatprep.subr.mxu0 0.0
    %7160 = vmatpush2.msra.mxu0 0.0
    %7161 = vmatprep.subr.mxu0 0.0
    %7162 = vmatpush2.msra.mxu0 0.0
    %7163 = vmatprep.subr.mxu0 0.0
    %7164 = vmatpush2.msra.mxu0 0.0
    %7165 = vmatprep.subr.mxu0 0.0
    %7166 = vmatpush2.msra.mxu0 0.0
    %7167 = vmatprep.subr.mxu0 0.0
    %7168 = vmatpush2.msra.mxu0 0.0
    %7169 = vmatprep.subr.mxu0 0.0
    %7170 = vmatpush2.msra.mxu0 0.0
    %7171 = vmatprep.subr.mxu0 0.0
    %7172 = vmatpush2.msra.mxu0 0.0
    %7173 = vmatprep.subr.mxu0 0.0
    %7174 = vmatpush2.msra.mxu0 0.0
    %7175 = vmatprep.subr.mxu0 0.0
    %7176 = vmatpush2.msra.mxu0 0.0
    %7177 = vmatprep.subr.mxu0 0.0
    %7178 = vmatpush2.msra.mxu0 0.0
    %7179 = vmatprep.mubr.f32.mxu0 0.0
    %7180 = vmatmul.mubr.f32.gmra.mxu0 %v7113
    %v7181 = vpop.f32.mrf.mxu0
    %v7182 = vadd.f32 0.0, %v7181
    %v7183 = vpop.f32.mrf.mxu0
    %v7184 = vadd.f32 0.0, %v7183
    %7185 = vdwg.mxu0
    %7186 = vmatprep.subr.mxu0 %v6004
    %7187 = vmatpush1.msra.mxu0 %v6003
    %7188 = vmatprep.subr.mxu0 %v6000
    %7189 = vmatpush1.msra.mxu0 %v5999
    %7190 = vmatprep.subr.mxu0 %v5996
    %7191 = vmatpush1.msra.mxu0 %v5995
    %7192 = vmatprep.subr.mxu0 %v5992
    %7193 = vmatpush1.msra.mxu0 %v5991
    %7194 = vmatprep.subr.mxu0 %v5988
    %7195 = vmatpush1.msra.mxu0 %v5987
    %7196 = vmatprep.subr.mxu0 %v5984
    %7197 = vmatpush1.msra.mxu0 %v5983
    %7198 = vmatprep.subr.mxu0 %v5980
    %7199 = vmatpush1.msra.mxu0 %v5979
    %7200 = vmatprep.subr.mxu0 %v5976
    %7201 = vmatpush1.msra.mxu0 %v5975
    %7202 = vmatprep.subr.mxu0 %v5972
    %7203 = vmatpush1.msra.mxu0 %v5971
    %7204 = vmatprep.subr.mxu0 %v5968
    %7205 = vmatpush1.msra.mxu0 %v5967
    %7206 = vmatprep.subr.mxu0 %v5964
    %7207 = vmatpush1.msra.mxu0 %v5963
    %7208 = vmatprep.subr.mxu0 %v5960
    %7209 = vmatpush1.msra.mxu0 %v5959
    %7210 = vmatprep.subr.mxu0 %v5956
    %7211 = vmatpush1.msra.mxu0 %v5955
    %7212 = vmatprep.subr.mxu0 %v5952
    %7213 = vmatpush1.msra.mxu0 %v5951
    %7214 = vmatprep.subr.mxu0 %v5948
    %7215 = vmatpush1.msra.mxu0 %v5947
    %7216 = vmatprep.subr.mxu0 %v5944
    %7217 = vmatpush1.msra.mxu0 %v5943
    %7218 = vmatprep.subr.mxu0 0.0
    %7219 = vmatpush2.msra.mxu0 0.0
    %7220 = vmatprep.subr.mxu0 0.0
    %7221 = vmatpush2.msra.mxu0 0.0
    %7222 = vmatprep.subr.mxu0 0.0
    %7223 = vmatpush2.msra.mxu0 0.0
    %7224 = vmatprep.subr.mxu0 0.0
    %7225 = vmatpush2.msra.mxu0 0.0
    %7226 = vmatprep.subr.mxu0 0.0
    %7227 = vmatpush2.msra.mxu0 0.0
    %7228 = vmatprep.subr.mxu0 0.0
    %7229 = vmatpush2.msra.mxu0 0.0
    %7230 = vmatprep.subr.mxu0 0.0
    %7231 = vmatpush2.msra.mxu0 0.0
    %7232 = vmatprep.subr.mxu0 0.0
    %7233 = vmatpush2.msra.mxu0 0.0
    %7234 = vmatprep.subr.mxu0 0.0
    %7235 = vmatpush2.msra.mxu0 0.0
    %7236 = vmatprep.subr.mxu0 0.0
    %7237 = vmatpush2.msra.mxu0 0.0
    %7238 = vmatprep.subr.mxu0 0.0
    %7239 = vmatpush2.msra.mxu0 0.0
    %7240 = vmatprep.subr.mxu0 0.0
    %7241 = vmatpush2.msra.mxu0 0.0
    %7242 = vmatprep.subr.mxu0 0.0
    %7243 = vmatpush2.msra.mxu0 0.0
    %7244 = vmatprep.subr.mxu0 0.0
    %7245 = vmatpush2.msra.mxu0 0.0
    %7246 = vmatprep.subr.mxu0 0.0
    %7247 = vmatpush2.msra.mxu0 0.0
    %7248 = vmatprep.subr.mxu0 0.0
    %7249 = vmatpush2.msra.mxu0 0.0
    %7250 = vmatprep.mubr.f32.mxu0 0.0
    %7251 = vmatmul.mubr.f32.gmra.mxu0 %v7113
    %v7252 = vpop.f32.mrf.mxu0
    %v7253 = vadd.f32 0.0, %v7252
    %v7254 = vpop.f32.mrf.mxu0
    %v7255 = vadd.f32 0.0, %v7254
    %7256 = vdwg.mxu0
    %v7261 = vrot.slane %v7182, 6
    %v7262 = vrot.slane %v7184, 6
    %v7263 = vrot.slane %v7253, 6
    %v7264 = vrot.slane %v7255, 6
    %v7269 = vadd.f32 %v5853, %v7261
    %v7270 = vadd.f32 %v5855, %v7262
    %v7271 = vadd.f32 %v5930, %v7263
    %v7272 = vadd.f32 %v5932, %v7264
    %v7273 = vxor.u32 %v7269, 2147483648
    %v7274 = vxor.u32 %v7270, 2147483648
    %v7275 = vxor.u32 %v7271, 2147483648
    %v7276 = vmul.f32 %v7273, 1.442695
    %v7277 = vpow.pop %v7276
    %v7278 = vmul.f32 %v7274, 1.442695
    %v7279 = vpow.pop %v7278
    %v7280 = vmul.f32 %v7275, 1.442695
    %v7281 = vpow.pop %v7280
    %v7282 = vadd.f32 %v7277, 1.0
    %v7283 = vadd.f32 %v7279, 1.0
    %v7284 = vadd.f32 %v7281, 1.0
    %v7285 = vrcp.pop %v7282
    %v7286 = vmul.f32 1.0, %v7285
    %v7287 = vrcp.pop %v7283
    %v7288 = vmul.f32 1.0, %v7287
    %v7289 = vrcp.pop %v7284
    %v7290 = vmul.f32 1.0, %v7289
    %v7291 = vtanh.pop %v7272
    %v7293 = vrot.slane %v7109, 2
    %v7295 = vmul.f32 %v7288, %v7293
    %v7296 = vmul.f32 %v7286, %v7291
    %v7297 = vadd.f32 %v7295, %v7296
    %v7298 = vtanh.pop %v7297
    %v7299 = vmul.f32 %v7290, %v7298
    %v7301 = vrot.slane %v7299, 2
    %7303 = vmatprep.subr.mxu0 %v6002
    %7304 = vmatpush1.msra.mxu0 %v6001
    %7305 = vmatprep.subr.mxu0 %v5998
    %7306 = vmatpush1.msra.mxu0 %v5997
    %7307 = vmatprep.subr.mxu0 %v5994
    %7308 = vmatpush1.msra.mxu0 %v5993
    %7309 = vmatprep.subr.mxu0 %v5990
    %7310 = vmatpush1.msra.mxu0 %v5989
    %7311 = vmatprep.subr.mxu0 %v5986
    %7312 = vmatpush1.msra.mxu0 %v5985
    %7313 = vmatprep.subr.mxu0 %v5982
    %7314 = vmatpush1.msra.mxu0 %v5981
    %7315 = vmatprep.subr.mxu0 %v5978
    %7316 = vmatpush1.msra.mxu0 %v5977
    %7317 = vmatprep.subr.mxu0 %v5974
    %7318 = vmatpush1.msra.mxu0 %v5973
    %7319 = vmatprep.subr.mxu0 %v5970
    %7320 = vmatpush1.msra.mxu0 %v5969
    %7321 = vmatprep.subr.mxu0 %v5966
    %7322 = vmatpush1.msra.mxu0 %v5965
    %7323 = vmatprep.subr.mxu0 %v5962
    %7324 = vmatpush1.msra.mxu0 %v5961
    %7325 = vmatprep.subr.mxu0 %v5958
    %7326 = vmatpush1.msra.mxu0 %v5957
    %7327 = vmatprep.subr.mxu0 %v5954
    %7328 = vmatpush1.msra.mxu0 %v5953
    %7329 = vmatprep.subr.mxu0 %v5950
    %7330 = vmatpush1.msra.mxu0 %v5949
    %7331 = vmatprep.subr.mxu0 %v5946
    %7332 = vmatpush1.msra.mxu0 %v5945
    %7333 = vmatprep.subr.mxu0 %v5942
    %7334 = vmatpush1.msra.mxu0 %v5941
    %7335 = vmatprep.subr.mxu0 0.0
    %7336 = vmatpush2.msra.mxu0 0.0
    %7337 = vmatprep.subr.mxu0 0.0
    %7338 = vmatpush2.msra.mxu0 0.0
    %7339 = vmatprep.subr.mxu0 0.0
    %7340 = vmatpush2.msra.mxu0 0.0
    %7341 = vmatprep.subr.mxu0 0.0
    %7342 = vmatpush2.msra.mxu0 0.0
    %7343 = vmatprep.subr.mxu0 0.0
    %7344 = vmatpush2.msra.mxu0 0.0
    %7345 = vmatprep.subr.mxu0 0.0
    %7346 = vmatpush2.msra.mxu0 0.0
    %7347 = vmatprep.subr.mxu0 0.0
    %7348 = vmatpush2.msra.mxu0 0.0
    %7349 = vmatprep.subr.mxu0 0.0
    %7350 = vmatpush2.msra.mxu0 0.0
    %7351 = vmatprep.subr.mxu0 0.0
    %7352 = vmatpush2.msra.mxu0 0.0
    %7353 = vmatprep.subr.mxu0 0.0
    %7354 = vmatpush2.msra.mxu0 0.0
    %7355 = vmatprep.subr.mxu0 0.0
    %7356 = vmatpush2.msra.mxu0 0.0
    %7357 = vmatprep.subr.mxu0 0.0
    %7358 = vmatpush2.msra.mxu0 0.0
    %7359 = vmatprep.subr.mxu0 0.0
    %7360 = vmatpush2.msra.mxu0 0.0
    %7361 = vmatprep.subr.mxu0 0.0
    %7362 = vmatpush2.msra.mxu0 0.0
    %7363 = vmatprep.subr.mxu0 0.0
    %7364 = vmatpush2.msra.mxu0 0.0
    %7365 = vmatprep.subr.mxu0 0.0
    %7366 = vmatpush2.msra.mxu0 0.0
    %7367 = vmatprep.mubr.f32.mxu0 0.0
    %7368 = vmatmul.mubr.f32.gmra.mxu0 %v7301
    %v7369 = vpop.f32.mrf.mxu0
    %v7370 = vadd.f32 0.0, %v7369
    %v7371 = vpop.f32.mrf.mxu0
    %v7372 = vadd.f32 0.0, %v7371
    %7373 = vdwg.mxu0
    %7374 = vmatprep.subr.mxu0 %v6004
    %7375 = vmatpush1.msra.mxu0 %v6003
    %7376 = vmatprep.subr.mxu0 %v6000
    %7377 = vmatpush1.msra.mxu0 %v5999
    %7378 = vmatprep.subr.mxu0 %v5996
    %7379 = vmatpush1.msra.mxu0 %v5995
    %7380 = vmatprep.subr.mxu0 %v5992
    %7381 = vmatpush1.msra.mxu0 %v5991
    %7382 = vmatprep.subr.mxu0 %v5988
    %7383 = vmatpush1.msra.mxu0 %v5987
    %7384 = vmatprep.subr.mxu0 %v5984
    %7385 = vmatpush1.msra.mxu0 %v5983
    %7386 = vmatprep.subr.mxu0 %v5980
    %7387 = vmatpush1.msra.mxu0 %v5979
    %7388 = vmatprep.subr.mxu0 %v5976
    %7389 = vmatpush1.msra.mxu0 %v5975
    %7390 = vmatprep.subr.mxu0 %v5972
    %7391 = vmatpush1.msra.mxu0 %v5971
    %7392 = vmatprep.subr.mxu0 %v5968
    %7393 = vmatpush1.msra.mxu0 %v5967
    %7394 = vmatprep.subr.mxu0 %v5964
    %7395 = vmatpush1.msra.mxu0 %v5963
    %7396 = vmatprep.subr.mxu0 %v5960
    %7397 = vmatpush1.msra.mxu0 %v5959
    %7398 = vmatprep.subr.mxu0 %v5956
    %7399 = vmatpush1.msra.mxu0 %v5955
    %7400 = vmatprep.subr.mxu0 %v5952
    %7401 = vmatpush1.msra.mxu0 %v5951
    %7402 = vmatprep.subr.mxu0 %v5948
    %7403 = vmatpush1.msra.mxu0 %v5947
    %7404 = vmatprep.subr.mxu0 %v5944
    %7405 = vmatpush1.msra.mxu0 %v5943
    %7406 = vmatprep.subr.mxu0 0.0
    %7407 = vmatpush2.msra.mxu0 0.0
    %7408 = vmatprep.subr.mxu0 0.0
    %7409 = vmatpush2.msra.mxu0 0.0
    %7410 = vmatprep.subr.mxu0 0.0
    %7411 = vmatpush2.msra.mxu0 0.0
    %7412 = vmatprep.subr.mxu0 0.0
    %7413 = vmatpush2.msra.mxu0 0.0
    %7414 = vmatprep.subr.mxu0 0.0
    %7415 = vmatpush2.msra.mxu0 0.0
    %7416 = vmatprep.subr.mxu0 0.0
    %7417 = vmatpush2.msra.mxu0 0.0
    %7418 = vmatprep.subr.mxu0 0.0
    %7419 = vmatpush2.msra.mxu0 0.0
    %7420 = vmatprep.subr.mxu0 0.0
    %7421 = vmatpush2.msra.mxu0 0.0
    %7422 = vmatprep.subr.mxu0 0.0
    %7423 = vmatpush2.msra.mxu0 0.0
    %7424 = vmatprep.subr.mxu0 0.0
    %7425 = vmatpush2.msra.mxu0 0.0
    %7426 = vmatprep.subr.mxu0 0.0
    %7427 = vmatpush2.msra.mxu0 0.0
    %7428 = vmatprep.subr.mxu0 0.0
    %7429 = vmatpush2.msra.mxu0 0.0
    %7430 = vmatprep.subr.mxu0 0.0
    %7431 = vmatpush2.msra.mxu0 0.0
    %7432 = vmatprep.subr.mxu0 0.0
    %7433 = vmatpush2.msra.mxu0 0.0
    %7434 = vmatprep.subr.mxu0 0.0
    %7435 = vmatpush2.msra.mxu0 0.0
    %7436 = vmatprep.subr.mxu0 0.0
    %7437 = vmatpush2.msra.mxu0 0.0
    %7438 = vmatprep.mubr.f32.mxu0 0.0
    %7439 = vmatmul.mubr.f32.gmra.mxu0 %v7301
    %v7440 = vpop.f32.mrf.mxu0
    %v7441 = vadd.f32 0.0, %v7440
    %v7442 = vpop.f32.mrf.mxu0
    %v7443 = vadd.f32 0.0, %v7442
    %7444 = vdwg.mxu0
    %v7445 = vadd.f32 %v5853, %v7370
    %v7446 = vadd.f32 %v5855, %v7372
    %v7447 = vadd.f32 %v5930, %v7441
    %v7448 = vadd.f32 %v5932, %v7443
    %v7449 = vxor.u32 %v7445, 2147483648
    %v7450 = vxor.u32 %v7446, 2147483648
    %v7451 = vxor.u32 %v7447, 2147483648
    %v7452 = vmul.f32 %v7449, 1.442695
    %v7453 = vpow.pop %v7452
    %v7454 = vmul.f32 %v7450, 1.442695
    %v7455 = vpow.pop %v7454
    %v7456 = vmul.f32 %v7451, 1.442695
    %v7457 = vpow.pop %v7456
    %v7458 = vadd.f32 %v7453, 1.0
    %v7459 = vadd.f32 %v7455, 1.0
    %v7460 = vadd.f32 %v7457, 1.0
    %v7461 = vrcp.pop %v7458
    %v7462 = vmul.f32 1.0, %v7461
    %v7463 = vrcp.pop %v7459
    %v7464 = vmul.f32 1.0, %v7463
    %v7465 = vrcp.pop %v7460
    %v7466 = vmul.f32 1.0, %v7465
    %v7467 = vtanh.pop %v7448
    %v7469 = vrot.slane %v7297, 2
    %v7471 = vmul.f32 %v7464, %v7469
    %v7472 = vmul.f32 %v7462, %v7467
    %v7473 = vadd.f32 %v7471, %v7472
    %v7474 = vtanh.pop %v7473
    %v7475 = vmul.f32 %v7466, %v7474
    %v7476 = vsel %vm3781, %v4335, %v4520
    %v7477 = vsel %vm3783, %v7476, %v4708
    %v7478 = vsel %vm3785, %v7477, %v4896
    %v7479 = vsel %vm3781, %v5072, %v5257
    %v7480 = vsel %vm3783, %v7479, %v5445
    %v7481 = vsel %vm3785, %v7480, %v5633
    %v7482 = vsel %vm3781, %v7475, %v7299
    %v7483 = vsel %vm3783, %v7482, %v7111
    %v7484 = vsel %vm3785, %v7483, %v6923
    %v7485 = vsel %vm3781, %v6738, %v6562
    %v7486 = vsel %vm3783, %v7485, %v6374
    %v7487 = vsel %vm3785, %v7486, %v6186
    %s7488 = scalar_lea.vmem [#allocation5], 2048
    %v7489 = vld [vmem:[%s7488] sm:$0xff]
    %v7490 = vld [vmem:[%s7488 + $0x8] sm:$0xff]
    %v7491 = vld [vmem:[%s7488 + $0x10] sm:$0xff]
    %v7492 = vld [vmem:[%s7488 + $0x18] sm:$0xff]
    %v7493 = vld [vmem:[%s7488 + $0x20] sm:$0xff]
    %v7494 = vld [vmem:[%s7488 + $0x28] sm:$0xff]
    %v7495 = vld [vmem:[%s7488 + $0x30] sm:$0xff]
    %v7496 = vld [vmem:[%s7488 + $0x38] sm:$0xff]
    %v7497 = vld [vmem:[%s7488 + $0x40] sm:$0xff]
    %v7498 = vld [vmem:[%s7488 + $0x48] sm:$0xff]
    %v7499 = vld [vmem:[%s7488 + $0x50] sm:$0xff]
    %v7500 = vld [vmem:[%s7488 + $0x58] sm:$0xff]
    %v7501 = vld [vmem:[%s7488 + $0x60] sm:$0xff]
    %v7502 = vld [vmem:[%s7488 + $0x68] sm:$0xff]
    %v7503 = vld [vmem:[%s7488 + $0x70] sm:$0xff]
    %v7504 = vld [vmem:[%s7488 + $0x78] sm:$0xff]
    %v7505 = vld [vmem:[%s7488 + $0x80] sm:$0xff]
    %v7506 = vld [vmem:[%s7488 + $0x88] sm:$0xff]
    %v7507 = vld [vmem:[%s7488 + $0x90] sm:$0xff]
    %v7508 = vld [vmem:[%s7488 + $0x98] sm:$0xff]
    %v7509 = vld [vmem:[%s7488 + $0xa0] sm:$0xff]
    %v7510 = vld [vmem:[%s7488 + $0xa8] sm:$0xff]
    %v7511 = vld [vmem:[%s7488 + $0xb0] sm:$0xff]
    %v7512 = vld [vmem:[%s7488 + $0xb8] sm:$0xff]
    %v7513 = vld [vmem:[%s7488 + $0xc0] sm:$0xff]
    %v7514 = vld [vmem:[%s7488 + $0xc8] sm:$0xff]
    %v7515 = vld [vmem:[%s7488 + $0xd0] sm:$0xff]
    %v7516 = vld [vmem:[%s7488 + $0xd8] sm:$0xff]
    %v7517 = vld [vmem:[%s7488 + $0xe0] sm:$0xff]
    %v7518 = vld [vmem:[%s7488 + $0xe8] sm:$0xff]
    %v7519 = vld [vmem:[%s7488 + $0xf0] sm:$0xff]
    %v7520 = vld [vmem:[%s7488 + $0xf8] sm:$0xff]
    %v7521 = vld [vmem:[%s7488 + $0x100] sm:$0xff]
    %v7522 = vld [vmem:[%s7488 + $0x108] sm:$0xff]
    %v7523 = vld [vmem:[%s7488 + $0x110] sm:$0xff]
    %v7524 = vld [vmem:[%s7488 + $0x118] sm:$0xff]
    %v7525 = vld [vmem:[%s7488 + $0x120] sm:$0xff]
    %v7526 = vld [vmem:[%s7488 + $0x128] sm:$0xff]
    %v7527 = vld [vmem:[%s7488 + $0x130] sm:$0xff]
    %v7528 = vld [vmem:[%s7488 + $0x138] sm:$0xff]
    %v7529 = vld [vmem:[%s7488 + $0x140] sm:$0xff]
    %v7530 = vld [vmem:[%s7488 + $0x148] sm:$0xff]
    %v7531 = vld [vmem:[%s7488 + $0x150] sm:$0xff]
    %v7532 = vld [vmem:[%s7488 + $0x158] sm:$0xff]
    %v7533 = vld [vmem:[%s7488 + $0x160] sm:$0xff]
    %v7534 = vld [vmem:[%s7488 + $0x168] sm:$0xff]
    %v7535 = vld [vmem:[%s7488 + $0x170] sm:$0xff]
    %v7536 = vld [vmem:[%s7488 + $0x178] sm:$0xff]
    %v7537 = vld [vmem:[%s7488 + $0x180] sm:$0xff]
    %v7538 = vld [vmem:[%s7488 + $0x188] sm:$0xff]
    %v7539 = vld [vmem:[%s7488 + $0x190] sm:$0xff]
    %v7540 = vld [vmem:[%s7488 + $0x198] sm:$0xff]
    %v7541 = vld [vmem:[%s7488 + $0x1a0] sm:$0xff]
    %v7542 = vld [vmem:[%s7488 + $0x1a8] sm:$0xff]
    %v7543 = vld [vmem:[%s7488 + $0x1b0] sm:$0xff]
    %v7544 = vld [vmem:[%s7488 + $0x1b8] sm:$0xff]
    %v7545 = vld [vmem:[%s7488 + $0x1c0] sm:$0xff]
    %v7546 = vld [vmem:[%s7488 + $0x1c8] sm:$0xff]
    %v7547 = vld [vmem:[%s7488 + $0x1d0] sm:$0xff]
    %v7548 = vld [vmem:[%s7488 + $0x1d8] sm:$0xff]
    %v7549 = vld [vmem:[%s7488 + $0x1e0] sm:$0xff]
    %v7550 = vld [vmem:[%s7488 + $0x1e8] sm:$0xff]
    %v7551 = vld [vmem:[%s7488 + $0x1f0] sm:$0xff]
    %v7552 = vld [vmem:[%s7488 + $0x1f8] sm:$0xff]
    %v7553 = vld [vmem:[%s7488 + $0x200] sm:$0xff]
    %v7554 = vld [vmem:[%s7488 + $0x208] sm:$0xff]
    %v7555 = vld [vmem:[%s7488 + $0x210] sm:$0xff]
    %v7556 = vld [vmem:[%s7488 + $0x218] sm:$0xff]
    %v7557 = vld [vmem:[%s7488 + $0x220] sm:$0xff]
    %v7558 = vld [vmem:[%s7488 + $0x228] sm:$0xff]
    %v7559 = vld [vmem:[%s7488 + $0x230] sm:$0xff]
    %v7560 = vld [vmem:[%s7488 + $0x238] sm:$0xff]
    %v7561 = vld [vmem:[%s7488 + $0x240] sm:$0xff]
    %v7562 = vld [vmem:[%s7488 + $0x248] sm:$0xff]
    %v7563 = vld [vmem:[%s7488 + $0x250] sm:$0xff]
    %v7564 = vld [vmem:[%s7488 + $0x258] sm:$0xff]
    %v7565 = vld [vmem:[%s7488 + $0x260] sm:$0xff]
    %v7566 = vld [vmem:[%s7488 + $0x268] sm:$0xff]
    %v7567 = vld [vmem:[%s7488 + $0x270] sm:$0xff]
    %v7568 = vld [vmem:[%s7488 + $0x278] sm:$0xff]
    %v7569 = vld [vmem:[%s7488 + $0x280] sm:$0xff]
    %v7570 = vld [vmem:[%s7488 + $0x288] sm:$0xff]
    %v7571 = vld [vmem:[%s7488 + $0x290] sm:$0xff]
    %v7572 = vld [vmem:[%s7488 + $0x298] sm:$0xff]
    %v7573 = vld [vmem:[%s7488 + $0x2a0] sm:$0xff]
    %v7574 = vld [vmem:[%s7488 + $0x2a8] sm:$0xff]
    %v7575 = vld [vmem:[%s7488 + $0x2b0] sm:$0xff]
    %v7576 = vld [vmem:[%s7488 + $0x2b8] sm:$0xff]
    %v7577 = vld [vmem:[%s7488 + $0x2c0] sm:$0xff]
    %v7578 = vld [vmem:[%s7488 + $0x2c8] sm:$0xff]
    %v7579 = vld [vmem:[%s7488 + $0x2d0] sm:$0xff]
    %v7580 = vld [vmem:[%s7488 + $0x2d8] sm:$0xff]
    %v7581 = vld [vmem:[%s7488 + $0x2e0] sm:$0xff]
    %v7582 = vld [vmem:[%s7488 + $0x2e8] sm:$0xff]
    %v7583 = vld [vmem:[%s7488 + $0x2f0] sm:$0xff]
    %v7584 = vld [vmem:[%s7488 + $0x2f8] sm:$0xff]
    %v7585 = vld [vmem:[%s7488 + $0x300] sm:$0xff]
    %v7586 = vld [vmem:[%s7488 + $0x308] sm:$0xff]
    %v7587 = vld [vmem:[%s7488 + $0x310] sm:$0xff]
    %v7588 = vld [vmem:[%s7488 + $0x318] sm:$0xff]
    %v7589 = vld [vmem:[%s7488 + $0x320] sm:$0xff]
    %v7590 = vld [vmem:[%s7488 + $0x328] sm:$0xff]
    %v7591 = vld [vmem:[%s7488 + $0x330] sm:$0xff]
    %v7592 = vld [vmem:[%s7488 + $0x338] sm:$0xff]
    %v7593 = vld [vmem:[%s7488 + $0x340] sm:$0xff]
    %v7594 = vld [vmem:[%s7488 + $0x348] sm:$0xff]
    %v7595 = vld [vmem:[%s7488 + $0x350] sm:$0xff]
    %v7596 = vld [vmem:[%s7488 + $0x358] sm:$0xff]
    %v7597 = vld [vmem:[%s7488 + $0x360] sm:$0xff]
    %v7598 = vld [vmem:[%s7488 + $0x368] sm:$0xff]
    %v7599 = vld [vmem:[%s7488 + $0x370] sm:$0xff]
    %v7600 = vld [vmem:[%s7488 + $0x378] sm:$0xff]
    %v7601 = vld [vmem:[%s7488 + $0x380] sm:$0xff]
    %v7602 = vld [vmem:[%s7488 + $0x388] sm:$0xff]
    %v7603 = vld [vmem:[%s7488 + $0x390] sm:$0xff]
    %v7604 = vld [vmem:[%s7488 + $0x398] sm:$0xff]
    %v7605 = vld [vmem:[%s7488 + $0x3a0] sm:$0xff]
    %v7606 = vld [vmem:[%s7488 + $0x3a8] sm:$0xff]
    %v7607 = vld [vmem:[%s7488 + $0x3b0] sm:$0xff]
    %v7608 = vld [vmem:[%s7488 + $0x3b8] sm:$0xff]
    %v7609 = vld [vmem:[%s7488 + $0x3c0] sm:$0xff]
    %v7610 = vld [vmem:[%s7488 + $0x3c8] sm:$0xff]
    %v7611 = vld [vmem:[%s7488 + $0x3d0] sm:$0xff]
    %v7612 = vld [vmem:[%s7488 + $0x3d8] sm:$0xff]
    %v7613 = vld [vmem:[%s7488 + $0x3e0] sm:$0xff]
    %v7614 = vld [vmem:[%s7488 + $0x3e8] sm:$0xff]
    %v7615 = vld [vmem:[%s7488 + $0x3f0] sm:$0xff]
    %v7616 = vld [vmem:[%s7488 + $0x3f8] sm:$0xff]
    %s7617 = scalar_lea.vmem [#allocation8], 16
    %v7618 = vld [vmem:[%s7617] sm:$0xf]
    %v7620 = vlaneseq
    %v7621 = vshrl.u32 %v7620, 7
    %v7622 = vsub.s32 0, %v7621
    %v7623 = vrot.slane %v7618, %v7622
    %v7624 = vlaneseq
    %v7625 = vshrl.u32 %v7624, 7
    %v7626 = vsub.s32 1, %v7625
    %v7627 = vrot.slane %v7618, %v7626
    %v7628 = vlaneseq
    %v7629 = vshrl.u32 %v7628, 7
    %v7630 = vsub.s32 2, %v7629
    %v7631 = vrot.slane %v7618, %v7630
    %v7632 = vlaneseq
    %v7633 = vshrl.u32 %v7632, 7
    %v7634 = vsub.s32 3, %v7633
    %v7635 = vrot.slane %v7618, %v7634
    %7640 = vmatprep.subr.mxu0 %v7550
    %7641 = vmatpush1.msra.mxu0 %v7549
    %7642 = vmatprep.subr.mxu0 %v7546
    %7643 = vmatpush1.msra.mxu0 %v7545
    %7644 = vmatprep.subr.mxu0 %v7542
    %7645 = vmatpush1.msra.mxu0 %v7541
    %7646 = vmatprep.subr.mxu0 %v7538
    %7647 = vmatpush1.msra.mxu0 %v7537
    %7648 = vmatprep.subr.mxu0 %v7534
    %7649 = vmatpush1.msra.mxu0 %v7533
    %7650 = vmatprep.subr.mxu0 %v7530
    %7651 = vmatpush1.msra.mxu0 %v7529
    %7652 = vmatprep.subr.mxu0 %v7526
    %7653 = vmatpush1.msra.mxu0 %v7525
    %7654 = vmatprep.subr.mxu0 %v7522
    %7655 = vmatpush1.msra.mxu0 %v7521
    %7656 = vmatprep.subr.mxu0 %v7518
    %7657 = vmatpush1.msra.mxu0 %v7517
    %7658 = vmatprep.subr.mxu0 %v7514
    %7659 = vmatpush1.msra.mxu0 %v7513
    %7660 = vmatprep.subr.mxu0 %v7510
    %7661 = vmatpush1.msra.mxu0 %v7509
    %7662 = vmatprep.subr.mxu0 %v7506
    %7663 = vmatpush1.msra.mxu0 %v7505
    %7664 = vmatprep.subr.mxu0 %v7502
    %7665 = vmatpush1.msra.mxu0 %v7501
    %7666 = vmatprep.subr.mxu0 %v7498
    %7667 = vmatpush1.msra.mxu0 %v7497
    %7668 = vmatprep.subr.mxu0 %v7494
    %7669 = vmatpush1.msra.mxu0 %v7493
    %7670 = vmatprep.subr.mxu0 %v7490
    %7671 = vmatpush1.msra.mxu0 %v7489
    %7672 = vmatprep.subr.mxu0 %v7614
    %7673 = vmatpush2.msra.mxu0 %v7613
    %7674 = vmatprep.subr.mxu0 %v7610
    %7675 = vmatpush2.msra.mxu0 %v7609
    %7676 = vmatprep.subr.mxu0 %v7606
    %7677 = vmatpush2.msra.mxu0 %v7605
    %7678 = vmatprep.subr.mxu0 %v7602
    %7679 = vmatpush2.msra.mxu0 %v7601
    %7680 = vmatprep.subr.mxu0 %v7598
    %7681 = vmatpush2.msra.mxu0 %v7597
    %7682 = vmatprep.subr.mxu0 %v7594
    %7683 = vmatpush2.msra.mxu0 %v7593
    %7684 = vmatprep.subr.mxu0 %v7590
    %7685 = vmatpush2.msra.mxu0 %v7589
    %7686 = vmatprep.subr.mxu0 %v7586
    %7687 = vmatpush2.msra.mxu0 %v7585
    %7688 = vmatprep.subr.mxu0 %v7582
    %7689 = vmatpush2.msra.mxu0 %v7581
    %7690 = vmatprep.subr.mxu0 %v7578
    %7691 = vmatpush2.msra.mxu0 %v7577
    %7692 = vmatprep.subr.mxu0 %v7574
    %7693 = vmatpush2.msra.mxu0 %v7573
    %7694 = vmatprep.subr.mxu0 %v7570
    %7695 = vmatpush2.msra.mxu0 %v7569
    %7696 = vmatprep.subr.mxu0 %v7566
    %7697 = vmatpush2.msra.mxu0 %v7565
    %7698 = vmatprep.subr.mxu0 %v7562
    %7699 = vmatpush2.msra.mxu0 %v7561
    %7700 = vmatprep.subr.mxu0 %v7558
    %7701 = vmatpush2.msra.mxu0 %v7557
    %7702 = vmatprep.subr.mxu0 %v7554
    %7703 = vmatpush2.msra.mxu0 %v7553
    %7704 = vmatprep.mubr.f32.mxu0 %v7484
    %7705 = vmatmul.mubr.f32.gmra.mxu0 %v7478
    %v7706 = vpop.f32.mrf.mxu0
    %v7707 = vadd.f32 %v7623, %v7706
    %v7708 = vpop.f32.mrf.mxu0
    %v7709 = vadd.f32 %v7627, %v7708
    %7710 = vmatprep.mubr.f32.mxu0 %v7487
    %7711 = vmatmul.mubr.f32.gmra.mxu0 %v7481
    %v7712 = vpop.f32.mrf.mxu0
    %v7713 = vadd.f32 %v7623, %v7712
    %v7714 = vpop.f32.mrf.mxu0
    %v7715 = vadd.f32 %v7627, %v7714
    %7716 = vdwg.mxu0
    %7717 = vmatprep.subr.mxu0 %v7552
    %7718 = vmatpush1.msra.mxu0 %v7551
    %7719 = vmatprep.subr.mxu0 %v7548
    %7720 = vmatpush1.msra.mxu0 %v7547
    %7721 = vmatprep.subr.mxu0 %v7544
    %7722 = vmatpush1.msra.mxu0 %v7543
    %7723 = vmatprep.subr.mxu0 %v7540
    %7724 = vmatpush1.msra.mxu0 %v7539
    %7725 = vmatprep.subr.mxu0 %v7536
    %7726 = vmatpush1.msra.mxu0 %v7535
    %7727 = vmatprep.subr.mxu0 %v7532
    %7728 = vmatpush1.msra.mxu0 %v7531
    %7729 = vmatprep.subr.mxu0 %v7528
    %7730 = vmatpush1.msra.mxu0 %v7527
    %7731 = vmatprep.subr.mxu0 %v7524
    %7732 = vmatpush1.msra.mxu0 %v7523
    %7733 = vmatprep.subr.mxu0 %v7520
    %7734 = vmatpush1.msra.mxu0 %v7519
    %7735 = vmatprep.subr.mxu0 %v7516
    %7736 = vmatpush1.msra.mxu0 %v7515
    %7737 = vmatprep.subr.mxu0 %v7512
    %7738 = vmatpush1.msra.mxu0 %v7511
    %7739 = vmatprep.subr.mxu0 %v7508
    %7740 = vmatpush1.msra.mxu0 %v7507
    %7741 = vmatprep.subr.mxu0 %v7504
    %7742 = vmatpush1.msra.mxu0 %v7503
    %7743 = vmatprep.subr.mxu0 %v7500
    %7744 = vmatpush1.msra.mxu0 %v7499
    %7745 = vmatprep.subr.mxu0 %v7496
    %7746 = vmatpush1.msra.mxu0 %v7495
    %7747 = vmatprep.subr.mxu0 %v7492
    %7748 = vmatpush1.msra.mxu0 %v7491
    %7749 = vmatprep.subr.mxu0 %v7616
    %7750 = vmatpush2.msra.mxu0 %v7615
    %7751 = vmatprep.subr.mxu0 %v7612
    %7752 = vmatpush2.msra.mxu0 %v7611
    %7753 = vmatprep.subr.mxu0 %v7608
    %7754 = vmatpush2.msra.mxu0 %v7607
    %7755 = vmatprep.subr.mxu0 %v7604
    %7756 = vmatpush2.msra.mxu0 %v7603
    %7757 = vmatprep.subr.mxu0 %v7600
    %7758 = vmatpush2.msra.mxu0 %v7599
    %7759 = vmatprep.subr.mxu0 %v7596
    %7760 = vmatpush2.msra.mxu0 %v7595
    %7761 = vmatprep.subr.mxu0 %v7592
    %7762 = vmatpush2.msra.mxu0 %v7591
    %7763 = vmatprep.subr.mxu0 %v7588
    %7764 = vmatpush2.msra.mxu0 %v7587
    %7765 = vmatprep.subr.mxu0 %v7584
    %7766 = vmatpush2.msra.mxu0 %v7583
    %7767 = vmatprep.subr.mxu0 %v7580
    %7768 = vmatpush2.msra.mxu0 %v7579
    %7769 = vmatprep.subr.mxu0 %v7576
    %7770 = vmatpush2.msra.mxu0 %v7575
    %7771 = vmatprep.subr.mxu0 %v7572
    %7772 = vmatpush2.msra.mxu0 %v7571
    %7773 = vmatprep.subr.mxu0 %v7568
    %7774 = vmatpush2.msra.mxu0 %v7567
    %7775 = vmatprep.subr.mxu0 %v7564
    %7776 = vmatpush2.msra.mxu0 %v7563
    %7777 = vmatprep.subr.mxu0 %v7560
    %7778 = vmatpush2.msra.mxu0 %v7559
    %7779 = vmatprep.subr.mxu0 %v7556
    %7780 = vmatpush2.msra.mxu0 %v7555
    %7781 = vmatprep.mubr.f32.mxu0 %v7484
    %7782 = vmatmul.mubr.f32.gmra.mxu0 %v7478
    %v7783 = vpop.f32.mrf.mxu0
    %v7784 = vadd.f32 %v7631, %v7783
    %v7785 = vpop.f32.mrf.mxu0
    %v7786 = vadd.f32 %v7635, %v7785
    %7787 = vmatprep.mubr.f32.mxu0 %v7487
    %7788 = vmatmul.mubr.f32.gmra.mxu0 %v7481
    %v7789 = vpop.f32.mrf.mxu0
    %v7790 = vadd.f32 %v7631, %v7789
    %v7791 = vpop.f32.mrf.mxu0
    %v7792 = vadd.f32 %v7635, %v7791
    %7793 = vdwg.mxu0
    %s7794 = scalar_lea.vmem [#allocation7], 2048
    %v7795 = vld [vmem:[%s7794] sm:$0xff]
    %v7796 = vld [vmem:[%s7794 + $0x8] sm:$0xff]
    %v7797 = vld [vmem:[%s7794 + $0x10] sm:$0xff]
    %v7798 = vld [vmem:[%s7794 + $0x18] sm:$0xff]
    %v7799 = vld [vmem:[%s7794 + $0x20] sm:$0xff]
    %v7800 = vld [vmem:[%s7794 + $0x28] sm:$0xff]
    %v7801 = vld [vmem:[%s7794 + $0x30] sm:$0xff]
    %v7802 = vld [vmem:[%s7794 + $0x38] sm:$0xff]
    %v7803 = vld [vmem:[%s7794 + $0x40] sm:$0xff]
    %v7804 = vld [vmem:[%s7794 + $0x48] sm:$0xff]
    %v7805 = vld [vmem:[%s7794 + $0x50] sm:$0xff]
    %v7806 = vld [vmem:[%s7794 + $0x58] sm:$0xff]
    %v7807 = vld [vmem:[%s7794 + $0x60] sm:$0xff]
    %v7808 = vld [vmem:[%s7794 + $0x68] sm:$0xff]
    %v7809 = vld [vmem:[%s7794 + $0x70] sm:$0xff]
    %v7810 = vld [vmem:[%s7794 + $0x78] sm:$0xff]
    %v7811 = vld [vmem:[%s7794 + $0x80] sm:$0xff]
    %v7812 = vld [vmem:[%s7794 + $0x88] sm:$0xff]
    %v7813 = vld [vmem:[%s7794 + $0x90] sm:$0xff]
    %v7814 = vld [vmem:[%s7794 + $0x98] sm:$0xff]
    %v7815 = vld [vmem:[%s7794 + $0xa0] sm:$0xff]
    %v7816 = vld [vmem:[%s7794 + $0xa8] sm:$0xff]
    %v7817 = vld [vmem:[%s7794 + $0xb0] sm:$0xff]
    %v7818 = vld [vmem:[%s7794 + $0xb8] sm:$0xff]
    %v7819 = vld [vmem:[%s7794 + $0xc0] sm:$0xff]
    %v7820 = vld [vmem:[%s7794 + $0xc8] sm:$0xff]
    %v7821 = vld [vmem:[%s7794 + $0xd0] sm:$0xff]
    %v7822 = vld [vmem:[%s7794 + $0xd8] sm:$0xff]
    %v7823 = vld [vmem:[%s7794 + $0xe0] sm:$0xff]
    %v7824 = vld [vmem:[%s7794 + $0xe8] sm:$0xff]
    %v7825 = vld [vmem:[%s7794 + $0xf0] sm:$0xff]
    %v7826 = vld [vmem:[%s7794 + $0xf8] sm:$0xff]
    %v7827 = vld [vmem:[%s7794 + $0x100] sm:$0xff]
    %v7828 = vld [vmem:[%s7794 + $0x108] sm:$0xff]
    %v7829 = vld [vmem:[%s7794 + $0x110] sm:$0xff]
    %v7830 = vld [vmem:[%s7794 + $0x118] sm:$0xff]
    %v7831 = vld [vmem:[%s7794 + $0x120] sm:$0xff]
    %v7832 = vld [vmem:[%s7794 + $0x128] sm:$0xff]
    %v7833 = vld [vmem:[%s7794 + $0x130] sm:$0xff]
    %v7834 = vld [vmem:[%s7794 + $0x138] sm:$0xff]
    %v7835 = vld [vmem:[%s7794 + $0x140] sm:$0xff]
    %v7836 = vld [vmem:[%s7794 + $0x148] sm:$0xff]
    %v7837 = vld [vmem:[%s7794 + $0x150] sm:$0xff]
    %v7838 = vld [vmem:[%s7794 + $0x158] sm:$0xff]
    %v7839 = vld [vmem:[%s7794 + $0x160] sm:$0xff]
    %v7840 = vld [vmem:[%s7794 + $0x168] sm:$0xff]
    %v7841 = vld [vmem:[%s7794 + $0x170] sm:$0xff]
    %v7842 = vld [vmem:[%s7794 + $0x178] sm:$0xff]
    %v7843 = vld [vmem:[%s7794 + $0x180] sm:$0xff]
    %v7844 = vld [vmem:[%s7794 + $0x188] sm:$0xff]
    %v7845 = vld [vmem:[%s7794 + $0x190] sm:$0xff]
    %v7846 = vld [vmem:[%s7794 + $0x198] sm:$0xff]
    %v7847 = vld [vmem:[%s7794 + $0x1a0] sm:$0xff]
    %v7848 = vld [vmem:[%s7794 + $0x1a8] sm:$0xff]
    %v7849 = vld [vmem:[%s7794 + $0x1b0] sm:$0xff]
    %v7850 = vld [vmem:[%s7794 + $0x1b8] sm:$0xff]
    %v7851 = vld [vmem:[%s7794 + $0x1c0] sm:$0xff]
    %v7852 = vld [vmem:[%s7794 + $0x1c8] sm:$0xff]
    %v7853 = vld [vmem:[%s7794 + $0x1d0] sm:$0xff]
    %v7854 = vld [vmem:[%s7794 + $0x1d8] sm:$0xff]
    %v7855 = vld [vmem:[%s7794 + $0x1e0] sm:$0xff]
    %v7856 = vld [vmem:[%s7794 + $0x1e8] sm:$0xff]
    %v7857 = vld [vmem:[%s7794 + $0x1f0] sm:$0xff]
    %v7858 = vld [vmem:[%s7794 + $0x1f8] sm:$0xff]
    %7859 = vmatprep.subr.mxu0 %v7856
    %7860 = vmatpush1.msra.mxu0 %v7855
    %7861 = vmatprep.subr.mxu0 %v7852
    %7862 = vmatpush1.msra.mxu0 %v7851
    %7863 = vmatprep.subr.mxu0 %v7848
    %7864 = vmatpush1.msra.mxu0 %v7847
    %7865 = vmatprep.subr.mxu0 %v7844
    %7866 = vmatpush1.msra.mxu0 %v7843
    %7867 = vmatprep.subr.mxu0 %v7840
    %7868 = vmatpush1.msra.mxu0 %v7839
    %7869 = vmatprep.subr.mxu0 %v7836
    %7870 = vmatpush1.msra.mxu0 %v7835
    %7871 = vmatprep.subr.mxu0 %v7832
    %7872 = vmatpush1.msra.mxu0 %v7831
    %7873 = vmatprep.subr.mxu0 %v7828
    %7874 = vmatpush1.msra.mxu0 %v7827
    %7875 = vmatprep.subr.mxu0 %v7824
    %7876 = vmatpush1.msra.mxu0 %v7823
    %7877 = vmatprep.subr.mxu0 %v7820
    %7878 = vmatpush1.msra.mxu0 %v7819
    %7879 = vmatprep.subr.mxu0 %v7816
    %7880 = vmatpush1.msra.mxu0 %v7815
    %7881 = vmatprep.subr.mxu0 %v7812
    %7882 = vmatpush1.msra.mxu0 %v7811
    %7883 = vmatprep.subr.mxu0 %v7808
    %7884 = vmatpush1.msra.mxu0 %v7807
    %7885 = vmatprep.subr.mxu0 %v7804
    %7886 = vmatpush1.msra.mxu0 %v7803
    %7887 = vmatprep.subr.mxu0 %v7800
    %7888 = vmatpush1.msra.mxu0 %v7799
    %7889 = vmatprep.subr.mxu0 %v7796
    %7890 = vmatpush1.msra.mxu0 %v7795
    %7891 = vmatprep.subr.mxu0 0.0
    %7892 = vmatpush2.msra.mxu0 0.0
    %7893 = vmatprep.subr.mxu0 0.0
    %7894 = vmatpush2.msra.mxu0 0.0
    %7895 = vmatprep.subr.mxu0 0.0
    %7896 = vmatpush2.msra.mxu0 0.0
    %7897 = vmatprep.subr.mxu0 0.0
    %7898 = vmatpush2.msra.mxu0 0.0
    %7899 = vmatprep.subr.mxu0 0.0
    %7900 = vmatpush2.msra.mxu0 0.0
    %7901 = vmatprep.subr.mxu0 0.0
    %7902 = vmatpush2.msra.mxu0 0.0
    %7903 = vmatprep.subr.mxu0 0.0
    %7904 = vmatpush2.msra.mxu0 0.0
    %7905 = vmatprep.subr.mxu0 0.0
    %7906 = vmatpush2.msra.mxu0 0.0
    %7907 = vmatprep.subr.mxu0 0.0
    %7908 = vmatpush2.msra.mxu0 0.0
    %7909 = vmatprep.subr.mxu0 0.0
    %7910 = vmatpush2.msra.mxu0 0.0
    %7911 = vmatprep.subr.mxu0 0.0
    %7912 = vmatpush2.msra.mxu0 0.0
    %7913 = vmatprep.subr.mxu0 0.0
    %7914 = vmatpush2.msra.mxu0 0.0
    %7915 = vmatprep.subr.mxu0 0.0
    %7916 = vmatpush2.msra.mxu0 0.0
    %7917 = vmatprep.subr.mxu0 0.0
    %7918 = vmatpush2.msra.mxu0 0.0
    %7919 = vmatprep.subr.mxu0 0.0
    %7920 = vmatpush2.msra.mxu0 0.0
    %7921 = vmatprep.subr.mxu0 0.0
    %7922 = vmatpush2.msra.mxu0 0.0
    %7923 = vmatprep.mubr.f32.mxu0 0.0
    %7924 = vmatmul.mubr.f32.gmra.mxu0 0.0
    %v7925 = vpop.f32.mrf.mxu0
    %v7926 = vadd.f32 0.0, %v7925
    %v7927 = vpop.f32.mrf.mxu0
    %v7928 = vadd.f32 0.0, %v7927
    %7929 = vdwg.mxu0
    %7930 = vmatprep.subr.mxu0 %v7858
    %7931 = vmatpush1.msra.mxu0 %v7857
    %7932 = vmatprep.subr.mxu0 %v7854
    %7933 = vmatpush1.msra.mxu0 %v7853
    %7934 = vmatprep.subr.mxu0 %v7850
    %7935 = vmatpush1.msra.mxu0 %v7849
    %7936 = vmatprep.subr.mxu0 %v7846
    %7937 = vmatpush1.msra.mxu0 %v7845
    %7938 = vmatprep.subr.mxu0 %v7842
    %7939 = vmatpush1.msra.mxu0 %v7841
    %7940 = vmatprep.subr.mxu0 %v7838
    %7941 = vmatpush1.msra.mxu0 %v7837
    %7942 = vmatprep.subr.mxu0 %v7834
    %7943 = vmatpush1.msra.mxu0 %v7833
    %7944 = vmatprep.subr.mxu0 %v7830
    %7945 = vmatpush1.msra.mxu0 %v7829
    %7946 = vmatprep.subr.mxu0 %v7826
    %7947 = vmatpush1.msra.mxu0 %v7825
    %7948 = vmatprep.subr.mxu0 %v7822
    %7949 = vmatpush1.msra.mxu0 %v7821
    %7950 = vmatprep.subr.mxu0 %v7818
    %7951 = vmatpush1.msra.mxu0 %v7817
    %7952 = vmatprep.subr.mxu0 %v7814
    %7953 = vmatpush1.msra.mxu0 %v7813
    %7954 = vmatprep.subr.mxu0 %v7810
    %7955 = vmatpush1.msra.mxu0 %v7809
    %7956 = vmatprep.subr.mxu0 %v7806
    %7957 = vmatpush1.msra.mxu0 %v7805
    %7958 = vmatprep.subr.mxu0 %v7802
    %7959 = vmatpush1.msra.mxu0 %v7801
    %7960 = vmatprep.subr.mxu0 %v7798
    %7961 = vmatpush1.msra.mxu0 %v7797
    %7962 = vmatprep.subr.mxu0 0.0
    %7963 = vmatpush2.msra.mxu0 0.0
    %7964 = vmatprep.subr.mxu0 0.0
    %7965 = vmatpush2.msra.mxu0 0.0
    %7966 = vmatprep.subr.mxu0 0.0
    %7967 = vmatpush2.msra.mxu0 0.0
    %7968 = vmatprep.subr.mxu0 0.0
    %7969 = vmatpush2.msra.mxu0 0.0
    %7970 = vmatprep.subr.mxu0 0.0
    %7971 = vmatpush2.msra.mxu0 0.0
    %7972 = vmatprep.subr.mxu0 0.0
    %7973 = vmatpush2.msra.mxu0 0.0
    %7974 = vmatprep.subr.mxu0 0.0
    %7975 = vmatpush2.msra.mxu0 0.0
    %7976 = vmatprep.subr.mxu0 0.0
    %7977 = vmatpush2.msra.mxu0 0.0
    %7978 = vmatprep.subr.mxu0 0.0
    %7979 = vmatpush2.msra.mxu0 0.0
    %7980 = vmatprep.subr.mxu0 0.0
    %7981 = vmatpush2.msra.mxu0 0.0
    %7982 = vmatprep.subr.mxu0 0.0
    %7983 = vmatpush2.msra.mxu0 0.0
    %7984 = vmatprep.subr.mxu0 0.0
    %7985 = vmatpush2.msra.mxu0 0.0
    %7986 = vmatprep.subr.mxu0 0.0
    %7987 = vmatpush2.msra.mxu0 0.0
    %7988 = vmatprep.subr.mxu0 0.0
    %7989 = vmatpush2.msra.mxu0 0.0
    %7990 = vmatprep.subr.mxu0 0.0
    %7991 = vmatpush2.msra.mxu0 0.0
    %7992 = vmatprep.subr.mxu0 0.0
    %7993 = vmatpush2.msra.mxu0 0.0
    %7994 = vmatprep.mubr.f32.mxu0 0.0
    %7995 = vmatmul.mubr.f32.gmra.mxu0 0.0
    %v7996 = vpop.f32.mrf.mxu0
    %v7997 = vadd.f32 0.0, %v7996
    %v7998 = vpop.f32.mrf.mxu0
    %v7999 = vadd.f32 0.0, %v7998
    %8000 = vdwg.mxu0
    %v8001 = vadd.f32 %v7707, %v7926
    %v8002 = vadd.f32 %v7709, %v7928
    %v8003 = vadd.f32 %v7784, %v7997
    %v8004 = vadd.f32 %v7786, %v7999
    %v8005 = vxor.u32 %v8001, 2147483648
    %v8006 = vxor.u32 %v8002, 2147483648
    %v8007 = vxor.u32 %v8003, 2147483648
    %v8008 = vmul.f32 %v8005, 1.442695
    %v8009 = vpow.pop %v8008
    %v8010 = vmul.f32 %v8006, 1.442695
    %v8011 = vpow.pop %v8010
    %v8012 = vmul.f32 %v8007, 1.442695
    %v8013 = vpow.pop %v8012
    %v8014 = vadd.f32 %v8009, 1.0
    %v8015 = vadd.f32 %v8011, 1.0
    %v8016 = vadd.f32 %v8013, 1.0
    %v8017 = vrcp.pop %v8014
    %v8018 = vmul.f32 1.0, %v8017
    %v8019 = vrcp.pop %v8015
    %v8020 = vmul.f32 1.0, %v8019
    %v8021 = vrcp.pop %v8016
    %v8022 = vmul.f32 1.0, %v8021
    %v8023 = vtanh.pop %v8004
    %v8024 = vmul.f32 %v8020, 0.0
    %v8025 = vmul.f32 %v8018, %v8023
    %v8026 = vadd.f32 %v8024, %v8025
    %v8027 = vtanh.pop %v8026
    %v8028 = vmul.f32 %v8022, %v8027
    %8029 = vmatprep.subr.mxu0 %v7856
    %8030 = vmatpush1.msra.mxu0 %v7855
    %8031 = vmatprep.subr.mxu0 %v7852
    %8032 = vmatpush1.msra.mxu0 %v7851
    %8033 = vmatprep.subr.mxu0 %v7848
    %8034 = vmatpush1.msra.mxu0 %v7847
    %8035 = vmatprep.subr.mxu0 %v7844
    %8036 = vmatpush1.msra.mxu0 %v7843
    %8037 = vmatprep.subr.mxu0 %v7840
    %8038 = vmatpush1.msra.mxu0 %v7839
    %8039 = vmatprep.subr.mxu0 %v7836
    %8040 = vmatpush1.msra.mxu0 %v7835
    %8041 = vmatprep.subr.mxu0 %v7832
    %8042 = vmatpush1.msra.mxu0 %v7831
    %8043 = vmatprep.subr.mxu0 %v7828
    %8044 = vmatpush1.msra.mxu0 %v7827
    %8045 = vmatprep.subr.mxu0 %v7824
    %8046 = vmatpush1.msra.mxu0 %v7823
    %8047 = vmatprep.subr.mxu0 %v7820
    %8048 = vmatpush1.msra.mxu0 %v7819
    %8049 = vmatprep.subr.mxu0 %v7816
    %8050 = vmatpush1.msra.mxu0 %v7815
    %8051 = vmatprep.subr.mxu0 %v7812
    %8052 = vmatpush1.msra.mxu0 %v7811
    %8053 = vmatprep.subr.mxu0 %v7808
    %8054 = vmatpush1.msra.mxu0 %v7807
    %8055 = vmatprep.subr.mxu0 %v7804
    %8056 = vmatpush1.msra.mxu0 %v7803
    %8057 = vmatprep.subr.mxu0 %v7800
    %8058 = vmatpush1.msra.mxu0 %v7799
    %8059 = vmatprep.subr.mxu0 %v7796
    %8060 = vmatpush1.msra.mxu0 %v7795
    %8061 = vmatprep.subr.mxu0 0.0
    %8062 = vmatpush2.msra.mxu0 0.0
    %8063 = vmatprep.subr.mxu0 0.0
    %8064 = vmatpush2.msra.mxu0 0.0
    %8065 = vmatprep.subr.mxu0 0.0
    %8066 = vmatpush2.msra.mxu0 0.0
    %8067 = vmatprep.subr.mxu0 0.0
    %8068 = vmatpush2.msra.mxu0 0.0
    %8069 = vmatprep.subr.mxu0 0.0
    %8070 = vmatpush2.msra.mxu0 0.0
    %8071 = vmatprep.subr.mxu0 0.0
    %8072 = vmatpush2.msra.mxu0 0.0
    %8073 = vmatprep.subr.mxu0 0.0
    %8074 = vmatpush2.msra.mxu0 0.0
    %8075 = vmatprep.subr.mxu0 0.0
    %8076 = vmatpush2.msra.mxu0 0.0
    %8077 = vmatprep.subr.mxu0 0.0
    %8078 = vmatpush2.msra.mxu0 0.0
    %8079 = vmatprep.subr.mxu0 0.0
    %8080 = vmatpush2.msra.mxu0 0.0
    %8081 = vmatprep.subr.mxu0 0.0
    %8082 = vmatpush2.msra.mxu0 0.0
    %8083 = vmatprep.subr.mxu0 0.0
    %8084 = vmatpush2.msra.mxu0 0.0
    %8085 = vmatprep.subr.mxu0 0.0
    %8086 = vmatpush2.msra.mxu0 0.0
    %8087 = vmatprep.subr.mxu0 0.0
    %8088 = vmatpush2.msra.mxu0 0.0
    %8089 = vmatprep.subr.mxu0 0.0
    %8090 = vmatpush2.msra.mxu0 0.0
    %8091 = vmatprep.subr.mxu0 0.0
    %8092 = vmatpush2.msra.mxu0 0.0
    %8093 = vmatprep.mubr.f32.mxu0 0.0
    %8094 = vmatmul.mubr.f32.gmra.mxu0 %v8028
    %v8095 = vpop.f32.mrf.mxu0
    %v8096 = vadd.f32 0.0, %v8095
    %v8097 = vpop.f32.mrf.mxu0
    %v8098 = vadd.f32 0.0, %v8097
    %8099 = vdwg.mxu0
    %8100 = vmatprep.subr.mxu0 %v7858
    %8101 = vmatpush1.msra.mxu0 %v7857
    %8102 = vmatprep.subr.mxu0 %v7854
    %8103 = vmatpush1.msra.mxu0 %v7853
    %8104 = vmatprep.subr.mxu0 %v7850
    %8105 = vmatpush1.msra.mxu0 %v7849
    %8106 = vmatprep.subr.mxu0 %v7846
    %8107 = vmatpush1.msra.mxu0 %v7845
    %8108 = vmatprep.subr.mxu0 %v7842
    %8109 = vmatpush1.msra.mxu0 %v7841
    %8110 = vmatprep.subr.mxu0 %v7838
    %8111 = vmatpush1.msra.mxu0 %v7837
    %8112 = vmatprep.subr.mxu0 %v7834
    %8113 = vmatpush1.msra.mxu0 %v7833
    %8114 = vmatprep.subr.mxu0 %v7830
    %8115 = vmatpush1.msra.mxu0 %v7829
    %8116 = vmatprep.subr.mxu0 %v7826
    %8117 = vmatpush1.msra.mxu0 %v7825
    %8118 = vmatprep.subr.mxu0 %v7822
    %8119 = vmatpush1.msra.mxu0 %v7821
    %8120 = vmatprep.subr.mxu0 %v7818
    %8121 = vmatpush1.msra.mxu0 %v7817
    %8122 = vmatprep.subr.mxu0 %v7814
    %8123 = vmatpush1.msra.mxu0 %v7813
    %8124 = vmatprep.subr.mxu0 %v7810
    %8125 = vmatpush1.msra.mxu0 %v7809
    %8126 = vmatprep.subr.mxu0 %v7806
    %8127 = vmatpush1.msra.mxu0 %v7805
    %8128 = vmatprep.subr.mxu0 %v7802
    %8129 = vmatpush1.msra.mxu0 %v7801
    %8130 = vmatprep.subr.mxu0 %v7798
    %8131 = vmatpush1.msra.mxu0 %v7797
    %8132 = vmatprep.subr.mxu0 0.0
    %8133 = vmatpush2.msra.mxu0 0.0
    %8134 = vmatprep.subr.mxu0 0.0
    %8135 = vmatpush2.msra.mxu0 0.0
    %8136 = vmatprep.subr.mxu0 0.0
    %8137 = vmatpush2.msra.mxu0 0.0
    %8138 = vmatprep.subr.mxu0 0.0
    %8139 = vmatpush2.msra.mxu0 0.0
    %8140 = vmatprep.subr.mxu0 0.0
    %8141 = vmatpush2.msra.mxu0 0.0
    %8142 = vmatprep.subr.mxu0 0.0
    %8143 = vmatpush2.msra.mxu0 0.0
    %8144 = vmatprep.subr.mxu0 0.0
    %8145 = vmatpush2.msra.mxu0 0.0
    %8146 = vmatprep.subr.mxu0 0.0
    %8147 = vmatpush2.msra.mxu0 0.0
    %8148 = vmatprep.subr.mxu0 0.0
    %8149 = vmatpush2.msra.mxu0 0.0
    %8150 = vmatprep.subr.mxu0 0.0
    %8151 = vmatpush2.msra.mxu0 0.0
    %8152 = vmatprep.subr.mxu0 0.0
    %8153 = vmatpush2.msra.mxu0 0.0
    %8154 = vmatprep.subr.mxu0 0.0
    %8155 = vmatpush2.msra.mxu0 0.0
    %8156 = vmatprep.subr.mxu0 0.0
    %8157 = vmatpush2.msra.mxu0 0.0
    %8158 = vmatprep.subr.mxu0 0.0
    %8159 = vmatpush2.msra.mxu0 0.0
    %8160 = vmatprep.subr.mxu0 0.0
    %8161 = vmatpush2.msra.mxu0 0.0
    %8162 = vmatprep.subr.mxu0 0.0
    %8163 = vmatpush2.msra.mxu0 0.0
    %8164 = vmatprep.mubr.f32.mxu0 0.0
    %8165 = vmatmul.mubr.f32.gmra.mxu0 %v8028
    %v8166 = vpop.f32.mrf.mxu0
    %v8167 = vadd.f32 0.0, %v8166
    %v8168 = vpop.f32.mrf.mxu0
    %v8169 = vadd.f32 0.0, %v8168
    %8170 = vdwg.mxu0
    %v8175 = vrot.slane %v8096, 6
    %v8176 = vrot.slane %v8098, 6
    %v8177 = vrot.slane %v8167, 6
    %v8178 = vrot.slane %v8169, 6
    %v8183 = vadd.f32 %v7707, %v8175
    %v8184 = vadd.f32 %v7709, %v8176
    %v8185 = vadd.f32 %v7784, %v8177
    %v8186 = vadd.f32 %v7786, %v8178
    %v8187 = vxor.u32 %v8183, 2147483648
    %v8188 = vxor.u32 %v8184, 2147483648
    %v8189 = vxor.u32 %v8185, 2147483648
    %v8190 = vmul.f32 %v8187, 1.442695
    %v8191 = vpow.pop %v8190
    %v8192 = vmul.f32 %v8188, 1.442695
    %v8193 = vpow.pop %v8192
    %v8194 = vmul.f32 %v8189, 1.442695
    %v8195 = vpow.pop %v8194
    %v8196 = vadd.f32 %v8191, 1.0
    %v8197 = vadd.f32 %v8193, 1.0
    %v8198 = vadd.f32 %v8195, 1.0
    %v8199 = vrcp.pop %v8196
    %v8200 = vmul.f32 1.0, %v8199
    %v8201 = vrcp.pop %v8197
    %v8202 = vmul.f32 1.0, %v8201
    %v8203 = vrcp.pop %v8198
    %v8204 = vmul.f32 1.0, %v8203
    %v8205 = vtanh.pop %v8186
    %v8207 = vrot.slane %v8026, 6
    %v8209 = vmul.f32 %v8202, %v8207
    %v8210 = vmul.f32 %v8200, %v8205
    %v8211 = vadd.f32 %v8209, %v8210
    %v8212 = vtanh.pop %v8211
    %v8213 = vmul.f32 %v8204, %v8212
    %v8215 = vrot.slane %v8213, 2
    %8217 = vmatprep.subr.mxu0 %v7856
    %8218 = vmatpush1.msra.mxu0 %v7855
    %8219 = vmatprep.subr.mxu0 %v7852
    %8220 = vmatpush1.msra.mxu0 %v7851
    %8221 = vmatprep.subr.mxu0 %v7848
    %8222 = vmatpush1.msra.mxu0 %v7847
    %8223 = vmatprep.subr.mxu0 %v7844
    %8224 = vmatpush1.msra.mxu0 %v7843
    %8225 = vmatprep.subr.mxu0 %v7840
    %8226 = vmatpush1.msra.mxu0 %v7839
    %8227 = vmatprep.subr.mxu0 %v7836
    %8228 = vmatpush1.msra.mxu0 %v7835
    %8229 = vmatprep.subr.mxu0 %v7832
    %8230 = vmatpush1.msra.mxu0 %v7831
    %8231 = vmatprep.subr.mxu0 %v7828
    %8232 = vmatpush1.msra.mxu0 %v7827
    %8233 = vmatprep.subr.mxu0 %v7824
    %8234 = vmatpush1.msra.mxu0 %v7823
    %8235 = vmatprep.subr.mxu0 %v7820
    %8236 = vmatpush1.msra.mxu0 %v7819
    %8237 = vmatprep.subr.mxu0 %v7816
    %8238 = vmatpush1.msra.mxu0 %v7815
    %8239 = vmatprep.subr.mxu0 %v7812
    %8240 = vmatpush1.msra.mxu0 %v7811
    %8241 = vmatprep.subr.mxu0 %v7808
    %8242 = vmatpush1.msra.mxu0 %v7807
    %8243 = vmatprep.subr.mxu0 %v7804
    %8244 = vmatpush1.msra.mxu0 %v7803
    %8245 = vmatprep.subr.mxu0 %v7800
    %8246 = vmatpush1.msra.mxu0 %v7799
    %8247 = vmatprep.subr.mxu0 %v7796
    %8248 = vmatpush1.msra.mxu0 %v7795
    %8249 = vmatprep.subr.mxu0 0.0
    %8250 = vmatpush2.msra.mxu0 0.0
    %8251 = vmatprep.subr.mxu0 0.0
    %8252 = vmatpush2.msra.mxu0 0.0
    %8253 = vmatprep.subr.mxu0 0.0
    %8254 = vmatpush2.msra.mxu0 0.0
    %8255 = vmatprep.subr.mxu0 0.0
    %8256 = vmatpush2.msra.mxu0 0.0
    %8257 = vmatprep.subr.mxu0 0.0
    %8258 = vmatpush2.msra.mxu0 0.0
    %8259 = vmatprep.subr.mxu0 0.0
    %8260 = vmatpush2.msra.mxu0 0.0
    %8261 = vmatprep.subr.mxu0 0.0
    %8262 = vmatpush2.msra.mxu0 0.0
    %8263 = vmatprep.subr.mxu0 0.0
    %8264 = vmatpush2.msra.mxu0 0.0
    %8265 = vmatprep.subr.mxu0 0.0
    %8266 = vmatpush2.msra.mxu0 0.0
    %8267 = vmatprep.subr.mxu0 0.0
    %8268 = vmatpush2.msra.mxu0 0.0
    %8269 = vmatprep.subr.mxu0 0.0
    %8270 = vmatpush2.msra.mxu0 0.0
    %8271 = vmatprep.subr.mxu0 0.0
    %8272 = vmatpush2.msra.mxu0 0.0
    %8273 = vmatprep.subr.mxu0 0.0
    %8274 = vmatpush2.msra.mxu0 0.0
    %8275 = vmatprep.subr.mxu0 0.0
    %8276 = vmatpush2.msra.mxu0 0.0
    %8277 = vmatprep.subr.mxu0 0.0
    %8278 = vmatpush2.msra.mxu0 0.0
    %8279 = vmatprep.subr.mxu0 0.0
    %8280 = vmatpush2.msra.mxu0 0.0
    %8281 = vmatprep.mubr.f32.mxu0 0.0
    %8282 = vmatmul.mubr.f32.gmra.mxu0 %v8215
    %v8283 = vpop.f32.mrf.mxu0
    %v8284 = vadd.f32 0.0, %v8283
    %v8285 = vpop.f32.mrf.mxu0
    %v8286 = vadd.f32 0.0, %v8285
    %8287 = vdwg.mxu0
    %8288 = vmatprep.subr.mxu0 %v7858
    %8289 = vmatpush1.msra.mxu0 %v7857
    %8290 = vmatprep.subr.mxu0 %v7854
    %8291 = vmatpush1.msra.mxu0 %v7853
    %8292 = vmatprep.subr.mxu0 %v7850
    %8293 = vmatpush1.msra.mxu0 %v7849
    %8294 = vmatprep.subr.mxu0 %v7846
    %8295 = vmatpush1.msra.mxu0 %v7845
    %8296 = vmatprep.subr.mxu0 %v7842
    %8297 = vmatpush1.msra.mxu0 %v7841
    %8298 = vmatprep.subr.mxu0 %v7838
    %8299 = vmatpush1.msra.mxu0 %v7837
    %8300 = vmatprep.subr.mxu0 %v7834
    %8301 = vmatpush1.msra.mxu0 %v7833
    %8302 = vmatprep.subr.mxu0 %v7830
    %8303 = vmatpush1.msra.mxu0 %v7829
    %8304 = vmatprep.subr.mxu0 %v7826
    %8305 = vmatpush1.msra.mxu0 %v7825
    %8306 = vmatprep.subr.mxu0 %v7822
    %8307 = vmatpush1.msra.mxu0 %v7821
    %8308 = vmatprep.subr.mxu0 %v7818
    %8309 = vmatpush1.msra.mxu0 %v7817
    %8310 = vmatprep.subr.mxu0 %v7814
    %8311 = vmatpush1.msra.mxu0 %v7813
    %8312 = vmatprep.subr.mxu0 %v7810
    %8313 = vmatpush1.msra.mxu0 %v7809
    %8314 = vmatprep.subr.mxu0 %v7806
    %8315 = vmatpush1.msra.mxu0 %v7805
    %8316 = vmatprep.subr.mxu0 %v7802
    %8317 = vmatpush1.msra.mxu0 %v7801
    %8318 = vmatprep.subr.mxu0 %v7798
    %8319 = vmatpush1.msra.mxu0 %v7797
    %8320 = vmatprep.subr.mxu0 0.0
    %8321 = vmatpush2.msra.mxu0 0.0
    %8322 = vmatprep.subr.mxu0 0.0
    %8323 = vmatpush2.msra.mxu0 0.0
    %8324 = vmatprep.subr.mxu0 0.0
    %8325 = vmatpush2.msra.mxu0 0.0
    %8326 = vmatprep.subr.mxu0 0.0
    %8327 = vmatpush2.msra.mxu0 0.0
    %8328 = vmatprep.subr.mxu0 0.0
    %8329 = vmatpush2.msra.mxu0 0.0
    %8330 = vmatprep.subr.mxu0 0.0
    %8331 = vmatpush2.msra.mxu0 0.0
    %8332 = vmatprep.subr.mxu0 0.0
    %8333 = vmatpush2.msra.mxu0 0.0
    %8334 = vmatprep.subr.mxu0 0.0
    %8335 = vmatpush2.msra.mxu0 0.0
    %8336 = vmatprep.subr.mxu0 0.0
    %8337 = vmatpush2.msra.mxu0 0.0
    %8338 = vmatprep.subr.mxu0 0.0
    %8339 = vmatpush2.msra.mxu0 0.0
    %8340 = vmatprep.subr.mxu0 0.0
    %8341 = vmatpush2.msra.mxu0 0.0
    %8342 = vmatprep.subr.mxu0 0.0
    %8343 = vmatpush2.msra.mxu0 0.0
    %8344 = vmatprep.subr.mxu0 0.0
    %8345 = vmatpush2.msra.mxu0 0.0
    %8346 = vmatprep.subr.mxu0 0.0
    %8347 = vmatpush2.msra.mxu0 0.0
    %8348 = vmatprep.subr.mxu0 0.0
    %8349 = vmatpush2.msra.mxu0 0.0
    %8350 = vmatprep.subr.mxu0 0.0
    %8351 = vmatpush2.msra.mxu0 0.0
    %8352 = vmatprep.mubr.f32.mxu0 0.0
    %8353 = vmatmul.mubr.f32.gmra.mxu0 %v8215
    %v8354 = vpop.f32.mrf.mxu0
    %v8355 = vadd.f32 0.0, %v8354
    %v8356 = vpop.f32.mrf.mxu0
    %v8357 = vadd.f32 0.0, %v8356
    %8358 = vdwg.mxu0
    %v8363 = vrot.slane %v8284, 4
    %v8364 = vrot.slane %v8286, 4
    %v8365 = vrot.slane %v8355, 4
    %v8366 = vrot.slane %v8357, 4
    %v8371 = vadd.f32 %v7707, %v8363
    %v8372 = vadd.f32 %v7709, %v8364
    %v8373 = vadd.f32 %v7784, %v8365
    %v8374 = vadd.f32 %v7786, %v8366
    %v8375 = vxor.u32 %v8371, 2147483648
    %v8376 = vxor.u32 %v8372, 2147483648
    %v8377 = vxor.u32 %v8373, 2147483648
    %v8378 = vmul.f32 %v8375, 1.442695
    %v8379 = vpow.pop %v8378
    %v8380 = vmul.f32 %v8376, 1.442695
    %v8381 = vpow.pop %v8380
    %v8382 = vmul.f32 %v8377, 1.442695
    %v8383 = vpow.pop %v8382
    %v8384 = vadd.f32 %v8379, 1.0
    %v8385 = vadd.f32 %v8381, 1.0
    %v8386 = vadd.f32 %v8383, 1.0
    %v8387 = vrcp.pop %v8384
    %v8388 = vmul.f32 1.0, %v8387
    %v8389 = vrcp.pop %v8385
    %v8390 = vmul.f32 1.0, %v8389
    %v8391 = vrcp.pop %v8386
    %v8392 = vmul.f32 1.0, %v8391
    %v8393 = vtanh.pop %v8374
    %v8395 = vrot.slane %v8211, 6
    %v8397 = vmul.f32 %v8390, %v8395
    %v8398 = vmul.f32 %v8388, %v8393
    %v8399 = vadd.f32 %v8397, %v8398
    %v8400 = vtanh.pop %v8399
    %v8401 = vmul.f32 %v8392, %v8400
    %v8403 = vrot.slane %v8401, 4
    %8405 = vmatprep.subr.mxu0 %v7856
    %8406 = vmatpush1.msra.mxu0 %v7855
    %8407 = vmatprep.subr.mxu0 %v7852
    %8408 = vmatpush1.msra.mxu0 %v7851
    %8409 = vmatprep.subr.mxu0 %v7848
    %8410 = vmatpush1.msra.mxu0 %v7847
    %8411 = vmatprep.subr.mxu0 %v7844
    %8412 = vmatpush1.msra.mxu0 %v7843
    %8413 = vmatprep.subr.mxu0 %v7840
    %8414 = vmatpush1.msra.mxu0 %v7839
    %8415 = vmatprep.subr.mxu0 %v7836
    %8416 = vmatpush1.msra.mxu0 %v7835
    %8417 = vmatprep.subr.mxu0 %v7832
    %8418 = vmatpush1.msra.mxu0 %v7831
    %8419 = vmatprep.subr.mxu0 %v7828
    %8420 = vmatpush1.msra.mxu0 %v7827
    %8421 = vmatprep.subr.mxu0 %v7824
    %8422 = vmatpush1.msra.mxu0 %v7823
    %8423 = vmatprep.subr.mxu0 %v7820
    %8424 = vmatpush1.msra.mxu0 %v7819
    %8425 = vmatprep.subr.mxu0 %v7816
    %8426 = vmatpush1.msra.mxu0 %v7815
    %8427 = vmatprep.subr.mxu0 %v7812
    %8428 = vmatpush1.msra.mxu0 %v7811
    %8429 = vmatprep.subr.mxu0 %v7808
    %8430 = vmatpush1.msra.mxu0 %v7807
    %8431 = vmatprep.subr.mxu0 %v7804
    %8432 = vmatpush1.msra.mxu0 %v7803
    %8433 = vmatprep.subr.mxu0 %v7800
    %8434 = vmatpush1.msra.mxu0 %v7799
    %8435 = vmatprep.subr.mxu0 %v7796
    %8436 = vmatpush1.msra.mxu0 %v7795
    %8437 = vmatprep.subr.mxu0 0.0
    %8438 = vmatpush2.msra.mxu0 0.0
    %8439 = vmatprep.subr.mxu0 0.0
    %8440 = vmatpush2.msra.mxu0 0.0
    %8441 = vmatprep.subr.mxu0 0.0
    %8442 = vmatpush2.msra.mxu0 0.0
    %8443 = vmatprep.subr.mxu0 0.0
    %8444 = vmatpush2.msra.mxu0 0.0
    %8445 = vmatprep.subr.mxu0 0.0
    %8446 = vmatpush2.msra.mxu0 0.0
    %8447 = vmatprep.subr.mxu0 0.0
    %8448 = vmatpush2.msra.mxu0 0.0
    %8449 = vmatprep.subr.mxu0 0.0
    %8450 = vmatpush2.msra.mxu0 0.0
    %8451 = vmatprep.subr.mxu0 0.0
    %8452 = vmatpush2.msra.mxu0 0.0
    %8453 = vmatprep.subr.mxu0 0.0
    %8454 = vmatpush2.msra.mxu0 0.0
    %8455 = vmatprep.subr.mxu0 0.0
    %8456 = vmatpush2.msra.mxu0 0.0
    %8457 = vmatprep.subr.mxu0 0.0
    %8458 = vmatpush2.msra.mxu0 0.0
    %8459 = vmatprep.subr.mxu0 0.0
    %8460 = vmatpush2.msra.mxu0 0.0
    %8461 = vmatprep.subr.mxu0 0.0
    %8462 = vmatpush2.msra.mxu0 0.0
    %8463 = vmatprep.subr.mxu0 0.0
    %8464 = vmatpush2.msra.mxu0 0.0
    %8465 = vmatprep.subr.mxu0 0.0
    %8466 = vmatpush2.msra.mxu0 0.0
    %8467 = vmatprep.subr.mxu0 0.0
    %8468 = vmatpush2.msra.mxu0 0.0
    %8469 = vmatprep.mubr.f32.mxu0 0.0
    %8470 = vmatmul.mubr.f32.gmra.mxu0 %v8403
    %v8471 = vpop.f32.mrf.mxu0
    %v8472 = vadd.f32 0.0, %v8471
    %v8473 = vpop.f32.mrf.mxu0
    %v8474 = vadd.f32 0.0, %v8473
    %8475 = vdwg.mxu0
    %8476 = vmatprep.subr.mxu0 %v7858
    %8477 = vmatpush1.msra.mxu0 %v7857
    %8478 = vmatprep.subr.mxu0 %v7854
    %8479 = vmatpush1.msra.mxu0 %v7853
    %8480 = vmatprep.subr.mxu0 %v7850
    %8481 = vmatpush1.msra.mxu0 %v7849
    %8482 = vmatprep.subr.mxu0 %v7846
    %8483 = vmatpush1.msra.mxu0 %v7845
    %8484 = vmatprep.subr.mxu0 %v7842
    %8485 = vmatpush1.msra.mxu0 %v7841
    %8486 = vmatprep.subr.mxu0 %v7838
    %8487 = vmatpush1.msra.mxu0 %v7837
    %8488 = vmatprep.subr.mxu0 %v7834
    %8489 = vmatpush1.msra.mxu0 %v7833
    %8490 = vmatprep.subr.mxu0 %v7830
    %8491 = vmatpush1.msra.mxu0 %v7829
    %8492 = vmatprep.subr.mxu0 %v7826
    %8493 = vmatpush1.msra.mxu0 %v7825
    %8494 = vmatprep.subr.mxu0 %v7822
    %8495 = vmatpush1.msra.mxu0 %v7821
    %8496 = vmatprep.subr.mxu0 %v7818
    %8497 = vmatpush1.msra.mxu0 %v7817
    %8498 = vmatprep.subr.mxu0 %v7814
    %8499 = vmatpush1.msra.mxu0 %v7813
    %8500 = vmatprep.subr.mxu0 %v7810
    %8501 = vmatpush1.msra.mxu0 %v7809
    %8502 = vmatprep.subr.mxu0 %v7806
    %8503 = vmatpush1.msra.mxu0 %v7805
    %8504 = vmatprep.subr.mxu0 %v7802
    %8505 = vmatpush1.msra.mxu0 %v7801
    %8506 = vmatprep.subr.mxu0 %v7798
    %8507 = vmatpush1.msra.mxu0 %v7797
    %8508 = vmatprep.subr.mxu0 0.0
    %8509 = vmatpush2.msra.mxu0 0.0
    %8510 = vmatprep.subr.mxu0 0.0
    %8511 = vmatpush2.msra.mxu0 0.0
    %8512 = vmatprep.subr.mxu0 0.0
    %8513 = vmatpush2.msra.mxu0 0.0
    %8514 = vmatprep.subr.mxu0 0.0
    %8515 = vmatpush2.msra.mxu0 0.0
    %8516 = vmatprep.subr.mxu0 0.0
    %8517 = vmatpush2.msra.mxu0 0.0
    %8518 = vmatprep.subr.mxu0 0.0
    %8519 = vmatpush2.msra.mxu0 0.0
    %8520 = vmatprep.subr.mxu0 0.0
    %8521 = vmatpush2.msra.mxu0 0.0
    %8522 = vmatprep.subr.mxu0 0.0
    %8523 = vmatpush2.msra.mxu0 0.0
    %8524 = vmatprep.subr.mxu0 0.0
    %8525 = vmatpush2.msra.mxu0 0.0
    %8526 = vmatprep.subr.mxu0 0.0
    %8527 = vmatpush2.msra.mxu0 0.0
    %8528 = vmatprep.subr.mxu0 0.0
    %8529 = vmatpush2.msra.mxu0 0.0
    %8530 = vmatprep.subr.mxu0 0.0
    %8531 = vmatpush2.msra.mxu0 0.0
    %8532 = vmatprep.subr.mxu0 0.0
    %8533 = vmatpush2.msra.mxu0 0.0
    %8534 = vmatprep.subr.mxu0 0.0
    %8535 = vmatpush2.msra.mxu0 0.0
    %8536 = vmatprep.subr.mxu0 0.0
    %8537 = vmatpush2.msra.mxu0 0.0
    %8538 = vmatprep.subr.mxu0 0.0
    %8539 = vmatpush2.msra.mxu0 0.0
    %8540 = vmatprep.mubr.f32.mxu0 0.0
    %8541 = vmatmul.mubr.f32.gmra.mxu0 %v8403
    %v8542 = vpop.f32.mrf.mxu0
    %v8543 = vadd.f32 0.0, %v8542
    %v8544 = vpop.f32.mrf.mxu0
    %v8545 = vadd.f32 0.0, %v8544
    %8546 = vdwg.mxu0
    %v8551 = vrot.slane %v8472, 2
    %v8552 = vrot.slane %v8474, 2
    %v8553 = vrot.slane %v8543, 2
    %v8554 = vrot.slane %v8545, 2
    %v8559 = vadd.f32 %v7707, %v8551
    %v8560 = vadd.f32 %v7709, %v8552
    %v8561 = vadd.f32 %v7784, %v8553
    %v8562 = vadd.f32 %v7786, %v8554
    %v8563 = vxor.u32 %v8559, 2147483648
    %v8564 = vxor.u32 %v8560, 2147483648
    %v8565 = vxor.u32 %v8561, 2147483648
    %v8566 = vmul.f32 %v8563, 1.442695
    %v8567 = vpow.pop %v8566
    %v8568 = vmul.f32 %v8564, 1.442695
    %v8569 = vpow.pop %v8568
    %v8570 = vmul.f32 %v8565, 1.442695
    %v8571 = vpow.pop %v8570
    %v8572 = vadd.f32 %v8567, 1.0
    %v8573 = vadd.f32 %v8569, 1.0
    %v8574 = vadd.f32 %v8571, 1.0
    %v8575 = vrcp.pop %v8572
    %v8576 = vmul.f32 1.0, %v8575
    %v8577 = vrcp.pop %v8573
    %v8578 = vmul.f32 1.0, %v8577
    %v8579 = vrcp.pop %v8574
    %v8580 = vmul.f32 1.0, %v8579
    %v8581 = vtanh.pop %v8562
    %v8583 = vrot.slane %v8399, 6
    %v8585 = vmul.f32 %v8578, %v8583
    %v8586 = vmul.f32 %v8576, %v8581
    %v8587 = vadd.f32 %v8585, %v8586
    %v8588 = vtanh.pop %v8587
    %v8589 = vmul.f32 %v8580, %v8588
    %v8591 = vrot.slane %v8589, 6
    %8593 = vmatprep.subr.mxu0 %v7856
    %8594 = vmatpush1.msra.mxu0 %v7855
    %8595 = vmatprep.subr.mxu0 %v7852
    %8596 = vmatpush1.msra.mxu0 %v7851
    %8597 = vmatprep.subr.mxu0 %v7848
    %8598 = vmatpush1.msra.mxu0 %v7847
    %8599 = vmatprep.subr.mxu0 %v7844
    %8600 = vmatpush1.msra.mxu0 %v7843
    %8601 = vmatprep.subr.mxu0 %v7840
    %8602 = vmatpush1.msra.mxu0 %v7839
    %8603 = vmatprep.subr.mxu0 %v7836
    %8604 = vmatpush1.msra.mxu0 %v7835
    %8605 = vmatprep.subr.mxu0 %v7832
    %8606 = vmatpush1.msra.mxu0 %v7831
    %8607 = vmatprep.subr.mxu0 %v7828
    %8608 = vmatpush1.msra.mxu0 %v7827
    %8609 = vmatprep.subr.mxu0 %v7824
    %8610 = vmatpush1.msra.mxu0 %v7823
    %8611 = vmatprep.subr.mxu0 %v7820
    %8612 = vmatpush1.msra.mxu0 %v7819
    %8613 = vmatprep.subr.mxu0 %v7816
    %8614 = vmatpush1.msra.mxu0 %v7815
    %8615 = vmatprep.subr.mxu0 %v7812
    %8616 = vmatpush1.msra.mxu0 %v7811
    %8617 = vmatprep.subr.mxu0 %v7808
    %8618 = vmatpush1.msra.mxu0 %v7807
    %8619 = vmatprep.subr.mxu0 %v7804
    %8620 = vmatpush1.msra.mxu0 %v7803
    %8621 = vmatprep.subr.mxu0 %v7800
    %8622 = vmatpush1.msra.mxu0 %v7799
    %8623 = vmatprep.subr.mxu0 %v7796
    %8624 = vmatpush1.msra.mxu0 %v7795
    %8625 = vmatprep.subr.mxu0 0.0
    %8626 = vmatpush2.msra.mxu0 0.0
    %8627 = vmatprep.subr.mxu0 0.0
    %8628 = vmatpush2.msra.mxu0 0.0
    %8629 = vmatprep.subr.mxu0 0.0
    %8630 = vmatpush2.msra.mxu0 0.0
    %8631 = vmatprep.subr.mxu0 0.0
    %8632 = vmatpush2.msra.mxu0 0.0
    %8633 = vmatprep.subr.mxu0 0.0
    %8634 = vmatpush2.msra.mxu0 0.0
    %8635 = vmatprep.subr.mxu0 0.0
    %8636 = vmatpush2.msra.mxu0 0.0
    %8637 = vmatprep.subr.mxu0 0.0
    %8638 = vmatpush2.msra.mxu0 0.0
    %8639 = vmatprep.subr.mxu0 0.0
    %8640 = vmatpush2.msra.mxu0 0.0
    %8641 = vmatprep.subr.mxu0 0.0
    %8642 = vmatpush2.msra.mxu0 0.0
    %8643 = vmatprep.subr.mxu0 0.0
    %8644 = vmatpush2.msra.mxu0 0.0
    %8645 = vmatprep.subr.mxu0 0.0
    %8646 = vmatpush2.msra.mxu0 0.0
    %8647 = vmatprep.subr.mxu0 0.0
    %8648 = vmatpush2.msra.mxu0 0.0
    %8649 = vmatprep.subr.mxu0 0.0
    %8650 = vmatpush2.msra.mxu0 0.0
    %8651 = vmatprep.subr.mxu0 0.0
    %8652 = vmatpush2.msra.mxu0 0.0
    %8653 = vmatprep.subr.mxu0 0.0
    %8654 = vmatpush2.msra.mxu0 0.0
    %8655 = vmatprep.subr.mxu0 0.0
    %8656 = vmatpush2.msra.mxu0 0.0
    %8657 = vmatprep.mubr.f32.mxu0 0.0
    %8658 = vmatmul.mubr.f32.gmra.mxu0 %v8591
    %v8659 = vpop.f32.mrf.mxu0
    %v8660 = vadd.f32 0.0, %v8659
    %v8661 = vpop.f32.mrf.mxu0
    %v8662 = vadd.f32 0.0, %v8661
    %8663 = vdwg.mxu0
    %8664 = vmatprep.subr.mxu0 %v7858
    %8665 = vmatpush1.msra.mxu0 %v7857
    %8666 = vmatprep.subr.mxu0 %v7854
    %8667 = vmatpush1.msra.mxu0 %v7853
    %8668 = vmatprep.subr.mxu0 %v7850
    %8669 = vmatpush1.msra.mxu0 %v7849
    %8670 = vmatprep.subr.mxu0 %v7846
    %8671 = vmatpush1.msra.mxu0 %v7845
    %8672 = vmatprep.subr.mxu0 %v7842
    %8673 = vmatpush1.msra.mxu0 %v7841
    %8674 = vmatprep.subr.mxu0 %v7838
    %8675 = vmatpush1.msra.mxu0 %v7837
    %8676 = vmatprep.subr.mxu0 %v7834
    %8677 = vmatpush1.msra.mxu0 %v7833
    %8678 = vmatprep.subr.mxu0 %v7830
    %8679 = vmatpush1.msra.mxu0 %v7829
    %8680 = vmatprep.subr.mxu0 %v7826
    %8681 = vmatpush1.msra.mxu0 %v7825
    %8682 = vmatprep.subr.mxu0 %v7822
    %8683 = vmatpush1.msra.mxu0 %v7821
    %8684 = vmatprep.subr.mxu0 %v7818
    %8685 = vmatpush1.msra.mxu0 %v7817
    %8686 = vmatprep.subr.mxu0 %v7814
    %8687 = vmatpush1.msra.mxu0 %v7813
    %8688 = vmatprep.subr.mxu0 %v7810
    %8689 = vmatpush1.msra.mxu0 %v7809
    %8690 = vmatprep.subr.mxu0 %v7806
    %8691 = vmatpush1.msra.mxu0 %v7805
    %8692 = vmatprep.subr.mxu0 %v7802
    %8693 = vmatpush1.msra.mxu0 %v7801
    %8694 = vmatprep.subr.mxu0 %v7798
    %8695 = vmatpush1.msra.mxu0 %v7797
    %8696 = vmatprep.subr.mxu0 0.0
    %8697 = vmatpush2.msra.mxu0 0.0
    %8698 = vmatprep.subr.mxu0 0.0
    %8699 = vmatpush2.msra.mxu0 0.0
    %8700 = vmatprep.subr.mxu0 0.0
    %8701 = vmatpush2.msra.mxu0 0.0
    %8702 = vmatprep.subr.mxu0 0.0
    %8703 = vmatpush2.msra.mxu0 0.0
    %8704 = vmatprep.subr.mxu0 0.0
    %8705 = vmatpush2.msra.mxu0 0.0
    %8706 = vmatprep.subr.mxu0 0.0
    %8707 = vmatpush2.msra.mxu0 0.0
    %8708 = vmatprep.subr.mxu0 0.0
    %8709 = vmatpush2.msra.mxu0 0.0
    %8710 = vmatprep.subr.mxu0 0.0
    %8711 = vmatpush2.msra.mxu0 0.0
    %8712 = vmatprep.subr.mxu0 0.0
    %8713 = vmatpush2.msra.mxu0 0.0
    %8714 = vmatprep.subr.mxu0 0.0
    %8715 = vmatpush2.msra.mxu0 0.0
    %8716 = vmatprep.subr.mxu0 0.0
    %8717 = vmatpush2.msra.mxu0 0.0
    %8718 = vmatprep.subr.mxu0 0.0
    %8719 = vmatpush2.msra.mxu0 0.0
    %8720 = vmatprep.subr.mxu0 0.0
    %8721 = vmatpush2.msra.mxu0 0.0
    %8722 = vmatprep.subr.mxu0 0.0
    %8723 = vmatpush2.msra.mxu0 0.0
    %8724 = vmatprep.subr.mxu0 0.0
    %8725 = vmatpush2.msra.mxu0 0.0
    %8726 = vmatprep.subr.mxu0 0.0
    %8727 = vmatpush2.msra.mxu0 0.0
    %8728 = vmatprep.mubr.f32.mxu0 0.0
    %8729 = vmatmul.mubr.f32.gmra.mxu0 %v8591
    %v8730 = vpop.f32.mrf.mxu0
    %v8731 = vadd.f32 0.0, %v8730
    %v8732 = vpop.f32.mrf.mxu0
    %v8733 = vadd.f32 0.0, %v8732
    %8734 = vdwg.mxu0
    %v8735 = vadd.f32 %v7713, %v8660
    %v8736 = vadd.f32 %v7715, %v8662
    %v8737 = vadd.f32 %v7790, %v8731
    %v8738 = vadd.f32 %v7792, %v8733
    %v8739 = vxor.u32 %v8735, 2147483648
    %v8740 = vxor.u32 %v8736, 2147483648
    %v8741 = vxor.u32 %v8737, 2147483648
    %v8742 = vmul.f32 %v8739, 1.442695
    %v8743 = vpow.pop %v8742
    %v8744 = vmul.f32 %v8740, 1.442695
    %v8745 = vpow.pop %v8744
    %v8746 = vmul.f32 %v8741, 1.442695
    %v8747 = vpow.pop %v8746
    %v8748 = vadd.f32 %v8743, 1.0
    %v8749 = vadd.f32 %v8745, 1.0
    %v8750 = vadd.f32 %v8747, 1.0
    %v8751 = vrcp.pop %v8748
    %v8752 = vmul.f32 1.0, %v8751
    %v8753 = vrcp.pop %v8749
    %v8754 = vmul.f32 1.0, %v8753
    %v8755 = vrcp.pop %v8750
    %v8756 = vmul.f32 1.0, %v8755
    %v8757 = vtanh.pop %v8738
    %v8759 = vrot.slane %v8587, 6
    %v8761 = vmul.f32 %v8754, %v8759
    %v8762 = vmul.f32 %v8752, %v8757
    %v8763 = vadd.f32 %v8761, %v8762
    %v8764 = vtanh.pop %v8763
    %v8765 = vmul.f32 %v8756, %v8764
    %8766 = vmatprep.subr.mxu0 %v7856
    %8767 = vmatpush1.msra.mxu0 %v7855
    %8768 = vmatprep.subr.mxu0 %v7852
    %8769 = vmatpush1.msra.mxu0 %v7851
    %8770 = vmatprep.subr.mxu0 %v7848
    %8771 = vmatpush1.msra.mxu0 %v7847
    %8772 = vmatprep.subr.mxu0 %v7844
    %8773 = vmatpush1.msra.mxu0 %v7843
    %8774 = vmatprep.subr.mxu0 %v7840
    %8775 = vmatpush1.msra.mxu0 %v7839
    %8776 = vmatprep.subr.mxu0 %v7836
    %8777 = vmatpush1.msra.mxu0 %v7835
    %8778 = vmatprep.subr.mxu0 %v7832
    %8779 = vmatpush1.msra.mxu0 %v7831
    %8780 = vmatprep.subr.mxu0 %v7828
    %8781 = vmatpush1.msra.mxu0 %v7827
    %8782 = vmatprep.subr.mxu0 %v7824
    %8783 = vmatpush1.msra.mxu0 %v7823
    %8784 = vmatprep.subr.mxu0 %v7820
    %8785 = vmatpush1.msra.mxu0 %v7819
    %8786 = vmatprep.subr.mxu0 %v7816
    %8787 = vmatpush1.msra.mxu0 %v7815
    %8788 = vmatprep.subr.mxu0 %v7812
    %8789 = vmatpush1.msra.mxu0 %v7811
    %8790 = vmatprep.subr.mxu0 %v7808
    %8791 = vmatpush1.msra.mxu0 %v7807
    %8792 = vmatprep.subr.mxu0 %v7804
    %8793 = vmatpush1.msra.mxu0 %v7803
    %8794 = vmatprep.subr.mxu0 %v7800
    %8795 = vmatpush1.msra.mxu0 %v7799
    %8796 = vmatprep.subr.mxu0 %v7796
    %8797 = vmatpush1.msra.mxu0 %v7795
    %8798 = vmatprep.subr.mxu0 0.0
    %8799 = vmatpush2.msra.mxu0 0.0
    %8800 = vmatprep.subr.mxu0 0.0
    %8801 = vmatpush2.msra.mxu0 0.0
    %8802 = vmatprep.subr.mxu0 0.0
    %8803 = vmatpush2.msra.mxu0 0.0
    %8804 = vmatprep.subr.mxu0 0.0
    %8805 = vmatpush2.msra.mxu0 0.0
    %8806 = vmatprep.subr.mxu0 0.0
    %8807 = vmatpush2.msra.mxu0 0.0
    %8808 = vmatprep.subr.mxu0 0.0
    %8809 = vmatpush2.msra.mxu0 0.0
    %8810 = vmatprep.subr.mxu0 0.0
    %8811 = vmatpush2.msra.mxu0 0.0
    %8812 = vmatprep.subr.mxu0 0.0
    %8813 = vmatpush2.msra.mxu0 0.0
    %8814 = vmatprep.subr.mxu0 0.0
    %8815 = vmatpush2.msra.mxu0 0.0
    %8816 = vmatprep.subr.mxu0 0.0
    %8817 = vmatpush2.msra.mxu0 0.0
    %8818 = vmatprep.subr.mxu0 0.0
    %8819 = vmatpush2.msra.mxu0 0.0
    %8820 = vmatprep.subr.mxu0 0.0
    %8821 = vmatpush2.msra.mxu0 0.0
    %8822 = vmatprep.subr.mxu0 0.0
    %8823 = vmatpush2.msra.mxu0 0.0
    %8824 = vmatprep.subr.mxu0 0.0
    %8825 = vmatpush2.msra.mxu0 0.0
    %8826 = vmatprep.subr.mxu0 0.0
    %8827 = vmatpush2.msra.mxu0 0.0
    %8828 = vmatprep.subr.mxu0 0.0
    %8829 = vmatpush2.msra.mxu0 0.0
    %8830 = vmatprep.mubr.f32.mxu0 0.0
    %8831 = vmatmul.mubr.f32.gmra.mxu0 %v8765
    %v8832 = vpop.f32.mrf.mxu0
    %v8833 = vadd.f32 0.0, %v8832
    %v8834 = vpop.f32.mrf.mxu0
    %v8835 = vadd.f32 0.0, %v8834
    %8836 = vdwg.mxu0
    %8837 = vmatprep.subr.mxu0 %v7858
    %8838 = vmatpush1.msra.mxu0 %v7857
    %8839 = vmatprep.subr.mxu0 %v7854
    %8840 = vmatpush1.msra.mxu0 %v7853
    %8841 = vmatprep.subr.mxu0 %v7850
    %8842 = vmatpush1.msra.mxu0 %v7849
    %8843 = vmatprep.subr.mxu0 %v7846
    %8844 = vmatpush1.msra.mxu0 %v7845
    %8845 = vmatprep.subr.mxu0 %v7842
    %8846 = vmatpush1.msra.mxu0 %v7841
    %8847 = vmatprep.subr.mxu0 %v7838
    %8848 = vmatpush1.msra.mxu0 %v7837
    %8849 = vmatprep.subr.mxu0 %v7834
    %8850 = vmatpush1.msra.mxu0 %v7833
    %8851 = vmatprep.subr.mxu0 %v7830
    %8852 = vmatpush1.msra.mxu0 %v7829
    %8853 = vmatprep.subr.mxu0 %v7826
    %8854 = vmatpush1.msra.mxu0 %v7825
    %8855 = vmatprep.subr.mxu0 %v7822
    %8856 = vmatpush1.msra.mxu0 %v7821
    %8857 = vmatprep.subr.mxu0 %v7818
    %8858 = vmatpush1.msra.mxu0 %v7817
    %8859 = vmatprep.subr.mxu0 %v7814
    %8860 = vmatpush1.msra.mxu0 %v7813
    %8861 = vmatprep.subr.mxu0 %v7810
    %8862 = vmatpush1.msra.mxu0 %v7809
    %8863 = vmatprep.subr.mxu0 %v7806
    %8864 = vmatpush1.msra.mxu0 %v7805
    %8865 = vmatprep.subr.mxu0 %v7802
    %8866 = vmatpush1.msra.mxu0 %v7801
    %8867 = vmatprep.subr.mxu0 %v7798
    %8868 = vmatpush1.msra.mxu0 %v7797
    %8869 = vmatprep.subr.mxu0 0.0
    %8870 = vmatpush2.msra.mxu0 0.0
    %8871 = vmatprep.subr.mxu0 0.0
    %8872 = vmatpush2.msra.mxu0 0.0
    %8873 = vmatprep.subr.mxu0 0.0
    %8874 = vmatpush2.msra.mxu0 0.0
    %8875 = vmatprep.subr.mxu0 0.0
    %8876 = vmatpush2.msra.mxu0 0.0
    %8877 = vmatprep.subr.mxu0 0.0
    %8878 = vmatpush2.msra.mxu0 0.0
    %8879 = vmatprep.subr.mxu0 0.0
    %8880 = vmatpush2.msra.mxu0 0.0
    %8881 = vmatprep.subr.mxu0 0.0
    %8882 = vmatpush2.msra.mxu0 0.0
    %8883 = vmatprep.subr.mxu0 0.0
    %8884 = vmatpush2.msra.mxu0 0.0
    %8885 = vmatprep.subr.mxu0 0.0
    %8886 = vmatpush2.msra.mxu0 0.0
    %8887 = vmatprep.subr.mxu0 0.0
    %8888 = vmatpush2.msra.mxu0 0.0
    %8889 = vmatprep.subr.mxu0 0.0
    %8890 = vmatpush2.msra.mxu0 0.0
    %8891 = vmatprep.subr.mxu0 0.0
    %8892 = vmatpush2.msra.mxu0 0.0
    %8893 = vmatprep.subr.mxu0 0.0
    %8894 = vmatpush2.msra.mxu0 0.0
    %8895 = vmatprep.subr.mxu0 0.0
    %8896 = vmatpush2.msra.mxu0 0.0
    %8897 = vmatprep.subr.mxu0 0.0
    %8898 = vmatpush2.msra.mxu0 0.0
    %8899 = vmatprep.subr.mxu0 0.0
    %8900 = vmatpush2.msra.mxu0 0.0
    %8901 = vmatprep.mubr.f32.mxu0 0.0
    %8902 = vmatmul.mubr.f32.gmra.mxu0 %v8765
    %v8903 = vpop.f32.mrf.mxu0
    %v8904 = vadd.f32 0.0, %v8903
    %v8905 = vpop.f32.mrf.mxu0
    %v8906 = vadd.f32 0.0, %v8905
    %8907 = vdwg.mxu0
    %v8912 = vrot.slane %v8833, 6
    %v8913 = vrot.slane %v8835, 6
    %v8914 = vrot.slane %v8904, 6
    %v8915 = vrot.slane %v8906, 6
    %v8920 = vadd.f32 %v7713, %v8912
    %v8921 = vadd.f32 %v7715, %v8913
    %v8922 = vadd.f32 %v7790, %v8914
    %v8923 = vadd.f32 %v7792, %v8915
    %v8924 = vxor.u32 %v8920, 2147483648
    %v8925 = vxor.u32 %v8921, 2147483648
    %v8926 = vxor.u32 %v8922, 2147483648
    %v8927 = vmul.f32 %v8924, 1.442695
    %v8928 = vpow.pop %v8927
    %v8929 = vmul.f32 %v8925, 1.442695
    %v8930 = vpow.pop %v8929
    %v8931 = vmul.f32 %v8926, 1.442695
    %v8932 = vpow.pop %v8931
    %v8933 = vadd.f32 %v8928, 1.0
    %v8934 = vadd.f32 %v8930, 1.0
    %v8935 = vadd.f32 %v8932, 1.0
    %v8936 = vrcp.pop %v8933
    %v8937 = vmul.f32 1.0, %v8936
    %v8938 = vrcp.pop %v8934
    %v8939 = vmul.f32 1.0, %v8938
    %v8940 = vrcp.pop %v8935
    %v8941 = vmul.f32 1.0, %v8940
    %v8942 = vtanh.pop %v8923
    %v8944 = vrot.slane %v8763, 6
    %v8946 = vmul.f32 %v8939, %v8944
    %v8947 = vmul.f32 %v8937, %v8942
    %v8948 = vadd.f32 %v8946, %v8947
    %v8949 = vtanh.pop %v8948
    %v8950 = vmul.f32 %v8941, %v8949
    %v8952 = vrot.slane %v8950, 2
    %8954 = vmatprep.subr.mxu0 %v7856
    %8955 = vmatpush1.msra.mxu0 %v7855
    %8956 = vmatprep.subr.mxu0 %v7852
    %8957 = vmatpush1.msra.mxu0 %v7851
    %8958 = vmatprep.subr.mxu0 %v7848
    %8959 = vmatpush1.msra.mxu0 %v7847
    %8960 = vmatprep.subr.mxu0 %v7844
    %8961 = vmatpush1.msra.mxu0 %v7843
    %8962 = vmatprep.subr.mxu0 %v7840
    %8963 = vmatpush1.msra.mxu0 %v7839
    %8964 = vmatprep.subr.mxu0 %v7836
    %8965 = vmatpush1.msra.mxu0 %v7835
    %8966 = vmatprep.subr.mxu0 %v7832
    %8967 = vmatpush1.msra.mxu0 %v7831
    %8968 = vmatprep.subr.mxu0 %v7828
    %8969 = vmatpush1.msra.mxu0 %v7827
    %8970 = vmatprep.subr.mxu0 %v7824
    %8971 = vmatpush1.msra.mxu0 %v7823
    %8972 = vmatprep.subr.mxu0 %v7820
    %8973 = vmatpush1.msra.mxu0 %v7819
    %8974 = vmatprep.subr.mxu0 %v7816
    %8975 = vmatpush1.msra.mxu0 %v7815
    %8976 = vmatprep.subr.mxu0 %v7812
    %8977 = vmatpush1.msra.mxu0 %v7811
    %8978 = vmatprep.subr.mxu0 %v7808
    %8979 = vmatpush1.msra.mxu0 %v7807
    %8980 = vmatprep.subr.mxu0 %v7804
    %8981 = vmatpush1.msra.mxu0 %v7803
    %8982 = vmatprep.subr.mxu0 %v7800
    %8983 = vmatpush1.msra.mxu0 %v7799
    %8984 = vmatprep.subr.mxu0 %v7796
    %8985 = vmatpush1.msra.mxu0 %v7795
    %8986 = vmatprep.subr.mxu0 0.0
    %8987 = vmatpush2.msra.mxu0 0.0
    %8988 = vmatprep.subr.mxu0 0.0
    %8989 = vmatpush2.msra.mxu0 0.0
    %8990 = vmatprep.subr.mxu0 0.0
    %8991 = vmatpush2.msra.mxu0 0.0
    %8992 = vmatprep.subr.mxu0 0.0
    %8993 = vmatpush2.msra.mxu0 0.0
    %8994 = vmatprep.subr.mxu0 0.0
    %8995 = vmatpush2.msra.mxu0 0.0
    %8996 = vmatprep.subr.mxu0 0.0
    %8997 = vmatpush2.msra.mxu0 0.0
    %8998 = vmatprep.subr.mxu0 0.0
    %8999 = vmatpush2.msra.mxu0 0.0
    %9000 = vmatprep.subr.mxu0 0.0
    %9001 = vmatpush2.msra.mxu0 0.0
    %9002 = vmatprep.subr.mxu0 0.0
    %9003 = vmatpush2.msra.mxu0 0.0
    %9004 = vmatprep.subr.mxu0 0.0
    %9005 = vmatpush2.msra.mxu0 0.0
    %9006 = vmatprep.subr.mxu0 0.0
    %9007 = vmatpush2.msra.mxu0 0.0
    %9008 = vmatprep.subr.mxu0 0.0
    %9009 = vmatpush2.msra.mxu0 0.0
    %9010 = vmatprep.subr.mxu0 0.0
    %9011 = vmatpush2.msra.mxu0 0.0
    %9012 = vmatprep.subr.mxu0 0.0
    %9013 = vmatpush2.msra.mxu0 0.0
    %9014 = vmatprep.subr.mxu0 0.0
    %9015 = vmatpush2.msra.mxu0 0.0
    %9016 = vmatprep.subr.mxu0 0.0
    %9017 = vmatpush2.msra.mxu0 0.0
    %9018 = vmatprep.mubr.f32.mxu0 0.0
    %9019 = vmatmul.mubr.f32.gmra.mxu0 %v8952
    %v9020 = vpop.f32.mrf.mxu0
    %v9021 = vadd.f32 0.0, %v9020
    %v9022 = vpop.f32.mrf.mxu0
    %v9023 = vadd.f32 0.0, %v9022
    %9024 = vdwg.mxu0
    %9025 = vmatprep.subr.mxu0 %v7858
    %9026 = vmatpush1.msra.mxu0 %v7857
    %9027 = vmatprep.subr.mxu0 %v7854
    %9028 = vmatpush1.msra.mxu0 %v7853
    %9029 = vmatprep.subr.mxu0 %v7850
    %9030 = vmatpush1.msra.mxu0 %v7849
    %9031 = vmatprep.subr.mxu0 %v7846
    %9032 = vmatpush1.msra.mxu0 %v7845
    %9033 = vmatprep.subr.mxu0 %v7842
    %9034 = vmatpush1.msra.mxu0 %v7841
    %9035 = vmatprep.subr.mxu0 %v7838
    %9036 = vmatpush1.msra.mxu0 %v7837
    %9037 = vmatprep.subr.mxu0 %v7834
    %9038 = vmatpush1.msra.mxu0 %v7833
    %9039 = vmatprep.subr.mxu0 %v7830
    %9040 = vmatpush1.msra.mxu0 %v7829
    %9041 = vmatprep.subr.mxu0 %v7826
    %9042 = vmatpush1.msra.mxu0 %v7825
    %9043 = vmatprep.subr.mxu0 %v7822
    %9044 = vmatpush1.msra.mxu0 %v7821
    %9045 = vmatprep.subr.mxu0 %v7818
    %9046 = vmatpush1.msra.mxu0 %v7817
    %9047 = vmatprep.subr.mxu0 %v7814
    %9048 = vmatpush1.msra.mxu0 %v7813
    %9049 = vmatprep.subr.mxu0 %v7810
    %9050 = vmatpush1.msra.mxu0 %v7809
    %9051 = vmatprep.subr.mxu0 %v7806
    %9052 = vmatpush1.msra.mxu0 %v7805
    %9053 = vmatprep.subr.mxu0 %v7802
    %9054 = vmatpush1.msra.mxu0 %v7801
    %9055 = vmatprep.subr.mxu0 %v7798
    %9056 = vmatpush1.msra.mxu0 %v7797
    %9057 = vmatprep.subr.mxu0 0.0
    %9058 = vmatpush2.msra.mxu0 0.0
    %9059 = vmatprep.subr.mxu0 0.0
    %9060 = vmatpush2.msra.mxu0 0.0
    %9061 = vmatprep.subr.mxu0 0.0
    %9062 = vmatpush2.msra.mxu0 0.0
    %9063 = vmatprep.subr.mxu0 0.0
    %9064 = vmatpush2.msra.mxu0 0.0
    %9065 = vmatprep.subr.mxu0 0.0
    %9066 = vmatpush2.msra.mxu0 0.0
    %9067 = vmatprep.subr.mxu0 0.0
    %9068 = vmatpush2.msra.mxu0 0.0
    %9069 = vmatprep.subr.mxu0 0.0
    %9070 = vmatpush2.msra.mxu0 0.0
    %9071 = vmatprep.subr.mxu0 0.0
    %9072 = vmatpush2.msra.mxu0 0.0
    %9073 = vmatprep.subr.mxu0 0.0
    %9074 = vmatpush2.msra.mxu0 0.0
    %9075 = vmatprep.subr.mxu0 0.0
    %9076 = vmatpush2.msra.mxu0 0.0
    %9077 = vmatprep.subr.mxu0 0.0
    %9078 = vmatpush2.msra.mxu0 0.0
    %9079 = vmatprep.subr.mxu0 0.0
    %9080 = vmatpush2.msra.mxu0 0.0
    %9081 = vmatprep.subr.mxu0 0.0
    %9082 = vmatpush2.msra.mxu0 0.0
    %9083 = vmatprep.subr.mxu0 0.0
    %9084 = vmatpush2.msra.mxu0 0.0
    %9085 = vmatprep.subr.mxu0 0.0
    %9086 = vmatpush2.msra.mxu0 0.0
    %9087 = vmatprep.subr.mxu0 0.0
    %9088 = vmatpush2.msra.mxu0 0.0
    %9089 = vmatprep.mubr.f32.mxu0 0.0
    %9090 = vmatmul.mubr.f32.gmra.mxu0 %v8952
    %v9091 = vpop.f32.mrf.mxu0
    %v9092 = vadd.f32 0.0, %v9091
    %v9093 = vpop.f32.mrf.mxu0
    %v9094 = vadd.f32 0.0, %v9093
    %9095 = vdwg.mxu0
    %v9100 = vrot.slane %v9021, 4
    %v9101 = vrot.slane %v9023, 4
    %v9102 = vrot.slane %v9092, 4
    %v9103 = vrot.slane %v9094, 4
    %v9108 = vadd.f32 %v7713, %v9100
    %v9109 = vadd.f32 %v7715, %v9101
    %v9110 = vadd.f32 %v7790, %v9102
    %v9111 = vadd.f32 %v7792, %v9103
    %v9112 = vxor.u32 %v9108, 2147483648
    %v9113 = vxor.u32 %v9109, 2147483648
    %v9114 = vxor.u32 %v9110, 2147483648
    %v9115 = vmul.f32 %v9112, 1.442695
    %v9116 = vpow.pop %v9115
    %v9117 = vmul.f32 %v9113, 1.442695
    %v9118 = vpow.pop %v9117
    %v9119 = vmul.f32 %v9114, 1.442695
    %v9120 = vpow.pop %v9119
    %v9121 = vadd.f32 %v9116, 1.0
    %v9122 = vadd.f32 %v9118, 1.0
    %v9123 = vadd.f32 %v9120, 1.0
    %v9124 = vrcp.pop %v9121
    %v9125 = vmul.f32 1.0, %v9124
    %v9126 = vrcp.pop %v9122
    %v9127 = vmul.f32 1.0, %v9126
    %v9128 = vrcp.pop %v9123
    %v9129 = vmul.f32 1.0, %v9128
    %v9130 = vtanh.pop %v9111
    %v9132 = vrot.slane %v8948, 6
    %v9134 = vmul.f32 %v9127, %v9132
    %v9135 = vmul.f32 %v9125, %v9130
    %v9136 = vadd.f32 %v9134, %v9135
    %v9137 = vtanh.pop %v9136
    %v9138 = vmul.f32 %v9129, %v9137
    %v9140 = vrot.slane %v9138, 4
    %9142 = vmatprep.subr.mxu0 %v7856
    %9143 = vmatpush1.msra.mxu0 %v7855
    %9144 = vmatprep.subr.mxu0 %v7852
    %9145 = vmatpush1.msra.mxu0 %v7851
    %9146 = vmatprep.subr.mxu0 %v7848
    %9147 = vmatpush1.msra.mxu0 %v7847
    %9148 = vmatprep.subr.mxu0 %v7844
    %9149 = vmatpush1.msra.mxu0 %v7843
    %9150 = vmatprep.subr.mxu0 %v7840
    %9151 = vmatpush1.msra.mxu0 %v7839
    %9152 = vmatprep.subr.mxu0 %v7836
    %9153 = vmatpush1.msra.mxu0 %v7835
    %9154 = vmatprep.subr.mxu0 %v7832
    %9155 = vmatpush1.msra.mxu0 %v7831
    %9156 = vmatprep.subr.mxu0 %v7828
    %9157 = vmatpush1.msra.mxu0 %v7827
    %9158 = vmatprep.subr.mxu0 %v7824
    %9159 = vmatpush1.msra.mxu0 %v7823
    %9160 = vmatprep.subr.mxu0 %v7820
    %9161 = vmatpush1.msra.mxu0 %v7819
    %9162 = vmatprep.subr.mxu0 %v7816
    %9163 = vmatpush1.msra.mxu0 %v7815
    %9164 = vmatprep.subr.mxu0 %v7812
    %9165 = vmatpush1.msra.mxu0 %v7811
    %9166 = vmatprep.subr.mxu0 %v7808
    %9167 = vmatpush1.msra.mxu0 %v7807
    %9168 = vmatprep.subr.mxu0 %v7804
    %9169 = vmatpush1.msra.mxu0 %v7803
    %9170 = vmatprep.subr.mxu0 %v7800
    %9171 = vmatpush1.msra.mxu0 %v7799
    %9172 = vmatprep.subr.mxu0 %v7796
    %9173 = vmatpush1.msra.mxu0 %v7795
    %9174 = vmatprep.subr.mxu0 0.0
    %9175 = vmatpush2.msra.mxu0 0.0
    %9176 = vmatprep.subr.mxu0 0.0
    %9177 = vmatpush2.msra.mxu0 0.0
    %9178 = vmatprep.subr.mxu0 0.0
    %9179 = vmatpush2.msra.mxu0 0.0
    %9180 = vmatprep.subr.mxu0 0.0
    %9181 = vmatpush2.msra.mxu0 0.0
    %9182 = vmatprep.subr.mxu0 0.0
    %9183 = vmatpush2.msra.mxu0 0.0
    %9184 = vmatprep.subr.mxu0 0.0
    %9185 = vmatpush2.msra.mxu0 0.0
    %9186 = vmatprep.subr.mxu0 0.0
    %9187 = vmatpush2.msra.mxu0 0.0
    %9188 = vmatprep.subr.mxu0 0.0
    %9189 = vmatpush2.msra.mxu0 0.0
    %9190 = vmatprep.subr.mxu0 0.0
    %9191 = vmatpush2.msra.mxu0 0.0
    %9192 = vmatprep.subr.mxu0 0.0
    %9193 = vmatpush2.msra.mxu0 0.0
    %9194 = vmatprep.subr.mxu0 0.0
    %9195 = vmatpush2.msra.mxu0 0.0
    %9196 = vmatprep.subr.mxu0 0.0
    %9197 = vmatpush2.msra.mxu0 0.0
    %9198 = vmatprep.subr.mxu0 0.0
    %9199 = vmatpush2.msra.mxu0 0.0
    %9200 = vmatprep.subr.mxu0 0.0
    %9201 = vmatpush2.msra.mxu0 0.0
    %9202 = vmatprep.subr.mxu0 0.0
    %9203 = vmatpush2.msra.mxu0 0.0
    %9204 = vmatprep.subr.mxu0 0.0
    %9205 = vmatpush2.msra.mxu0 0.0
    %9206 = vmatprep.mubr.f32.mxu0 0.0
    %9207 = vmatmul.mubr.f32.gmra.mxu0 %v9140
    %v9208 = vpop.f32.mrf.mxu0
    %v9209 = vadd.f32 0.0, %v9208
    %v9210 = vpop.f32.mrf.mxu0
    %v9211 = vadd.f32 0.0, %v9210
    %9212 = vdwg.mxu0
    %9213 = vmatprep.subr.mxu0 %v7858
    %9214 = vmatpush1.msra.mxu0 %v7857
    %9215 = vmatprep.subr.mxu0 %v7854
    %9216 = vmatpush1.msra.mxu0 %v7853
    %9217 = vmatprep.subr.mxu0 %v7850
    %9218 = vmatpush1.msra.mxu0 %v7849
    %9219 = vmatprep.subr.mxu0 %v7846
    %9220 = vmatpush1.msra.mxu0 %v7845
    %9221 = vmatprep.subr.mxu0 %v7842
    %9222 = vmatpush1.msra.mxu0 %v7841
    %9223 = vmatprep.subr.mxu0 %v7838
    %9224 = vmatpush1.msra.mxu0 %v7837
    %9225 = vmatprep.subr.mxu0 %v7834
    %9226 = vmatpush1.msra.mxu0 %v7833
    %9227 = vmatprep.subr.mxu0 %v7830
    %9228 = vmatpush1.msra.mxu0 %v7829
    %9229 = vmatprep.subr.mxu0 %v7826
    %9230 = vmatpush1.msra.mxu0 %v7825
    %9231 = vmatprep.subr.mxu0 %v7822
    %9232 = vmatpush1.msra.mxu0 %v7821
    %9233 = vmatprep.subr.mxu0 %v7818
    %9234 = vmatpush1.msra.mxu0 %v7817
    %9235 = vmatprep.subr.mxu0 %v7814
    %9236 = vmatpush1.msra.mxu0 %v7813
    %9237 = vmatprep.subr.mxu0 %v7810
    %9238 = vmatpush1.msra.mxu0 %v7809
    %9239 = vmatprep.subr.mxu0 %v7806
    %9240 = vmatpush1.msra.mxu0 %v7805
    %9241 = vmatprep.subr.mxu0 %v7802
    %9242 = vmatpush1.msra.mxu0 %v7801
    %9243 = vmatprep.subr.mxu0 %v7798
    %9244 = vmatpush1.msra.mxu0 %v7797
    %9245 = vmatprep.subr.mxu0 0.0
    %9246 = vmatpush2.msra.mxu0 0.0
    %9247 = vmatprep.subr.mxu0 0.0
    %9248 = vmatpush2.msra.mxu0 0.0
    %9249 = vmatprep.subr.mxu0 0.0
    %9250 = vmatpush2.msra.mxu0 0.0
    %9251 = vmatprep.subr.mxu0 0.0
    %9252 = vmatpush2.msra.mxu0 0.0
    %9253 = vmatprep.subr.mxu0 0.0
    %9254 = vmatpush2.msra.mxu0 0.0
    %9255 = vmatprep.subr.mxu0 0.0
    %9256 = vmatpush2.msra.mxu0 0.0
    %9257 = vmatprep.subr.mxu0 0.0
    %9258 = vmatpush2.msra.mxu0 0.0
    %9259 = vmatprep.subr.mxu0 0.0
    %9260 = vmatpush2.msra.mxu0 0.0
    %9261 = vmatprep.subr.mxu0 0.0
    %9262 = vmatpush2.msra.mxu0 0.0
    %9263 = vmatprep.subr.mxu0 0.0
    %9264 = vmatpush2.msra.mxu0 0.0
    %9265 = vmatprep.subr.mxu0 0.0
    %9266 = vmatpush2.msra.mxu0 0.0
    %9267 = vmatprep.subr.mxu0 0.0
    %9268 = vmatpush2.msra.mxu0 0.0
    %9269 = vmatprep.subr.mxu0 0.0
    %9270 = vmatpush2.msra.mxu0 0.0
    %9271 = vmatprep.subr.mxu0 0.0
    %9272 = vmatpush2.msra.mxu0 0.0
    %9273 = vmatprep.subr.mxu0 0.0
    %9274 = vmatpush2.msra.mxu0 0.0
    %9275 = vmatprep.subr.mxu0 0.0
    %9276 = vmatpush2.msra.mxu0 0.0
    %9277 = vmatprep.mubr.f32.mxu0 0.0
    %9278 = vmatmul.mubr.f32.gmra.mxu0 %v9140
    %v9279 = vpop.f32.mrf.mxu0
    %v9280 = vadd.f32 0.0, %v9279
    %v9281 = vpop.f32.mrf.mxu0
    %v9282 = vadd.f32 0.0, %v9281
    %9283 = vdwg.mxu0
    %v9288 = vrot.slane %v9209, 2
    %v9289 = vrot.slane %v9211, 2
    %v9290 = vrot.slane %v9280, 2
    %v9291 = vrot.slane %v9282, 2
    %v9296 = vadd.f32 %v7713, %v9288
    %v9297 = vadd.f32 %v7715, %v9289
    %v9298 = vadd.f32 %v7790, %v9290
    %v9299 = vadd.f32 %v7792, %v9291
    %v9300 = vxor.u32 %v9296, 2147483648
    %v9301 = vxor.u32 %v9297, 2147483648
    %v9302 = vxor.u32 %v9298, 2147483648
    %v9303 = vmul.f32 %v9300, 1.442695
    %v9304 = vpow.pop %v9303
    %v9305 = vmul.f32 %v9301, 1.442695
    %v9306 = vpow.pop %v9305
    %v9307 = vmul.f32 %v9302, 1.442695
    %v9308 = vpow.pop %v9307
    %v9309 = vadd.f32 %v9304, 1.0
    %v9310 = vadd.f32 %v9306, 1.0
    %v9311 = vadd.f32 %v9308, 1.0
    %v9312 = vrcp.pop %v9309
    %v9313 = vmul.f32 1.0, %v9312
    %v9314 = vrcp.pop %v9310
    %v9315 = vmul.f32 1.0, %v9314
    %v9316 = vrcp.pop %v9311
    %v9317 = vmul.f32 1.0, %v9316
    %v9318 = vtanh.pop %v9299
    %v9320 = vrot.slane %v9136, 6
    %v9322 = vmul.f32 %v9315, %v9320
    %v9323 = vmul.f32 %v9313, %v9318
    %v9324 = vadd.f32 %v9322, %v9323
    %v9325 = vtanh.pop %v9324
    %v9326 = vmul.f32 %v9317, %v9325
    %s9327 = scalar_lea.vmem [#allocation5], 3072
    %v9328 = vld [vmem:[%s9327] sm:$0xff]
    %v9329 = vld [vmem:[%s9327 + $0x8] sm:$0xff]
    %v9330 = vld [vmem:[%s9327 + $0x10] sm:$0xff]
    %v9331 = vld [vmem:[%s9327 + $0x18] sm:$0xff]
    %v9332 = vld [vmem:[%s9327 + $0x20] sm:$0xff]
    %v9333 = vld [vmem:[%s9327 + $0x28] sm:$0xff]
    %v9334 = vld [vmem:[%s9327 + $0x30] sm:$0xff]
    %v9335 = vld [vmem:[%s9327 + $0x38] sm:$0xff]
    %v9336 = vld [vmem:[%s9327 + $0x40] sm:$0xff]
    %v9337 = vld [vmem:[%s9327 + $0x48] sm:$0xff]
    %v9338 = vld [vmem:[%s9327 + $0x50] sm:$0xff]
    %v9339 = vld [vmem:[%s9327 + $0x58] sm:$0xff]
    %v9340 = vld [vmem:[%s9327 + $0x60] sm:$0xff]
    %v9341 = vld [vmem:[%s9327 + $0x68] sm:$0xff]
    %v9342 = vld [vmem:[%s9327 + $0x70] sm:$0xff]
    %v9343 = vld [vmem:[%s9327 + $0x78] sm:$0xff]
    %v9344 = vld [vmem:[%s9327 + $0x80] sm:$0xff]
    %v9345 = vld [vmem:[%s9327 + $0x88] sm:$0xff]
    %v9346 = vld [vmem:[%s9327 + $0x90] sm:$0xff]
    %v9347 = vld [vmem:[%s9327 + $0x98] sm:$0xff]
    %v9348 = vld [vmem:[%s9327 + $0xa0] sm:$0xff]
    %v9349 = vld [vmem:[%s9327 + $0xa8] sm:$0xff]
    %v9350 = vld [vmem:[%s9327 + $0xb0] sm:$0xff]
    %v9351 = vld [vmem:[%s9327 + $0xb8] sm:$0xff]
    %v9352 = vld [vmem:[%s9327 + $0xc0] sm:$0xff]
    %v9353 = vld [vmem:[%s9327 + $0xc8] sm:$0xff]
    %v9354 = vld [vmem:[%s9327 + $0xd0] sm:$0xff]
    %v9355 = vld [vmem:[%s9327 + $0xd8] sm:$0xff]
    %v9356 = vld [vmem:[%s9327 + $0xe0] sm:$0xff]
    %v9357 = vld [vmem:[%s9327 + $0xe8] sm:$0xff]
    %v9358 = vld [vmem:[%s9327 + $0xf0] sm:$0xff]
    %v9359 = vld [vmem:[%s9327 + $0xf8] sm:$0xff]
    %v9360 = vld [vmem:[%s9327 + $0x100] sm:$0xff]
    %v9361 = vld [vmem:[%s9327 + $0x108] sm:$0xff]
    %v9362 = vld [vmem:[%s9327 + $0x110] sm:$0xff]
    %v9363 = vld [vmem:[%s9327 + $0x118] sm:$0xff]
    %v9364 = vld [vmem:[%s9327 + $0x120] sm:$0xff]
    %v9365 = vld [vmem:[%s9327 + $0x128] sm:$0xff]
    %v9366 = vld [vmem:[%s9327 + $0x130] sm:$0xff]
    %v9367 = vld [vmem:[%s9327 + $0x138] sm:$0xff]
    %v9368 = vld [vmem:[%s9327 + $0x140] sm:$0xff]
    %v9369 = vld [vmem:[%s9327 + $0x148] sm:$0xff]
    %v9370 = vld [vmem:[%s9327 + $0x150] sm:$0xff]
    %v9371 = vld [vmem:[%s9327 + $0x158] sm:$0xff]
    %v9372 = vld [vmem:[%s9327 + $0x160] sm:$0xff]
    %v9373 = vld [vmem:[%s9327 + $0x168] sm:$0xff]
    %v9374 = vld [vmem:[%s9327 + $0x170] sm:$0xff]
    %v9375 = vld [vmem:[%s9327 + $0x178] sm:$0xff]
    %v9376 = vld [vmem:[%s9327 + $0x180] sm:$0xff]
    %v9377 = vld [vmem:[%s9327 + $0x188] sm:$0xff]
    %v9378 = vld [vmem:[%s9327 + $0x190] sm:$0xff]
    %v9379 = vld [vmem:[%s9327 + $0x198] sm:$0xff]
    %v9380 = vld [vmem:[%s9327 + $0x1a0] sm:$0xff]
    %v9381 = vld [vmem:[%s9327 + $0x1a8] sm:$0xff]
    %v9382 = vld [vmem:[%s9327 + $0x1b0] sm:$0xff]
    %v9383 = vld [vmem:[%s9327 + $0x1b8] sm:$0xff]
    %v9384 = vld [vmem:[%s9327 + $0x1c0] sm:$0xff]
    %v9385 = vld [vmem:[%s9327 + $0x1c8] sm:$0xff]
    %v9386 = vld [vmem:[%s9327 + $0x1d0] sm:$0xff]
    %v9387 = vld [vmem:[%s9327 + $0x1d8] sm:$0xff]
    %v9388 = vld [vmem:[%s9327 + $0x1e0] sm:$0xff]
    %v9389 = vld [vmem:[%s9327 + $0x1e8] sm:$0xff]
    %v9390 = vld [vmem:[%s9327 + $0x1f0] sm:$0xff]
    %v9391 = vld [vmem:[%s9327 + $0x1f8] sm:$0xff]
    %v9392 = vld [vmem:[%s9327 + $0x200] sm:$0xff]
    %v9393 = vld [vmem:[%s9327 + $0x208] sm:$0xff]
    %v9394 = vld [vmem:[%s9327 + $0x210] sm:$0xff]
    %v9395 = vld [vmem:[%s9327 + $0x218] sm:$0xff]
    %v9396 = vld [vmem:[%s9327 + $0x220] sm:$0xff]
    %v9397 = vld [vmem:[%s9327 + $0x228] sm:$0xff]
    %v9398 = vld [vmem:[%s9327 + $0x230] sm:$0xff]
    %v9399 = vld [vmem:[%s9327 + $0x238] sm:$0xff]
    %v9400 = vld [vmem:[%s9327 + $0x240] sm:$0xff]
    %v9401 = vld [vmem:[%s9327 + $0x248] sm:$0xff]
    %v9402 = vld [vmem:[%s9327 + $0x250] sm:$0xff]
    %v9403 = vld [vmem:[%s9327 + $0x258] sm:$0xff]
    %v9404 = vld [vmem:[%s9327 + $0x260] sm:$0xff]
    %v9405 = vld [vmem:[%s9327 + $0x268] sm:$0xff]
    %v9406 = vld [vmem:[%s9327 + $0x270] sm:$0xff]
    %v9407 = vld [vmem:[%s9327 + $0x278] sm:$0xff]
    %v9408 = vld [vmem:[%s9327 + $0x280] sm:$0xff]
    %v9409 = vld [vmem:[%s9327 + $0x288] sm:$0xff]
    %v9410 = vld [vmem:[%s9327 + $0x290] sm:$0xff]
    %v9411 = vld [vmem:[%s9327 + $0x298] sm:$0xff]
    %v9412 = vld [vmem:[%s9327 + $0x2a0] sm:$0xff]
    %v9413 = vld [vmem:[%s9327 + $0x2a8] sm:$0xff]
    %v9414 = vld [vmem:[%s9327 + $0x2b0] sm:$0xff]
    %v9415 = vld [vmem:[%s9327 + $0x2b8] sm:$0xff]
    %v9416 = vld [vmem:[%s9327 + $0x2c0] sm:$0xff]
    %v9417 = vld [vmem:[%s9327 + $0x2c8] sm:$0xff]
    %v9418 = vld [vmem:[%s9327 + $0x2d0] sm:$0xff]
    %v9419 = vld [vmem:[%s9327 + $0x2d8] sm:$0xff]
    %v9420 = vld [vmem:[%s9327 + $0x2e0] sm:$0xff]
    %v9421 = vld [vmem:[%s9327 + $0x2e8] sm:$0xff]
    %v9422 = vld [vmem:[%s9327 + $0x2f0] sm:$0xff]
    %v9423 = vld [vmem:[%s9327 + $0x2f8] sm:$0xff]
    %v9424 = vld [vmem:[%s9327 + $0x300] sm:$0xff]
    %v9425 = vld [vmem:[%s9327 + $0x308] sm:$0xff]
    %v9426 = vld [vmem:[%s9327 + $0x310] sm:$0xff]
    %v9427 = vld [vmem:[%s9327 + $0x318] sm:$0xff]
    %v9428 = vld [vmem:[%s9327 + $0x320] sm:$0xff]
    %v9429 = vld [vmem:[%s9327 + $0x328] sm:$0xff]
    %v9430 = vld [vmem:[%s9327 + $0x330] sm:$0xff]
    %v9431 = vld [vmem:[%s9327 + $0x338] sm:$0xff]
    %v9432 = vld [vmem:[%s9327 + $0x340] sm:$0xff]
    %v9433 = vld [vmem:[%s9327 + $0x348] sm:$0xff]
    %v9434 = vld [vmem:[%s9327 + $0x350] sm:$0xff]
    %v9435 = vld [vmem:[%s9327 + $0x358] sm:$0xff]
    %v9436 = vld [vmem:[%s9327 + $0x360] sm:$0xff]
    %v9437 = vld [vmem:[%s9327 + $0x368] sm:$0xff]
    %v9438 = vld [vmem:[%s9327 + $0x370] sm:$0xff]
    %v9439 = vld [vmem:[%s9327 + $0x378] sm:$0xff]
    %v9440 = vld [vmem:[%s9327 + $0x380] sm:$0xff]
    %v9441 = vld [vmem:[%s9327 + $0x388] sm:$0xff]
    %v9442 = vld [vmem:[%s9327 + $0x390] sm:$0xff]
    %v9443 = vld [vmem:[%s9327 + $0x398] sm:$0xff]
    %v9444 = vld [vmem:[%s9327 + $0x3a0] sm:$0xff]
    %v9445 = vld [vmem:[%s9327 + $0x3a8] sm:$0xff]
    %v9446 = vld [vmem:[%s9327 + $0x3b0] sm:$0xff]
    %v9447 = vld [vmem:[%s9327 + $0x3b8] sm:$0xff]
    %v9448 = vld [vmem:[%s9327 + $0x3c0] sm:$0xff]
    %v9449 = vld [vmem:[%s9327 + $0x3c8] sm:$0xff]
    %v9450 = vld [vmem:[%s9327 + $0x3d0] sm:$0xff]
    %v9451 = vld [vmem:[%s9327 + $0x3d8] sm:$0xff]
    %v9452 = vld [vmem:[%s9327 + $0x3e0] sm:$0xff]
    %v9453 = vld [vmem:[%s9327 + $0x3e8] sm:$0xff]
    %v9454 = vld [vmem:[%s9327 + $0x3f0] sm:$0xff]
    %v9455 = vld [vmem:[%s9327 + $0x3f8] sm:$0xff]
    %s9456 = scalar_lea.vmem [#allocation8], 20
    %v9457 = vld [vmem:[%s9456] sm:$0xf]
    %v9459 = vlaneseq
    %v9460 = vshrl.u32 %v9459, 7
    %v9461 = vsub.s32 0, %v9460
    %v9462 = vrot.slane %v9457, %v9461
    %v9463 = vlaneseq
    %v9464 = vshrl.u32 %v9463, 7
    %v9465 = vsub.s32 1, %v9464
    %v9466 = vrot.slane %v9457, %v9465
    %v9467 = vlaneseq
    %v9468 = vshrl.u32 %v9467, 7
    %v9469 = vsub.s32 2, %v9468
    %v9470 = vrot.slane %v9457, %v9469
    %v9471 = vlaneseq
    %v9472 = vshrl.u32 %v9471, 7
    %v9473 = vsub.s32 3, %v9472
    %v9474 = vrot.slane %v9457, %v9473
    %9479 = vmatprep.subr.mxu0 %v9389
    %9480 = vmatpush1.msra.mxu0 %v9388
    %9481 = vmatprep.subr.mxu0 %v9385
    %9482 = vmatpush1.msra.mxu0 %v9384
    %9483 = vmatprep.subr.mxu0 %v9381
    %9484 = vmatpush1.msra.mxu0 %v9380
    %9485 = vmatprep.subr.mxu0 %v9377
    %9486 = vmatpush1.msra.mxu0 %v9376
    %9487 = vmatprep.subr.mxu0 %v9373
    %9488 = vmatpush1.msra.mxu0 %v9372
    %9489 = vmatprep.subr.mxu0 %v9369
    %9490 = vmatpush1.msra.mxu0 %v9368
    %9491 = vmatprep.subr.mxu0 %v9365
    %9492 = vmatpush1.msra.mxu0 %v9364
    %9493 = vmatprep.subr.mxu0 %v9361
    %9494 = vmatpush1.msra.mxu0 %v9360
    %9495 = vmatprep.subr.mxu0 %v9357
    %9496 = vmatpush1.msra.mxu0 %v9356
    %9497 = vmatprep.subr.mxu0 %v9353
    %9498 = vmatpush1.msra.mxu0 %v9352
    %9499 = vmatprep.subr.mxu0 %v9349
    %9500 = vmatpush1.msra.mxu0 %v9348
    %9501 = vmatprep.subr.mxu0 %v9345
    %9502 = vmatpush1.msra.mxu0 %v9344
    %9503 = vmatprep.subr.mxu0 %v9341
    %9504 = vmatpush1.msra.mxu0 %v9340
    %9505 = vmatprep.subr.mxu0 %v9337
    %9506 = vmatpush1.msra.mxu0 %v9336
    %9507 = vmatprep.subr.mxu0 %v9333
    %9508 = vmatpush1.msra.mxu0 %v9332
    %9509 = vmatprep.subr.mxu0 %v9329
    %9510 = vmatpush1.msra.mxu0 %v9328
    %9511 = vmatprep.subr.mxu0 %v9453
    %9512 = vmatpush2.msra.mxu0 %v9452
    %9513 = vmatprep.subr.mxu0 %v9449
    %9514 = vmatpush2.msra.mxu0 %v9448
    %9515 = vmatprep.subr.mxu0 %v9445
    %9516 = vmatpush2.msra.mxu0 %v9444
    %9517 = vmatprep.subr.mxu0 %v9441
    %9518 = vmatpush2.msra.mxu0 %v9440
    %9519 = vmatprep.subr.mxu0 %v9437
    %9520 = vmatpush2.msra.mxu0 %v9436
    %9521 = vmatprep.subr.mxu0 %v9433
    %9522 = vmatpush2.msra.mxu0 %v9432
    %9523 = vmatprep.subr.mxu0 %v9429
    %9524 = vmatpush2.msra.mxu0 %v9428
    %9525 = vmatprep.subr.mxu0 %v9425
    %9526 = vmatpush2.msra.mxu0 %v9424
    %9527 = vmatprep.subr.mxu0 %v9421
    %9528 = vmatpush2.msra.mxu0 %v9420
    %9529 = vmatprep.subr.mxu0 %v9417
    %9530 = vmatpush2.msra.mxu0 %v9416
    %9531 = vmatprep.subr.mxu0 %v9413
    %9532 = vmatpush2.msra.mxu0 %v9412
    %9533 = vmatprep.subr.mxu0 %v9409
    %9534 = vmatpush2.msra.mxu0 %v9408
    %9535 = vmatprep.subr.mxu0 %v9405
    %9536 = vmatpush2.msra.mxu0 %v9404
    %9537 = vmatprep.subr.mxu0 %v9401
    %9538 = vmatpush2.msra.mxu0 %v9400
    %9539 = vmatprep.subr.mxu0 %v9397
    %9540 = vmatpush2.msra.mxu0 %v9396
    %9541 = vmatprep.subr.mxu0 %v9393
    %9542 = vmatpush2.msra.mxu0 %v9392
    %9543 = vmatprep.mubr.f32.mxu0 %v7484
    %9544 = vmatmul.mubr.f32.gmra.mxu0 %v7478
    %v9545 = vpop.f32.mrf.mxu0
    %v9546 = vpop.f32.mrf.mxu0
    %9547 = vmatprep.mubr.f32.mxu0 %v7487
    %9548 = vmatmul.mubr.f32.gmra.mxu0 %v7481
    %v9549 = vpop.f32.mrf.mxu0
    %v9550 = vadd.f32 %v9462, %v9549
    %v9551 = vpop.f32.mrf.mxu0
    %v9552 = vadd.f32 %v9466, %v9551
    %9553 = vdwg.mxu0
    %9554 = vmatprep.subr.mxu0 %v9391
    %9555 = vmatpush1.msra.mxu0 %v9390
    %9556 = vmatprep.subr.mxu0 %v9387
    %9557 = vmatpush1.msra.mxu0 %v9386
    %9558 = vmatprep.subr.mxu0 %v9383
    %9559 = vmatpush1.msra.mxu0 %v9382
    %9560 = vmatprep.subr.mxu0 %v9379
    %9561 = vmatpush1.msra.mxu0 %v9378
    %9562 = vmatprep.subr.mxu0 %v9375
    %9563 = vmatpush1.msra.mxu0 %v9374
    %9564 = vmatprep.subr.mxu0 %v9371
    %9565 = vmatpush1.msra.mxu0 %v9370
    %9566 = vmatprep.subr.mxu0 %v9367
    %9567 = vmatpush1.msra.mxu0 %v9366
    %9568 = vmatprep.subr.mxu0 %v9363
    %9569 = vmatpush1.msra.mxu0 %v9362
    %9570 = vmatprep.subr.mxu0 %v9359
    %9571 = vmatpush1.msra.mxu0 %v9358
    %9572 = vmatprep.subr.mxu0 %v9355
    %9573 = vmatpush1.msra.mxu0 %v9354
    %9574 = vmatprep.subr.mxu0 %v9351
    %9575 = vmatpush1.msra.mxu0 %v9350
    %9576 = vmatprep.subr.mxu0 %v9347
    %9577 = vmatpush1.msra.mxu0 %v9346
    %9578 = vmatprep.subr.mxu0 %v9343
    %9579 = vmatpush1.msra.mxu0 %v9342
    %9580 = vmatprep.subr.mxu0 %v9339
    %9581 = vmatpush1.msra.mxu0 %v9338
    %9582 = vmatprep.subr.mxu0 %v9335
    %9583 = vmatpush1.msra.mxu0 %v9334
    %9584 = vmatprep.subr.mxu0 %v9331
    %9585 = vmatpush1.msra.mxu0 %v9330
    %9586 = vmatprep.subr.mxu0 %v9455
    %9587 = vmatpush2.msra.mxu0 %v9454
    %9588 = vmatprep.subr.mxu0 %v9451
    %9589 = vmatpush2.msra.mxu0 %v9450
    %9590 = vmatprep.subr.mxu0 %v9447
    %9591 = vmatpush2.msra.mxu0 %v9446
    %9592 = vmatprep.subr.mxu0 %v9443
    %9593 = vmatpush2.msra.mxu0 %v9442
    %9594 = vmatprep.subr.mxu0 %v9439
    %9595 = vmatpush2.msra.mxu0 %v9438
    %9596 = vmatprep.subr.mxu0 %v9435
    %9597 = vmatpush2.msra.mxu0 %v9434
    %9598 = vmatprep.subr.mxu0 %v9431
    %9599 = vmatpush2.msra.mxu0 %v9430
    %9600 = vmatprep.subr.mxu0 %v9427
    %9601 = vmatpush2.msra.mxu0 %v9426
    %9602 = vmatprep.subr.mxu0 %v9423
    %9603 = vmatpush2.msra.mxu0 %v9422
    %9604 = vmatprep.subr.mxu0 %v9419
    %9605 = vmatpush2.msra.mxu0 %v9418
    %9606 = vmatprep.subr.mxu0 %v9415
    %9607 = vmatpush2.msra.mxu0 %v9414
    %9608 = vmatprep.subr.mxu0 %v9411
    %9609 = vmatpush2.msra.mxu0 %v9410
    %9610 = vmatprep.subr.mxu0 %v9407
    %9611 = vmatpush2.msra.mxu0 %v9406
    %9612 = vmatprep.subr.mxu0 %v9403
    %9613 = vmatpush2.msra.mxu0 %v9402
    %9614 = vmatprep.subr.mxu0 %v9399
    %9615 = vmatpush2.msra.mxu0 %v9398
    %9616 = vmatprep.subr.mxu0 %v9395
    %9617 = vmatpush2.msra.mxu0 %v9394
    %9618 = vmatprep.mubr.f32.mxu0 %v7484
    %9619 = vmatmul.mubr.f32.gmra.mxu0 %v7478
    %v9620 = vpop.f32.mrf.mxu0
    %v9621 = vpop.f32.mrf.mxu0
    %9622 = vmatprep.mubr.f32.mxu0 %v7487
    %9623 = vmatmul.mubr.f32.gmra.mxu0 %v7481
    %v9624 = vpop.f32.mrf.mxu0
    %v9625 = vadd.f32 %v9470, %v9624
    %v9626 = vpop.f32.mrf.mxu0
    %v9627 = vadd.f32 %v9474, %v9626
    %9628 = vdwg.mxu0
    %s9629 = scalar_lea.vmem [#allocation7], 2560
    %v9630 = vld [vmem:[%s9629] sm:$0xff]
    %v9631 = vld [vmem:[%s9629 + $0x8] sm:$0xff]
    %v9632 = vld [vmem:[%s9629 + $0x10] sm:$0xff]
    %v9633 = vld [vmem:[%s9629 + $0x18] sm:$0xff]
    %v9634 = vld [vmem:[%s9629 + $0x20] sm:$0xff]
    %v9635 = vld [vmem:[%s9629 + $0x28] sm:$0xff]
    %v9636 = vld [vmem:[%s9629 + $0x30] sm:$0xff]
    %v9637 = vld [vmem:[%s9629 + $0x38] sm:$0xff]
    %v9638 = vld [vmem:[%s9629 + $0x40] sm:$0xff]
    %v9639 = vld [vmem:[%s9629 + $0x48] sm:$0xff]
    %v9640 = vld [vmem:[%s9629 + $0x50] sm:$0xff]
    %v9641 = vld [vmem:[%s9629 + $0x58] sm:$0xff]
    %v9642 = vld [vmem:[%s9629 + $0x60] sm:$0xff]
    %v9643 = vld [vmem:[%s9629 + $0x68] sm:$0xff]
    %v9644 = vld [vmem:[%s9629 + $0x70] sm:$0xff]
    %v9645 = vld [vmem:[%s9629 + $0x78] sm:$0xff]
    %v9646 = vld [vmem:[%s9629 + $0x80] sm:$0xff]
    %v9647 = vld [vmem:[%s9629 + $0x88] sm:$0xff]
    %v9648 = vld [vmem:[%s9629 + $0x90] sm:$0xff]
    %v9649 = vld [vmem:[%s9629 + $0x98] sm:$0xff]
    %v9650 = vld [vmem:[%s9629 + $0xa0] sm:$0xff]
    %v9651 = vld [vmem:[%s9629 + $0xa8] sm:$0xff]
    %v9652 = vld [vmem:[%s9629 + $0xb0] sm:$0xff]
    %v9653 = vld [vmem:[%s9629 + $0xb8] sm:$0xff]
    %v9654 = vld [vmem:[%s9629 + $0xc0] sm:$0xff]
    %v9655 = vld [vmem:[%s9629 + $0xc8] sm:$0xff]
    %v9656 = vld [vmem:[%s9629 + $0xd0] sm:$0xff]
    %v9657 = vld [vmem:[%s9629 + $0xd8] sm:$0xff]
    %v9658 = vld [vmem:[%s9629 + $0xe0] sm:$0xff]
    %v9659 = vld [vmem:[%s9629 + $0xe8] sm:$0xff]
    %v9660 = vld [vmem:[%s9629 + $0xf0] sm:$0xff]
    %v9661 = vld [vmem:[%s9629 + $0xf8] sm:$0xff]
    %v9662 = vld [vmem:[%s9629 + $0x100] sm:$0xff]
    %v9663 = vld [vmem:[%s9629 + $0x108] sm:$0xff]
    %v9664 = vld [vmem:[%s9629 + $0x110] sm:$0xff]
    %v9665 = vld [vmem:[%s9629 + $0x118] sm:$0xff]
    %v9666 = vld [vmem:[%s9629 + $0x120] sm:$0xff]
    %v9667 = vld [vmem:[%s9629 + $0x128] sm:$0xff]
    %v9668 = vld [vmem:[%s9629 + $0x130] sm:$0xff]
    %v9669 = vld [vmem:[%s9629 + $0x138] sm:$0xff]
    %v9670 = vld [vmem:[%s9629 + $0x140] sm:$0xff]
    %v9671 = vld [vmem:[%s9629 + $0x148] sm:$0xff]
    %v9672 = vld [vmem:[%s9629 + $0x150] sm:$0xff]
    %v9673 = vld [vmem:[%s9629 + $0x158] sm:$0xff]
    %v9674 = vld [vmem:[%s9629 + $0x160] sm:$0xff]
    %v9675 = vld [vmem:[%s9629 + $0x168] sm:$0xff]
    %v9676 = vld [vmem:[%s9629 + $0x170] sm:$0xff]
    %v9677 = vld [vmem:[%s9629 + $0x178] sm:$0xff]
    %v9678 = vld [vmem:[%s9629 + $0x180] sm:$0xff]
    %v9679 = vld [vmem:[%s9629 + $0x188] sm:$0xff]
    %v9680 = vld [vmem:[%s9629 + $0x190] sm:$0xff]
    %v9681 = vld [vmem:[%s9629 + $0x198] sm:$0xff]
    %v9682 = vld [vmem:[%s9629 + $0x1a0] sm:$0xff]
    %v9683 = vld [vmem:[%s9629 + $0x1a8] sm:$0xff]
    %v9684 = vld [vmem:[%s9629 + $0x1b0] sm:$0xff]
    %v9685 = vld [vmem:[%s9629 + $0x1b8] sm:$0xff]
    %v9686 = vld [vmem:[%s9629 + $0x1c0] sm:$0xff]
    %v9687 = vld [vmem:[%s9629 + $0x1c8] sm:$0xff]
    %v9688 = vld [vmem:[%s9629 + $0x1d0] sm:$0xff]
    %v9689 = vld [vmem:[%s9629 + $0x1d8] sm:$0xff]
    %v9690 = vld [vmem:[%s9629 + $0x1e0] sm:$0xff]
    %v9691 = vld [vmem:[%s9629 + $0x1e8] sm:$0xff]
    %v9692 = vld [vmem:[%s9629 + $0x1f0] sm:$0xff]
    %v9693 = vld [vmem:[%s9629 + $0x1f8] sm:$0xff]
    %9694 = vmatprep.subr.mxu0 %v9691
    %9695 = vmatpush1.msra.mxu0 %v9690
    %9696 = vmatprep.subr.mxu0 %v9687
    %9697 = vmatpush1.msra.mxu0 %v9686
    %9698 = vmatprep.subr.mxu0 %v9683
    %9699 = vmatpush1.msra.mxu0 %v9682
    %9700 = vmatprep.subr.mxu0 %v9679
    %9701 = vmatpush1.msra.mxu0 %v9678
    %9702 = vmatprep.subr.mxu0 %v9675
    %9703 = vmatpush1.msra.mxu0 %v9674
    %9704 = vmatprep.subr.mxu0 %v9671
    %9705 = vmatpush1.msra.mxu0 %v9670
    %9706 = vmatprep.subr.mxu0 %v9667
    %9707 = vmatpush1.msra.mxu0 %v9666
    %9708 = vmatprep.subr.mxu0 %v9663
    %9709 = vmatpush1.msra.mxu0 %v9662
    %9710 = vmatprep.subr.mxu0 %v9659
    %9711 = vmatpush1.msra.mxu0 %v9658
    %9712 = vmatprep.subr.mxu0 %v9655
    %9713 = vmatpush1.msra.mxu0 %v9654
    %9714 = vmatprep.subr.mxu0 %v9651
    %9715 = vmatpush1.msra.mxu0 %v9650
    %9716 = vmatprep.subr.mxu0 %v9647
    %9717 = vmatpush1.msra.mxu0 %v9646
    %9718 = vmatprep.subr.mxu0 %v9643
    %9719 = vmatpush1.msra.mxu0 %v9642
    %9720 = vmatprep.subr.mxu0 %v9639
    %9721 = vmatpush1.msra.mxu0 %v9638
    %9722 = vmatprep.subr.mxu0 %v9635
    %9723 = vmatpush1.msra.mxu0 %v9634
    %9724 = vmatprep.subr.mxu0 %v9631
    %9725 = vmatpush1.msra.mxu0 %v9630
    %9726 = vmatprep.subr.mxu0 0.0
    %9727 = vmatpush2.msra.mxu0 0.0
    %9728 = vmatprep.subr.mxu0 0.0
    %9729 = vmatpush2.msra.mxu0 0.0
    %9730 = vmatprep.subr.mxu0 0.0
    %9731 = vmatpush2.msra.mxu0 0.0
    %9732 = vmatprep.subr.mxu0 0.0
    %9733 = vmatpush2.msra.mxu0 0.0
    %9734 = vmatprep.subr.mxu0 0.0
    %9735 = vmatpush2.msra.mxu0 0.0
    %9736 = vmatprep.subr.mxu0 0.0
    %9737 = vmatpush2.msra.mxu0 0.0
    %9738 = vmatprep.subr.mxu0 0.0
    %9739 = vmatpush2.msra.mxu0 0.0
    %9740 = vmatprep.subr.mxu0 0.0
    %9741 = vmatpush2.msra.mxu0 0.0
    %9742 = vmatprep.subr.mxu0 0.0
    %9743 = vmatpush2.msra.mxu0 0.0
    %9744 = vmatprep.subr.mxu0 0.0
    %9745 = vmatpush2.msra.mxu0 0.0
    %9746 = vmatprep.subr.mxu0 0.0
    %9747 = vmatpush2.msra.mxu0 0.0
    %9748 = vmatprep.subr.mxu0 0.0
    %9749 = vmatpush2.msra.mxu0 0.0
    %9750 = vmatprep.subr.mxu0 0.0
    %9751 = vmatpush2.msra.mxu0 0.0
    %9752 = vmatprep.subr.mxu0 0.0
    %9753 = vmatpush2.msra.mxu0 0.0
    %9754 = vmatprep.subr.mxu0 0.0
    %9755 = vmatpush2.msra.mxu0 0.0
    %9756 = vmatprep.subr.mxu0 0.0
    %9757 = vmatpush2.msra.mxu0 0.0
    %9758 = vmatprep.mubr.f32.mxu0 0.0
    %9759 = vmatmul.mubr.f32.gmra.mxu0 0.0
    %v9760 = vpop.f32.mrf.mxu0
    %v9761 = vadd.f32 0.0, %v9760
    %v9762 = vpop.f32.mrf.mxu0
    %v9763 = vadd.f32 0.0, %v9762
    %9764 = vdwg.mxu0
    %9765 = vmatprep.subr.mxu0 %v9693
    %9766 = vmatpush1.msra.mxu0 %v9692
    %9767 = vmatprep.subr.mxu0 %v9689
    %9768 = vmatpush1.msra.mxu0 %v9688
    %9769 = vmatprep.subr.mxu0 %v9685
    %9770 = vmatpush1.msra.mxu0 %v9684
    %9771 = vmatprep.subr.mxu0 %v9681
    %9772 = vmatpush1.msra.mxu0 %v9680
    %9773 = vmatprep.subr.mxu0 %v9677
    %9774 = vmatpush1.msra.mxu0 %v9676
    %9775 = vmatprep.subr.mxu0 %v9673
    %9776 = vmatpush1.msra.mxu0 %v9672
    %9777 = vmatprep.subr.mxu0 %v9669
    %9778 = vmatpush1.msra.mxu0 %v9668
    %9779 = vmatprep.subr.mxu0 %v9665
    %9780 = vmatpush1.msra.mxu0 %v9664
    %9781 = vmatprep.subr.mxu0 %v9661
    %9782 = vmatpush1.msra.mxu0 %v9660
    %9783 = vmatprep.subr.mxu0 %v9657
    %9784 = vmatpush1.msra.mxu0 %v9656
    %9785 = vmatprep.subr.mxu0 %v9653
    %9786 = vmatpush1.msra.mxu0 %v9652
    %9787 = vmatprep.subr.mxu0 %v9649
    %9788 = vmatpush1.msra.mxu0 %v9648
    %9789 = vmatprep.subr.mxu0 %v9645
    %9790 = vmatpush1.msra.mxu0 %v9644
    %9791 = vmatprep.subr.mxu0 %v9641
    %9792 = vmatpush1.msra.mxu0 %v9640
    %9793 = vmatprep.subr.mxu0 %v9637
    %9794 = vmatpush1.msra.mxu0 %v9636
    %9795 = vmatprep.subr.mxu0 %v9633
    %9796 = vmatpush1.msra.mxu0 %v9632
    %9797 = vmatprep.subr.mxu0 0.0
    %9798 = vmatpush2.msra.mxu0 0.0
    %9799 = vmatprep.subr.mxu0 0.0
    %9800 = vmatpush2.msra.mxu0 0.0
    %9801 = vmatprep.subr.mxu0 0.0
    %9802 = vmatpush2.msra.mxu0 0.0
    %9803 = vmatprep.subr.mxu0 0.0
    %9804 = vmatpush2.msra.mxu0 0.0
    %9805 = vmatprep.subr.mxu0 0.0
    %9806 = vmatpush2.msra.mxu0 0.0
    %9807 = vmatprep.subr.mxu0 0.0
    %9808 = vmatpush2.msra.mxu0 0.0
    %9809 = vmatprep.subr.mxu0 0.0
    %9810 = vmatpush2.msra.mxu0 0.0
    %9811 = vmatprep.subr.mxu0 0.0
    %9812 = vmatpush2.msra.mxu0 0.0
    %9813 = vmatprep.subr.mxu0 0.0
    %9814 = vmatpush2.msra.mxu0 0.0
    %9815 = vmatprep.subr.mxu0 0.0
    %9816 = vmatpush2.msra.mxu0 0.0
    %9817 = vmatprep.subr.mxu0 0.0
    %9818 = vmatpush2.msra.mxu0 0.0
    %9819 = vmatprep.subr.mxu0 0.0
    %9820 = vmatpush2.msra.mxu0 0.0
    %9821 = vmatprep.subr.mxu0 0.0
    %9822 = vmatpush2.msra.mxu0 0.0
    %9823 = vmatprep.subr.mxu0 0.0
    %9824 = vmatpush2.msra.mxu0 0.0
    %9825 = vmatprep.subr.mxu0 0.0
    %9826 = vmatpush2.msra.mxu0 0.0
    %9827 = vmatprep.subr.mxu0 0.0
    %9828 = vmatpush2.msra.mxu0 0.0
    %9829 = vmatprep.mubr.f32.mxu0 0.0
    %9830 = vmatmul.mubr.f32.gmra.mxu0 0.0
    %v9831 = vpop.f32.mrf.mxu0
    %v9832 = vadd.f32 0.0, %v9831
    %v9833 = vpop.f32.mrf.mxu0
    %v9834 = vadd.f32 0.0, %v9833
    %9835 = vdwg.mxu0
    %v9840 = vrot.slane %v9761, 2
    %v9841 = vrot.slane %v9763, 2
    %v9842 = vrot.slane %v9832, 2
    %v9843 = vrot.slane %v9834, 2
    %v9848 = vadd.f32 %v9550, %v9840
    %v9849 = vadd.f32 %v9552, %v9841
    %v9850 = vadd.f32 %v9625, %v9842
    %v9851 = vadd.f32 %v9627, %v9843
    %v9852 = vxor.u32 %v9848, 2147483648
    %v9853 = vxor.u32 %v9849, 2147483648
    %v9854 = vxor.u32 %v9850, 2147483648
    %v9855 = vmul.f32 %v9852, 1.442695
    %v9856 = vpow.pop %v9855
    %v9857 = vmul.f32 %v9853, 1.442695
    %v9858 = vpow.pop %v9857
    %v9859 = vmul.f32 %v9854, 1.442695
    %v9860 = vpow.pop %v9859
    %v9861 = vadd.f32 %v9856, 1.0
    %v9862 = vadd.f32 %v9858, 1.0
    %v9863 = vadd.f32 %v9860, 1.0
    %v9864 = vrcp.pop %v9861
    %v9865 = vmul.f32 1.0, %v9864
    %v9866 = vrcp.pop %v9862
    %v9867 = vmul.f32 1.0, %v9866
    %v9868 = vrcp.pop %v9863
    %v9869 = vmul.f32 1.0, %v9868
    %v9870 = vtanh.pop %v9851
    %v9871 = vmul.f32 %v9867, 0.0
    %v9872 = vmul.f32 %v9865, %v9870
    %v9873 = vadd.f32 %v9871, %v9872
    %v9874 = vtanh.pop %v9873
    %v9875 = vmul.f32 %v9869, %v9874
    %v9877 = vrot.slane %v9875, 6
    %9879 = vmatprep.subr.mxu0 %v9691
    %9880 = vmatpush1.msra.mxu0 %v9690
    %9881 = vmatprep.subr.mxu0 %v9687
    %9882 = vmatpush1.msra.mxu0 %v9686
    %9883 = vmatprep.subr.mxu0 %v9683
    %9884 = vmatpush1.msra.mxu0 %v9682
    %9885 = vmatprep.subr.mxu0 %v9679
    %9886 = vmatpush1.msra.mxu0 %v9678
    %9887 = vmatprep.subr.mxu0 %v9675
    %9888 = vmatpush1.msra.mxu0 %v9674
    %9889 = vmatprep.subr.mxu0 %v9671
    %9890 = vmatpush1.msra.mxu0 %v9670
    %9891 = vmatprep.subr.mxu0 %v9667
    %9892 = vmatpush1.msra.mxu0 %v9666
    %9893 = vmatprep.subr.mxu0 %v9663
    %9894 = vmatpush1.msra.mxu0 %v9662
    %9895 = vmatprep.subr.mxu0 %v9659
    %9896 = vmatpush1.msra.mxu0 %v9658
    %9897 = vmatprep.subr.mxu0 %v9655
    %9898 = vmatpush1.msra.mxu0 %v9654
    %9899 = vmatprep.subr.mxu0 %v9651
    %9900 = vmatpush1.msra.mxu0 %v9650
    %9901 = vmatprep.subr.mxu0 %v9647
    %9902 = vmatpush1.msra.mxu0 %v9646
    %9903 = vmatprep.subr.mxu0 %v9643
    %9904 = vmatpush1.msra.mxu0 %v9642
    %9905 = vmatprep.subr.mxu0 %v9639
    %9906 = vmatpush1.msra.mxu0 %v9638
    %9907 = vmatprep.subr.mxu0 %v9635
    %9908 = vmatpush1.msra.mxu0 %v9634
    %9909 = vmatprep.subr.mxu0 %v9631
    %9910 = vmatpush1.msra.mxu0 %v9630
    %9911 = vmatprep.subr.mxu0 0.0
    %9912 = vmatpush2.msra.mxu0 0.0
    %9913 = vmatprep.subr.mxu0 0.0
    %9914 = vmatpush2.msra.mxu0 0.0
    %9915 = vmatprep.subr.mxu0 0.0
    %9916 = vmatpush2.msra.mxu0 0.0
    %9917 = vmatprep.subr.mxu0 0.0
    %9918 = vmatpush2.msra.mxu0 0.0
    %9919 = vmatprep.subr.mxu0 0.0
    %9920 = vmatpush2.msra.mxu0 0.0
    %9921 = vmatprep.subr.mxu0 0.0
    %9922 = vmatpush2.msra.mxu0 0.0
    %9923 = vmatprep.subr.mxu0 0.0
    %9924 = vmatpush2.msra.mxu0 0.0
    %9925 = vmatprep.subr.mxu0 0.0
    %9926 = vmatpush2.msra.mxu0 0.0
    %9927 = vmatprep.subr.mxu0 0.0
    %9928 = vmatpush2.msra.mxu0 0.0
    %9929 = vmatprep.subr.mxu0 0.0
    %9930 = vmatpush2.msra.mxu0 0.0
    %9931 = vmatprep.subr.mxu0 0.0
    %9932 = vmatpush2.msra.mxu0 0.0
    %9933 = vmatprep.subr.mxu0 0.0
    %9934 = vmatpush2.msra.mxu0 0.0
    %9935 = vmatprep.subr.mxu0 0.0
    %9936 = vmatpush2.msra.mxu0 0.0
    %9937 = vmatprep.subr.mxu0 0.0
    %9938 = vmatpush2.msra.mxu0 0.0
    %9939 = vmatprep.subr.mxu0 0.0
    %9940 = vmatpush2.msra.mxu0 0.0
    %9941 = vmatprep.subr.mxu0 0.0
    %9942 = vmatpush2.msra.mxu0 0.0
    %9943 = vmatprep.mubr.f32.mxu0 0.0
    %9944 = vmatmul.mubr.f32.gmra.mxu0 %v9877
    %v9945 = vpop.f32.mrf.mxu0
    %v9946 = vadd.f32 0.0, %v9945
    %v9947 = vpop.f32.mrf.mxu0
    %v9948 = vadd.f32 0.0, %v9947
    %9949 = vdwg.mxu0
    %9950 = vmatprep.subr.mxu0 %v9693
    %9951 = vmatpush1.msra.mxu0 %v9692
    %9952 = vmatprep.subr.mxu0 %v9689
    %9953 = vmatpush1.msra.mxu0 %v9688
    %9954 = vmatprep.subr.mxu0 %v9685
    %9955 = vmatpush1.msra.mxu0 %v9684
    %9956 = vmatprep.subr.mxu0 %v9681
    %9957 = vmatpush1.msra.mxu0 %v9680
    %9958 = vmatprep.subr.mxu0 %v9677
    %9959 = vmatpush1.msra.mxu0 %v9676
    %9960 = vmatprep.subr.mxu0 %v9673
    %9961 = vmatpush1.msra.mxu0 %v9672
    %9962 = vmatprep.subr.mxu0 %v9669
    %9963 = vmatpush1.msra.mxu0 %v9668
    %9964 = vmatprep.subr.mxu0 %v9665
    %9965 = vmatpush1.msra.mxu0 %v9664
    %9966 = vmatprep.subr.mxu0 %v9661
    %9967 = vmatpush1.msra.mxu0 %v9660
    %9968 = vmatprep.subr.mxu0 %v9657
    %9969 = vmatpush1.msra.mxu0 %v9656
    %9970 = vmatprep.subr.mxu0 %v9653
    %9971 = vmatpush1.msra.mxu0 %v9652
    %9972 = vmatprep.subr.mxu0 %v9649
    %9973 = vmatpush1.msra.mxu0 %v9648
    %9974 = vmatprep.subr.mxu0 %v9645
    %9975 = vmatpush1.msra.mxu0 %v9644
    %9976 = vmatprep.subr.mxu0 %v9641
    %9977 = vmatpush1.msra.mxu0 %v9640
    %9978 = vmatprep.subr.mxu0 %v9637
    %9979 = vmatpush1.msra.mxu0 %v9636
    %9980 = vmatprep.subr.mxu0 %v9633
    %9981 = vmatpush1.msra.mxu0 %v9632
    %9982 = vmatprep.subr.mxu0 0.0
    %9983 = vmatpush2.msra.mxu0 0.0
    %9984 = vmatprep.subr.mxu0 0.0
    %9985 = vmatpush2.msra.mxu0 0.0
    %9986 = vmatprep.subr.mxu0 0.0
    %9987 = vmatpush2.msra.mxu0 0.0
    %9988 = vmatprep.subr.mxu0 0.0
    %9989 = vmatpush2.msra.mxu0 0.0
    %9990 = vmatprep.subr.mxu0 0.0
    %9991 = vmatpush2.msra.mxu0 0.0
    %9992 = vmatprep.subr.mxu0 0.0
    %9993 = vmatpush2.msra.mxu0 0.0
    %9994 = vmatprep.subr.mxu0 0.0
    %9995 = vmatpush2.msra.mxu0 0.0
    %9996 = vmatprep.subr.mxu0 0.0
    %9997 = vmatpush2.msra.mxu0 0.0
    %9998 = vmatprep.subr.mxu0 0.0
    %9999 = vmatpush2.msra.mxu0 0.0
    %10000 = vmatprep.subr.mxu0 0.0
    %10001 = vmatpush2.msra.mxu0 0.0
    %10002 = vmatprep.subr.mxu0 0.0
    %10003 = vmatpush2.msra.mxu0 0.0
    %10004 = vmatprep.subr.mxu0 0.0
    %10005 = vmatpush2.msra.mxu0 0.0
    %10006 = vmatprep.subr.mxu0 0.0
    %10007 = vmatpush2.msra.mxu0 0.0
    %10008 = vmatprep.subr.mxu0 0.0
    %10009 = vmatpush2.msra.mxu0 0.0
    %10010 = vmatprep.subr.mxu0 0.0
    %10011 = vmatpush2.msra.mxu0 0.0
    %10012 = vmatprep.subr.mxu0 0.0
    %10013 = vmatpush2.msra.mxu0 0.0
    %10014 = vmatprep.mubr.f32.mxu0 0.0
    %10015 = vmatmul.mubr.f32.gmra.mxu0 %v9877
    %v10016 = vpop.f32.mrf.mxu0
    %v10017 = vadd.f32 0.0, %v10016
    %v10018 = vpop.f32.mrf.mxu0
    %v10019 = vadd.f32 0.0, %v10018
    %10020 = vdwg.mxu0
    %v10025 = vrot.slane %v9946, 4
    %v10026 = vrot.slane %v9948, 4
    %v10027 = vrot.slane %v10017, 4
    %v10028 = vrot.slane %v10019, 4
    %v10033 = vadd.f32 %v9550, %v10025
    %v10034 = vadd.f32 %v9552, %v10026
    %v10035 = vadd.f32 %v9625, %v10027
    %v10036 = vadd.f32 %v9627, %v10028
    %v10037 = vxor.u32 %v10033, 2147483648
    %v10038 = vxor.u32 %v10034, 2147483648
    %v10039 = vxor.u32 %v10035, 2147483648
    %v10040 = vmul.f32 %v10037, 1.442695
    %v10041 = vpow.pop %v10040
    %v10042 = vmul.f32 %v10038, 1.442695
    %v10043 = vpow.pop %v10042
    %v10044 = vmul.f32 %v10039, 1.442695
    %v10045 = vpow.pop %v10044
    %v10046 = vadd.f32 %v10041, 1.0
    %v10047 = vadd.f32 %v10043, 1.0
    %v10048 = vadd.f32 %v10045, 1.0
    %v10049 = vrcp.pop %v10046
    %v10050 = vmul.f32 1.0, %v10049
    %v10051 = vrcp.pop %v10047
    %v10052 = vmul.f32 1.0, %v10051
    %v10053 = vrcp.pop %v10048
    %v10054 = vmul.f32 1.0, %v10053
    %v10055 = vtanh.pop %v10036
    %v10057 = vrot.slane %v9873, 2
    %v10059 = vmul.f32 %v10052, %v10057
    %v10060 = vmul.f32 %v10050, %v10055
    %v10061 = vadd.f32 %v10059, %v10060
    %v10062 = vtanh.pop %v10061
    %v10063 = vmul.f32 %v10054, %v10062
    %v10065 = vrot.slane %v9326, 2
    %v10066 = vrot.slane %v9875, 2
    %v10067 = vld [vmem:[%s5] sm:$0xff]
    %v10068 = vld [vmem:[%s5 + $0x8] sm:$0xff]
    %v10069 = vld [vmem:[%s5 + $0x10] sm:$0xff]
    %v10070 = vld [vmem:[%s5 + $0x18] sm:$0xff]
    %v10071 = vld [vmem:[%s5 + $0x20] sm:$0xff]
    %v10072 = vld [vmem:[%s5 + $0x28] sm:$0xff]
    %v10073 = vld [vmem:[%s5 + $0x30] sm:$0xff]
    %v10074 = vld [vmem:[%s5 + $0x38] sm:$0xff]
    %v10075 = vld [vmem:[%s5 + $0x40] sm:$0xff]
    %v10076 = vld [vmem:[%s5 + $0x48] sm:$0xff]
    %v10077 = vld [vmem:[%s5 + $0x50] sm:$0xff]
    %v10078 = vld [vmem:[%s5 + $0x58] sm:$0xff]
    %v10079 = vld [vmem:[%s5 + $0x60] sm:$0xff]
    %v10080 = vld [vmem:[%s5 + $0x68] sm:$0xff]
    %v10081 = vld [vmem:[%s5 + $0x70] sm:$0xff]
    %v10082 = vld [vmem:[%s5 + $0x78] sm:$0xff]
    %v10083 = vld [vmem:[%s5 + $0x80] sm:$0xff]
    %v10084 = vld [vmem:[%s5 + $0x88] sm:$0xff]
    %v10085 = vld [vmem:[%s5 + $0x90] sm:$0xff]
    %v10086 = vld [vmem:[%s5 + $0x98] sm:$0xff]
    %v10087 = vld [vmem:[%s5 + $0xa0] sm:$0xff]
    %v10088 = vld [vmem:[%s5 + $0xa8] sm:$0xff]
    %v10089 = vld [vmem:[%s5 + $0xb0] sm:$0xff]
    %v10090 = vld [vmem:[%s5 + $0xb8] sm:$0xff]
    %v10091 = vld [vmem:[%s5 + $0xc0] sm:$0xff]
    %v10092 = vld [vmem:[%s5 + $0xc8] sm:$0xff]
    %v10093 = vld [vmem:[%s5 + $0xd0] sm:$0xff]
    %v10094 = vld [vmem:[%s5 + $0xd8] sm:$0xff]
    %v10095 = vld [vmem:[%s5 + $0xe0] sm:$0xff]
    %v10096 = vld [vmem:[%s5 + $0xe8] sm:$0xff]
    %v10097 = vld [vmem:[%s5 + $0xf0] sm:$0xff]
    %v10098 = vld [vmem:[%s5 + $0xf8] sm:$0xff]
    %v10099 = vld [vmem:[%s5 + $0x100] sm:$0xff]
    %v10100 = vld [vmem:[%s5 + $0x108] sm:$0xff]
    %v10101 = vld [vmem:[%s5 + $0x110] sm:$0xff]
    %v10102 = vld [vmem:[%s5 + $0x118] sm:$0xff]
    %v10103 = vld [vmem:[%s5 + $0x120] sm:$0xff]
    %v10104 = vld [vmem:[%s5 + $0x128] sm:$0xff]
    %v10105 = vld [vmem:[%s5 + $0x130] sm:$0xff]
    %v10106 = vld [vmem:[%s5 + $0x138] sm:$0xff]
    %v10107 = vld [vmem:[%s5 + $0x140] sm:$0xff]
    %v10108 = vld [vmem:[%s5 + $0x148] sm:$0xff]
    %v10109 = vld [vmem:[%s5 + $0x150] sm:$0xff]
    %v10110 = vld [vmem:[%s5 + $0x158] sm:$0xff]
    %v10111 = vld [vmem:[%s5 + $0x160] sm:$0xff]
    %v10112 = vld [vmem:[%s5 + $0x168] sm:$0xff]
    %v10113 = vld [vmem:[%s5 + $0x170] sm:$0xff]
    %v10114 = vld [vmem:[%s5 + $0x178] sm:$0xff]
    %v10115 = vld [vmem:[%s5 + $0x180] sm:$0xff]
    %v10116 = vld [vmem:[%s5 + $0x188] sm:$0xff]
    %v10117 = vld [vmem:[%s5 + $0x190] sm:$0xff]
    %v10118 = vld [vmem:[%s5 + $0x198] sm:$0xff]
    %v10119 = vld [vmem:[%s5 + $0x1a0] sm:$0xff]
    %v10120 = vld [vmem:[%s5 + $0x1a8] sm:$0xff]
    %v10121 = vld [vmem:[%s5 + $0x1b0] sm:$0xff]
    %v10122 = vld [vmem:[%s5 + $0x1b8] sm:$0xff]
    %v10123 = vld [vmem:[%s5 + $0x1c0] sm:$0xff]
    %v10124 = vld [vmem:[%s5 + $0x1c8] sm:$0xff]
    %v10125 = vld [vmem:[%s5 + $0x1d0] sm:$0xff]
    %v10126 = vld [vmem:[%s5 + $0x1d8] sm:$0xff]
    %v10127 = vld [vmem:[%s5 + $0x1e0] sm:$0xff]
    %v10128 = vld [vmem:[%s5 + $0x1e8] sm:$0xff]
    %v10129 = vld [vmem:[%s5 + $0x1f0] sm:$0xff]
    %v10130 = vld [vmem:[%s5 + $0x1f8] sm:$0xff]
    %v10131 = vld [vmem:[#allocation10] sm:$0x1]
    %v10133 = vlaneseq
    %v10134 = vshrl.u32 %v10133, 7
    %v10135 = vsub.s32 0, %v10134
    %v10136 = vrot.slane %v10131, %v10135
    %v10139 = vrot.slane %v10063, 4
    %v10140 = vrot.slane %v10065, 4
    %v10141 = vrot.slane %v10066, 4
    %10145 = vmatprep.subr.mxu0 0.0
    %10146 = vmatpush1.msra.mxu0 %v10082
    %10147 = vmatprep.subr.mxu0 0.0
    %10148 = vmatpush1.msra.mxu0 %v10081
    %10149 = vmatprep.subr.mxu0 0.0
    %10150 = vmatpush1.msra.mxu0 %v10080
    %10151 = vmatprep.subr.mxu0 0.0
    %10152 = vmatpush1.msra.mxu0 %v10079
    %10153 = vmatprep.subr.mxu0 0.0
    %10154 = vmatpush1.msra.mxu0 %v10078
    %10155 = vmatprep.subr.mxu0 0.0
    %10156 = vmatpush1.msra.mxu0 %v10077
    %10157 = vmatprep.subr.mxu0 0.0
    %10158 = vmatpush1.msra.mxu0 %v10076
    %10159 = vmatprep.subr.mxu0 0.0
    %10160 = vmatpush1.msra.mxu0 %v10075
    %10161 = vmatprep.subr.mxu0 0.0
    %10162 = vmatpush1.msra.mxu0 %v10074
    %10163 = vmatprep.subr.mxu0 0.0
    %10164 = vmatpush1.msra.mxu0 %v10073
    %10165 = vmatprep.subr.mxu0 0.0
    %10166 = vmatpush1.msra.mxu0 %v10072
    %10167 = vmatprep.subr.mxu0 0.0
    %10168 = vmatpush1.msra.mxu0 %v10071
    %10169 = vmatprep.subr.mxu0 0.0
    %10170 = vmatpush1.msra.mxu0 %v10070
    %10171 = vmatprep.subr.mxu0 0.0
    %10172 = vmatpush1.msra.mxu0 %v10069
    %10173 = vmatprep.subr.mxu0 0.0
    %10174 = vmatpush1.msra.mxu0 %v10068
    %10175 = vmatprep.subr.mxu0 0.0
    %10176 = vmatpush1.msra.mxu0 %v10067
    %10177 = vmatprep.subr.mxu0 0.0
    %10178 = vmatpush2.msra.mxu0 %v10098
    %10179 = vmatprep.subr.mxu0 0.0
    %10180 = vmatpush2.msra.mxu0 %v10097
    %10181 = vmatprep.subr.mxu0 0.0
    %10182 = vmatpush2.msra.mxu0 %v10096
    %10183 = vmatprep.subr.mxu0 0.0
    %10184 = vmatpush2.msra.mxu0 %v10095
    %10185 = vmatprep.subr.mxu0 0.0
    %10186 = vmatpush2.msra.mxu0 %v10094
    %10187 = vmatprep.subr.mxu0 0.0
    %10188 = vmatpush2.msra.mxu0 %v10093
    %10189 = vmatprep.subr.mxu0 0.0
    %10190 = vmatpush2.msra.mxu0 %v10092
    %10191 = vmatprep.subr.mxu0 0.0
    %10192 = vmatpush2.msra.mxu0 %v10091
    %10193 = vmatprep.subr.mxu0 0.0
    %10194 = vmatpush2.msra.mxu0 %v10090
    %10195 = vmatprep.subr.mxu0 0.0
    %10196 = vmatpush2.msra.mxu0 %v10089
    %10197 = vmatprep.subr.mxu0 0.0
    %10198 = vmatpush2.msra.mxu0 %v10088
    %10199 = vmatprep.subr.mxu0 0.0
    %10200 = vmatpush2.msra.mxu0 %v10087
    %10201 = vmatprep.subr.mxu0 0.0
    %10202 = vmatpush2.msra.mxu0 %v10086
    %10203 = vmatprep.subr.mxu0 0.0
    %10204 = vmatpush2.msra.mxu0 %v10085
    %10205 = vmatprep.subr.mxu0 0.0
    %10206 = vmatpush2.msra.mxu0 %v10084
    %10207 = vmatprep.subr.mxu0 0.0
    %10208 = vmatpush2.msra.mxu0 %v10083
    %10209 = vmatprep.mubr.f32.mxu0 %v10139
    %10210 = vmatmul.mubr.f32.gmra.mxu0 %v9140
    %v10211 = vpop.f32.mrf.mxu0
    %v10212 = vadd.f32 %v10136, %v10211
    %v10213 = vpop.f32.mrf.mxu0
    %10214 = vdwg.mxu0
    %10215 = vmatprep.subr.mxu0 0.0
    %10216 = vmatpush1.msra.mxu0 %v10114
    %10217 = vmatprep.subr.mxu0 0.0
    %10218 = vmatpush1.msra.mxu0 %v10113
    %10219 = vmatprep.subr.mxu0 0.0
    %10220 = vmatpush1.msra.mxu0 %v10112
    %10221 = vmatprep.subr.mxu0 0.0
    %10222 = vmatpush1.msra.mxu0 %v10111
    %10223 = vmatprep.subr.mxu0 0.0
    %10224 = vmatpush1.msra.mxu0 %v10110
    %10225 = vmatprep.subr.mxu0 0.0
    %10226 = vmatpush1.msra.mxu0 %v10109
    %10227 = vmatprep.subr.mxu0 0.0
    %10228 = vmatpush1.msra.mxu0 %v10108
    %10229 = vmatprep.subr.mxu0 0.0
    %10230 = vmatpush1.msra.mxu0 %v10107
    %10231 = vmatprep.subr.mxu0 0.0
    %10232 = vmatpush1.msra.mxu0 %v10106
    %10233 = vmatprep.subr.mxu0 0.0
    %10234 = vmatpush1.msra.mxu0 %v10105
    %10235 = vmatprep.subr.mxu0 0.0
    %10236 = vmatpush1.msra.mxu0 %v10104
    %10237 = vmatprep.subr.mxu0 0.0
    %10238 = vmatpush1.msra.mxu0 %v10103
    %10239 = vmatprep.subr.mxu0 0.0
    %10240 = vmatpush1.msra.mxu0 %v10102
    %10241 = vmatprep.subr.mxu0 0.0
    %10242 = vmatpush1.msra.mxu0 %v10101
    %10243 = vmatprep.subr.mxu0 0.0
    %10244 = vmatpush1.msra.mxu0 %v10100
    %10245 = vmatprep.subr.mxu0 0.0
    %10246 = vmatpush1.msra.mxu0 %v10099
    %10247 = vmatprep.subr.mxu0 0.0
    %10248 = vmatpush2.msra.mxu0 %v10130
    %10249 = vmatprep.subr.mxu0 0.0
    %10250 = vmatpush2.msra.mxu0 %v10129
    %10251 = vmatprep.subr.mxu0 0.0
    %10252 = vmatpush2.msra.mxu0 %v10128
    %10253 = vmatprep.subr.mxu0 0.0
    %10254 = vmatpush2.msra.mxu0 %v10127
    %10255 = vmatprep.subr.mxu0 0.0
    %10256 = vmatpush2.msra.mxu0 %v10126
    %10257 = vmatprep.subr.mxu0 0.0
    %10258 = vmatpush2.msra.mxu0 %v10125
    %10259 = vmatprep.subr.mxu0 0.0
    %10260 = vmatpush2.msra.mxu0 %v10124
    %10261 = vmatprep.subr.mxu0 0.0
    %10262 = vmatpush2.msra.mxu0 %v10123
    %10263 = vmatprep.subr.mxu0 0.0
    %10264 = vmatpush2.msra.mxu0 %v10122
    %10265 = vmatprep.subr.mxu0 0.0
    %10266 = vmatpush2.msra.mxu0 %v10121
    %10267 = vmatprep.subr.mxu0 0.0
    %10268 = vmatpush2.msra.mxu0 %v10120
    %10269 = vmatprep.subr.mxu0 0.0
    %10270 = vmatpush2.msra.mxu0 %v10119
    %10271 = vmatprep.subr.mxu0 0.0
    %10272 = vmatpush2.msra.mxu0 %v10118
    %10273 = vmatprep.subr.mxu0 0.0
    %10274 = vmatpush2.msra.mxu0 %v10117
    %10275 = vmatprep.subr.mxu0 0.0
    %10276 = vmatpush2.msra.mxu0 %v10116
    %10277 = vmatprep.subr.mxu0 0.0
    %10278 = vmatpush2.msra.mxu0 %v10115
    %10279 = vmatprep.mubr.f32.mxu0 %v10141
    %10280 = vmatmul.mubr.f32.gmra.mxu0 %v10140
    %v10281 = vpop.f32.mrf.mxu0
    %v10282 = vadd.f32 %v10212, %v10281
    %v10283 = vpop.f32.mrf.mxu0
    %10284 = vdwg.mxu0
    %v10285 = vld [vmem:[#allocation11] sm:$0xff]
    %v10286 = vld [vmem:[#allocation11 + $0x8] sm:$0xff]
    %v10287 = vld [vmem:[#allocation11 + $0x10] sm:$0xff]
    %v10288 = vld [vmem:[#allocation11 + $0x18] sm:$0xff]
    %v10289 = vld [vmem:[#allocation11 + $0x20] sm:$0xff]
    %v10290 = vld [vmem:[#allocation11 + $0x28] sm:$0xff]
    %v10291 = vld [vmem:[#allocation11 + $0x30] sm:$0xff]
    %v10292 = vld [vmem:[#allocation11 + $0x38] sm:$0xff]
    %v10293 = vld [vmem:[#allocation13] sm:$0x1]
    %v10295 = vlaneseq
    %v10296 = vshrl.u32 %v10295, 7
    %v10297 = vsub.s32 0, %v10296
    %v10298 = vrot.slane %v10293, %v10297
    %vm10300 = vcmask 523264
    %v10302 = vsel %vm10300, %v10282, 0
    %10304 = vmatprep.subr.mxu0 0.0
    %10305 = vmatpush1.msra.mxu0 0.0
    %10306 = vmatprep.subr.mxu0 0.0
    %10307 = vmatpush1.msra.mxu0 0.0
    %10308 = vmatprep.subr.mxu0 0.0
    %10309 = vmatpush1.msra.mxu0 0.0
    %10310 = vmatprep.subr.mxu0 0.0
    %10311 = vmatpush1.msra.mxu0 0.0
    %10312 = vmatprep.subr.mxu0 0.0
    %10313 = vmatpush1.msra.mxu0 0.0
    %10314 = vmatprep.subr.mxu0 0.0
    %10315 = vmatpush1.msra.mxu0 0.0
    %10316 = vmatprep.subr.mxu0 0.0
    %10317 = vmatpush1.msra.mxu0 0.0
    %10318 = vmatprep.subr.mxu0 0.0
    %10319 = vmatpush1.msra.mxu0 0.0
    %10320 = vmatprep.subr.mxu0 0.0
    %10321 = vmatpush1.msra.mxu0 %v10292
    %10322 = vmatprep.subr.mxu0 0.0
    %10323 = vmatpush1.msra.mxu0 %v10291
    %10324 = vmatprep.subr.mxu0 0.0
    %10325 = vmatpush1.msra.mxu0 %v10290
    %10326 = vmatprep.subr.mxu0 0.0
    %10327 = vmatpush1.msra.mxu0 %v10289
    %10328 = vmatprep.subr.mxu0 0.0
    %10329 = vmatpush1.msra.mxu0 %v10288
    %10330 = vmatprep.subr.mxu0 0.0
    %10331 = vmatpush1.msra.mxu0 %v10287
    %10332 = vmatprep.subr.mxu0 0.0
    %10333 = vmatpush1.msra.mxu0 %v10286
    %10334 = vmatprep.subr.mxu0 0.0
    %10335 = vmatpush1.msra.mxu0 %v10285
    %10336 = vmatprep.subr.mxu0 0.0
    %10337 = vmatpush2.msra.mxu0 0.0
    %10338 = vmatprep.subr.mxu0 0.0
    %10339 = vmatpush2.msra.mxu0 0.0
    %10340 = vmatprep.subr.mxu0 0.0
    %10341 = vmatpush2.msra.mxu0 0.0
    %10342 = vmatprep.subr.mxu0 0.0
    %10343 = vmatpush2.msra.mxu0 0.0
    %10344 = vmatprep.subr.mxu0 0.0
    %10345 = vmatpush2.msra.mxu0 0.0
    %10346 = vmatprep.subr.mxu0 0.0
    %10347 = vmatpush2.msra.mxu0 0.0
    %10348 = vmatprep.subr.mxu0 0.0
    %10349 = vmatpush2.msra.mxu0 0.0
    %10350 = vmatprep.subr.mxu0 0.0
    %10351 = vmatpush2.msra.mxu0 0.0
    %10352 = vmatprep.subr.mxu0 0.0
    %10353 = vmatpush2.msra.mxu0 0.0
    %10354 = vmatprep.subr.mxu0 0.0
    %10355 = vmatpush2.msra.mxu0 0.0
    %10356 = vmatprep.subr.mxu0 0.0
    %10357 = vmatpush2.msra.mxu0 0.0
    %10358 = vmatprep.subr.mxu0 0.0
    %10359 = vmatpush2.msra.mxu0 0.0
    %10360 = vmatprep.subr.mxu0 0.0
    %10361 = vmatpush2.msra.mxu0 0.0
    %10362 = vmatprep.subr.mxu0 0.0
    %10363 = vmatpush2.msra.mxu0 0.0
    %10364 = vmatprep.subr.mxu0 0.0
    %10365 = vmatpush2.msra.mxu0 0.0
    %10366 = vmatprep.subr.mxu0 0.0
    %10367 = vmatpush2.msra.mxu0 0.0
    %10368 = vmatprep.mubr.f32.mxu0 0.0
    %10369 = vmatmul.mubr.f32.gmra.mxu0 %v10302
    %v10370 = vpop.f32.mrf.mxu0
    %v10371 = vadd.f32 %v10298, %v10370
    %v10372 = vpop.f32.mrf.mxu0
    %10373 = vdwg.mxu0
    %10374 = vst [vmem:[#allocation14] sm:$0x3] %v10371
    // Predicated region
    $region66: #{bilstm_forward.1} parent=1 // pred_check
      _
    $region67: #{bilstm_forward.1} parent=1 // pred_check_branch
      %10376 = sbr.rel (0) target = $region69
    $region68: #{bilstm_forward.1} parent=1 // pred_region
      %s10378 = ssub.s32 32, 32
      %10379 = vsyncadd [#allocation4], %s10378
      %s10381 = sshll.u32 [#allocation14], 4
      %s10382 = int_to_ptr.vmem [resolvable:$true] %s10381
      %10384 = dma.vmem_to_hbm [thread:$0]  %s10382, 32, %s9, [#allocation4]
    $region69: #{bilstm_forward.1} parent=1 // pred_fallthru
      _
    // Predicated region
    $region70: #{bilstm_forward.1} parent=1 // pred_check
      _
    $region71: #{bilstm_forward.1} parent=1 // pred_check_branch
      %10386 = sbr.rel (0) target = $region73
    $region72: #{bilstm_forward.1} parent=1 // pred_region
      %10387 = dma.done [#allocation4], 32
    $region73: #{bilstm_forward.1} parent=1 // pred_fallthru
      _
    %10388 = vsyncpa [#allocation3], 1
    %10389 = vsyncpa [#allocation6], 1
    %10390 = vsyncpa [#allocation9], 1
    %10391 = vsyncpa [#allocation12], 1
    %10392 = vsyncpa [#allocation4], 1

</llo_original>
